<compile_context>
chip_gen: v7x
topology: tpu7x:2x2x1
jax: 0.10.0
libtpu: 0.0.40
codegen_flags: <defaults>
</compile_context>

<pallas_src>
import jax
import jax.numpy as jnp
from jax.experimental import pallas as pl
from jax.experimental.pallas import tpu as pltpu

_EPS = 1e-5          # torch BatchNorm default eps
_PT_CHUNK = 512      # points per chunk for the streamed STN 128->1024 stage

_WEIGHT_ORDER = ("stn_c1_w", "stn_c2_w", "stn_c3_w",
                 "stn_f1_w", "stn_f2_w", "stn_f3_w",
                 "c1_w", "c2_w", "c3_w")
# Weights cast to bf16 for the MXU (f32 accumulation).  The two K=3 convs and the tiny fc3
# (which produces the 3x3 transform) stay f32.
_BF16_WEIGHTS = frozenset(("stn_c2_w", "stn_c3_w", "stn_f1_w", "stn_f2_w", "c2_w", "c3_w"))

# All per-channel vectors packed into one (rows, width) array.
_VEC_ORDER = ("stn_bn1_g", "stn_bn1_b", "stn_bn2_g", "stn_bn2_b",
              "stn_bn3_g", "stn_bn3_b", "stn_bn4_g", "stn_bn4_b",
              "stn_bn5_g", "stn_bn5_b", "stn_f3_beff",
              "bn1_g", "bn1_b", "bn2_g", "bn2_b", "bn3_g", "bn3_b")


def _param_shapes(z_dim):
    # weights stored as (in, out) == torch weight transposed; biases / BN params as (1, C)
    return {
        # ---- STN3d (input transform net) ----
        "stn_c1_w": (3, 64),      "stn_c1_b": (1, 64),
        "stn_c2_w": (64, 128),    "stn_c2_b": (1, 128),
        "stn_c3_w": (128, 1024),  "stn_c3_b": (1, 1024),
        "stn_f1_w": (1024, 512),  "stn_f1_b": (1, 512),
        "stn_f2_w": (512, 256),   "stn_f2_b": (1, 256),
        "stn_f3_w": (256, 9),     "stn_f3_b": (1, 9),
        "stn_bn1_g": (1, 64),     "stn_bn1_b": (1, 64),
        "stn_bn2_g": (1, 128),    "stn_bn2_b": (1, 128),
        "stn_bn3_g": (1, 1024),   "stn_bn3_b": (1, 1024),
        "stn_bn4_g": (1, 512),    "stn_bn4_b": (1, 512),
        "stn_bn5_g": (1, 256),    "stn_bn5_b": (1, 256),
        "stn_iden":  (1, 9),
        # ---- PointNetfeat trunk ----
        "c1_w": (3, 64),          "c1_b": (1, 64),
        "c2_w": (64, 128),        "c2_b": (1, 128),
        "c3_w": (128, z_dim),     "c3_b": (1, z_dim),
        "bn1_g": (1, 64),         "bn1_b": (1, 64),
        "bn2_g": (1, 128),        "bn2_b": (1, 128),
        "bn3_g": (1, z_dim),      "bn3_b": (1, z_dim),
    }


def init_params(z_dim, key):
    # Same parameter set as the torch module.  Note: the conv/linear biases that feed a
    # batch-stat BatchNorm are kept here for interface parity but are (exactly) irrelevant
    # to the forward value — the BN mean subtraction cancels any per-channel constant —
    # so the kernel never reads them.
    shapes = _param_shapes(z_dim)
    params = {}
    keys = jax.random.split(key, len(shapes))
    for k, (name, shape) in zip(keys, shapes.items()):
        if name == "stn_iden":
            params[name] = jnp.array([[1, 0, 0, 0, 1, 0, 0, 0, 1]], jnp.float32)
        elif name.endswith("_g"):                       # BN gamma
            params[name] = jnp.ones(shape, jnp.float32)
        elif "bn" in name and name.endswith("_b"):      # BN beta
            params[name] = jnp.zeros(shape, jnp.float32)
        elif name.endswith("_w"):                       # conv / linear weight
            params[name] = jax.random.normal(k, shape, jnp.float32) / jnp.sqrt(shape[0])
        else:                                           # conv / linear bias
            params[name] = 0.01 * jax.random.normal(k, shape, jnp.float32)
    return params


def build_pointnet(z_dim, pooling):
    shapes = _param_shapes(z_dim)

    def _vwidth(name):
        return 9 if name == "stn_f3_beff" else shapes[name][1]

    vec_index = {n: (i, _vwidth(n)) for i, n in enumerate(_VEC_ORDER)}
    vec_w = max(128, max(w for _, w in vec_index.values()))

    # ------------------------------------------------------------------ kernel
    def kernel(x_ref, vec_ref,
               stn_c1_w, stn_c2_w, stn_c3_w, stn_f1_w, stn_f2_w, stn_f3_w,
               c1_w, c2_w, c3_w, out_ref):
        f32 = jnp.float32
        x = x_ref[...]                                # (B, 3, N) f32, N on lanes
        bsz = x.shape[0]
        npts = x.shape[2]

        def vrow(name):                               # packed per-channel parameter vectors
            row, width = vec_index[name]
            return vec_ref[row, :width]               # (C,) f32

        relu = lambda t: jnp.maximum(t, 0.0)

        def bn(h, gname, bname, axes):
            # training-mode BatchNorm fused into a single scale/shift pass:
            #   scale = gamma * rsqrt(var + eps); shift = beta - mean * scale
            mean = jnp.mean(h, axis=axes, keepdims=True)
            var = jnp.maximum(jnp.mean(h * h, axis=axes, keepdims=True) - mean * mean, 0.0)
            scale = vrow(gname) * jax.lax.rsqrt(var + _EPS)
            return h * scale + (vrow(bname) - mean * scale)

        def conv(h, w):
            # 1x1 Conv1d == matmul over the trailing channel axis (MXU, f32 accumulation).
            # Bias omitted on purpose: every conv/linear here feeds a batch-stat BN, under
            # which a per-channel constant cancels exactly.
            b, n, cin = h.shape
            y = jnp.dot(h.reshape(b * n, cin).astype(w.dtype), w,
                        preferred_element_type=f32)
            return y.reshape(b, n, w.shape[1])

        def linear(h, w):
            return jnp.dot(h.astype(w.dtype), w, preferred_element_type=f32)

        # Single in-kernel relayout: NCW (B, 3, N) -> channels-last (B, N, 3).
        xt = jnp.transpose(x, (0, 2, 1))

        # ---------------- STN3d: predicts a per-cloud 3x3 transform ----------------
        s = relu(bn(conv(xt, stn_c1_w[...]), "stn_bn1_g", "stn_bn1_b", (0, 1)))   # (B,N,64)
        s = relu(bn(conv(s, stn_c2_w[...]), "stn_bn2_g", "stn_bn2_b", (0, 1)))    # (B,N,128)

        # STN conv3 (128->1024) + BN + ReLU + max-pool over points WITHOUT materializing the
        # (B, N, 1024) activation: batch statistics of the affine layer follow exactly from
        # the first/second moments of its 128-wide input, then the conv is streamed over
        # point chunks with a running max.
        w3 = stn_c3_w[...]                            # (128, 1024) bf16
        w3f = w3.astype(f32)
        s2f = s.reshape(bsz * npts, s.shape[2])       # (B*N, 128)
        mu = jnp.mean(s2f, axis=0, keepdims=True)                                   # (1, 128)
        gram = jax.lax.dot_general(s2f, s2f, (((0,), (0,)), ((), ())),
                                   preferred_element_type=f32) / (bsz * npts)       # (128,128)
        mean3 = jnp.dot(mu, w3f, preferred_element_type=f32)                        # (1,1024)
        ey2 = jnp.sum(w3f * jnp.dot(gram, w3f, preferred_element_type=f32),
                      axis=0, keepdims=True)                                        # (1,1024)
        var3 = jnp.maximum(ey2 - mean3 * mean3, 0.0)
        scale3 = vrow("stn_bn3_g") * jax.lax.rsqrt(var3 + _EPS)
        shift3 = vrow("stn_bn3_b") - mean3 * scale3

        g = jnp.zeros((bsz, w3.shape[1]), f32)
        for lo in range(0, npts, _PT_CHUNK):          # static chunk loop over the point axis
            hi = min(lo + _PT_CHUNK, npts)
            yc = conv(s[:, lo:hi, :], w3)             # (B, chunk, 1024), bf16 MXU, f32 acc
            yc = relu(yc * scale3 + shift3)
            g = jnp.maximum(g, jnp.max(yc, axis=1))   # running max over points

        g = relu(bn(linear(g, stn_f1_w[...]), "stn_bn4_g", "stn_bn4_b", (0,)))   # (B, 512)
        g = relu(bn(linear(g, stn_f2_w[...]), "stn_bn5_g", "stn_bn5_b", (0,)))   # (B, 256)
        trans = linear(g, stn_f3_w[...]) + vrow("stn_f3_beff")   # (B, 9), identity folded in

        # ---------------- PointNetfeat trunk ----------------
        # Fold the 3x3 transform into conv1:  w_eff[b] = trans3x3[b] @ c1_w, then one
        # batched MXU contraction h = einsum('bnd,bdf->bnf', x, w_eff).
        c1w = c1_w[...]                                                            # (3, 64)
        trans3 = jnp.stack([trans[:, 0:3], trans[:, 3:6], trans[:, 6:9]], axis=1)  # (B, 3, 3)
        w_eff = jnp.dot(trans3.reshape(bsz * 3, 3), c1w,
                        preferred_element_type=f32).reshape(bsz, 3, c1w.shape[1])  # (B, 3, 64)
        h = jnp.einsum("bnd,bdf->bnf", xt, w_eff, preferred_element_type=f32)      # (B, N, 64)
        h = relu(bn(h, "bn1_g", "bn1_b", (0, 1)))
        h = relu(bn(conv(h, c2_w[...]), "bn2_g", "bn2_b", (0, 1)))                 # (B, N, 128)
        h = bn(conv(h, c3_w[...]), "bn3_g", "bn3_b", (0, 1))                       # (B, N, z)

        if pooling == "max":
            z = jnp.max(h, axis=1)
        else:                                         # "average"
            z = jnp.mean(h, axis=1)
        out_ref[...] = z.astype(out_ref.dtype)

    # ------------------------------------------------------------------ wrapper
    def forward(x, params):
        x = jnp.asarray(x, jnp.float32)
        if x.ndim == 4:
            orig = x.shape
            x_in = x.reshape(-1, x.shape[2], x.shape[3])      # (B*T, N, 3)
        else:
            orig = None
            x_in = x
        # Same NCW transpose the torch module feeds Conv1d with; done outside the kernel so
        # the DMA'd input is lane-dense in N rather than padded 3 -> 128 channels.
        x_ncw = jnp.swapaxes(x_in, 1, 2)                      # (B*T, 3, N)
        bt, _, npts = x_ncw.shape

        # Pack every tiny per-channel vector (BN gamma/beta, fc3 bias + identity) into one array.
        rows = []
        for name in _VEC_ORDER:
            if name == "stn_f3_beff":
                v = (params["stn_f3_b"] + params["stn_iden"]).reshape(-1)
            else:
                v = params[name].reshape(-1)
            rows.append(jnp.pad(v.astype(jnp.float32), (0, vec_w - v.shape[0])))
        vec_pack = jnp.stack(rows, axis=0)                    # (len(_VEC_ORDER), vec_w)

        weights = [params[n].astype(jnp.bfloat16 if n in _BF16_WEIGHTS else jnp.float32)
                   for n in _WEIGHT_ORDER]
        operands = [x_ncw, vec_pack] + weights

        bytes_accessed = sum(int(a.size) * a.dtype.itemsize for a in operands) + bt * z_dim * 4
        flops = 2 * bt * npts * (3 * 64 + 64 * 128 + 128 * 1024 + 128 * 128
                                 + 3 * 64 + 64 * 128 + 128 * z_dim)
        flops += 2 * bt * (1024 * 512 + 512 * 256 + 256 * 9) + 2 * 128 * 128 * 1024
        transcendentals = 2 * (64 + 128 + 1024 + 512 + 256 + 64 + 128 + z_dim)

        # Full-residency activations + streamed STN chunk + weights (see TODO above).
        act_bytes = 4 * bt * npts * (128 + 64 + 128 + 64 + 128 + max(z_dim, 128)) \
            + 4 * bt * min(npts, _PT_CHUNK) * 1024
        vmem_limit = int(min(64 * 2 ** 20,
                             max(32 * 2 ** 20, 2 * (act_bytes + bytes_accessed))))

        vmem = pl.BlockSpec(memory_space=pltpu.MemorySpace.VMEM)
        z = pl.pallas_call(
            kernel,
            out_shape=jax.ShapeDtypeStruct((bt, z_dim), jnp.float32),
            in_specs=[vmem] * len(operands),
            out_specs=vmem,
            compiler_params=pltpu.CompilerParams(vmem_limit_bytes=vmem_limit),
            cost_estimate=pl.CostEstimate(flops=int(flops),
                                          transcendentals=int(transcendentals),
                                          bytes_accessed=int(bytes_accessed)),
        )(*operands)

        if orig is not None:
            z = z.reshape(orig[0], orig[1], -1)
        return z

    return forward


if __name__ == "__main__":
    Z_DIM = 64
    POOLING = "max"
    B, T, N, D = 2, 3, 16, 3          # (batch, clouds-per-item, points, xyz)

    key = jax.random.PRNGKey(0)
    pkey, xkey = jax.random.split(key)
    params = init_params(Z_DIM, pkey)
    x = jax.random.normal(xkey, (B, T, N, D), jnp.float32)

    forward = build_pointnet(Z_DIM, POOLING)
    z_v = jax.block_until_ready(jax.jit(forward)(x, params))

    assert z_v.shape == (B, T, Z_DIM), z_v.shape
    assert bool(jnp.all(jnp.isfinite(z_v)))
    print("KERNEL_OK")
</pallas_src>

<mosaic_0001>
module attributes {stable_mosaic.version = 11 : i64} {
  func.func @kernel(%arg0: memref<6x3x16xf32, #tpu.memory_space<vmem>>, %arg1: memref<17x1024xf32, #tpu.memory_space<vmem>>, %arg2: memref<3x64xf32, #tpu.memory_space<vmem>>, %arg3: memref<64x128xbf16, #tpu.memory_space<vmem>>, %arg4: memref<128x1024xbf16, #tpu.memory_space<vmem>>, %arg5: memref<1024x512xbf16, #tpu.memory_space<vmem>>, %arg6: memref<512x256xbf16, #tpu.memory_space<vmem>>, %arg7: memref<256x9xf32, #tpu.memory_space<vmem>>, %arg8: memref<3x64xf32, #tpu.memory_space<vmem>>, %arg9: memref<64x128xbf16, #tpu.memory_space<vmem>>, %arg10: memref<128x64xbf16, #tpu.memory_space<vmem>>, %arg11: memref<6x64xf32, #tpu.memory_space<vmem>>) attributes {dimension_semantics = [], scalar_prefetch = 0 : i64, scratch_operands = 0 : i64, tpu.core_type = #tpu.core_type<tc>} {
    %c0 = arith.constant 0 : index
    %c0_0 = arith.constant 0 : index
    %c0_1 = arith.constant 0 : index
    %0 = vector.load %arg0[%c0, %c0_0, %c0_1] : memref<6x3x16xf32, #tpu.memory_space<vmem>>, vector<6x3x16xf32>
    %1 = tpu.transpose %0, [0, 2, 1] : vector<6x3x16xf32> -> vector<6x16x3xf32>
    %c0_2 = arith.constant 0 : index
    %c0_3 = arith.constant 0 : index
    %2 = vector.load %arg2[%c0_2, %c0_3] : memref<3x64xf32, #tpu.memory_space<vmem>>, vector<3x64xf32>
    %3 = vector.shape_cast %1 : vector<6x16x3xf32> to vector<96x3xf32>
    %cst = arith.constant dense<0.000000e+00> : vector<96x64xf32>
    %4 = tpu.matmul %3, %2, %cst {dimension_numbers = #tpu.dot_dimension_numbers<[1], [0], [0], [1], [0, 0, 1, 1], [], []>} : vector<96x3xf32>, vector<3x64xf32>, vector<96x64xf32> -> vector<96x64xf32>
    %5 = vector.shape_cast %4 : vector<96x64xf32> to vector<6x16x64xf32>
    %cst_4 = arith.constant dense<0.000000e+00> : vector<64xf32>
    %6 = vector.multi_reduction <add>, %5, %cst_4 [0, 1] : vector<6x16x64xf32> to vector<64xf32>
    %7 = vector.shape_cast %6 : vector<64xf32> to vector<1x1x64xf32>
    %cst_5 = arith.constant 9.600000e+01 : f32
    %8 = vector.broadcast %cst_5 : f32 to vector<1x1x64xf32>
    %9 = arith.divf %7, %8 : vector<1x1x64xf32>
    %10 = arith.mulf %5, %5 : vector<6x16x64xf32>
    %cst_6 = arith.constant dense<0.000000e+00> : vector<64xf32>
    %11 = vector.multi_reduction <add>, %10, %cst_6 [0, 1] : vector<6x16x64xf32> to vector<64xf32>
    %12 = vector.shape_cast %11 : vector<64xf32> to vector<1x1x64xf32>
    %cst_7 = arith.constant 9.600000e+01 : f32
    %13 = vector.broadcast %cst_7 : f32 to vector<1x1x64xf32>
    %14 = arith.divf %12, %13 : vector<1x1x64xf32>
    %15 = arith.mulf %9, %9 : vector<1x1x64xf32>
    %16 = arith.subf %14, %15 : vector<1x1x64xf32>
    %cst_8 = arith.constant 0.000000e+00 : f32
    %17 = vector.broadcast %cst_8 : f32 to vector<1x1x64xf32>
    %18 = arith.maximumf %16, %17 : vector<1x1x64xf32>
    %c0_9 = arith.constant 0 : index
    %c0_10 = arith.constant 0 : index
    %19 = vector.load %arg1[%c0_9, %c0_10] : memref<17x1024xf32, #tpu.memory_space<vmem>>, vector<1x64xf32>
    %20 = vector.shape_cast %19 : vector<1x64xf32> to vector<64xf32>
    %cst_11 = arith.constant 9.99999974E-6 : f32
    %21 = vector.broadcast %cst_11 : f32 to vector<1x1x64xf32>
    %22 = arith.addf %18, %21 : vector<1x1x64xf32>
    %23 = math.rsqrt %22 : vector<1x1x64xf32>
    %24 = vector.shape_cast %20 : vector<64xf32> to vector<1x1x64xf32>
    %25 = arith.mulf %24, %23 : vector<1x1x64xf32>
    %26 = vector.broadcast %25 : vector<1x1x64xf32> to vector<6x16x64xf32>
    %27 = arith.mulf %5, %26 : vector<6x16x64xf32>
    %c1 = arith.constant 1 : index
    %c0_12 = arith.constant 0 : index
    %28 = vector.load %arg1[%c1, %c0_12] : memref<17x1024xf32, #tpu.memory_space<vmem>>, vector<1x64xf32>
    %29 = vector.shape_cast %28 : vector<1x64xf32> to vector<64xf32>
    %30 = arith.mulf %9, %25 : vector<1x1x64xf32>
    %31 = vector.shape_cast %29 : vector<64xf32> to vector<1x1x64xf32>
    %32 = arith.subf %31, %30 : vector<1x1x64xf32>
    %33 = vector.broadcast %32 : vector<1x1x64xf32> to vector<6x16x64xf32>
    %34 = arith.addf %27, %33 : vector<6x16x64xf32>
    %cst_13 = arith.constant 0.000000e+00 : f32
    %35 = vector.broadcast %cst_13 : f32 to vector<6x16x64xf32>
    %36 = arith.maximumf %34, %35 : vector<6x16x64xf32>
    %c0_14 = arith.constant 0 : index
    %c0_15 = arith.constant 0 : index
    %37 = vector.load %arg3[%c0_14, %c0_15] : memref<64x128xbf16, #tpu.memory_space<vmem>>, vector<64x128xbf16>
    %38 = vector.shape_cast %36 : vector<6x16x64xf32> to vector<96x64xf32>
    %39 = arith.truncf %38 : vector<96x64xf32> to vector<96x64xbf16>
    %cst_16 = arith.constant dense<0.000000e+00> : vector<96x128xf32>
    %40 = tpu.matmul %39, %37, %cst_16 {dimension_numbers = #tpu.dot_dimension_numbers<[1], [0], [0], [1], [0, 0, 1, 1], [], []>} : vector<96x64xbf16>, vector<64x128xbf16>, vector<96x128xf32> -> vector<96x128xf32>
    %41 = vector.shape_cast %40 : vector<96x128xf32> to vector<6x16x128xf32>
    %cst_17 = arith.constant dense<0.000000e+00> : vector<128xf32>
    %42 = vector.multi_reduction <add>, %41, %cst_17 [0, 1] : vector<6x16x128xf32> to vector<128xf32>
    %43 = vector.shape_cast %42 : vector<128xf32> to vector<1x1x128xf32>
    %cst_18 = arith.constant 9.600000e+01 : f32
    %44 = vector.broadcast %cst_18 : f32 to vector<1x1x128xf32>
    %45 = arith.divf %43, %44 : vector<1x1x128xf32>
    %46 = arith.mulf %41, %41 : vector<6x16x128xf32>
    %cst_19 = arith.constant dense<0.000000e+00> : vector<128xf32>
    %47 = vector.multi_reduction <add>, %46, %cst_19 [0, 1] : vector<6x16x128xf32> to vector<128xf32>
    %48 = vector.shape_cast %47 : vector<128xf32> to vector<1x1x128xf32>
    %cst_20 = arith.constant 9.600000e+01 : f32
    %49 = vector.broadcast %cst_20 : f32 to vector<1x1x128xf32>
    %50 = arith.divf %48, %49 : vector<1x1x128xf32>
    %51 = arith.mulf %45, %45 : vector<1x1x128xf32>
    %52 = arith.subf %50, %51 : vector<1x1x128xf32>
    %cst_21 = arith.constant 0.000000e+00 : f32
    %53 = vector.broadcast %cst_21 : f32 to vector<1x1x128xf32>
    %54 = arith.maximumf %52, %53 : vector<1x1x128xf32>
    %c2 = arith.constant 2 : index
    %c0_22 = arith.constant 0 : index
    %55 = vector.load %arg1[%c2, %c0_22] : memref<17x1024xf32, #tpu.memory_space<vmem>>, vector<1x128xf32>
    %56 = vector.shape_cast %55 : vector<1x128xf32> to vector<128xf32>
    %cst_23 = arith.constant 9.99999974E-6 : f32
    %57 = vector.broadcast %cst_23 : f32 to vector<1x1x128xf32>
    %58 = arith.addf %54, %57 : vector<1x1x128xf32>
    %59 = math.rsqrt %58 : vector<1x1x128xf32>
    %60 = vector.shape_cast %56 : vector<128xf32> to vector<1x1x128xf32>
    %61 = arith.mulf %60, %59 : vector<1x1x128xf32>
    %62 = vector.broadcast %61 : vector<1x1x128xf32> to vector<6x16x128xf32>
    %63 = arith.mulf %41, %62 : vector<6x16x128xf32>
    %c3 = arith.constant 3 : index
    %c0_24 = arith.constant 0 : index
    %64 = vector.load %arg1[%c3, %c0_24] : memref<17x1024xf32, #tpu.memory_space<vmem>>, vector<1x128xf32>
    %65 = vector.shape_cast %64 : vector<1x128xf32> to vector<128xf32>
    %66 = arith.mulf %45, %61 : vector<1x1x128xf32>
    %67 = vector.shape_cast %65 : vector<128xf32> to vector<1x1x128xf32>
    %68 = arith.subf %67, %66 : vector<1x1x128xf32>
    %69 = vector.broadcast %68 : vector<1x1x128xf32> to vector<6x16x128xf32>
    %70 = arith.addf %63, %69 : vector<6x16x128xf32>
    %cst_25 = arith.constant 0.000000e+00 : f32
    %71 = vector.broadcast %cst_25 : f32 to vector<6x16x128xf32>
    %72 = arith.maximumf %70, %71 : vector<6x16x128xf32>
    %c0_26 = arith.constant 0 : index
    %c0_27 = arith.constant 0 : index
    %73 = vector.load %arg4[%c0_26, %c0_27] : memref<128x1024xbf16, #tpu.memory_space<vmem>>, vector<128x1024xbf16>
    %74 = arith.extf %73 : vector<128x1024xbf16> to vector<128x1024xf32>
    %75 = vector.shape_cast %72 : vector<6x16x128xf32> to vector<96x128xf32>
    %cst_28 = arith.constant dense<0.000000e+00> : vector<128xf32>
    %76 = vector.multi_reduction <add>, %75, %cst_28 [0] : vector<96x128xf32> to vector<128xf32>
    %77 = vector.shape_cast %76 : vector<128xf32> to vector<1x128xf32>
    %cst_29 = arith.constant 9.600000e+01 : f32
    %78 = vector.broadcast %cst_29 : f32 to vector<1x128xf32>
    %79 = arith.divf %77, %78 : vector<1x128xf32>
    %cst_30 = arith.constant dense<0.000000e+00> : vector<128x128xf32>
    %80 = tpu.matmul %75, %75, %cst_30 {dimension_numbers = #tpu.dot_dimension_numbers<[0], [0], [1], [1], [0, 1, 1, 1], [], []>} : vector<96x128xf32>, vector<96x128xf32>, vector<128x128xf32> -> vector<128x128xf32>
    %cst_31 = arith.constant 9.600000e+01 : f32
    %81 = vector.broadcast %cst_31 : f32 to vector<128x128xf32>
    %82 = arith.divf %80, %81 : vector<128x128xf32>
    %cst_32 = arith.constant dense<0.000000e+00> : vector<1x1024xf32>
    %83 = tpu.matmul %79, %74, %cst_32 {dimension_numbers = #tpu.dot_dimension_numbers<[1], [0], [0], [1], [0, 0, 1, 1], [], []>} : vector<1x128xf32>, vector<128x1024xf32>, vector<1x1024xf32> -> vector<1x1024xf32>
    %cst_33 = arith.constant dense<0.000000e+00> : vector<128x1024xf32>
    %84 = tpu.matmul %82, %74, %cst_33 {dimension_numbers = #tpu.dot_dimension_numbers<[1], [0], [0], [1], [0, 0, 1, 1], [], []>} : vector<128x128xf32>, vector<128x1024xf32>, vector<128x1024xf32> -> vector<128x1024xf32>
    %85 = arith.mulf %74, %84 : vector<128x1024xf32>
    %cst_34 = arith.constant dense<0.000000e+00> : vector<1024xf32>
    %86 = vector.multi_reduction <add>, %85, %cst_34 [0] : vector<128x1024xf32> to vector<1024xf32>
    %87 = vector.shape_cast %86 : vector<1024xf32> to vector<1x1024xf32>
    %88 = arith.mulf %83, %83 : vector<1x1024xf32>
    %89 = arith.subf %87, %88 : vector<1x1024xf32>
    %cst_35 = arith.constant 0.000000e+00 : f32
    %90 = vector.broadcast %cst_35 : f32 to vector<1x1024xf32>
    %91 = arith.maximumf %89, %90 : vector<1x1024xf32>
    %c4 = arith.constant 4 : index
    %c0_36 = arith.constant 0 : index
    %92 = vector.load %arg1[%c4, %c0_36] : memref<17x1024xf32, #tpu.memory_space<vmem>>, vector<1x1024xf32>
    %93 = vector.shape_cast %92 : vector<1x1024xf32> to vector<1024xf32>
    %cst_37 = arith.constant 9.99999974E-6 : f32
    %94 = vector.broadcast %cst_37 : f32 to vector<1x1024xf32>
    %95 = arith.addf %91, %94 : vector<1x1024xf32>
    %96 = math.rsqrt %95 : vector<1x1024xf32>
    %97 = vector.shape_cast %93 : vector<1024xf32> to vector<1x1024xf32>
    %98 = arith.mulf %97, %96 : vector<1x1024xf32>
    %c5 = arith.constant 5 : index
    %c0_38 = arith.constant 0 : index
    %99 = vector.load %arg1[%c5, %c0_38] : memref<17x1024xf32, #tpu.memory_space<vmem>>, vector<1x1024xf32>
    %100 = vector.shape_cast %99 : vector<1x1024xf32> to vector<1024xf32>
    %101 = arith.mulf %83, %98 : vector<1x1024xf32>
    %102 = vector.shape_cast %100 : vector<1024xf32> to vector<1x1024xf32>
    %103 = arith.subf %102, %101 : vector<1x1024xf32>
    %cst_39 = arith.constant 0.000000e+00 : f32
    %104 = vector.broadcast %cst_39 : f32 to vector<6x1024xf32>
    %105 = vector.shape_cast %72 : vector<6x16x128xf32> to vector<96x128xf32>
    %106 = arith.truncf %105 : vector<96x128xf32> to vector<96x128xbf16>
    %cst_40 = arith.constant dense<0.000000e+00> : vector<96x1024xf32>
    %107 = tpu.matmul %106, %73, %cst_40 {dimension_numbers = #tpu.dot_dimension_numbers<[1], [0], [0], [1], [0, 0, 1, 1], [], []>} : vector<96x128xbf16>, vector<128x1024xbf16>, vector<96x1024xf32> -> vector<96x1024xf32>
    %108 = vector.shape_cast %107 : vector<96x1024xf32> to vector<6x16x1024xf32>
    %109 = vector.shape_cast %98 : vector<1x1024xf32> to vector<1x1x1024xf32>
    %110 = vector.broadcast %109 : vector<1x1x1024xf32> to vector<6x16x1024xf32>
    %111 = arith.mulf %108, %110 : vector<6x16x1024xf32>
    %112 = vector.shape_cast %103 : vector<1x1024xf32> to vector<1x1x1024xf32>
    %113 = vector.broadcast %112 : vector<1x1x1024xf32> to vector<6x16x1024xf32>
    %114 = arith.addf %111, %113 : vector<6x16x1024xf32>
    %cst_41 = arith.constant 0.000000e+00 : f32
    %115 = vector.broadcast %cst_41 : f32 to vector<6x16x1024xf32>
    %116 = arith.maximumf %114, %115 : vector<6x16x1024xf32>
    %cst_42 = arith.constant dense<0xFF800000> : vector<6x1024xf32>
    %117 = vector.multi_reduction <maximumf>, %116, %cst_42 [1] : vector<6x16x1024xf32> to vector<6x1024xf32>
    %118 = arith.maximumf %104, %117 : vector<6x1024xf32>
    %c0_43 = arith.constant 0 : index
    %c0_44 = arith.constant 0 : index
    %119 = vector.load %arg5[%c0_43, %c0_44] : memref<1024x512xbf16, #tpu.memory_space<vmem>>, vector<1024x512xbf16>
    %120 = arith.truncf %118 : vector<6x1024xf32> to vector<6x1024xbf16>
    %cst_45 = arith.constant dense<0.000000e+00> : vector<6x512xf32>
    %121 = tpu.matmul %120, %119, %cst_45 {dimension_numbers = #tpu.dot_dimension_numbers<[1], [0], [0], [1], [0, 0, 1, 1], [], []>} : vector<6x1024xbf16>, vector<1024x512xbf16>, vector<6x512xf32> -> vector<6x512xf32>
    %cst_46 = arith.constant dense<0.000000e+00> : vector<512xf32>
    %122 = vector.multi_reduction <add>, %121, %cst_46 [0] : vector<6x512xf32> to vector<512xf32>
    %123 = vector.shape_cast %122 : vector<512xf32> to vector<1x512xf32>
    %cst_47 = arith.constant 6.000000e+00 : f32
    %124 = vector.broadcast %cst_47 : f32 to vector<1x512xf32>
    %125 = arith.divf %123, %124 : vector<1x512xf32>
    %126 = arith.mulf %121, %121 : vector<6x512xf32>
    %cst_48 = arith.constant dense<0.000000e+00> : vector<512xf32>
    %127 = vector.multi_reduction <add>, %126, %cst_48 [0] : vector<6x512xf32> to vector<512xf32>
    %128 = vector.shape_cast %127 : vector<512xf32> to vector<1x512xf32>
    %cst_49 = arith.constant 6.000000e+00 : f32
    %129 = vector.broadcast %cst_49 : f32 to vector<1x512xf32>
    %130 = arith.divf %128, %129 : vector<1x512xf32>
    %131 = arith.mulf %125, %125 : vector<1x512xf32>
    %132 = arith.subf %130, %131 : vector<1x512xf32>
    %cst_50 = arith.constant 0.000000e+00 : f32
    %133 = vector.broadcast %cst_50 : f32 to vector<1x512xf32>
    %134 = arith.maximumf %132, %133 : vector<1x512xf32>
    %c6 = arith.constant 6 : index
    %c0_51 = arith.constant 0 : index
    %135 = vector.load %arg1[%c6, %c0_51] : memref<17x1024xf32, #tpu.memory_space<vmem>>, vector<1x512xf32>
    %136 = vector.shape_cast %135 : vector<1x512xf32> to vector<512xf32>
    %cst_52 = arith.constant 9.99999974E-6 : f32
    %137 = vector.broadcast %cst_52 : f32 to vector<1x512xf32>
    %138 = arith.addf %134, %137 : vector<1x512xf32>
    %139 = math.rsqrt %138 : vector<1x512xf32>
    %140 = vector.shape_cast %136 : vector<512xf32> to vector<1x512xf32>
    %141 = arith.mulf %140, %139 : vector<1x512xf32>
    %142 = vector.broadcast %141 : vector<1x512xf32> to vector<6x512xf32>
    %143 = arith.mulf %121, %142 : vector<6x512xf32>
    %c7 = arith.constant 7 : index
    %c0_53 = arith.constant 0 : index
    %144 = vector.load %arg1[%c7, %c0_53] : memref<17x1024xf32, #tpu.memory_space<vmem>>, vector<1x512xf32>
    %145 = vector.shape_cast %144 : vector<1x512xf32> to vector<512xf32>
    %146 = arith.mulf %125, %141 : vector<1x512xf32>
    %147 = vector.shape_cast %145 : vector<512xf32> to vector<1x512xf32>
    %148 = arith.subf %147, %146 : vector<1x512xf32>
    %149 = vector.broadcast %148 : vector<1x512xf32> to vector<6x512xf32>
    %150 = arith.addf %143, %149 : vector<6x512xf32>
    %cst_54 = arith.constant 0.000000e+00 : f32
    %151 = vector.broadcast %cst_54 : f32 to vector<6x512xf32>
    %152 = arith.maximumf %150, %151 : vector<6x512xf32>
    %c0_55 = arith.constant 0 : index
    %c0_56 = arith.constant 0 : index
    %153 = vector.load %arg6[%c0_55, %c0_56] : memref<512x256xbf16, #tpu.memory_space<vmem>>, vector<512x256xbf16>
    %154 = arith.truncf %152 : vector<6x512xf32> to vector<6x512xbf16>
    %cst_57 = arith.constant dense<0.000000e+00> : vector<6x256xf32>
    %155 = tpu.matmul %154, %153, %cst_57 {dimension_numbers = #tpu.dot_dimension_numbers<[1], [0], [0], [1], [0, 0, 1, 1], [], []>} : vector<6x512xbf16>, vector<512x256xbf16>, vector<6x256xf32> -> vector<6x256xf32>
    %cst_58 = arith.constant dense<0.000000e+00> : vector<256xf32>
    %156 = vector.multi_reduction <add>, %155, %cst_58 [0] : vector<6x256xf32> to vector<256xf32>
    %157 = vector.shape_cast %156 : vector<256xf32> to vector<1x256xf32>
    %cst_59 = arith.constant 6.000000e+00 : f32
    %158 = vector.broadcast %cst_59 : f32 to vector<1x256xf32>
    %159 = arith.divf %157, %158 : vector<1x256xf32>
    %160 = arith.mulf %155, %155 : vector<6x256xf32>
    %cst_60 = arith.constant dense<0.000000e+00> : vector<256xf32>
    %161 = vector.multi_reduction <add>, %160, %cst_60 [0] : vector<6x256xf32> to vector<256xf32>
    %162 = vector.shape_cast %161 : vector<256xf32> to vector<1x256xf32>
    %cst_61 = arith.constant 6.000000e+00 : f32
    %163 = vector.broadcast %cst_61 : f32 to vector<1x256xf32>
    %164 = arith.divf %162, %163 : vector<1x256xf32>
    %165 = arith.mulf %159, %159 : vector<1x256xf32>
    %166 = arith.subf %164, %165 : vector<1x256xf32>
    %cst_62 = arith.constant 0.000000e+00 : f32
    %167 = vector.broadcast %cst_62 : f32 to vector<1x256xf32>
    %168 = arith.maximumf %166, %167 : vector<1x256xf32>
    %c8 = arith.constant 8 : index
    %c0_63 = arith.constant 0 : index
    %169 = vector.load %arg1[%c8, %c0_63] : memref<17x1024xf32, #tpu.memory_space<vmem>>, vector<1x256xf32>
    %170 = vector.shape_cast %169 : vector<1x256xf32> to vector<256xf32>
    %cst_64 = arith.constant 9.99999974E-6 : f32
    %171 = vector.broadcast %cst_64 : f32 to vector<1x256xf32>
    %172 = arith.addf %168, %171 : vector<1x256xf32>
    %173 = math.rsqrt %172 : vector<1x256xf32>
    %174 = vector.shape_cast %170 : vector<256xf32> to vector<1x256xf32>
    %175 = arith.mulf %174, %173 : vector<1x256xf32>
    %176 = vector.broadcast %175 : vector<1x256xf32> to vector<6x256xf32>
    %177 = arith.mulf %155, %176 : vector<6x256xf32>
    %c9 = arith.constant 9 : index
    %c0_65 = arith.constant 0 : index
    %178 = vector.load %arg1[%c9, %c0_65] : memref<17x1024xf32, #tpu.memory_space<vmem>>, vector<1x256xf32>
    %179 = vector.shape_cast %178 : vector<1x256xf32> to vector<256xf32>
    %180 = arith.mulf %159, %175 : vector<1x256xf32>
    %181 = vector.shape_cast %179 : vector<256xf32> to vector<1x256xf32>
    %182 = arith.subf %181, %180 : vector<1x256xf32>
    %183 = vector.broadcast %182 : vector<1x256xf32> to vector<6x256xf32>
    %184 = arith.addf %177, %183 : vector<6x256xf32>
    %cst_66 = arith.constant 0.000000e+00 : f32
    %185 = vector.broadcast %cst_66 : f32 to vector<6x256xf32>
    %186 = arith.maximumf %184, %185 : vector<6x256xf32>
    %c0_67 = arith.constant 0 : index
    %c0_68 = arith.constant 0 : index
    %187 = vector.load %arg7[%c0_67, %c0_68] : memref<256x9xf32, #tpu.memory_space<vmem>>, vector<256x9xf32>
    %cst_69 = arith.constant dense<0.000000e+00> : vector<6x9xf32>
    %188 = tpu.matmul %186, %187, %cst_69 {dimension_numbers = #tpu.dot_dimension_numbers<[1], [0], [0], [1], [0, 0, 1, 1], [], []>} : vector<6x256xf32>, vector<256x9xf32>, vector<6x9xf32> -> vector<6x9xf32>
    %c10 = arith.constant 10 : index
    %c0_70 = arith.constant 0 : index
    %189 = vector.load %arg1[%c10, %c0_70] : memref<17x1024xf32, #tpu.memory_space<vmem>>, vector<1x9xf32>
    %190 = vector.shape_cast %189 : vector<1x9xf32> to vector<9xf32>
    %191 = vector.shape_cast %190 : vector<9xf32> to vector<1x9xf32>
    %192 = vector.broadcast %191 : vector<1x9xf32> to vector<6x9xf32>
    %193 = arith.addf %188, %192 : vector<6x9xf32>
    %c0_71 = arith.constant 0 : index
    %c0_72 = arith.constant 0 : index
    %194 = vector.load %arg8[%c0_71, %c0_72] : memref<3x64xf32, #tpu.memory_space<vmem>>, vector<3x64xf32>
    %195 = vector.extract_strided_slice %193 {offsets = [0, 0], sizes = [6, 3], strides = [1, 1]} : vector<6x9xf32> to vector<6x3xf32>
    %196 = vector.extract_strided_slice %193 {offsets = [0, 3], sizes = [6, 3], strides = [1, 1]} : vector<6x9xf32> to vector<6x3xf32>
    %197 = vector.extract_strided_slice %193 {offsets = [0, 6], sizes = [6, 3], strides = [1, 1]} : vector<6x9xf32> to vector<6x3xf32>
    %198 = vector.shape_cast %195 : vector<6x3xf32> to vector<6x1x3xf32>
    %199 = vector.shape_cast %196 : vector<6x3xf32> to vector<6x1x3xf32>
    %200 = vector.shape_cast %197 : vector<6x3xf32> to vector<6x1x3xf32>
    %201 = tpu.concatenate %198, %199, %200 in 1 : vector<6x1x3xf32>, vector<6x1x3xf32>, vector<6x1x3xf32> -> vector<6x3x3xf32>
    %202 = vector.shape_cast %201 : vector<6x3x3xf32> to vector<18x3xf32>
    %cst_73 = arith.constant dense<0.000000e+00> : vector<18x64xf32>
    %203 = tpu.matmul %202, %194, %cst_73 {dimension_numbers = #tpu.dot_dimension_numbers<[1], [0], [0], [1], [0, 0, 1, 1], [], []>} : vector<18x3xf32>, vector<3x64xf32>, vector<18x64xf32> -> vector<18x64xf32>
    %204 = vector.shape_cast %203 : vector<18x64xf32> to vector<6x3x64xf32>
    "tpu.trace_start"() <{level = 10 : i32, message = "bnd,bdf->bnf"}> : () -> ()
    %cst_74 = arith.constant dense<0.000000e+00> : vector<6x16x64xf32>
    %205 = tpu.matmul %1, %204, %cst_74 {dimension_numbers = #tpu.dot_dimension_numbers<[2], [1], [1], [2], [0, 0, 0, 1, 1, 2], [0], [0]>} : vector<6x16x3xf32>, vector<6x3x64xf32>, vector<6x16x64xf32> -> vector<6x16x64xf32>
    "tpu.trace_stop"() : () -> ()
    %cst_75 = arith.constant dense<0.000000e+00> : vector<64xf32>
    %206 = vector.multi_reduction <add>, %205, %cst_75 [0, 1] : vector<6x16x64xf32> to vector<64xf32>
    %207 = vector.shape_cast %206 : vector<64xf32> to vector<1x1x64xf32>
    %cst_76 = arith.constant 9.600000e+01 : f32
    %208 = vector.broadcast %cst_76 : f32 to vector<1x1x64xf32>
    %209 = arith.divf %207, %208 : vector<1x1x64xf32>
    %210 = arith.mulf %205, %205 : vector<6x16x64xf32>
    %cst_77 = arith.constant dense<0.000000e+00> : vector<64xf32>
    %211 = vector.multi_reduction <add>, %210, %cst_77 [0, 1] : vector<6x16x64xf32> to vector<64xf32>
    %212 = vector.shape_cast %211 : vector<64xf32> to vector<1x1x64xf32>
    %cst_78 = arith.constant 9.600000e+01 : f32
    %213 = vector.broadcast %cst_78 : f32 to vector<1x1x64xf32>
    %214 = arith.divf %212, %213 : vector<1x1x64xf32>
    %215 = arith.mulf %209, %209 : vector<1x1x64xf32>
    %216 = arith.subf %214, %215 : vector<1x1x64xf32>
    %cst_79 = arith.constant 0.000000e+00 : f32
    %217 = vector.broadcast %cst_79 : f32 to vector<1x1x64xf32>
    %218 = arith.maximumf %216, %217 : vector<1x1x64xf32>
    %c11 = arith.constant 11 : index
    %c0_80 = arith.constant 0 : index
    %219 = vector.load %arg1[%c11, %c0_80] : memref<17x1024xf32, #tpu.memory_space<vmem>>, vector<1x64xf32>
    %220 = vector.shape_cast %219 : vector<1x64xf32> to vector<64xf32>
    %cst_81 = arith.constant 9.99999974E-6 : f32
    %221 = vector.broadcast %cst_81 : f32 to vector<1x1x64xf32>
    %222 = arith.addf %218, %221 : vector<1x1x64xf32>
    %223 = math.rsqrt %222 : vector<1x1x64xf32>
    %224 = vector.shape_cast %220 : vector<64xf32> to vector<1x1x64xf32>
    %225 = arith.mulf %224, %223 : vector<1x1x64xf32>
    %226 = vector.broadcast %225 : vector<1x1x64xf32> to vector<6x16x64xf32>
    %227 = arith.mulf %205, %226 : vector<6x16x64xf32>
    %c12 = arith.constant 12 : index
    %c0_82 = arith.constant 0 : index
    %228 = vector.load %arg1[%c12, %c0_82] : memref<17x1024xf32, #tpu.memory_space<vmem>>, vector<1x64xf32>
    %229 = vector.shape_cast %228 : vector<1x64xf32> to vector<64xf32>
    %230 = arith.mulf %209, %225 : vector<1x1x64xf32>
    %231 = vector.shape_cast %229 : vector<64xf32> to vector<1x1x64xf32>
    %232 = arith.subf %231, %230 : vector<1x1x64xf32>
    %233 = vector.broadcast %232 : vector<1x1x64xf32> to vector<6x16x64xf32>
    %234 = arith.addf %227, %233 : vector<6x16x64xf32>
    %cst_83 = arith.constant 0.000000e+00 : f32
    %235 = vector.broadcast %cst_83 : f32 to vector<6x16x64xf32>
    %236 = arith.maximumf %234, %235 : vector<6x16x64xf32>
    %c0_84 = arith.constant 0 : index
    %c0_85 = arith.constant 0 : index
    %237 = vector.load %arg9[%c0_84, %c0_85] : memref<64x128xbf16, #tpu.memory_space<vmem>>, vector<64x128xbf16>
    %238 = vector.shape_cast %236 : vector<6x16x64xf32> to vector<96x64xf32>
    %239 = arith.truncf %238 : vector<96x64xf32> to vector<96x64xbf16>
    %cst_86 = arith.constant dense<0.000000e+00> : vector<96x128xf32>
    %240 = tpu.matmul %239, %237, %cst_86 {dimension_numbers = #tpu.dot_dimension_numbers<[1], [0], [0], [1], [0, 0, 1, 1], [], []>} : vector<96x64xbf16>, vector<64x128xbf16>, vector<96x128xf32> -> vector<96x128xf32>
    %241 = vector.shape_cast %240 : vector<96x128xf32> to vector<6x16x128xf32>
    %cst_87 = arith.constant dense<0.000000e+00> : vector<128xf32>
    %242 = vector.multi_reduction <add>, %241, %cst_87 [0, 1] : vector<6x16x128xf32> to vector<128xf32>
    %243 = vector.shape_cast %242 : vector<128xf32> to vector<1x1x128xf32>
    %cst_88 = arith.constant 9.600000e+01 : f32
    %244 = vector.broadcast %cst_88 : f32 to vector<1x1x128xf32>
    %245 = arith.divf %243, %244 : vector<1x1x128xf32>
    %246 = arith.mulf %241, %241 : vector<6x16x128xf32>
    %cst_89 = arith.constant dense<0.000000e+00> : vector<128xf32>
    %247 = vector.multi_reduction <add>, %246, %cst_89 [0, 1] : vector<6x16x128xf32> to vector<128xf32>
    %248 = vector.shape_cast %247 : vector<128xf32> to vector<1x1x128xf32>
    %cst_90 = arith.constant 9.600000e+01 : f32
    %249 = vector.broadcast %cst_90 : f32 to vector<1x1x128xf32>
    %250 = arith.divf %248, %249 : vector<1x1x128xf32>
    %251 = arith.mulf %245, %245 : vector<1x1x128xf32>
    %252 = arith.subf %250, %251 : vector<1x1x128xf32>
    %cst_91 = arith.constant 0.000000e+00 : f32
    %253 = vector.broadcast %cst_91 : f32 to vector<1x1x128xf32>
    %254 = arith.maximumf %252, %253 : vector<1x1x128xf32>
    %c13 = arith.constant 13 : index
    %c0_92 = arith.constant 0 : index
    %255 = vector.load %arg1[%c13, %c0_92] : memref<17x1024xf32, #tpu.memory_space<vmem>>, vector<1x128xf32>
    %256 = vector.shape_cast %255 : vector<1x128xf32> to vector<128xf32>
    %cst_93 = arith.constant 9.99999974E-6 : f32
    %257 = vector.broadcast %cst_93 : f32 to vector<1x1x128xf32>
    %258 = arith.addf %254, %257 : vector<1x1x128xf32>
    %259 = math.rsqrt %258 : vector<1x1x128xf32>
    %260 = vector.shape_cast %256 : vector<128xf32> to vector<1x1x128xf32>
    %261 = arith.mulf %260, %259 : vector<1x1x128xf32>
    %262 = vector.broadcast %261 : vector<1x1x128xf32> to vector<6x16x128xf32>
    %263 = arith.mulf %241, %262 : vector<6x16x128xf32>
    %c14 = arith.constant 14 : index
    %c0_94 = arith.constant 0 : index
    %264 = vector.load %arg1[%c14, %c0_94] : memref<17x1024xf32, #tpu.memory_space<vmem>>, vector<1x128xf32>
    %265 = vector.shape_cast %264 : vector<1x128xf32> to vector<128xf32>
    %266 = arith.mulf %245, %261 : vector<1x1x128xf32>
    %267 = vector.shape_cast %265 : vector<128xf32> to vector<1x1x128xf32>
    %268 = arith.subf %267, %266 : vector<1x1x128xf32>
    %269 = vector.broadcast %268 : vector<1x1x128xf32> to vector<6x16x128xf32>
    %270 = arith.addf %263, %269 : vector<6x16x128xf32>
    %cst_95 = arith.constant 0.000000e+00 : f32
    %271 = vector.broadcast %cst_95 : f32 to vector<6x16x128xf32>
    %272 = arith.maximumf %270, %271 : vector<6x16x128xf32>
    %c0_96 = arith.constant 0 : index
    %c0_97 = arith.constant 0 : index
    %273 = vector.load %arg10[%c0_96, %c0_97] : memref<128x64xbf16, #tpu.memory_space<vmem>>, vector<128x64xbf16>
    %274 = vector.shape_cast %272 : vector<6x16x128xf32> to vector<96x128xf32>
    %275 = arith.truncf %274 : vector<96x128xf32> to vector<96x128xbf16>
    %cst_98 = arith.constant dense<0.000000e+00> : vector<96x64xf32>
    %276 = tpu.matmul %275, %273, %cst_98 {dimension_numbers = #tpu.dot_dimension_numbers<[1], [0], [0], [1], [0, 0, 1, 1], [], []>} : vector<96x128xbf16>, vector<128x64xbf16>, vector<96x64xf32> -> vector<96x64xf32>
    %277 = vector.shape_cast %276 : vector<96x64xf32> to vector<6x16x64xf32>
    %cst_99 = arith.constant dense<0.000000e+00> : vector<64xf32>
    %278 = vector.multi_reduction <add>, %277, %cst_99 [0, 1] : vector<6x16x64xf32> to vector<64xf32>
    %279 = vector.shape_cast %278 : vector<64xf32> to vector<1x1x64xf32>
    %cst_100 = arith.constant 9.600000e+01 : f32
    %280 = vector.broadcast %cst_100 : f32 to vector<1x1x64xf32>
    %281 = arith.divf %279, %280 : vector<1x1x64xf32>
    %282 = arith.mulf %277, %277 : vector<6x16x64xf32>
    %cst_101 = arith.constant dense<0.000000e+00> : vector<64xf32>
    %283 = vector.multi_reduction <add>, %282, %cst_101 [0, 1] : vector<6x16x64xf32> to vector<64xf32>
    %284 = vector.shape_cast %283 : vector<64xf32> to vector<1x1x64xf32>
    %cst_102 = arith.constant 9.600000e+01 : f32
    %285 = vector.broadcast %cst_102 : f32 to vector<1x1x64xf32>
    %286 = arith.divf %284, %285 : vector<1x1x64xf32>
    %287 = arith.mulf %281, %281 : vector<1x1x64xf32>
    %288 = arith.subf %286, %287 : vector<1x1x64xf32>
    %cst_103 = arith.constant 0.000000e+00 : f32
    %289 = vector.broadcast %cst_103 : f32 to vector<1x1x64xf32>
    %290 = arith.maximumf %288, %289 : vector<1x1x64xf32>
    %c15 = arith.constant 15 : index
    %c0_104 = arith.constant 0 : index
    %291 = vector.load %arg1[%c15, %c0_104] : memref<17x1024xf32, #tpu.memory_space<vmem>>, vector<1x64xf32>
    %292 = vector.shape_cast %291 : vector<1x64xf32> to vector<64xf32>
    %cst_105 = arith.constant 9.99999974E-6 : f32
    %293 = vector.broadcast %cst_105 : f32 to vector<1x1x64xf32>
    %294 = arith.addf %290, %293 : vector<1x1x64xf32>
    %295 = math.rsqrt %294 : vector<1x1x64xf32>
    %296 = vector.shape_cast %292 : vector<64xf32> to vector<1x1x64xf32>
    %297 = arith.mulf %296, %295 : vector<1x1x64xf32>
    %298 = vector.broadcast %297 : vector<1x1x64xf32> to vector<6x16x64xf32>
    %299 = arith.mulf %277, %298 : vector<6x16x64xf32>
    %c16 = arith.constant 16 : index
    %c0_106 = arith.constant 0 : index
    %300 = vector.load %arg1[%c16, %c0_106] : memref<17x1024xf32, #tpu.memory_space<vmem>>, vector<1x64xf32>
    %301 = vector.shape_cast %300 : vector<1x64xf32> to vector<64xf32>
    %302 = arith.mulf %281, %297 : vector<1x1x64xf32>
    %303 = vector.shape_cast %301 : vector<64xf32> to vector<1x1x64xf32>
    %304 = arith.subf %303, %302 : vector<1x1x64xf32>
    %305 = vector.broadcast %304 : vector<1x1x64xf32> to vector<6x16x64xf32>
    %306 = arith.addf %299, %305 : vector<6x16x64xf32>
    %cst_107 = arith.constant dense<0xFF800000> : vector<6x64xf32>
    %307 = vector.multi_reduction <maximumf>, %306, %cst_107 [1] : vector<6x16x64xf32> to vector<6x64xf32>
    %c0_108 = arith.constant 0 : index
    %c0_109 = arith.constant 0 : index
    %308 = vector.load %arg11[%c0_108, %c0_109] : memref<6x64xf32, #tpu.memory_space<vmem>>, vector<6x64xf32>
    tpu.vector_store %arg11[%c0_108, %c0_109], %307 {strides = array<i32>} : memref<6x64xf32, #tpu.memory_space<vmem>>, vector<6x64xf32>,
    return
  }
}

</mosaic_0001>

<llo_original>
// kernel: forward.1
$region0: #{forward.1}
  #allocation0 [shape = 'u32[]', space=smem, size = 0x4, offset = 0x4, fixed_abs, tag = 'smem constant byte address 0x4 - core index']
  #allocation1 [shape = 'u32[144,128]{1,0:T(1,128)}', space=vmem, size = 0x12000, scoped, tag = 'internal scratch']
  %s0 = inlined_call_operand.vmem [shape: f32[6,3,16], index: 0, kind: input, shape index: {}]
  %s1 = inlined_call_operand.vmem [shape: f32[17,1024], index: 1, kind: input, shape index: {}]
  %s2 = inlined_call_operand.vmem [shape: f32[3,64], index: 2, kind: input, shape index: {}]
  %s3 = inlined_call_operand.vmem [shape: bf16[64,128], index: 3, kind: input, shape index: {}]
  %s4 = inlined_call_operand.vmem [shape: bf16[128,1024], index: 4, kind: input, shape index: {}]
  %s5 = inlined_call_operand.vmem [shape: bf16[1024,512], index: 5, kind: input, shape index: {}]
  %s6 = inlined_call_operand.vmem [shape: bf16[512,256], index: 6, kind: input, shape index: {}]
  %s7 = inlined_call_operand.vmem [shape: f32[256,9], index: 7, kind: input, shape index: {}]
  %s8 = inlined_call_operand.vmem [shape: f32[3,64], index: 8, kind: input, shape index: {}]
  %s9 = inlined_call_operand.vmem [shape: bf16[64,128], index: 9, kind: input, shape index: {}]
  %s10 = inlined_call_operand.vmem [shape: bf16[128,64], index: 10, kind: input, shape index: {}]
  %s11 = inlined_call_operand.vmem [shape: f32[6,64], index: 11, kind: output, shape index: {}]
  %s12 = sld [smem:[#allocation0]]
  $region54: #{forward.1} parent=0
    _
  %s14 = ssub.s32 1, %s12
  %s15 = scalar_select 0, %s14, %s12
  // Predicated region
  $region2: #{forward.1} parent=0 // pred_check
    _
  $region3: #{forward.1} parent=0 // pred_check_branch
    %17 = sbr.rel (0) target = $region5
  $region4: #{forward.1} parent=0 // pred_region
    _
  $region5: #{forward.1} parent=0 // pred_fallthru
    _
  // Predicated region
  $region6: #{forward.1} parent=0 // pred_check
    _
  $region7: #{forward.1} parent=0 // pred_check_branch
    %19 = sbr.rel (0) target = $region9
  $region8: #{forward.1} parent=0 // pred_region
    _
  $region9: #{forward.1} parent=0 // pred_fallthru
    _
  // Predicated region
  $region10: #{forward.1} parent=0 // pred_check
    _
  $region11: #{forward.1} parent=0 // pred_check_branch
    %21 = sbr.rel (0) target = $region13
  $region12: #{forward.1} parent=0 // pred_region
    _
  $region13: #{forward.1} parent=0 // pred_fallthru
    _
  // Predicated region
  $region14: #{forward.1} parent=0 // pred_check
    _
  $region15: #{forward.1} parent=0 // pred_check_branch
    %23 = sbr.rel (0) target = $region17
  $region16: #{forward.1} parent=0 // pred_region
    _
  $region17: #{forward.1} parent=0 // pred_fallthru
    _
  // Predicated region
  $region18: #{forward.1} parent=0 // pred_check
    _
  $region19: #{forward.1} parent=0 // pred_check_branch
    %25 = sbr.rel (0) target = $region21
  $region20: #{forward.1} parent=0 // pred_region
    _
  $region21: #{forward.1} parent=0 // pred_fallthru
    _
  // Predicated region
  $region22: #{forward.1} parent=0 // pred_check
    _
  $region23: #{forward.1} parent=0 // pred_check_branch
    %27 = sbr.rel (0) target = $region25
  $region24: #{forward.1} parent=0 // pred_region
    _
  $region25: #{forward.1} parent=0 // pred_fallthru
    _
  // Predicated region
  $region26: #{forward.1} parent=0 // pred_check
    _
  $region27: #{forward.1} parent=0 // pred_check_branch
    %29 = sbr.rel (0) target = $region29
  $region28: #{forward.1} parent=0 // pred_region
    _
  $region29: #{forward.1} parent=0 // pred_fallthru
    _
  // Predicated region
  $region30: #{forward.1} parent=0 // pred_check
    _
  $region31: #{forward.1} parent=0 // pred_check_branch
    %31 = sbr.rel (0) target = $region33
  $region32: #{forward.1} parent=0 // pred_region
    _
  $region33: #{forward.1} parent=0 // pred_fallthru
    _
  // Predicated region
  $region34: #{forward.1} parent=0 // pred_check
    _
  $region35: #{forward.1} parent=0 // pred_check_branch
    %33 = sbr.rel (0) target = $region37
  $region36: #{forward.1} parent=0 // pred_region
    _
  $region37: #{forward.1} parent=0 // pred_fallthru
    _
  // Predicated region
  $region38: #{forward.1} parent=0 // pred_check
    _
  $region39: #{forward.1} parent=0 // pred_check_branch
    %35 = sbr.rel (0) target = $region41
  $region40: #{forward.1} parent=0 // pred_region
    _
  $region41: #{forward.1} parent=0 // pred_fallthru
    _
  // Predicated region
  $region42: #{forward.1} parent=0 // pred_check
    _
  $region43: #{forward.1} parent=0 // pred_check_branch
    %37 = sbr.rel (0) target = $region45
  $region44: #{forward.1} parent=0 // pred_region
    _
  $region45: #{forward.1} parent=0 // pred_fallthru
    _
  %v39 = vld [vmem:[%s0] sm:$0x7]
  %v40 = vld [vmem:[%s0 + $0x4] sm:$0x7]
  %v41 = vld [vmem:[%s0 + $0x8] sm:$0x7]
  %v42 = vld [vmem:[%s0 + $0xc] sm:$0x7]
  %v43 = vld [vmem:[%s0 + $0x10] sm:$0x7]
  %v44 = vld [vmem:[%s0 + $0x14] sm:$0x7]
  %45 = vxpose.xlu0.b32.start [1/16] %v39, 128
  %46 = vxpose.xlu0.b32.cont [2/16] 0.0, 128
  %47 = vxpose.xlu0.b32.cont [3/16] 0.0, 128
  %48 = vxpose.xlu0.b32.cont [4/16] 0.0, 128
  %49 = vxpose.xlu0.b32.cont [5/16] 0.0, 128
  %50 = vxpose.xlu0.b32.cont [6/16] 0.0, 128
  %51 = vxpose.xlu0.b32.cont [7/16] 0.0, 128
  %52 = vxpose.xlu0.b32.cont [8/16] 0.0, 128
  %53 = vxpose.xlu0.b32.cont [9/16] 0.0, 128
  %54 = vxpose.xlu0.b32.cont [10/16] 0.0, 128
  %55 = vxpose.xlu0.b32.cont [11/16] 0.0, 128
  %56 = vxpose.xlu0.b32.cont [12/16] 0.0, 128
  %57 = vxpose.xlu0.b32.cont [13/16] 0.0, 128
  %58 = vxpose.xlu0.b32.cont [14/16] 0.0, 128
  %59 = vxpose.xlu0.b32.cont [15/16] 0.0, 128
  %60 = vxpose.xlu0.b32.end [16/16] 0.0, 128
  %v61 = vpop.trf.xlu0
  %v62 = vpop.trf.xlu0
  %v63 = vpop.trf.xlu0
  %v64 = vpop.trf.xlu0
  %v65 = vpop.trf.xlu0
  %v66 = vpop.trf.xlu0
  %v67 = vpop.trf.xlu0
  %v68 = vpop.trf.xlu0
  %v69 = vpop.trf.xlu0
  %v70 = vpop.trf.xlu0
  %v71 = vpop.trf.xlu0
  %v72 = vpop.trf.xlu0
  %v73 = vpop.trf.xlu0
  %v74 = vpop.trf.xlu0
  %v75 = vpop.trf.xlu0
  %v76 = vpop.trf.xlu0
  %77 = vxpose.xlu0.b32.start [1/16] %v40, 128
  %78 = vxpose.xlu0.b32.cont [2/16] 0.0, 128
  %79 = vxpose.xlu0.b32.cont [3/16] 0.0, 128
  %80 = vxpose.xlu0.b32.cont [4/16] 0.0, 128
  %81 = vxpose.xlu0.b32.cont [5/16] 0.0, 128
  %82 = vxpose.xlu0.b32.cont [6/16] 0.0, 128
  %83 = vxpose.xlu0.b32.cont [7/16] 0.0, 128
  %84 = vxpose.xlu0.b32.cont [8/16] 0.0, 128
  %85 = vxpose.xlu0.b32.cont [9/16] 0.0, 128
  %86 = vxpose.xlu0.b32.cont [10/16] 0.0, 128
  %87 = vxpose.xlu0.b32.cont [11/16] 0.0, 128
  %88 = vxpose.xlu0.b32.cont [12/16] 0.0, 128
  %89 = vxpose.xlu0.b32.cont [13/16] 0.0, 128
  %90 = vxpose.xlu0.b32.cont [14/16] 0.0, 128
  %91 = vxpose.xlu0.b32.cont [15/16] 0.0, 128
  %92 = vxpose.xlu0.b32.end [16/16] 0.0, 128
  %v93 = vpop.trf.xlu0
  %v94 = vpop.trf.xlu0
  %v95 = vpop.trf.xlu0
  %v96 = vpop.trf.xlu0
  %v97 = vpop.trf.xlu0
  %v98 = vpop.trf.xlu0
  %v99 = vpop.trf.xlu0
  %v100 = vpop.trf.xlu0
  %v101 = vpop.trf.xlu0
  %v102 = vpop.trf.xlu0
  %v103 = vpop.trf.xlu0
  %v104 = vpop.trf.xlu0
  %v105 = vpop.trf.xlu0
  %v106 = vpop.trf.xlu0
  %v107 = vpop.trf.xlu0
  %v108 = vpop.trf.xlu0
  %109 = vxpose.xlu0.b32.start [1/16] %v41, 128
  %110 = vxpose.xlu0.b32.cont [2/16] 0.0, 128
  %111 = vxpose.xlu0.b32.cont [3/16] 0.0, 128
  %112 = vxpose.xlu0.b32.cont [4/16] 0.0, 128
  %113 = vxpose.xlu0.b32.cont [5/16] 0.0, 128
  %114 = vxpose.xlu0.b32.cont [6/16] 0.0, 128
  %115 = vxpose.xlu0.b32.cont [7/16] 0.0, 128
  %116 = vxpose.xlu0.b32.cont [8/16] 0.0, 128
  %117 = vxpose.xlu0.b32.cont [9/16] 0.0, 128
  %118 = vxpose.xlu0.b32.cont [10/16] 0.0, 128
  %119 = vxpose.xlu0.b32.cont [11/16] 0.0, 128
  %120 = vxpose.xlu0.b32.cont [12/16] 0.0, 128
  %121 = vxpose.xlu0.b32.cont [13/16] 0.0, 128
  %122 = vxpose.xlu0.b32.cont [14/16] 0.0, 128
  %123 = vxpose.xlu0.b32.cont [15/16] 0.0, 128
  %124 = vxpose.xlu0.b32.end [16/16] 0.0, 128
  %v125 = vpop.trf.xlu0
  %v126 = vpop.trf.xlu0
  %v127 = vpop.trf.xlu0
  %v128 = vpop.trf.xlu0
  %v129 = vpop.trf.xlu0
  %v130 = vpop.trf.xlu0
  %v131 = vpop.trf.xlu0
  %v132 = vpop.trf.xlu0
  %v133 = vpop.trf.xlu0
  %v134 = vpop.trf.xlu0
  %v135 = vpop.trf.xlu0
  %v136 = vpop.trf.xlu0
  %v137 = vpop.trf.xlu0
  %v138 = vpop.trf.xlu0
  %v139 = vpop.trf.xlu0
  %v140 = vpop.trf.xlu0
  %141 = vxpose.xlu0.b32.start [1/16] %v42, 128
  %142 = vxpose.xlu0.b32.cont [2/16] 0.0, 128
  %143 = vxpose.xlu0.b32.cont [3/16] 0.0, 128
  %144 = vxpose.xlu0.b32.cont [4/16] 0.0, 128
  %145 = vxpose.xlu0.b32.cont [5/16] 0.0, 128
  %146 = vxpose.xlu0.b32.cont [6/16] 0.0, 128
  %147 = vxpose.xlu0.b32.cont [7/16] 0.0, 128
  %148 = vxpose.xlu0.b32.cont [8/16] 0.0, 128
  %149 = vxpose.xlu0.b32.cont [9/16] 0.0, 128
  %150 = vxpose.xlu0.b32.cont [10/16] 0.0, 128
  %151 = vxpose.xlu0.b32.cont [11/16] 0.0, 128
  %152 = vxpose.xlu0.b32.cont [12/16] 0.0, 128
  %153 = vxpose.xlu0.b32.cont [13/16] 0.0, 128
  %154 = vxpose.xlu0.b32.cont [14/16] 0.0, 128
  %155 = vxpose.xlu0.b32.cont [15/16] 0.0, 128
  %156 = vxpose.xlu0.b32.end [16/16] 0.0, 128
  %v157 = vpop.trf.xlu0
  %v158 = vpop.trf.xlu0
  %v159 = vpop.trf.xlu0
  %v160 = vpop.trf.xlu0
  %v161 = vpop.trf.xlu0
  %v162 = vpop.trf.xlu0
  %v163 = vpop.trf.xlu0
  %v164 = vpop.trf.xlu0
  %v165 = vpop.trf.xlu0
  %v166 = vpop.trf.xlu0
  %v167 = vpop.trf.xlu0
  %v168 = vpop.trf.xlu0
  %v169 = vpop.trf.xlu0
  %v170 = vpop.trf.xlu0
  %v171 = vpop.trf.xlu0
  %v172 = vpop.trf.xlu0
  %173 = vxpose.xlu0.b32.start [1/16] %v43, 128
  %174 = vxpose.xlu0.b32.cont [2/16] 0.0, 128
  %175 = vxpose.xlu0.b32.cont [3/16] 0.0, 128
  %176 = vxpose.xlu0.b32.cont [4/16] 0.0, 128
  %177 = vxpose.xlu0.b32.cont [5/16] 0.0, 128
  %178 = vxpose.xlu0.b32.cont [6/16] 0.0, 128
  %179 = vxpose.xlu0.b32.cont [7/16] 0.0, 128
  %180 = vxpose.xlu0.b32.cont [8/16] 0.0, 128
  %181 = vxpose.xlu0.b32.cont [9/16] 0.0, 128
  %182 = vxpose.xlu0.b32.cont [10/16] 0.0, 128
  %183 = vxpose.xlu0.b32.cont [11/16] 0.0, 128
  %184 = vxpose.xlu0.b32.cont [12/16] 0.0, 128
  %185 = vxpose.xlu0.b32.cont [13/16] 0.0, 128
  %186 = vxpose.xlu0.b32.cont [14/16] 0.0, 128
  %187 = vxpose.xlu0.b32.cont [15/16] 0.0, 128
  %188 = vxpose.xlu0.b32.end [16/16] 0.0, 128
  %v189 = vpop.trf.xlu0
  %v190 = vpop.trf.xlu0
  %v191 = vpop.trf.xlu0
  %v192 = vpop.trf.xlu0
  %v193 = vpop.trf.xlu0
  %v194 = vpop.trf.xlu0
  %v195 = vpop.trf.xlu0
  %v196 = vpop.trf.xlu0
  %v197 = vpop.trf.xlu0
  %v198 = vpop.trf.xlu0
  %v199 = vpop.trf.xlu0
  %v200 = vpop.trf.xlu0
  %v201 = vpop.trf.xlu0
  %v202 = vpop.trf.xlu0
  %v203 = vpop.trf.xlu0
  %v204 = vpop.trf.xlu0
  %205 = vxpose.xlu0.b32.start [1/16] %v44, 128
  %206 = vxpose.xlu0.b32.cont [2/16] 0.0, 128
  %207 = vxpose.xlu0.b32.cont [3/16] 0.0, 128
  %208 = vxpose.xlu0.b32.cont [4/16] 0.0, 128
  %209 = vxpose.xlu0.b32.cont [5/16] 0.0, 128
  %210 = vxpose.xlu0.b32.cont [6/16] 0.0, 128
  %211 = vxpose.xlu0.b32.cont [7/16] 0.0, 128
  %212 = vxpose.xlu0.b32.cont [8/16] 0.0, 128
  %213 = vxpose.xlu0.b32.cont [9/16] 0.0, 128
  %214 = vxpose.xlu0.b32.cont [10/16] 0.0, 128
  %215 = vxpose.xlu0.b32.cont [11/16] 0.0, 128
  %216 = vxpose.xlu0.b32.cont [12/16] 0.0, 128
  %217 = vxpose.xlu0.b32.cont [13/16] 0.0, 128
  %218 = vxpose.xlu0.b32.cont [14/16] 0.0, 128
  %219 = vxpose.xlu0.b32.cont [15/16] 0.0, 128
  %220 = vxpose.xlu0.b32.end [16/16] 0.0, 128
  %v221 = vpop.trf.xlu0
  %v222 = vpop.trf.xlu0
  %v223 = vpop.trf.xlu0
  %v224 = vpop.trf.xlu0
  %v225 = vpop.trf.xlu0
  %v226 = vpop.trf.xlu0
  %v227 = vpop.trf.xlu0
  %v228 = vpop.trf.xlu0
  %v229 = vpop.trf.xlu0
  %v230 = vpop.trf.xlu0
  %v231 = vpop.trf.xlu0
  %v232 = vpop.trf.xlu0
  %v233 = vpop.trf.xlu0
  %v234 = vpop.trf.xlu0
  %v235 = vpop.trf.xlu0
  %v236 = vpop.trf.xlu0
  %v237 = vld [vmem:[%s2] sm:$0x7]
  %vm238 = vcmask 23552
  %v240 = vsel %vm238, %v61, 0
  %v243 = vsel %vm238, %v62, 0
  %v246 = vsel %vm238, %v93, 0
  %v249 = vsel %vm238, %v94, 0
  %v252 = vsel %vm238, %v125, 0
  %v255 = vsel %vm238, %v126, 0
  %v258 = vsel %vm238, %v157, 0
  %v261 = vsel %vm238, %v158, 0
  %v264 = vsel %vm238, %v189, 0
  %v267 = vsel %vm238, %v190, 0
  %v270 = vsel %vm238, %v221, 0
  %v273 = vsel %vm238, %v222, 0
  %vm275 = vcmask 1042432
  %v277 = vsel %vm275, %v237, 0
  %279 = vmatprep.subr.mxu0 0.0
  %280 = vmatpush1.msra.mxu0 %v277
  %281 = vmatprep.subr.mxu0 0.0
  %282 = vmatpush1.msra.mxu0 0.0
  %283 = vmatprep.subr.mxu0 0.0
  %284 = vmatpush1.msra.mxu0 0.0
  %285 = vmatprep.subr.mxu0 0.0
  %286 = vmatpush1.msra.mxu0 0.0
  %287 = vmatprep.subr.mxu0 0.0
  %288 = vmatpush1.msra.mxu0 0.0
  %289 = vmatprep.subr.mxu0 0.0
  %290 = vmatpush1.msra.mxu0 0.0
  %291 = vmatprep.subr.mxu0 0.0
  %292 = vmatpush1.msra.mxu0 0.0
  %293 = vmatprep.subr.mxu0 0.0
  %294 = vmatpush1.msra.mxu0 0.0
  %295 = vmatprep.subr.mxu0 0.0
  %296 = vmatpush1.msra.mxu0 0.0
  %297 = vmatprep.subr.mxu0 0.0
  %298 = vmatpush1.msra.mxu0 0.0
  %299 = vmatprep.subr.mxu0 0.0
  %300 = vmatpush1.msra.mxu0 0.0
  %301 = vmatprep.subr.mxu0 0.0
  %302 = vmatpush1.msra.mxu0 0.0
  %303 = vmatprep.subr.mxu0 0.0
  %304 = vmatpush1.msra.mxu0 0.0
  %305 = vmatprep.subr.mxu0 0.0
  %306 = vmatpush1.msra.mxu0 0.0
  %307 = vmatprep.subr.mxu0 0.0
  %308 = vmatpush1.msra.mxu0 0.0
  %309 = vmatprep.subr.mxu0 0.0
  %310 = vmatpush1.msra.mxu0 0.0
  %311 = vmatprep.subr.mxu0 0.0
  %312 = vmatpush1.msra.mxu0 0.0
  %313 = vmatprep.subr.mxu0 0.0
  %314 = vmatpush1.msra.mxu0 0.0
  %315 = vmatprep.subr.mxu0 0.0
  %316 = vmatpush1.msra.mxu0 0.0
  %317 = vmatprep.subr.mxu0 0.0
  %318 = vmatpush1.msra.mxu0 0.0
  %319 = vmatprep.subr.mxu0 0.0
  %320 = vmatpush1.msra.mxu0 0.0
  %321 = vmatprep.subr.mxu0 0.0
  %322 = vmatpush1.msra.mxu0 0.0
  %323 = vmatprep.subr.mxu0 0.0
  %324 = vmatpush1.msra.mxu0 0.0
  %325 = vmatprep.subr.mxu0 0.0
  %326 = vmatpush1.msra.mxu0 0.0
  %327 = vmatprep.subr.mxu0 0.0
  %328 = vmatpush1.msra.mxu0 0.0
  %329 = vmatprep.subr.mxu0 0.0
  %330 = vmatpush1.msra.mxu0 0.0
  %331 = vmatprep.subr.mxu0 0.0
  %332 = vmatpush1.msra.mxu0 0.0
  %333 = vmatprep.subr.mxu0 0.0
  %334 = vmatpush1.msra.mxu0 0.0
  %335 = vmatprep.subr.mxu0 0.0
  %336 = vmatpush1.msra.mxu0 0.0
  %337 = vmatprep.subr.mxu0 0.0
  %338 = vmatpush1.msra.mxu0 0.0
  %339 = vmatprep.subr.mxu0 0.0
  %340 = vmatpush1.msra.mxu0 0.0
  %341 = vmatprep.subr.mxu0 0.0
  %342 = vmatpush1.msra.mxu0 0.0
  %343 = vmatprep.mubr.f32.mxu0 0.0
  %344 = vmatmul.mubr.f32.gmra.mrb[0].mxu0 %v240
  %v345 = vpop.f32.mrb[0].mxu0
  %v346 = vadd.f32 0.0, %v345
  %v347 = vpop.f32.mrb[0].mxu0
  %348 = vmatprep.mubr.f32.mxu0 0.0
  %349 = vmatmul.mubr.f32.gmra.mrb[0].mxu0 %v243
  %v350 = vpop.f32.mrb[0].mxu0
  %v351 = vadd.f32 0.0, %v350
  %v352 = vpop.f32.mrb[0].mxu0
  %353 = vmatprep.mubr.f32.mxu0 0.0
  %354 = vmatmul.mubr.f32.gmra.mrb[0].mxu0 %v246
  %v355 = vpop.f32.mrb[0].mxu0
  %v356 = vadd.f32 0.0, %v355
  %v357 = vpop.f32.mrb[0].mxu0
  %358 = vmatprep.mubr.f32.mxu0 0.0
  %359 = vmatmul.mubr.f32.gmra.mrb[0].mxu0 %v249
  %v360 = vpop.f32.mrb[0].mxu0
  %v361 = vadd.f32 0.0, %v360
  %v362 = vpop.f32.mrb[0].mxu0
  %363 = vmatprep.mubr.f32.mxu0 0.0
  %364 = vmatmul.mubr.f32.gmra.mrb[0].mxu0 %v252
  %v365 = vpop.f32.mrb[0].mxu0
  %v366 = vadd.f32 0.0, %v365
  %v367 = vpop.f32.mrb[0].mxu0
  %368 = vmatprep.mubr.f32.mxu0 0.0
  %369 = vmatmul.mubr.f32.gmra.mrb[0].mxu0 %v255
  %v370 = vpop.f32.mrb[0].mxu0
  %v371 = vadd.f32 0.0, %v370
  %v372 = vpop.f32.mrb[0].mxu0
  %373 = vmatprep.mubr.f32.mxu0 0.0
  %374 = vmatmul.mubr.f32.gmra.mrb[0].mxu0 %v258
  %v375 = vpop.f32.mrb[0].mxu0
  %v376 = vadd.f32 0.0, %v375
  %v377 = vpop.f32.mrb[0].mxu0
  %378 = vmatprep.mubr.f32.mxu0 0.0
  %379 = vmatmul.mubr.f32.gmra.mrb[0].mxu0 %v261
  %v380 = vpop.f32.mrb[0].mxu0
  %v381 = vadd.f32 0.0, %v380
  %v382 = vpop.f32.mrb[0].mxu0
  %383 = vmatprep.mubr.f32.mxu0 0.0
  %384 = vmatmul.mubr.f32.gmra.mrb[0].mxu0 %v264
  %v385 = vpop.f32.mrb[0].mxu0
  %v386 = vadd.f32 0.0, %v385
  %v387 = vpop.f32.mrb[0].mxu0
  %388 = vmatprep.mubr.f32.mxu0 0.0
  %389 = vmatmul.mubr.f32.gmra.mrb[0].mxu0 %v267
  %v390 = vpop.f32.mrb[0].mxu0
  %v391 = vadd.f32 0.0, %v390
  %v392 = vpop.f32.mrb[0].mxu0
  %393 = vmatprep.mubr.f32.mxu0 0.0
  %394 = vmatmul.mubr.f32.gmra.mrb[0].mxu0 %v270
  %v395 = vpop.f32.mrb[0].mxu0
  %v396 = vadd.f32 0.0, %v395
  %v397 = vpop.f32.mrb[0].mxu0
  %398 = vmatprep.mubr.f32.mxu0 0.0
  %399 = vmatmul.mubr.f32.gmra.mrb[0].mxu0 %v273
  %v400 = vpop.f32.mrb[0].mxu0
  %v401 = vadd.f32 0.0, %v400
  %v402 = vpop.f32.mrb[0].mxu0
  %403 = vdwg.mxu0
  %vm404 = vcmask 523264
  %v405 = vsel %vm404, %v346, 0.0
  %v406 = vsel %vm404, %v351, 0.0
  %v407 = vadd.f32 %v405, %v406
  %v408 = vsel %vm404, %v356, 0.0
  %v409 = vadd.f32 %v407, %v408
  %v410 = vsel %vm404, %v361, 0.0
  %v411 = vadd.f32 %v409, %v410
  %v412 = vsel %vm404, %v366, 0.0
  %v413 = vadd.f32 %v411, %v412
  %v414 = vsel %vm404, %v371, 0.0
  %v415 = vadd.f32 %v413, %v414
  %v416 = vsel %vm404, %v376, 0.0
  %v417 = vadd.f32 %v415, %v416
  %v418 = vsel %vm404, %v381, 0.0
  %v419 = vadd.f32 %v417, %v418
  %v420 = vsel %vm404, %v386, 0.0
  %v421 = vadd.f32 %v419, %v420
  %v422 = vsel %vm404, %v391, 0.0
  %v423 = vadd.f32 %v421, %v422
  %v424 = vsel %vm404, %v396, 0.0
  %v425 = vadd.f32 %v423, %v424
  %v426 = vsel %vm404, %v401, 0.0
  %v427 = vadd.f32 %v425, %v426
  %v428 = vrot.slane %v427, 4
  %v429 = vadd.f32 %v427, %v428
  %v430 = vrot.slane %v429, 2
  %v431 = vadd.f32 %v429, %v430
  %v432 = vrot.slane %v431, 1
  %v433 = vadd.f32 %v431, %v432
  %v434 = vrcp.pop 96.0
  %v435 = vmul.f32 %v433, %v434
  %v436 = vmul.f32 %v346, %v346
  %v437 = vmul.f32 %v351, %v351
  %v438 = vmul.f32 %v356, %v356
  %v439 = vmul.f32 %v361, %v361
  %v440 = vmul.f32 %v366, %v366
  %v441 = vmul.f32 %v371, %v371
  %v442 = vmul.f32 %v376, %v376
  %v443 = vmul.f32 %v381, %v381
  %v444 = vmul.f32 %v386, %v386
  %v445 = vmul.f32 %v391, %v391
  %v446 = vmul.f32 %v396, %v396
  %v447 = vmul.f32 %v401, %v401
  %v448 = vsel %vm404, %v436, 0.0
  %v449 = vsel %vm404, %v437, 0.0
  %v450 = vadd.f32 %v448, %v449
  %v451 = vsel %vm404, %v438, 0.0
  %v452 = vadd.f32 %v450, %v451
  %v453 = vsel %vm404, %v439, 0.0
  %v454 = vadd.f32 %v452, %v453
  %v455 = vsel %vm404, %v440, 0.0
  %v456 = vadd.f32 %v454, %v455
  %v457 = vsel %vm404, %v441, 0.0
  %v458 = vadd.f32 %v456, %v457
  %v459 = vsel %vm404, %v442, 0.0
  %v460 = vadd.f32 %v458, %v459
  %v461 = vsel %vm404, %v443, 0.0
  %v462 = vadd.f32 %v460, %v461
  %v463 = vsel %vm404, %v444, 0.0
  %v464 = vadd.f32 %v462, %v463
  %v465 = vsel %vm404, %v445, 0.0
  %v466 = vadd.f32 %v464, %v465
  %v467 = vsel %vm404, %v446, 0.0
  %v468 = vadd.f32 %v466, %v467
  %v469 = vsel %vm404, %v447, 0.0
  %v470 = vadd.f32 %v468, %v469
  %v471 = vrot.slane %v470, 4
  %v472 = vadd.f32 %v470, %v471
  %v473 = vrot.slane %v472, 2
  %v474 = vadd.f32 %v472, %v473
  %v475 = vrot.slane %v474, 1
  %v476 = vadd.f32 %v474, %v475
  %v477 = vmul.f32 %v476, %v434
  %v478 = vmul.f32 %v435, %v435
  %v479 = vsub.f32 %v477, %v478
  %v480 = vmax.f32 %v479, 0.0
  %v481 = vld [vmem:[%s1] ss:$0 sm:$0xff]
  %v482 = vadd.f32 %v480, 1e-05
  %v483 = vrsqrt.pop %v482
  %v484 = vmul.f32 %v481, %v483
  %v485 = vmul.f32 %v346, %v484
  %v486 = vmul.f32 %v351, %v484
  %v487 = vmul.f32 %v356, %v484
  %v488 = vmul.f32 %v361, %v484
  %v489 = vmul.f32 %v366, %v484
  %v490 = vmul.f32 %v371, %v484
  %v491 = vmul.f32 %v376, %v484
  %v492 = vmul.f32 %v381, %v484
  %v493 = vmul.f32 %v386, %v484
  %v494 = vmul.f32 %v391, %v484
  %v495 = vmul.f32 %v396, %v484
  %v496 = vmul.f32 %v401, %v484
  %v497 = vld [vmem:[%s1 + $0x1] ss:$0 sm:$0xff]
  %v498 = vmul.f32 %v435, %v484
  %v499 = vsub.f32 %v497, %v498
  %v500 = vadd.f32 %v485, %v499
  %v501 = vadd.f32 %v486, %v499
  %v502 = vadd.f32 %v487, %v499
  %v503 = vadd.f32 %v488, %v499
  %v504 = vadd.f32 %v489, %v499
  %v505 = vadd.f32 %v490, %v499
  %v506 = vadd.f32 %v491, %v499
  %v507 = vadd.f32 %v492, %v499
  %v508 = vadd.f32 %v493, %v499
  %v509 = vadd.f32 %v494, %v499
  %v510 = vadd.f32 %v495, %v499
  %v511 = vadd.f32 %v496, %v499
  %v512 = vmax.f32 %v500, 0.0
  %v513 = vmax.f32 %v501, 0.0
  %v514 = vmax.f32 %v502, 0.0
  %v515 = vmax.f32 %v503, 0.0
  %v516 = vmax.f32 %v504, 0.0
  %v517 = vmax.f32 %v505, 0.0
  %v518 = vmax.f32 %v506, 0.0
  %v519 = vmax.f32 %v507, 0.0
  %v520 = vmax.f32 %v508, 0.0
  %v521 = vmax.f32 %v509, 0.0
  %v522 = vmax.f32 %v510, 0.0
  %v523 = vmax.f32 %v511, 0.0
  %v524 = vld [vmem:[%s3] sm:$0xf]
  %v525 = vld [vmem:[%s3 + $0x4] sm:$0xf]
  %v526 = vld [vmem:[%s3 + $0x8] sm:$0xf]
  %v527 = vld [vmem:[%s3 + $0xc] sm:$0xf]
  %v528 = vld [vmem:[%s3 + $0x10] sm:$0xf]
  %v529 = vld [vmem:[%s3 + $0x14] sm:$0xf]
  %v530 = vld [vmem:[%s3 + $0x18] sm:$0xf]
  %v531 = vld [vmem:[%s3 + $0x1c] sm:$0xf]
  %v532 = vpack.c.bf16 %v513, %v512
  %v533 = vpack.c.bf16 %v515, %v514
  %v534 = vpack.c.bf16 %v517, %v516
  %v535 = vpack.c.bf16 %v519, %v518
  %v536 = vpack.c.bf16 %v521, %v520
  %v537 = vpack.c.bf16 %v523, %v522
  %v546 = vunpack.c.l.b16 %v524
  %v547 = vunpack.c.l.b16 %v525
  %v548 = vunpack.c.l.b16 %v526
  %v549 = vunpack.c.l.b16 %v527
  %v550 = vunpack.c.l.b16 %v528
  %v551 = vunpack.c.l.b16 %v529
  %v552 = vunpack.c.l.b16 %v530
  %v553 = vunpack.c.l.b16 %v531
  %v554 = vpack.c.b16 %v547, %v546
  %v555 = vpack.c.b16 %v549, %v548
  %v556 = vpack.c.b16 %v551, %v550
  %v557 = vpack.c.b16 %v553, %v552
  %v563 = vsel %vm404, %v532, 0
  %v566 = vsel %vm404, %v533, 0
  %v569 = vsel %vm404, %v534, 0
  %v572 = vsel %vm404, %v535, 0
  %v575 = vsel %vm404, %v536, 0
  %v578 = vsel %vm404, %v537, 0
  %580 = vmatprep.subr.bf16.mxu0 0
  %581 = vmatpush1.bf16.msra.mxu0 %v554
  %582 = vmatprep.subr.bf16.mxu0 0
  %583 = vmatpush1.bf16.msra.mxu0 %v555
  %584 = vmatprep.subr.bf16.mxu0 0
  %585 = vmatpush1.bf16.msra.mxu0 %v556
  %586 = vmatprep.subr.bf16.mxu0 0
  %587 = vmatpush1.bf16.msra.mxu0 %v557
  %588 = vmatprep.subr.bf16.mxu0 0
  %589 = vmatpush1.bf16.msra.mxu0 0
  %590 = vmatprep.subr.bf16.mxu0 0
  %591 = vmatpush1.bf16.msra.mxu0 0
  %592 = vmatprep.subr.bf16.mxu0 0
  %593 = vmatpush1.bf16.msra.mxu0 0
  %594 = vmatprep.subr.bf16.mxu0 0
  %595 = vmatpush1.bf16.msra.mxu0 0
  %596 = vmatprep.subr.bf16.mxu0 0
  %597 = vmatpush1.bf16.msra.mxu0 0
  %598 = vmatprep.subr.bf16.mxu0 0
  %599 = vmatpush1.bf16.msra.mxu0 0
  %600 = vmatprep.subr.bf16.mxu0 0
  %601 = vmatpush1.bf16.msra.mxu0 0
  %602 = vmatprep.subr.bf16.mxu0 0
  %603 = vmatpush1.bf16.msra.mxu0 0
  %604 = vmatprep.subr.bf16.mxu0 0
  %605 = vmatpush1.bf16.msra.mxu0 0
  %606 = vmatprep.subr.bf16.mxu0 0
  %607 = vmatpush1.bf16.msra.mxu0 0
  %608 = vmatprep.subr.bf16.mxu0 0
  %609 = vmatpush1.bf16.msra.mxu0 0
  %610 = vmatprep.subr.bf16.mxu0 0
  %611 = vmatpush1.bf16.msra.mxu0 0
  %612 = vmatprep.mubr.bf16.mxu0 0
  %613 = vmatmul.mubr.bf16.gmra.mrb[0].mxu0 %v563
  %v614 = vpop.f32.mrb[0].mxu0
  %v615 = vadd.f32 0.0, %v614
  %v616 = vpop.f32.mrb[0].mxu0
  %v617 = vpop.f32.mrb[0].mxu0
  %v618 = vadd.f32 0.0, %v617
  %v619 = vpop.f32.mrb[0].mxu0
  %620 = vmatprep.mubr.bf16.mxu0 0
  %621 = vmatmul.mubr.bf16.gmra.mrb[0].mxu0 %v566
  %v622 = vpop.f32.mrb[0].mxu0
  %v623 = vadd.f32 0.0, %v622
  %v624 = vpop.f32.mrb[0].mxu0
  %v625 = vpop.f32.mrb[0].mxu0
  %v626 = vadd.f32 0.0, %v625
  %v627 = vpop.f32.mrb[0].mxu0
  %628 = vmatprep.mubr.bf16.mxu0 0
  %629 = vmatmul.mubr.bf16.gmra.mrb[0].mxu0 %v569
  %v630 = vpop.f32.mrb[0].mxu0
  %v631 = vadd.f32 0.0, %v630
  %v632 = vpop.f32.mrb[0].mxu0
  %v633 = vpop.f32.mrb[0].mxu0
  %v634 = vadd.f32 0.0, %v633
  %v635 = vpop.f32.mrb[0].mxu0
  %636 = vmatprep.mubr.bf16.mxu0 0
  %637 = vmatmul.mubr.bf16.gmra.mrb[0].mxu0 %v572
  %v638 = vpop.f32.mrb[0].mxu0
  %v639 = vadd.f32 0.0, %v638
  %v640 = vpop.f32.mrb[0].mxu0
  %v641 = vpop.f32.mrb[0].mxu0
  %v642 = vadd.f32 0.0, %v641
  %v643 = vpop.f32.mrb[0].mxu0
  %644 = vmatprep.mubr.bf16.mxu0 0
  %645 = vmatmul.mubr.bf16.gmra.mrb[0].mxu0 %v575
  %v646 = vpop.f32.mrb[0].mxu0
  %v647 = vadd.f32 0.0, %v646
  %v648 = vpop.f32.mrb[0].mxu0
  %v649 = vpop.f32.mrb[0].mxu0
  %v650 = vadd.f32 0.0, %v649
  %v651 = vpop.f32.mrb[0].mxu0
  %652 = vmatprep.mubr.bf16.mxu0 0
  %653 = vmatmul.mubr.bf16.gmra.mrb[0].mxu0 %v578
  %v654 = vpop.f32.mrb[0].mxu0
  %v655 = vadd.f32 0.0, %v654
  %v656 = vpop.f32.mrb[0].mxu0
  %v657 = vpop.f32.mrb[0].mxu0
  %v658 = vadd.f32 0.0, %v657
  %v659 = vpop.f32.mrb[0].mxu0
  %660 = vdwg.mxu0
  %v661 = vadd.f32 %v615, %v618
  %v662 = vadd.f32 %v661, %v623
  %v663 = vadd.f32 %v662, %v626
  %v664 = vadd.f32 %v663, %v631
  %v665 = vadd.f32 %v664, %v634
  %v666 = vadd.f32 %v665, %v639
  %v667 = vadd.f32 %v666, %v642
  %v668 = vadd.f32 %v667, %v647
  %v669 = vadd.f32 %v668, %v650
  %v670 = vadd.f32 %v669, %v655
  %v671 = vadd.f32 %v670, %v658
  %v672 = vrot.slane %v671, 4
  %v673 = vadd.f32 %v671, %v672
  %v674 = vrot.slane %v673, 2
  %v675 = vadd.f32 %v673, %v674
  %v676 = vrot.slane %v675, 1
  %v677 = vadd.f32 %v675, %v676
  %v678 = vmul.f32 %v677, %v434
  %v679 = vmul.f32 %v615, %v615
  %v680 = vmul.f32 %v618, %v618
  %v681 = vmul.f32 %v623, %v623
  %v682 = vmul.f32 %v626, %v626
  %v683 = vmul.f32 %v631, %v631
  %v684 = vmul.f32 %v634, %v634
  %v685 = vmul.f32 %v639, %v639
  %v686 = vmul.f32 %v642, %v642
  %v687 = vmul.f32 %v647, %v647
  %v688 = vmul.f32 %v650, %v650
  %v689 = vmul.f32 %v655, %v655
  %v690 = vmul.f32 %v658, %v658
  %v691 = vadd.f32 %v679, %v680
  %v692 = vadd.f32 %v691, %v681
  %v693 = vadd.f32 %v692, %v682
  %v694 = vadd.f32 %v693, %v683
  %v695 = vadd.f32 %v694, %v684
  %v696 = vadd.f32 %v695, %v685
  %v697 = vadd.f32 %v696, %v686
  %v698 = vadd.f32 %v697, %v687
  %v699 = vadd.f32 %v698, %v688
  %v700 = vadd.f32 %v699, %v689
  %v701 = vadd.f32 %v700, %v690
  %v702 = vrot.slane %v701, 4
  %v703 = vadd.f32 %v701, %v702
  %v704 = vrot.slane %v703, 2
  %v705 = vadd.f32 %v703, %v704
  %v706 = vrot.slane %v705, 1
  %v707 = vadd.f32 %v705, %v706
  %v708 = vmul.f32 %v707, %v434
  %v709 = vmul.f32 %v678, %v678
  %v710 = vsub.f32 %v708, %v709
  %v711 = vmax.f32 %v710, 0.0
  %v712 = vld [vmem:[%s1 + $0x2] ss:$0 sm:$0xff]
  %v713 = vadd.f32 %v711, 1e-05
  %v714 = vrsqrt.pop %v713
  %v715 = vmul.f32 %v712, %v714
  %v716 = vmul.f32 %v615, %v715
  %v717 = vmul.f32 %v618, %v715
  %v718 = vmul.f32 %v623, %v715
  %v719 = vmul.f32 %v626, %v715
  %v720 = vmul.f32 %v631, %v715
  %v721 = vmul.f32 %v634, %v715
  %v722 = vmul.f32 %v639, %v715
  %v723 = vmul.f32 %v642, %v715
  %v724 = vmul.f32 %v647, %v715
  %v725 = vmul.f32 %v650, %v715
  %v726 = vmul.f32 %v655, %v715
  %v727 = vmul.f32 %v658, %v715
  %v728 = vld [vmem:[%s1 + $0x3] ss:$0 sm:$0xff]
  %v729 = vmul.f32 %v678, %v715
  %v730 = vsub.f32 %v728, %v729
  %v731 = vadd.f32 %v716, %v730
  %v732 = vadd.f32 %v717, %v730
  %v733 = vadd.f32 %v718, %v730
  %v734 = vadd.f32 %v719, %v730
  %v735 = vadd.f32 %v720, %v730
  %v736 = vadd.f32 %v721, %v730
  %v737 = vadd.f32 %v722, %v730
  %v738 = vadd.f32 %v723, %v730
  %v739 = vadd.f32 %v724, %v730
  %v740 = vadd.f32 %v725, %v730
  %v741 = vadd.f32 %v726, %v730
  %v742 = vadd.f32 %v727, %v730
  %v743 = vmax.f32 %v731, 0.0
  %v744 = vmax.f32 %v732, 0.0
  %v745 = vmax.f32 %v733, 0.0
  %v746 = vmax.f32 %v734, 0.0
  %v747 = vmax.f32 %v735, 0.0
  %v748 = vmax.f32 %v736, 0.0
  %v749 = vmax.f32 %v737, 0.0
  %v750 = vmax.f32 %v738, 0.0
  %v751 = vmax.f32 %v739, 0.0
  %v752 = vmax.f32 %v740, 0.0
  %v753 = vmax.f32 %v741, 0.0
  %v754 = vmax.f32 %v742, 0.0
  %v755 = vld [vmem:[%s4] sm:$0xff]
  %v756 = vld [vmem:[%s4 + $0x8] sm:$0xff]
  %v757 = vld [vmem:[%s4 + $0x10] sm:$0xff]
  %v758 = vld [vmem:[%s4 + $0x18] sm:$0xff]
  %v759 = vld [vmem:[%s4 + $0x20] sm:$0xff]
  %v760 = vld [vmem:[%s4 + $0x28] sm:$0xff]
  %v761 = vld [vmem:[%s4 + $0x30] sm:$0xff]
  %v762 = vld [vmem:[%s4 + $0x38] sm:$0xff]
  %v763 = vld [vmem:[%s4 + $0x40] sm:$0xff]
  %v764 = vld [vmem:[%s4 + $0x48] sm:$0xff]
  %v765 = vld [vmem:[%s4 + $0x50] sm:$0xff]
  %v766 = vld [vmem:[%s4 + $0x58] sm:$0xff]
  %v767 = vld [vmem:[%s4 + $0x60] sm:$0xff]
  %v768 = vld [vmem:[%s4 + $0x68] sm:$0xff]
  %v769 = vld [vmem:[%s4 + $0x70] sm:$0xff]
  %v770 = vld [vmem:[%s4 + $0x78] sm:$0xff]
  %v771 = vld [vmem:[%s4 + $0x80] sm:$0xff]
  %v772 = vld [vmem:[%s4 + $0x88] sm:$0xff]
  %v773 = vld [vmem:[%s4 + $0x90] sm:$0xff]
  %v774 = vld [vmem:[%s4 + $0x98] sm:$0xff]
  %v775 = vld [vmem:[%s4 + $0xa0] sm:$0xff]
  %v776 = vld [vmem:[%s4 + $0xa8] sm:$0xff]
  %v777 = vld [vmem:[%s4 + $0xb0] sm:$0xff]
  %v778 = vld [vmem:[%s4 + $0xb8] sm:$0xff]
  %v779 = vld [vmem:[%s4 + $0xc0] sm:$0xff]
  %v780 = vld [vmem:[%s4 + $0xc8] sm:$0xff]
  %v781 = vld [vmem:[%s4 + $0xd0] sm:$0xff]
  %v782 = vld [vmem:[%s4 + $0xd8] sm:$0xff]
  %v783 = vld [vmem:[%s4 + $0xe0] sm:$0xff]
  %v784 = vld [vmem:[%s4 + $0xe8] sm:$0xff]
  %v785 = vld [vmem:[%s4 + $0xf0] sm:$0xff]
  %v786 = vld [vmem:[%s4 + $0xf8] sm:$0xff]
  %v787 = vld [vmem:[%s4 + $0x100] sm:$0xff]
  %v788 = vld [vmem:[%s4 + $0x108] sm:$0xff]
  %v789 = vld [vmem:[%s4 + $0x110] sm:$0xff]
  %v790 = vld [vmem:[%s4 + $0x118] sm:$0xff]
  %v791 = vld [vmem:[%s4 + $0x120] sm:$0xff]
  %v792 = vld [vmem:[%s4 + $0x128] sm:$0xff]
  %v793 = vld [vmem:[%s4 + $0x130] sm:$0xff]
  %v794 = vld [vmem:[%s4 + $0x138] sm:$0xff]
  %v795 = vld [vmem:[%s4 + $0x140] sm:$0xff]
  %v796 = vld [vmem:[%s4 + $0x148] sm:$0xff]
  %v797 = vld [vmem:[%s4 + $0x150] sm:$0xff]
  %v798 = vld [vmem:[%s4 + $0x158] sm:$0xff]
  %v799 = vld [vmem:[%s4 + $0x160] sm:$0xff]
  %v800 = vld [vmem:[%s4 + $0x168] sm:$0xff]
  %v801 = vld [vmem:[%s4 + $0x170] sm:$0xff]
  %v802 = vld [vmem:[%s4 + $0x178] sm:$0xff]
  %v803 = vld [vmem:[%s4 + $0x180] sm:$0xff]
  %v804 = vld [vmem:[%s4 + $0x188] sm:$0xff]
  %v805 = vld [vmem:[%s4 + $0x190] sm:$0xff]
  %v806 = vld [vmem:[%s4 + $0x198] sm:$0xff]
  %v807 = vld [vmem:[%s4 + $0x1a0] sm:$0xff]
  %v808 = vld [vmem:[%s4 + $0x1a8] sm:$0xff]
  %v809 = vld [vmem:[%s4 + $0x1b0] sm:$0xff]
  %v810 = vld [vmem:[%s4 + $0x1b8] sm:$0xff]
  %v811 = vld [vmem:[%s4 + $0x1c0] sm:$0xff]
  %v812 = vld [vmem:[%s4 + $0x1c8] sm:$0xff]
  %v813 = vld [vmem:[%s4 + $0x1d0] sm:$0xff]
  %v814 = vld [vmem:[%s4 + $0x1d8] sm:$0xff]
  %v815 = vld [vmem:[%s4 + $0x1e0] sm:$0xff]
  %v816 = vld [vmem:[%s4 + $0x1e8] sm:$0xff]
  %v817 = vld [vmem:[%s4 + $0x1f0] sm:$0xff]
  %v818 = vld [vmem:[%s4 + $0x1f8] sm:$0xff]
  %v819 = vunpack.c.l.bf16 %v755
  %v820 = vunpack.c.h.bf16 %v755
  %v821 = vunpack.c.l.bf16 %v756
  %v822 = vunpack.c.h.bf16 %v756
  %v823 = vunpack.c.l.bf16 %v757
  %v824 = vunpack.c.h.bf16 %v757
  %v825 = vunpack.c.l.bf16 %v758
  %v826 = vunpack.c.h.bf16 %v758
  %v827 = vunpack.c.l.bf16 %v759
  %v828 = vunpack.c.h.bf16 %v759
  %v829 = vunpack.c.l.bf16 %v760
  %v830 = vunpack.c.h.bf16 %v760
  %v831 = vunpack.c.l.bf16 %v761
  %v832 = vunpack.c.h.bf16 %v761
  %v833 = vunpack.c.l.bf16 %v762
  %v834 = vunpack.c.h.bf16 %v762
  %v835 = vunpack.c.l.bf16 %v763
  %v836 = vunpack.c.h.bf16 %v763
  %v837 = vunpack.c.l.bf16 %v764
  %v838 = vunpack.c.h.bf16 %v764
  %v839 = vunpack.c.l.bf16 %v765
  %v840 = vunpack.c.h.bf16 %v765
  %v841 = vunpack.c.l.bf16 %v766
  %v842 = vunpack.c.h.bf16 %v766
  %v843 = vunpack.c.l.bf16 %v767
  %v844 = vunpack.c.h.bf16 %v767
  %v845 = vunpack.c.l.bf16 %v768
  %v846 = vunpack.c.h.bf16 %v768
  %v847 = vunpack.c.l.bf16 %v769
  %v848 = vunpack.c.h.bf16 %v769
  %v849 = vunpack.c.l.bf16 %v770
  %v850 = vunpack.c.h.bf16 %v770
  %v851 = vunpack.c.l.bf16 %v771
  %v852 = vunpack.c.h.bf16 %v771
  %v853 = vunpack.c.l.bf16 %v772
  %v854 = vunpack.c.h.bf16 %v772
  %v855 = vunpack.c.l.bf16 %v773
  %v856 = vunpack.c.h.bf16 %v773
  %v857 = vunpack.c.l.bf16 %v774
  %v858 = vunpack.c.h.bf16 %v774
  %v859 = vunpack.c.l.bf16 %v775
  %v860 = vunpack.c.h.bf16 %v775
  %v861 = vunpack.c.l.bf16 %v776
  %v862 = vunpack.c.h.bf16 %v776
  %v863 = vunpack.c.l.bf16 %v777
  %v864 = vunpack.c.h.bf16 %v777
  %v865 = vunpack.c.l.bf16 %v778
  %v866 = vunpack.c.h.bf16 %v778
  %v867 = vunpack.c.l.bf16 %v779
  %v868 = vunpack.c.h.bf16 %v779
  %v869 = vunpack.c.l.bf16 %v780
  %v870 = vunpack.c.h.bf16 %v780
  %v871 = vunpack.c.l.bf16 %v781
  %v872 = vunpack.c.h.bf16 %v781
  %v873 = vunpack.c.l.bf16 %v782
  %v874 = vunpack.c.h.bf16 %v782
  %v875 = vunpack.c.l.bf16 %v783
  %v876 = vunpack.c.h.bf16 %v783
  %v877 = vunpack.c.l.bf16 %v784
  %v878 = vunpack.c.h.bf16 %v784
  %v879 = vunpack.c.l.bf16 %v785
  %v880 = vunpack.c.h.bf16 %v785
  %v881 = vunpack.c.l.bf16 %v786
  %v882 = vunpack.c.h.bf16 %v786
  %v883 = vunpack.c.l.bf16 %v787
  %v884 = vunpack.c.h.bf16 %v787
  %v885 = vunpack.c.l.bf16 %v788
  %v886 = vunpack.c.h.bf16 %v788
  %v887 = vunpack.c.l.bf16 %v789
  %v888 = vunpack.c.h.bf16 %v789
  %v889 = vunpack.c.l.bf16 %v790
  %v890 = vunpack.c.h.bf16 %v790
  %v891 = vunpack.c.l.bf16 %v791
  %v892 = vunpack.c.h.bf16 %v791
  %v893 = vunpack.c.l.bf16 %v792
  %v894 = vunpack.c.h.bf16 %v792
  %v895 = vunpack.c.l.bf16 %v793
  %v896 = vunpack.c.h.bf16 %v793
  %v897 = vunpack.c.l.bf16 %v794
  %v898 = vunpack.c.h.bf16 %v794
  %v899 = vunpack.c.l.bf16 %v795
  %v900 = vunpack.c.h.bf16 %v795
  %v901 = vunpack.c.l.bf16 %v796
  %v902 = vunpack.c.h.bf16 %v796
  %v903 = vunpack.c.l.bf16 %v797
  %v904 = vunpack.c.h.bf16 %v797
  %v905 = vunpack.c.l.bf16 %v798
  %v906 = vunpack.c.h.bf16 %v798
  %v907 = vunpack.c.l.bf16 %v799
  %v908 = vunpack.c.h.bf16 %v799
  %v909 = vunpack.c.l.bf16 %v800
  %v910 = vunpack.c.h.bf16 %v800
  %v911 = vunpack.c.l.bf16 %v801
  %v912 = vunpack.c.h.bf16 %v801
  %v913 = vunpack.c.l.bf16 %v802
  %v914 = vunpack.c.h.bf16 %v802
  %v915 = vunpack.c.l.bf16 %v803
  %v916 = vunpack.c.h.bf16 %v803
  %v917 = vunpack.c.l.bf16 %v804
  %v918 = vunpack.c.h.bf16 %v804
  %v919 = vunpack.c.l.bf16 %v805
  %v920 = vunpack.c.h.bf16 %v805
  %v921 = vunpack.c.l.bf16 %v806
  %v922 = vunpack.c.h.bf16 %v806
  %v923 = vunpack.c.l.bf16 %v807
  %v924 = vunpack.c.h.bf16 %v807
  %v925 = vunpack.c.l.bf16 %v808
  %v926 = vunpack.c.h.bf16 %v808
  %v927 = vunpack.c.l.bf16 %v809
  %v928 = vunpack.c.h.bf16 %v809
  %v929 = vunpack.c.l.bf16 %v810
  %v930 = vunpack.c.h.bf16 %v810
  %v931 = vunpack.c.l.bf16 %v811
  %v932 = vunpack.c.h.bf16 %v811
  %v933 = vunpack.c.l.bf16 %v812
  %v934 = vunpack.c.h.bf16 %v812
  %v935 = vunpack.c.l.bf16 %v813
  %v936 = vunpack.c.h.bf16 %v813
  %v937 = vunpack.c.l.bf16 %v814
  %v938 = vunpack.c.h.bf16 %v814
  %v939 = vunpack.c.l.bf16 %v815
  %v940 = vunpack.c.h.bf16 %v815
  %v941 = vunpack.c.l.bf16 %v816
  %v942 = vunpack.c.h.bf16 %v816
  %v943 = vunpack.c.l.bf16 %v817
  %v944 = vunpack.c.h.bf16 %v817
  %v945 = vunpack.c.l.bf16 %v818
  %v946 = vunpack.c.h.bf16 %v818
  %v947 = vadd.f32 %v743, %v744
  %v948 = vadd.f32 %v947, %v745
  %v949 = vadd.f32 %v948, %v746
  %v950 = vadd.f32 %v949, %v747
  %v951 = vadd.f32 %v950, %v748
  %v952 = vadd.f32 %v951, %v749
  %v953 = vadd.f32 %v952, %v750
  %v954 = vadd.f32 %v953, %v751
  %v955 = vadd.f32 %v954, %v752
  %v956 = vadd.f32 %v955, %v753
  %v957 = vadd.f32 %v956, %v754
  %v958 = vrot.slane %v957, 4
  %v959 = vadd.f32 %v957, %v958
  %v960 = vrot.slane %v959, 2
  %v961 = vadd.f32 %v959, %v960
  %v962 = vrot.slane %v961, 1
  %v963 = vadd.f32 %v961, %v962
  %v964 = vmul.f32 %v963, %v434
  %965 = vxpose.xlu0.b32.start [1/16] %v743, 128
  %966 = vxpose.xlu0.b32.cont [2/16] %v744, 128
  %967 = vxpose.xlu0.b32.cont [3/16] %v745, 128
  %968 = vxpose.xlu0.b32.cont [4/16] %v746, 128
  %969 = vxpose.xlu0.b32.cont [5/16] %v747, 128
  %970 = vxpose.xlu0.b32.cont [6/16] %v748, 128
  %971 = vxpose.xlu0.b32.cont [7/16] %v749, 128
  %972 = vxpose.xlu0.b32.cont [8/16] %v750, 128
  %973 = vxpose.xlu0.b32.cont [9/16] %v751, 128
  %974 = vxpose.xlu0.b32.cont [10/16] %v752, 128
  %975 = vxpose.xlu0.b32.cont [11/16] %v753, 128
  %976 = vxpose.xlu0.b32.cont [12/16] %v754, 128
  %977 = vxpose.xlu0.b32.cont [13/16] 0.0, 128
  %978 = vxpose.xlu0.b32.cont [14/16] 0.0, 128
  %979 = vxpose.xlu0.b32.cont [15/16] 0.0, 128
  %980 = vxpose.xlu0.b32.end [16/16] 0.0, 128
  %v981 = vpop.trf.xlu0
  %v982 = vpop.trf.xlu0
  %v983 = vpop.trf.xlu0
  %v984 = vpop.trf.xlu0
  %v985 = vpop.trf.xlu0
  %v986 = vpop.trf.xlu0
  %v987 = vpop.trf.xlu0
  %v988 = vpop.trf.xlu0
  %v989 = vpop.trf.xlu0
  %v990 = vpop.trf.xlu0
  %v991 = vpop.trf.xlu0
  %v992 = vpop.trf.xlu0
  %v993 = vpop.trf.xlu0
  %v994 = vpop.trf.xlu0
  %v995 = vpop.trf.xlu0
  %v996 = vpop.trf.xlu0
  %vm997 = vcmask 785408
  %v999 = vsel %vm997, %v981, 0
  %v1002 = vsel %vm997, %v982, 0
  %v1005 = vsel %vm997, %v983, 0
  %v1008 = vsel %vm997, %v984, 0
  %v1011 = vsel %vm997, %v985, 0
  %v1014 = vsel %vm997, %v986, 0
  %v1017 = vsel %vm997, %v987, 0
  %v1020 = vsel %vm997, %v988, 0
  %v1023 = vsel %vm997, %v989, 0
  %v1026 = vsel %vm997, %v990, 0
  %v1029 = vsel %vm997, %v991, 0
  %v1032 = vsel %vm997, %v992, 0
  %v1035 = vsel %vm997, %v993, 0
  %v1038 = vsel %vm997, %v994, 0
  %v1041 = vsel %vm997, %v995, 0
  %v1044 = vsel %vm997, %v996, 0
  %1046 = vmatprep.subr.mxu0 0.0
  %1047 = vmatpush1.msra.mxu0 %v743
  %1048 = vmatprep.subr.mxu0 0.0
  %1049 = vmatpush1.msra.mxu0 %v744
  %1050 = vmatprep.subr.mxu0 0.0
  %1051 = vmatpush1.msra.mxu0 %v745
  %1052 = vmatprep.subr.mxu0 0.0
  %1053 = vmatpush1.msra.mxu0 %v746
  %1054 = vmatprep.subr.mxu0 0.0
  %1055 = vmatpush1.msra.mxu0 %v747
  %1056 = vmatprep.subr.mxu0 0.0
  %1057 = vmatpush1.msra.mxu0 %v748
  %1058 = vmatprep.subr.mxu0 0.0
  %1059 = vmatpush1.msra.mxu0 %v749
  %1060 = vmatprep.subr.mxu0 0.0
  %1061 = vmatpush1.msra.mxu0 %v750
  %1062 = vmatprep.subr.mxu0 0.0
  %1063 = vmatpush1.msra.mxu0 %v751
  %1064 = vmatprep.subr.mxu0 0.0
  %1065 = vmatpush1.msra.mxu0 %v752
  %1066 = vmatprep.subr.mxu0 0.0
  %1067 = vmatpush1.msra.mxu0 %v753
  %1068 = vmatprep.subr.mxu0 0.0
  %1069 = vmatpush1.msra.mxu0 %v754
  %1070 = vmatprep.subr.mxu0 0.0
  %1071 = vmatpush1.msra.mxu0 0.0
  %1072 = vmatprep.subr.mxu0 0.0
  %1073 = vmatpush1.msra.mxu0 0.0
  %1074 = vmatprep.subr.mxu0 0.0
  %1075 = vmatpush1.msra.mxu0 0.0
  %1076 = vmatprep.subr.mxu0 0.0
  %1077 = vmatpush1.msra.mxu0 0.0
  %1078 = vmatprep.subr.mxu0 0.0
  %1079 = vmatpush1.msra.mxu0 0.0
  %1080 = vmatprep.subr.mxu0 0.0
  %1081 = vmatpush1.msra.mxu0 0.0
  %1082 = vmatprep.subr.mxu0 0.0
  %1083 = vmatpush1.msra.mxu0 0.0
  %1084 = vmatprep.subr.mxu0 0.0
  %1085 = vmatpush1.msra.mxu0 0.0
  %1086 = vmatprep.subr.mxu0 0.0
  %1087 = vmatpush1.msra.mxu0 0.0
  %1088 = vmatprep.subr.mxu0 0.0
  %1089 = vmatpush1.msra.mxu0 0.0
  %1090 = vmatprep.subr.mxu0 0.0
  %1091 = vmatpush1.msra.mxu0 0.0
  %1092 = vmatprep.subr.mxu0 0.0
  %1093 = vmatpush1.msra.mxu0 0.0
  %1094 = vmatprep.subr.mxu0 0.0
  %1095 = vmatpush1.msra.mxu0 0.0
  %1096 = vmatprep.subr.mxu0 0.0
  %1097 = vmatpush1.msra.mxu0 0.0
  %1098 = vmatprep.subr.mxu0 0.0
  %1099 = vmatpush1.msra.mxu0 0.0
  %1100 = vmatprep.subr.mxu0 0.0
  %1101 = vmatpush1.msra.mxu0 0.0
  %1102 = vmatprep.subr.mxu0 0.0
  %1103 = vmatpush1.msra.mxu0 0.0
  %1104 = vmatprep.subr.mxu0 0.0
  %1105 = vmatpush1.msra.mxu0 0.0
  %1106 = vmatprep.subr.mxu0 0.0
  %1107 = vmatpush1.msra.mxu0 0.0
  %1108 = vmatprep.subr.mxu0 0.0
  %1109 = vmatpush1.msra.mxu0 0.0
  %1110 = vmatprep.mubr.f32.mxu0 0.0
  %1111 = vmatmul.mubr.f32.gmra.mrb[0].mxu0 %v999
  %v1112 = vpop.f32.mrb[0].mxu0
  %v1113 = vadd.f32 0.0, %v1112
  %v1114 = vpop.f32.mrb[0].mxu0
  %1115 = vmatprep.mubr.f32.mxu0 0.0
  %1116 = vmatmul.mubr.f32.gmra.mrb[0].mxu0 %v1002
  %v1117 = vpop.f32.mrb[0].mxu0
  %v1118 = vadd.f32 0.0, %v1117
  %v1119 = vpop.f32.mrb[0].mxu0
  %1120 = vmatprep.mubr.f32.mxu0 0.0
  %1121 = vmatmul.mubr.f32.gmra.mrb[0].mxu0 %v1005
  %v1122 = vpop.f32.mrb[0].mxu0
  %v1123 = vadd.f32 0.0, %v1122
  %v1124 = vpop.f32.mrb[0].mxu0
  %1125 = vmatprep.mubr.f32.mxu0 0.0
  %1126 = vmatmul.mubr.f32.gmra.mrb[0].mxu0 %v1008
  %v1127 = vpop.f32.mrb[0].mxu0
  %v1128 = vadd.f32 0.0, %v1127
  %v1129 = vpop.f32.mrb[0].mxu0
  %1130 = vmatprep.mubr.f32.mxu0 0.0
  %1131 = vmatmul.mubr.f32.gmra.mrb[0].mxu0 %v1011
  %v1132 = vpop.f32.mrb[0].mxu0
  %v1133 = vadd.f32 0.0, %v1132
  %v1134 = vpop.f32.mrb[0].mxu0
  %1135 = vmatprep.mubr.f32.mxu0 0.0
  %1136 = vmatmul.mubr.f32.gmra.mrb[0].mxu0 %v1014
  %v1137 = vpop.f32.mrb[0].mxu0
  %v1138 = vadd.f32 0.0, %v1137
  %v1139 = vpop.f32.mrb[0].mxu0
  %1140 = vmatprep.mubr.f32.mxu0 0.0
  %1141 = vmatmul.mubr.f32.gmra.mrb[0].mxu0 %v1017
  %v1142 = vpop.f32.mrb[0].mxu0
  %v1143 = vadd.f32 0.0, %v1142
  %v1144 = vpop.f32.mrb[0].mxu0
  %1145 = vmatprep.mubr.f32.mxu0 0.0
  %1146 = vmatmul.mubr.f32.gmra.mrb[0].mxu0 %v1020
  %v1147 = vpop.f32.mrb[0].mxu0
  %v1148 = vadd.f32 0.0, %v1147
  %v1149 = vpop.f32.mrb[0].mxu0
  %1150 = vmatprep.mubr.f32.mxu0 0.0
  %1151 = vmatmul.mubr.f32.gmra.mrb[0].mxu0 %v1023
  %v1152 = vpop.f32.mrb[0].mxu0
  %v1153 = vadd.f32 0.0, %v1152
  %v1154 = vpop.f32.mrb[0].mxu0
  %1155 = vmatprep.mubr.f32.mxu0 0.0
  %1156 = vmatmul.mubr.f32.gmra.mrb[0].mxu0 %v1026
  %v1157 = vpop.f32.mrb[0].mxu0
  %v1158 = vadd.f32 0.0, %v1157
  %v1159 = vpop.f32.mrb[0].mxu0
  %1160 = vmatprep.mubr.f32.mxu0 0.0
  %1161 = vmatmul.mubr.f32.gmra.mrb[0].mxu0 %v1029
  %v1162 = vpop.f32.mrb[0].mxu0
  %v1163 = vadd.f32 0.0, %v1162
  %v1164 = vpop.f32.mrb[0].mxu0
  %1165 = vmatprep.mubr.f32.mxu0 0.0
  %1166 = vmatmul.mubr.f32.gmra.mrb[0].mxu0 %v1032
  %v1167 = vpop.f32.mrb[0].mxu0
  %v1168 = vadd.f32 0.0, %v1167
  %v1169 = vpop.f32.mrb[0].mxu0
  %1170 = vmatprep.mubr.f32.mxu0 0.0
  %1171 = vmatmul.mubr.f32.gmra.mrb[0].mxu0 %v1035
  %v1172 = vpop.f32.mrb[0].mxu0
  %v1173 = vadd.f32 0.0, %v1172
  %v1174 = vpop.f32.mrb[0].mxu0
  %1175 = vmatprep.mubr.f32.mxu0 0.0
  %1176 = vmatmul.mubr.f32.gmra.mrb[0].mxu0 %v1038
  %v1177 = vpop.f32.mrb[0].mxu0
  %v1178 = vadd.f32 0.0, %v1177
  %v1179 = vpop.f32.mrb[0].mxu0
  %1180 = vmatprep.mubr.f32.mxu0 0.0
  %1181 = vmatmul.mubr.f32.gmra.mrb[0].mxu0 %v1041
  %v1182 = vpop.f32.mrb[0].mxu0
  %v1183 = vadd.f32 0.0, %v1182
  %v1184 = vpop.f32.mrb[0].mxu0
  %1185 = vmatprep.mubr.f32.mxu0 0.0
  %1186 = vmatmul.mubr.f32.gmra.mrb[0].mxu0 %v1044
  %v1187 = vpop.f32.mrb[0].mxu0
  %v1188 = vadd.f32 0.0, %v1187
  %v1189 = vpop.f32.mrb[0].mxu0
  %1190 = vdwg.mxu0
  %v1191 = vmul.f32 %v1113, %v434
  %v1192 = vmul.f32 %v1118, %v434
  %v1193 = vmul.f32 %v1123, %v434
  %v1194 = vmul.f32 %v1128, %v434
  %v1195 = vmul.f32 %v1133, %v434
  %v1196 = vmul.f32 %v1138, %v434
  %v1197 = vmul.f32 %v1143, %v434
  %v1198 = vmul.f32 %v1148, %v434
  %v1199 = vmul.f32 %v1153, %v434
  %v1200 = vmul.f32 %v1158, %v434
  %v1201 = vmul.f32 %v1163, %v434
  %v1202 = vmul.f32 %v1168, %v434
  %v1203 = vmul.f32 %v1173, %v434
  %v1204 = vmul.f32 %v1178, %v434
  %v1205 = vmul.f32 %v1183, %v434
  %v1206 = vmul.f32 %v1188, %v434
  %1207 = vmatprep.subr.mxu0 %v820
  %1208 = vmatpush1.msra.mxu0 %v819
  %1209 = vmatprep.subr.mxu0 %v828
  %1210 = vmatpush1.msra.mxu0 %v827
  %1211 = vmatprep.subr.mxu0 %v836
  %1212 = vmatpush1.msra.mxu0 %v835
  %1213 = vmatprep.subr.mxu0 %v844
  %1214 = vmatpush1.msra.mxu0 %v843
  %1215 = vmatprep.subr.mxu0 %v852
  %1216 = vmatpush1.msra.mxu0 %v851
  %1217 = vmatprep.subr.mxu0 %v860
  %1218 = vmatpush1.msra.mxu0 %v859
  %1219 = vmatprep.subr.mxu0 %v868
  %1220 = vmatpush1.msra.mxu0 %v867
  %1221 = vmatprep.subr.mxu0 %v876
  %1222 = vmatpush1.msra.mxu0 %v875
  %1223 = vmatprep.subr.mxu0 %v884
  %1224 = vmatpush1.msra.mxu0 %v883
  %1225 = vmatprep.subr.mxu0 %v892
  %1226 = vmatpush1.msra.mxu0 %v891
  %1227 = vmatprep.subr.mxu0 %v900
  %1228 = vmatpush1.msra.mxu0 %v899
  %1229 = vmatprep.subr.mxu0 %v908
  %1230 = vmatpush1.msra.mxu0 %v907
  %1231 = vmatprep.subr.mxu0 %v916
  %1232 = vmatpush1.msra.mxu0 %v915
  %1233 = vmatprep.subr.mxu0 %v924
  %1234 = vmatpush1.msra.mxu0 %v923
  %1235 = vmatprep.subr.mxu0 %v932
  %1236 = vmatpush1.msra.mxu0 %v931
  %1237 = vmatprep.subr.mxu0 %v940
  %1238 = vmatpush1.msra.mxu0 %v939
  %1239 = vmatprep.subr.mxu0 0.0
  %1240 = vmatpush1.msra.mxu0 0.0
  %1241 = vmatprep.subr.mxu0 0.0
  %1242 = vmatpush1.msra.mxu0 0.0
  %1243 = vmatprep.subr.mxu0 0.0
  %1244 = vmatpush1.msra.mxu0 0.0
  %1245 = vmatprep.subr.mxu0 0.0
  %1246 = vmatpush1.msra.mxu0 0.0
  %1247 = vmatprep.subr.mxu0 0.0
  %1248 = vmatpush1.msra.mxu0 0.0
  %1249 = vmatprep.subr.mxu0 0.0
  %1250 = vmatpush1.msra.mxu0 0.0
  %1251 = vmatprep.subr.mxu0 0.0
  %1252 = vmatpush1.msra.mxu0 0.0
  %1253 = vmatprep.subr.mxu0 0.0
  %1254 = vmatpush1.msra.mxu0 0.0
  %1255 = vmatprep.subr.mxu0 0.0
  %1256 = vmatpush1.msra.mxu0 0.0
  %1257 = vmatprep.subr.mxu0 0.0
  %1258 = vmatpush1.msra.mxu0 0.0
  %1259 = vmatprep.subr.mxu0 0.0
  %1260 = vmatpush1.msra.mxu0 0.0
  %1261 = vmatprep.subr.mxu0 0.0
  %1262 = vmatpush1.msra.mxu0 0.0
  %1263 = vmatprep.subr.mxu0 0.0
  %1264 = vmatpush1.msra.mxu0 0.0
  %1265 = vmatprep.subr.mxu0 0.0
  %1266 = vmatpush1.msra.mxu0 0.0
  %1267 = vmatprep.subr.mxu0 0.0
  %1268 = vmatpush1.msra.mxu0 0.0
  %1269 = vmatprep.subr.mxu0 0.0
  %1270 = vmatpush1.msra.mxu0 0.0
  %1271 = vmatprep.mubr.f32.mxu0 0.0
  %1272 = vmatmul.mubr.f32.gmra.mrb[0].mxu0 %v964
  %v1273 = vpop.f32.mrb[0].mxu0
  %v1274 = vadd.f32 0.0, %v1273
  %v1275 = vpop.f32.mrb[0].mxu0
  %v1276 = vadd.f32 0.0, %v1275
  %1277 = vdwg.mxu0
  %1278 = vmatprep.subr.mxu0 %v822
  %1279 = vmatpush1.msra.mxu0 %v821
  %1280 = vmatprep.subr.mxu0 %v830
  %1281 = vmatpush1.msra.mxu0 %v829
  %1282 = vmatprep.subr.mxu0 %v838
  %1283 = vmatpush1.msra.mxu0 %v837
  %1284 = vmatprep.subr.mxu0 %v846
  %1285 = vmatpush1.msra.mxu0 %v845
  %1286 = vmatprep.subr.mxu0 %v854
  %1287 = vmatpush1.msra.mxu0 %v853
  %1288 = vmatprep.subr.mxu0 %v862
  %1289 = vmatpush1.msra.mxu0 %v861
  %1290 = vmatprep.subr.mxu0 %v870
  %1291 = vmatpush1.msra.mxu0 %v869
  %1292 = vmatprep.subr.mxu0 %v878
  %1293 = vmatpush1.msra.mxu0 %v877
  %1294 = vmatprep.subr.mxu0 %v886
  %1295 = vmatpush1.msra.mxu0 %v885
  %1296 = vmatprep.subr.mxu0 %v894
  %1297 = vmatpush1.msra.mxu0 %v893
  %1298 = vmatprep.subr.mxu0 %v902
  %1299 = vmatpush1.msra.mxu0 %v901
  %1300 = vmatprep.subr.mxu0 %v910
  %1301 = vmatpush1.msra.mxu0 %v909
  %1302 = vmatprep.subr.mxu0 %v918
  %1303 = vmatpush1.msra.mxu0 %v917
  %1304 = vmatprep.subr.mxu0 %v926
  %1305 = vmatpush1.msra.mxu0 %v925
  %1306 = vmatprep.subr.mxu0 %v934
  %1307 = vmatpush1.msra.mxu0 %v933
  %1308 = vmatprep.subr.mxu0 %v942
  %1309 = vmatpush1.msra.mxu0 %v941
  %1310 = vmatprep.subr.mxu0 0.0
  %1311 = vmatpush1.msra.mxu0 0.0
  %1312 = vmatprep.subr.mxu0 0.0
  %1313 = vmatpush1.msra.mxu0 0.0
  %1314 = vmatprep.subr.mxu0 0.0
  %1315 = vmatpush1.msra.mxu0 0.0
  %1316 = vmatprep.subr.mxu0 0.0
  %1317 = vmatpush1.msra.mxu0 0.0
  %1318 = vmatprep.subr.mxu0 0.0
  %1319 = vmatpush1.msra.mxu0 0.0
  %1320 = vmatprep.subr.mxu0 0.0
  %1321 = vmatpush1.msra.mxu0 0.0
  %1322 = vmatprep.subr.mxu0 0.0
  %1323 = vmatpush1.msra.mxu0 0.0
  %1324 = vmatprep.subr.mxu0 0.0
  %1325 = vmatpush1.msra.mxu0 0.0
  %1326 = vmatprep.subr.mxu0 0.0
  %1327 = vmatpush1.msra.mxu0 0.0
  %1328 = vmatprep.subr.mxu0 0.0
  %1329 = vmatpush1.msra.mxu0 0.0
  %1330 = vmatprep.subr.mxu0 0.0
  %1331 = vmatpush1.msra.mxu0 0.0
  %1332 = vmatprep.subr.mxu0 0.0
  %1333 = vmatpush1.msra.mxu0 0.0
  %1334 = vmatprep.subr.mxu0 0.0
  %1335 = vmatpush1.msra.mxu0 0.0
  %1336 = vmatprep.subr.mxu0 0.0
  %1337 = vmatpush1.msra.mxu0 0.0
  %1338 = vmatprep.subr.mxu0 0.0
  %1339 = vmatpush1.msra.mxu0 0.0
  %1340 = vmatprep.subr.mxu0 0.0
  %1341 = vmatpush1.msra.mxu0 0.0
  %1342 = vmatprep.mubr.f32.mxu0 0.0
  %1343 = vmatmul.mubr.f32.gmra.mrb[0].mxu0 %v964
  %v1344 = vpop.f32.mrb[0].mxu0
  %v1345 = vadd.f32 0.0, %v1344
  %v1346 = vpop.f32.mrb[0].mxu0
  %v1347 = vadd.f32 0.0, %v1346
  %1348 = vdwg.mxu0
  %1349 = vmatprep.subr.mxu0 %v824
  %1350 = vmatpush1.msra.mxu0 %v823
  %1351 = vmatprep.subr.mxu0 %v832
  %1352 = vmatpush1.msra.mxu0 %v831
  %1353 = vmatprep.subr.mxu0 %v840
  %1354 = vmatpush1.msra.mxu0 %v839
  %1355 = vmatprep.subr.mxu0 %v848
  %1356 = vmatpush1.msra.mxu0 %v847
  %1357 = vmatprep.subr.mxu0 %v856
  %1358 = vmatpush1.msra.mxu0 %v855
  %1359 = vmatprep.subr.mxu0 %v864
  %1360 = vmatpush1.msra.mxu0 %v863
  %1361 = vmatprep.subr.mxu0 %v872
  %1362 = vmatpush1.msra.mxu0 %v871
  %1363 = vmatprep.subr.mxu0 %v880
  %1364 = vmatpush1.msra.mxu0 %v879
  %1365 = vmatprep.subr.mxu0 %v888
  %1366 = vmatpush1.msra.mxu0 %v887
  %1367 = vmatprep.subr.mxu0 %v896
  %1368 = vmatpush1.msra.mxu0 %v895
  %1369 = vmatprep.subr.mxu0 %v904
  %1370 = vmatpush1.msra.mxu0 %v903
  %1371 = vmatprep.subr.mxu0 %v912
  %1372 = vmatpush1.msra.mxu0 %v911
  %1373 = vmatprep.subr.mxu0 %v920
  %1374 = vmatpush1.msra.mxu0 %v919
  %1375 = vmatprep.subr.mxu0 %v928
  %1376 = vmatpush1.msra.mxu0 %v927
  %1377 = vmatprep.subr.mxu0 %v936
  %1378 = vmatpush1.msra.mxu0 %v935
  %1379 = vmatprep.subr.mxu0 %v944
  %1380 = vmatpush1.msra.mxu0 %v943
  %1381 = vmatprep.subr.mxu0 0.0
  %1382 = vmatpush1.msra.mxu0 0.0
  %1383 = vmatprep.subr.mxu0 0.0
  %1384 = vmatpush1.msra.mxu0 0.0
  %1385 = vmatprep.subr.mxu0 0.0
  %1386 = vmatpush1.msra.mxu0 0.0
  %1387 = vmatprep.subr.mxu0 0.0
  %1388 = vmatpush1.msra.mxu0 0.0
  %1389 = vmatprep.subr.mxu0 0.0
  %1390 = vmatpush1.msra.mxu0 0.0
  %1391 = vmatprep.subr.mxu0 0.0
  %1392 = vmatpush1.msra.mxu0 0.0
  %1393 = vmatprep.subr.mxu0 0.0
  %1394 = vmatpush1.msra.mxu0 0.0
  %1395 = vmatprep.subr.mxu0 0.0
  %1396 = vmatpush1.msra.mxu0 0.0
  %1397 = vmatprep.subr.mxu0 0.0
  %1398 = vmatpush1.msra.mxu0 0.0
  %1399 = vmatprep.subr.mxu0 0.0
  %1400 = vmatpush1.msra.mxu0 0.0
  %1401 = vmatprep.subr.mxu0 0.0
  %1402 = vmatpush1.msra.mxu0 0.0
  %1403 = vmatprep.subr.mxu0 0.0
  %1404 = vmatpush1.msra.mxu0 0.0
  %1405 = vmatprep.subr.mxu0 0.0
  %1406 = vmatpush1.msra.mxu0 0.0
  %1407 = vmatprep.subr.mxu0 0.0
  %1408 = vmatpush1.msra.mxu0 0.0
  %1409 = vmatprep.subr.mxu0 0.0
  %1410 = vmatpush1.msra.mxu0 0.0
  %1411 = vmatprep.subr.mxu0 0.0
  %1412 = vmatpush1.msra.mxu0 0.0
  %1413 = vmatprep.mubr.f32.mxu0 0.0
  %1414 = vmatmul.mubr.f32.gmra.mrb[0].mxu0 %v964
  %v1415 = vpop.f32.mrb[0].mxu0
  %v1416 = vadd.f32 0.0, %v1415
  %v1417 = vpop.f32.mrb[0].mxu0
  %v1418 = vadd.f32 0.0, %v1417
  %1419 = vdwg.mxu0
  %1420 = vmatprep.subr.mxu0 %v826
  %1421 = vmatpush1.msra.mxu0 %v825
  %1422 = vmatprep.subr.mxu0 %v834
  %1423 = vmatpush1.msra.mxu0 %v833
  %1424 = vmatprep.subr.mxu0 %v842
  %1425 = vmatpush1.msra.mxu0 %v841
  %1426 = vmatprep.subr.mxu0 %v850
  %1427 = vmatpush1.msra.mxu0 %v849
  %1428 = vmatprep.subr.mxu0 %v858
  %1429 = vmatpush1.msra.mxu0 %v857
  %1430 = vmatprep.subr.mxu0 %v866
  %1431 = vmatpush1.msra.mxu0 %v865
  %1432 = vmatprep.subr.mxu0 %v874
  %1433 = vmatpush1.msra.mxu0 %v873
  %1434 = vmatprep.subr.mxu0 %v882
  %1435 = vmatpush1.msra.mxu0 %v881
  %1436 = vmatprep.subr.mxu0 %v890
  %1437 = vmatpush1.msra.mxu0 %v889
  %1438 = vmatprep.subr.mxu0 %v898
  %1439 = vmatpush1.msra.mxu0 %v897
  %1440 = vmatprep.subr.mxu0 %v906
  %1441 = vmatpush1.msra.mxu0 %v905
  %1442 = vmatprep.subr.mxu0 %v914
  %1443 = vmatpush1.msra.mxu0 %v913
  %1444 = vmatprep.subr.mxu0 %v922
  %1445 = vmatpush1.msra.mxu0 %v921
  %1446 = vmatprep.subr.mxu0 %v930
  %1447 = vmatpush1.msra.mxu0 %v929
  %1448 = vmatprep.subr.mxu0 %v938
  %1449 = vmatpush1.msra.mxu0 %v937
  %1450 = vmatprep.subr.mxu0 %v946
  %1451 = vmatpush1.msra.mxu0 %v945
  %1452 = vmatprep.subr.mxu0 0.0
  %1453 = vmatpush1.msra.mxu0 0.0
  %1454 = vmatprep.subr.mxu0 0.0
  %1455 = vmatpush1.msra.mxu0 0.0
  %1456 = vmatprep.subr.mxu0 0.0
  %1457 = vmatpush1.msra.mxu0 0.0
  %1458 = vmatprep.subr.mxu0 0.0
  %1459 = vmatpush1.msra.mxu0 0.0
  %1460 = vmatprep.subr.mxu0 0.0
  %1461 = vmatpush1.msra.mxu0 0.0
  %1462 = vmatprep.subr.mxu0 0.0
  %1463 = vmatpush1.msra.mxu0 0.0
  %1464 = vmatprep.subr.mxu0 0.0
  %1465 = vmatpush1.msra.mxu0 0.0
  %1466 = vmatprep.subr.mxu0 0.0
  %1467 = vmatpush1.msra.mxu0 0.0
  %1468 = vmatprep.subr.mxu0 0.0
  %1469 = vmatpush1.msra.mxu0 0.0
  %1470 = vmatprep.subr.mxu0 0.0
  %1471 = vmatpush1.msra.mxu0 0.0
  %1472 = vmatprep.subr.mxu0 0.0
  %1473 = vmatpush1.msra.mxu0 0.0
  %1474 = vmatprep.subr.mxu0 0.0
  %1475 = vmatpush1.msra.mxu0 0.0
  %1476 = vmatprep.subr.mxu0 0.0
  %1477 = vmatpush1.msra.mxu0 0.0
  %1478 = vmatprep.subr.mxu0 0.0
  %1479 = vmatpush1.msra.mxu0 0.0
  %1480 = vmatprep.subr.mxu0 0.0
  %1481 = vmatpush1.msra.mxu0 0.0
  %1482 = vmatprep.subr.mxu0 0.0
  %1483 = vmatpush1.msra.mxu0 0.0
  %1484 = vmatprep.mubr.f32.mxu0 0.0
  %1485 = vmatmul.mubr.f32.gmra.mrb[0].mxu0 %v964
  %v1486 = vpop.f32.mrb[0].mxu0
  %v1487 = vadd.f32 0.0, %v1486
  %v1488 = vpop.f32.mrb[0].mxu0
  %v1489 = vadd.f32 0.0, %v1488
  %1490 = vdwg.mxu0
  %1491 = vmatprep.subr.mxu0 %v820
  %1492 = vmatpush1.msra.mxu0 %v819
  %1493 = vmatprep.subr.mxu0 %v828
  %1494 = vmatpush1.msra.mxu0 %v827
  %1495 = vmatprep.subr.mxu0 %v836
  %1496 = vmatpush1.msra.mxu0 %v835
  %1497 = vmatprep.subr.mxu0 %v844
  %1498 = vmatpush1.msra.mxu0 %v843
  %1499 = vmatprep.subr.mxu0 %v852
  %1500 = vmatpush1.msra.mxu0 %v851
  %1501 = vmatprep.subr.mxu0 %v860
  %1502 = vmatpush1.msra.mxu0 %v859
  %1503 = vmatprep.subr.mxu0 %v868
  %1504 = vmatpush1.msra.mxu0 %v867
  %1505 = vmatprep.subr.mxu0 %v876
  %1506 = vmatpush1.msra.mxu0 %v875
  %1507 = vmatprep.subr.mxu0 %v884
  %1508 = vmatpush1.msra.mxu0 %v883
  %1509 = vmatprep.subr.mxu0 %v892
  %1510 = vmatpush1.msra.mxu0 %v891
  %1511 = vmatprep.subr.mxu0 %v900
  %1512 = vmatpush1.msra.mxu0 %v899
  %1513 = vmatprep.subr.mxu0 %v908
  %1514 = vmatpush1.msra.mxu0 %v907
  %1515 = vmatprep.subr.mxu0 %v916
  %1516 = vmatpush1.msra.mxu0 %v915
  %1517 = vmatprep.subr.mxu0 %v924
  %1518 = vmatpush1.msra.mxu0 %v923
  %1519 = vmatprep.subr.mxu0 %v932
  %1520 = vmatpush1.msra.mxu0 %v931
  %1521 = vmatprep.subr.mxu0 %v940
  %1522 = vmatpush1.msra.mxu0 %v939
  %1523 = vmatprep.subr.mxu0 0.0
  %1524 = vmatpush1.msra.mxu0 0.0
  %1525 = vmatprep.subr.mxu0 0.0
  %1526 = vmatpush1.msra.mxu0 0.0
  %1527 = vmatprep.subr.mxu0 0.0
  %1528 = vmatpush1.msra.mxu0 0.0
  %1529 = vmatprep.subr.mxu0 0.0
  %1530 = vmatpush1.msra.mxu0 0.0
  %1531 = vmatprep.subr.mxu0 0.0
  %1532 = vmatpush1.msra.mxu0 0.0
  %1533 = vmatprep.subr.mxu0 0.0
  %1534 = vmatpush1.msra.mxu0 0.0
  %1535 = vmatprep.subr.mxu0 0.0
  %1536 = vmatpush1.msra.mxu0 0.0
  %1537 = vmatprep.subr.mxu0 0.0
  %1538 = vmatpush1.msra.mxu0 0.0
  %1539 = vmatprep.subr.mxu0 0.0
  %1540 = vmatpush1.msra.mxu0 0.0
  %1541 = vmatprep.subr.mxu0 0.0
  %1542 = vmatpush1.msra.mxu0 0.0
  %1543 = vmatprep.subr.mxu0 0.0
  %1544 = vmatpush1.msra.mxu0 0.0
  %1545 = vmatprep.subr.mxu0 0.0
  %1546 = vmatpush1.msra.mxu0 0.0
  %1547 = vmatprep.subr.mxu0 0.0
  %1548 = vmatpush1.msra.mxu0 0.0
  %1549 = vmatprep.subr.mxu0 0.0
  %1550 = vmatpush1.msra.mxu0 0.0
  %1551 = vmatprep.subr.mxu0 0.0
  %1552 = vmatpush1.msra.mxu0 0.0
  %1553 = vmatprep.subr.mxu0 0.0
  %1554 = vmatpush1.msra.mxu0 0.0
  %1555 = vmatprep.mubr.f32.mxu0 0.0
  %1556 = vmatmul.mubr.f32.gmra.mrb[0].mxu0 %v1191
  %v1557 = vpop.f32.mrb[0].mxu0
  %v1558 = vadd.f32 0.0, %v1557
  %v1559 = vpop.f32.mrb[0].mxu0
  %v1560 = vadd.f32 0.0, %v1559
  %1561 = vmatprep.mubr.f32.mxu0 0.0
  %1562 = vmatmul.mubr.f32.gmra.mrb[0].mxu0 %v1192
  %v1563 = vpop.f32.mrb[0].mxu0
  %v1564 = vadd.f32 0.0, %v1563
  %v1565 = vpop.f32.mrb[0].mxu0
  %v1566 = vadd.f32 0.0, %v1565
  %1567 = vmatprep.mubr.f32.mxu0 0.0
  %1568 = vmatmul.mubr.f32.gmra.mrb[0].mxu0 %v1193
  %v1569 = vpop.f32.mrb[0].mxu0
  %v1570 = vadd.f32 0.0, %v1569
  %v1571 = vpop.f32.mrb[0].mxu0
  %v1572 = vadd.f32 0.0, %v1571
  %1573 = vmatprep.mubr.f32.mxu0 0.0
  %1574 = vmatmul.mubr.f32.gmra.mrb[0].mxu0 %v1194
  %v1575 = vpop.f32.mrb[0].mxu0
  %v1576 = vadd.f32 0.0, %v1575
  %v1577 = vpop.f32.mrb[0].mxu0
  %v1578 = vadd.f32 0.0, %v1577
  %1579 = vmatprep.mubr.f32.mxu0 0.0
  %1580 = vmatmul.mubr.f32.gmra.mrb[0].mxu0 %v1195
  %v1581 = vpop.f32.mrb[0].mxu0
  %v1582 = vadd.f32 0.0, %v1581
  %v1583 = vpop.f32.mrb[0].mxu0
  %v1584 = vadd.f32 0.0, %v1583
  %1585 = vmatprep.mubr.f32.mxu0 0.0
  %1586 = vmatmul.mubr.f32.gmra.mrb[0].mxu0 %v1196
  %v1587 = vpop.f32.mrb[0].mxu0
  %v1588 = vadd.f32 0.0, %v1587
  %v1589 = vpop.f32.mrb[0].mxu0
  %v1590 = vadd.f32 0.0, %v1589
  %1591 = vmatprep.mubr.f32.mxu0 0.0
  %1592 = vmatmul.mubr.f32.gmra.mrb[0].mxu0 %v1197
  %v1593 = vpop.f32.mrb[0].mxu0
  %v1594 = vadd.f32 0.0, %v1593
  %v1595 = vpop.f32.mrb[0].mxu0
  %v1596 = vadd.f32 0.0, %v1595
  %1597 = vmatprep.mubr.f32.mxu0 0.0
  %1598 = vmatmul.mubr.f32.gmra.mrb[0].mxu0 %v1198
  %v1599 = vpop.f32.mrb[0].mxu0
  %v1600 = vadd.f32 0.0, %v1599
  %v1601 = vpop.f32.mrb[0].mxu0
  %v1602 = vadd.f32 0.0, %v1601
  %1603 = vmatprep.mubr.f32.mxu0 0.0
  %1604 = vmatmul.mubr.f32.gmra.mrb[0].mxu0 %v1199
  %v1605 = vpop.f32.mrb[0].mxu0
  %v1606 = vadd.f32 0.0, %v1605
  %v1607 = vpop.f32.mrb[0].mxu0
  %v1608 = vadd.f32 0.0, %v1607
  %1609 = vmatprep.mubr.f32.mxu0 0.0
  %1610 = vmatmul.mubr.f32.gmra.mrb[0].mxu0 %v1200
  %v1611 = vpop.f32.mrb[0].mxu0
  %v1612 = vadd.f32 0.0, %v1611
  %v1613 = vpop.f32.mrb[0].mxu0
  %v1614 = vadd.f32 0.0, %v1613
  %1615 = vmatprep.mubr.f32.mxu0 0.0
  %1616 = vmatmul.mubr.f32.gmra.mrb[0].mxu0 %v1201
  %v1617 = vpop.f32.mrb[0].mxu0
  %v1618 = vadd.f32 0.0, %v1617
  %v1619 = vpop.f32.mrb[0].mxu0
  %v1620 = vadd.f32 0.0, %v1619
  %1621 = vmatprep.mubr.f32.mxu0 0.0
  %1622 = vmatmul.mubr.f32.gmra.mrb[0].mxu0 %v1202
  %v1623 = vpop.f32.mrb[0].mxu0
  %v1624 = vadd.f32 0.0, %v1623
  %v1625 = vpop.f32.mrb[0].mxu0
  %v1626 = vadd.f32 0.0, %v1625
  %1627 = vmatprep.mubr.f32.mxu0 0.0
  %1628 = vmatmul.mubr.f32.gmra.mrb[0].mxu0 %v1203
  %v1629 = vpop.f32.mrb[0].mxu0
  %v1630 = vadd.f32 0.0, %v1629
  %v1631 = vpop.f32.mrb[0].mxu0
  %v1632 = vadd.f32 0.0, %v1631
  %1633 = vmatprep.mubr.f32.mxu0 0.0
  %1634 = vmatmul.mubr.f32.gmra.mrb[0].mxu0 %v1204
  %v1635 = vpop.f32.mrb[0].mxu0
  %v1636 = vadd.f32 0.0, %v1635
  %v1637 = vpop.f32.mrb[0].mxu0
  %v1638 = vadd.f32 0.0, %v1637
  %1639 = vmatprep.mubr.f32.mxu0 0.0
  %1640 = vmatmul.mubr.f32.gmra.mrb[0].mxu0 %v1205
  %v1641 = vpop.f32.mrb[0].mxu0
  %v1642 = vadd.f32 0.0, %v1641
  %v1643 = vpop.f32.mrb[0].mxu0
  %v1644 = vadd.f32 0.0, %v1643
  %1645 = vmatprep.mubr.f32.mxu0 0.0
  %1646 = vmatmul.mubr.f32.gmra.mrb[0].mxu0 %v1206
  %v1647 = vpop.f32.mrb[0].mxu0
  %v1648 = vadd.f32 0.0, %v1647
  %v1649 = vpop.f32.mrb[0].mxu0
  %v1650 = vadd.f32 0.0, %v1649
  %1651 = vdwg.mxu0
  %1652 = vmatprep.subr.mxu0 %v822
  %1653 = vmatpush1.msra.mxu0 %v821
  %1654 = vmatprep.subr.mxu0 %v830
  %1655 = vmatpush1.msra.mxu0 %v829
  %1656 = vmatprep.subr.mxu0 %v838
  %1657 = vmatpush1.msra.mxu0 %v837
  %1658 = vmatprep.subr.mxu0 %v846
  %1659 = vmatpush1.msra.mxu0 %v845
  %1660 = vmatprep.subr.mxu0 %v854
  %1661 = vmatpush1.msra.mxu0 %v853
  %1662 = vmatprep.subr.mxu0 %v862
  %1663 = vmatpush1.msra.mxu0 %v861
  %1664 = vmatprep.subr.mxu0 %v870
  %1665 = vmatpush1.msra.mxu0 %v869
  %1666 = vmatprep.subr.mxu0 %v878
  %1667 = vmatpush1.msra.mxu0 %v877
  %1668 = vmatprep.subr.mxu0 %v886
  %1669 = vmatpush1.msra.mxu0 %v885
  %1670 = vmatprep.subr.mxu0 %v894
  %1671 = vmatpush1.msra.mxu0 %v893
  %1672 = vmatprep.subr.mxu0 %v902
  %1673 = vmatpush1.msra.mxu0 %v901
  %1674 = vmatprep.subr.mxu0 %v910
  %1675 = vmatpush1.msra.mxu0 %v909
  %1676 = vmatprep.subr.mxu0 %v918
  %1677 = vmatpush1.msra.mxu0 %v917
  %1678 = vmatprep.subr.mxu0 %v926
  %1679 = vmatpush1.msra.mxu0 %v925
  %1680 = vmatprep.subr.mxu0 %v934
  %1681 = vmatpush1.msra.mxu0 %v933
  %1682 = vmatprep.subr.mxu0 %v942
  %1683 = vmatpush1.msra.mxu0 %v941
  %1684 = vmatprep.subr.mxu0 0.0
  %1685 = vmatpush1.msra.mxu0 0.0
  %1686 = vmatprep.subr.mxu0 0.0
  %1687 = vmatpush1.msra.mxu0 0.0
  %1688 = vmatprep.subr.mxu0 0.0
  %1689 = vmatpush1.msra.mxu0 0.0
  %1690 = vmatprep.subr.mxu0 0.0
  %1691 = vmatpush1.msra.mxu0 0.0
  %1692 = vmatprep.subr.mxu0 0.0
  %1693 = vmatpush1.msra.mxu0 0.0
  %1694 = vmatprep.subr.mxu0 0.0
  %1695 = vmatpush1.msra.mxu0 0.0
  %1696 = vmatprep.subr.mxu0 0.0
  %1697 = vmatpush1.msra.mxu0 0.0
  %1698 = vmatprep.subr.mxu0 0.0
  %1699 = vmatpush1.msra.mxu0 0.0
  %1700 = vmatprep.subr.mxu0 0.0
  %1701 = vmatpush1.msra.mxu0 0.0
  %1702 = vmatprep.subr.mxu0 0.0
  %1703 = vmatpush1.msra.mxu0 0.0
  %1704 = vmatprep.subr.mxu0 0.0
  %1705 = vmatpush1.msra.mxu0 0.0
  %1706 = vmatprep.subr.mxu0 0.0
  %1707 = vmatpush1.msra.mxu0 0.0
  %1708 = vmatprep.subr.mxu0 0.0
  %1709 = vmatpush1.msra.mxu0 0.0
  %1710 = vmatprep.subr.mxu0 0.0
  %1711 = vmatpush1.msra.mxu0 0.0
  %1712 = vmatprep.subr.mxu0 0.0
  %1713 = vmatpush1.msra.mxu0 0.0
  %1714 = vmatprep.subr.mxu0 0.0
  %1715 = vmatpush1.msra.mxu0 0.0
  %1716 = vmatprep.mubr.f32.mxu0 0.0
  %1717 = vmatmul.mubr.f32.gmra.mrb[0].mxu0 %v1191
  %v1718 = vpop.f32.mrb[0].mxu0
  %v1719 = vadd.f32 0.0, %v1718
  %v1720 = vpop.f32.mrb[0].mxu0
  %v1721 = vadd.f32 0.0, %v1720
  %1722 = vmatprep.mubr.f32.mxu0 0.0
  %1723 = vmatmul.mubr.f32.gmra.mrb[0].mxu0 %v1192
  %v1724 = vpop.f32.mrb[0].mxu0
  %v1725 = vadd.f32 0.0, %v1724
  %v1726 = vpop.f32.mrb[0].mxu0
  %v1727 = vadd.f32 0.0, %v1726
  %1728 = vmatprep.mubr.f32.mxu0 0.0
  %1729 = vmatmul.mubr.f32.gmra.mrb[0].mxu0 %v1193
  %v1730 = vpop.f32.mrb[0].mxu0
  %v1731 = vadd.f32 0.0, %v1730
  %v1732 = vpop.f32.mrb[0].mxu0
  %v1733 = vadd.f32 0.0, %v1732
  %1734 = vmatprep.mubr.f32.mxu0 0.0
  %1735 = vmatmul.mubr.f32.gmra.mrb[0].mxu0 %v1194
  %v1736 = vpop.f32.mrb[0].mxu0
  %v1737 = vadd.f32 0.0, %v1736
  %v1738 = vpop.f32.mrb[0].mxu0
  %v1739 = vadd.f32 0.0, %v1738
  %1740 = vmatprep.mubr.f32.mxu0 0.0
  %1741 = vmatmul.mubr.f32.gmra.mrb[0].mxu0 %v1195
  %v1742 = vpop.f32.mrb[0].mxu0
  %v1743 = vadd.f32 0.0, %v1742
  %v1744 = vpop.f32.mrb[0].mxu0
  %v1745 = vadd.f32 0.0, %v1744
  %1746 = vmatprep.mubr.f32.mxu0 0.0
  %1747 = vmatmul.mubr.f32.gmra.mrb[0].mxu0 %v1196
  %v1748 = vpop.f32.mrb[0].mxu0
  %v1749 = vadd.f32 0.0, %v1748
  %v1750 = vpop.f32.mrb[0].mxu0
  %v1751 = vadd.f32 0.0, %v1750
  %1752 = vmatprep.mubr.f32.mxu0 0.0
  %1753 = vmatmul.mubr.f32.gmra.mrb[0].mxu0 %v1197
  %v1754 = vpop.f32.mrb[0].mxu0
  %v1755 = vadd.f32 0.0, %v1754
  %v1756 = vpop.f32.mrb[0].mxu0
  %v1757 = vadd.f32 0.0, %v1756
  %1758 = vmatprep.mubr.f32.mxu0 0.0
  %1759 = vmatmul.mubr.f32.gmra.mrb[0].mxu0 %v1198
  %v1760 = vpop.f32.mrb[0].mxu0
  %v1761 = vadd.f32 0.0, %v1760
  %v1762 = vpop.f32.mrb[0].mxu0
  %v1763 = vadd.f32 0.0, %v1762
  %1764 = vmatprep.mubr.f32.mxu0 0.0
  %1765 = vmatmul.mubr.f32.gmra.mrb[0].mxu0 %v1199
  %v1766 = vpop.f32.mrb[0].mxu0
  %v1767 = vadd.f32 0.0, %v1766
  %v1768 = vpop.f32.mrb[0].mxu0
  %v1769 = vadd.f32 0.0, %v1768
  %1770 = vmatprep.mubr.f32.mxu0 0.0
  %1771 = vmatmul.mubr.f32.gmra.mrb[0].mxu0 %v1200
  %v1772 = vpop.f32.mrb[0].mxu0
  %v1773 = vadd.f32 0.0, %v1772
  %v1774 = vpop.f32.mrb[0].mxu0
  %v1775 = vadd.f32 0.0, %v1774
  %1776 = vmatprep.mubr.f32.mxu0 0.0
  %1777 = vmatmul.mubr.f32.gmra.mrb[0].mxu0 %v1201
  %v1778 = vpop.f32.mrb[0].mxu0
  %v1779 = vadd.f32 0.0, %v1778
  %v1780 = vpop.f32.mrb[0].mxu0
  %v1781 = vadd.f32 0.0, %v1780
  %1782 = vmatprep.mubr.f32.mxu0 0.0
  %1783 = vmatmul.mubr.f32.gmra.mrb[0].mxu0 %v1202
  %v1784 = vpop.f32.mrb[0].mxu0
  %v1785 = vadd.f32 0.0, %v1784
  %v1786 = vpop.f32.mrb[0].mxu0
  %v1787 = vadd.f32 0.0, %v1786
  %1788 = vmatprep.mubr.f32.mxu0 0.0
  %1789 = vmatmul.mubr.f32.gmra.mrb[0].mxu0 %v1203
  %v1790 = vpop.f32.mrb[0].mxu0
  %v1791 = vadd.f32 0.0, %v1790
  %v1792 = vpop.f32.mrb[0].mxu0
  %v1793 = vadd.f32 0.0, %v1792
  %1794 = vmatprep.mubr.f32.mxu0 0.0
  %1795 = vmatmul.mubr.f32.gmra.mrb[0].mxu0 %v1204
  %v1796 = vpop.f32.mrb[0].mxu0
  %v1797 = vadd.f32 0.0, %v1796
  %v1798 = vpop.f32.mrb[0].mxu0
  %v1799 = vadd.f32 0.0, %v1798
  %1800 = vmatprep.mubr.f32.mxu0 0.0
  %1801 = vmatmul.mubr.f32.gmra.mrb[0].mxu0 %v1205
  %v1802 = vpop.f32.mrb[0].mxu0
  %v1803 = vadd.f32 0.0, %v1802
  %v1804 = vpop.f32.mrb[0].mxu0
  %v1805 = vadd.f32 0.0, %v1804
  %1806 = vmatprep.mubr.f32.mxu0 0.0
  %1807 = vmatmul.mubr.f32.gmra.mrb[0].mxu0 %v1206
  %v1808 = vpop.f32.mrb[0].mxu0
  %v1809 = vadd.f32 0.0, %v1808
  %v1810 = vpop.f32.mrb[0].mxu0
  %v1811 = vadd.f32 0.0, %v1810
  %1812 = vdwg.mxu0
  %1813 = vmatprep.subr.mxu0 %v824
  %1814 = vmatpush1.msra.mxu0 %v823
  %1815 = vmatprep.subr.mxu0 %v832
  %1816 = vmatpush1.msra.mxu0 %v831
  %1817 = vmatprep.subr.mxu0 %v840
  %1818 = vmatpush1.msra.mxu0 %v839
  %1819 = vmatprep.subr.mxu0 %v848
  %1820 = vmatpush1.msra.mxu0 %v847
  %1821 = vmatprep.subr.mxu0 %v856
  %1822 = vmatpush1.msra.mxu0 %v855
  %1823 = vmatprep.subr.mxu0 %v864
  %1824 = vmatpush1.msra.mxu0 %v863
  %1825 = vmatprep.subr.mxu0 %v872
  %1826 = vmatpush1.msra.mxu0 %v871
  %1827 = vmatprep.subr.mxu0 %v880
  %1828 = vmatpush1.msra.mxu0 %v879
  %1829 = vmatprep.subr.mxu0 %v888
  %1830 = vmatpush1.msra.mxu0 %v887
  %1831 = vmatprep.subr.mxu0 %v896
  %1832 = vmatpush1.msra.mxu0 %v895
  %1833 = vmatprep.subr.mxu0 %v904
  %1834 = vmatpush1.msra.mxu0 %v903
  %1835 = vmatprep.subr.mxu0 %v912
  %1836 = vmatpush1.msra.mxu0 %v911
  %1837 = vmatprep.subr.mxu0 %v920
  %1838 = vmatpush1.msra.mxu0 %v919
  %1839 = vmatprep.subr.mxu0 %v928
  %1840 = vmatpush1.msra.mxu0 %v927
  %1841 = vmatprep.subr.mxu0 %v936
  %1842 = vmatpush1.msra.mxu0 %v935
  %1843 = vmatprep.subr.mxu0 %v944
  %1844 = vmatpush1.msra.mxu0 %v943
  %1845 = vmatprep.subr.mxu0 0.0
  %1846 = vmatpush1.msra.mxu0 0.0
  %1847 = vmatprep.subr.mxu0 0.0
  %1848 = vmatpush1.msra.mxu0 0.0
  %1849 = vmatprep.subr.mxu0 0.0
  %1850 = vmatpush1.msra.mxu0 0.0
  %1851 = vmatprep.subr.mxu0 0.0
  %1852 = vmatpush1.msra.mxu0 0.0
  %1853 = vmatprep.subr.mxu0 0.0
  %1854 = vmatpush1.msra.mxu0 0.0
  %1855 = vmatprep.subr.mxu0 0.0
  %1856 = vmatpush1.msra.mxu0 0.0
  %1857 = vmatprep.subr.mxu0 0.0
  %1858 = vmatpush1.msra.mxu0 0.0
  %1859 = vmatprep.subr.mxu0 0.0
  %1860 = vmatpush1.msra.mxu0 0.0
  %1861 = vmatprep.subr.mxu0 0.0
  %1862 = vmatpush1.msra.mxu0 0.0
  %1863 = vmatprep.subr.mxu0 0.0
  %1864 = vmatpush1.msra.mxu0 0.0
  %1865 = vmatprep.subr.mxu0 0.0
  %1866 = vmatpush1.msra.mxu0 0.0
  %1867 = vmatprep.subr.mxu0 0.0
  %1868 = vmatpush1.msra.mxu0 0.0
  %1869 = vmatprep.subr.mxu0 0.0
  %1870 = vmatpush1.msra.mxu0 0.0
  %1871 = vmatprep.subr.mxu0 0.0
  %1872 = vmatpush1.msra.mxu0 0.0
  %1873 = vmatprep.subr.mxu0 0.0
  %1874 = vmatpush1.msra.mxu0 0.0
  %1875 = vmatprep.subr.mxu0 0.0
  %1876 = vmatpush1.msra.mxu0 0.0
  %1877 = vmatprep.mubr.f32.mxu0 0.0
  %1878 = vmatmul.mubr.f32.gmra.mrb[0].mxu0 %v1191
  %v1879 = vpop.f32.mrb[0].mxu0
  %v1880 = vadd.f32 0.0, %v1879
  %v1881 = vpop.f32.mrb[0].mxu0
  %v1882 = vadd.f32 0.0, %v1881
  %1883 = vmatprep.mubr.f32.mxu0 0.0
  %1884 = vmatmul.mubr.f32.gmra.mrb[0].mxu0 %v1192
  %v1885 = vpop.f32.mrb[0].mxu0
  %v1886 = vadd.f32 0.0, %v1885
  %v1887 = vpop.f32.mrb[0].mxu0
  %v1888 = vadd.f32 0.0, %v1887
  %1889 = vmatprep.mubr.f32.mxu0 0.0
  %1890 = vmatmul.mubr.f32.gmra.mrb[0].mxu0 %v1193
  %v1891 = vpop.f32.mrb[0].mxu0
  %v1892 = vadd.f32 0.0, %v1891
  %v1893 = vpop.f32.mrb[0].mxu0
  %v1894 = vadd.f32 0.0, %v1893
  %1895 = vmatprep.mubr.f32.mxu0 0.0
  %1896 = vmatmul.mubr.f32.gmra.mrb[0].mxu0 %v1194
  %v1897 = vpop.f32.mrb[0].mxu0
  %v1898 = vadd.f32 0.0, %v1897
  %v1899 = vpop.f32.mrb[0].mxu0
  %v1900 = vadd.f32 0.0, %v1899
  %1901 = vmatprep.mubr.f32.mxu0 0.0
  %1902 = vmatmul.mubr.f32.gmra.mrb[0].mxu0 %v1195
  %v1903 = vpop.f32.mrb[0].mxu0
  %v1904 = vadd.f32 0.0, %v1903
  %v1905 = vpop.f32.mrb[0].mxu0
  %v1906 = vadd.f32 0.0, %v1905
  %1907 = vmatprep.mubr.f32.mxu0 0.0
  %1908 = vmatmul.mubr.f32.gmra.mrb[0].mxu0 %v1196
  %v1909 = vpop.f32.mrb[0].mxu0
  %v1910 = vadd.f32 0.0, %v1909
  %v1911 = vpop.f32.mrb[0].mxu0
  %v1912 = vadd.f32 0.0, %v1911
  %1913 = vmatprep.mubr.f32.mxu0 0.0
  %1914 = vmatmul.mubr.f32.gmra.mrb[0].mxu0 %v1197
  %v1915 = vpop.f32.mrb[0].mxu0
  %v1916 = vadd.f32 0.0, %v1915
  %v1917 = vpop.f32.mrb[0].mxu0
  %v1918 = vadd.f32 0.0, %v1917
  %1919 = vmatprep.mubr.f32.mxu0 0.0
  %1920 = vmatmul.mubr.f32.gmra.mrb[0].mxu0 %v1198
  %v1921 = vpop.f32.mrb[0].mxu0
  %v1922 = vadd.f32 0.0, %v1921
  %v1923 = vpop.f32.mrb[0].mxu0
  %v1924 = vadd.f32 0.0, %v1923
  %1925 = vmatprep.mubr.f32.mxu0 0.0
  %1926 = vmatmul.mubr.f32.gmra.mrb[0].mxu0 %v1199
  %v1927 = vpop.f32.mrb[0].mxu0
  %v1928 = vadd.f32 0.0, %v1927
  %v1929 = vpop.f32.mrb[0].mxu0
  %v1930 = vadd.f32 0.0, %v1929
  %1931 = vmatprep.mubr.f32.mxu0 0.0
  %1932 = vmatmul.mubr.f32.gmra.mrb[0].mxu0 %v1200
  %v1933 = vpop.f32.mrb[0].mxu0
  %v1934 = vadd.f32 0.0, %v1933
  %v1935 = vpop.f32.mrb[0].mxu0
  %v1936 = vadd.f32 0.0, %v1935
  %1937 = vmatprep.mubr.f32.mxu0 0.0
  %1938 = vmatmul.mubr.f32.gmra.mrb[0].mxu0 %v1201
  %v1939 = vpop.f32.mrb[0].mxu0
  %v1940 = vadd.f32 0.0, %v1939
  %v1941 = vpop.f32.mrb[0].mxu0
  %v1942 = vadd.f32 0.0, %v1941
  %1943 = vmatprep.mubr.f32.mxu0 0.0
  %1944 = vmatmul.mubr.f32.gmra.mrb[0].mxu0 %v1202
  %v1945 = vpop.f32.mrb[0].mxu0
  %v1946 = vadd.f32 0.0, %v1945
  %v1947 = vpop.f32.mrb[0].mxu0
  %v1948 = vadd.f32 0.0, %v1947
  %1949 = vmatprep.mubr.f32.mxu0 0.0
  %1950 = vmatmul.mubr.f32.gmra.mrb[0].mxu0 %v1203
  %v1951 = vpop.f32.mrb[0].mxu0
  %v1952 = vadd.f32 0.0, %v1951
  %v1953 = vpop.f32.mrb[0].mxu0
  %v1954 = vadd.f32 0.0, %v1953
  %1955 = vmatprep.mubr.f32.mxu0 0.0
  %1956 = vmatmul.mubr.f32.gmra.mrb[0].mxu0 %v1204
  %v1957 = vpop.f32.mrb[0].mxu0
  %v1958 = vadd.f32 0.0, %v1957
  %v1959 = vpop.f32.mrb[0].mxu0
  %v1960 = vadd.f32 0.0, %v1959
  %1961 = vmatprep.mubr.f32.mxu0 0.0
  %1962 = vmatmul.mubr.f32.gmra.mrb[0].mxu0 %v1205
  %v1963 = vpop.f32.mrb[0].mxu0
  %v1964 = vadd.f32 0.0, %v1963
  %v1965 = vpop.f32.mrb[0].mxu0
  %v1966 = vadd.f32 0.0, %v1965
  %1967 = vmatprep.mubr.f32.mxu0 0.0
  %1968 = vmatmul.mubr.f32.gmra.mrb[0].mxu0 %v1206
  %v1969 = vpop.f32.mrb[0].mxu0
  %v1970 = vadd.f32 0.0, %v1969
  %v1971 = vpop.f32.mrb[0].mxu0
  %v1972 = vadd.f32 0.0, %v1971
  %1973 = vdwg.mxu0
  %1974 = vmatprep.subr.mxu0 %v826
  %1975 = vmatpush1.msra.mxu0 %v825
  %1976 = vmatprep.subr.mxu0 %v834
  %1977 = vmatpush1.msra.mxu0 %v833
  %1978 = vmatprep.subr.mxu0 %v842
  %1979 = vmatpush1.msra.mxu0 %v841
  %1980 = vmatprep.subr.mxu0 %v850
  %1981 = vmatpush1.msra.mxu0 %v849
  %1982 = vmatprep.subr.mxu0 %v858
  %1983 = vmatpush1.msra.mxu0 %v857
  %1984 = vmatprep.subr.mxu0 %v866
  %1985 = vmatpush1.msra.mxu0 %v865
  %1986 = vmatprep.subr.mxu0 %v874
  %1987 = vmatpush1.msra.mxu0 %v873
  %1988 = vmatprep.subr.mxu0 %v882
  %1989 = vmatpush1.msra.mxu0 %v881
  %1990 = vmatprep.subr.mxu0 %v890
  %1991 = vmatpush1.msra.mxu0 %v889
  %1992 = vmatprep.subr.mxu0 %v898
  %1993 = vmatpush1.msra.mxu0 %v897
  %1994 = vmatprep.subr.mxu0 %v906
  %1995 = vmatpush1.msra.mxu0 %v905
  %1996 = vmatprep.subr.mxu0 %v914
  %1997 = vmatpush1.msra.mxu0 %v913
  %1998 = vmatprep.subr.mxu0 %v922
  %1999 = vmatpush1.msra.mxu0 %v921
  %2000 = vmatprep.subr.mxu0 %v930
  %2001 = vmatpush1.msra.mxu0 %v929
  %2002 = vmatprep.subr.mxu0 %v938
  %2003 = vmatpush1.msra.mxu0 %v937
  %2004 = vmatprep.subr.mxu0 %v946
  %2005 = vmatpush1.msra.mxu0 %v945
  %2006 = vmatprep.subr.mxu0 0.0
  %2007 = vmatpush1.msra.mxu0 0.0
  %2008 = vmatprep.subr.mxu0 0.0
  %2009 = vmatpush1.msra.mxu0 0.0
  %2010 = vmatprep.subr.mxu0 0.0
  %2011 = vmatpush1.msra.mxu0 0.0
  %2012 = vmatprep.subr.mxu0 0.0
  %2013 = vmatpush1.msra.mxu0 0.0
  %2014 = vmatprep.subr.mxu0 0.0
  %2015 = vmatpush1.msra.mxu0 0.0
  %2016 = vmatprep.subr.mxu0 0.0
  %2017 = vmatpush1.msra.mxu0 0.0
  %2018 = vmatprep.subr.mxu0 0.0
  %2019 = vmatpush1.msra.mxu0 0.0
  %2020 = vmatprep.subr.mxu0 0.0
  %2021 = vmatpush1.msra.mxu0 0.0
  %2022 = vmatprep.subr.mxu0 0.0
  %2023 = vmatpush1.msra.mxu0 0.0
  %2024 = vmatprep.subr.mxu0 0.0
  %2025 = vmatpush1.msra.mxu0 0.0
  %2026 = vmatprep.subr.mxu0 0.0
  %2027 = vmatpush1.msra.mxu0 0.0
  %2028 = vmatprep.subr.mxu0 0.0
  %2029 = vmatpush1.msra.mxu0 0.0
  %2030 = vmatprep.subr.mxu0 0.0
  %2031 = vmatpush1.msra.mxu0 0.0
  %2032 = vmatprep.subr.mxu0 0.0
  %2033 = vmatpush1.msra.mxu0 0.0
  %2034 = vmatprep.subr.mxu0 0.0
  %2035 = vmatpush1.msra.mxu0 0.0
  %2036 = vmatprep.subr.mxu0 0.0
  %2037 = vmatpush1.msra.mxu0 0.0
  %2038 = vmatprep.mubr.f32.mxu0 0.0
  %2039 = vmatmul.mubr.f32.gmra.mrb[0].mxu0 %v1191
  %v2040 = vpop.f32.mrb[0].mxu0
  %v2041 = vadd.f32 0.0, %v2040
  %v2042 = vpop.f32.mrb[0].mxu0
  %v2043 = vadd.f32 0.0, %v2042
  %2044 = vmatprep.mubr.f32.mxu0 0.0
  %2045 = vmatmul.mubr.f32.gmra.mrb[0].mxu0 %v1192
  %v2046 = vpop.f32.mrb[0].mxu0
  %v2047 = vadd.f32 0.0, %v2046
  %v2048 = vpop.f32.mrb[0].mxu0
  %v2049 = vadd.f32 0.0, %v2048
  %2050 = vmatprep.mubr.f32.mxu0 0.0
  %2051 = vmatmul.mubr.f32.gmra.mrb[0].mxu0 %v1193
  %v2052 = vpop.f32.mrb[0].mxu0
  %v2053 = vadd.f32 0.0, %v2052
  %v2054 = vpop.f32.mrb[0].mxu0
  %v2055 = vadd.f32 0.0, %v2054
  %2056 = vmatprep.mubr.f32.mxu0 0.0
  %2057 = vmatmul.mubr.f32.gmra.mrb[0].mxu0 %v1194
  %v2058 = vpop.f32.mrb[0].mxu0
  %v2059 = vadd.f32 0.0, %v2058
  %v2060 = vpop.f32.mrb[0].mxu0
  %v2061 = vadd.f32 0.0, %v2060
  %2062 = vmatprep.mubr.f32.mxu0 0.0
  %2063 = vmatmul.mubr.f32.gmra.mrb[0].mxu0 %v1195
  %v2064 = vpop.f32.mrb[0].mxu0
  %v2065 = vadd.f32 0.0, %v2064
  %v2066 = vpop.f32.mrb[0].mxu0
  %v2067 = vadd.f32 0.0, %v2066
  %2068 = vmatprep.mubr.f32.mxu0 0.0
  %2069 = vmatmul.mubr.f32.gmra.mrb[0].mxu0 %v1196
  %v2070 = vpop.f32.mrb[0].mxu0
  %v2071 = vadd.f32 0.0, %v2070
  %v2072 = vpop.f32.mrb[0].mxu0
  %v2073 = vadd.f32 0.0, %v2072
  %2074 = vmatprep.mubr.f32.mxu0 0.0
  %2075 = vmatmul.mubr.f32.gmra.mrb[0].mxu0 %v1197
  %v2076 = vpop.f32.mrb[0].mxu0
  %v2077 = vadd.f32 0.0, %v2076
  %v2078 = vpop.f32.mrb[0].mxu0
  %v2079 = vadd.f32 0.0, %v2078
  %2080 = vmatprep.mubr.f32.mxu0 0.0
  %2081 = vmatmul.mubr.f32.gmra.mrb[0].mxu0 %v1198
  %v2082 = vpop.f32.mrb[0].mxu0
  %v2083 = vadd.f32 0.0, %v2082
  %v2084 = vpop.f32.mrb[0].mxu0
  %v2085 = vadd.f32 0.0, %v2084
  %2086 = vmatprep.mubr.f32.mxu0 0.0
  %2087 = vmatmul.mubr.f32.gmra.mrb[0].mxu0 %v1199
  %v2088 = vpop.f32.mrb[0].mxu0
  %v2089 = vadd.f32 0.0, %v2088
  %v2090 = vpop.f32.mrb[0].mxu0
  %v2091 = vadd.f32 0.0, %v2090
  %2092 = vmatprep.mubr.f32.mxu0 0.0
  %2093 = vmatmul.mubr.f32.gmra.mrb[0].mxu0 %v1200
  %v2094 = vpop.f32.mrb[0].mxu0
  %v2095 = vadd.f32 0.0, %v2094
  %v2096 = vpop.f32.mrb[0].mxu0
  %v2097 = vadd.f32 0.0, %v2096
  %2098 = vmatprep.mubr.f32.mxu0 0.0
  %2099 = vmatmul.mubr.f32.gmra.mrb[0].mxu0 %v1201
  %v2100 = vpop.f32.mrb[0].mxu0
  %v2101 = vadd.f32 0.0, %v2100
  %v2102 = vpop.f32.mrb[0].mxu0
  %v2103 = vadd.f32 0.0, %v2102
  %2104 = vmatprep.mubr.f32.mxu0 0.0
  %2105 = vmatmul.mubr.f32.gmra.mrb[0].mxu0 %v1202
  %v2106 = vpop.f32.mrb[0].mxu0
  %v2107 = vadd.f32 0.0, %v2106
  %v2108 = vpop.f32.mrb[0].mxu0
  %v2109 = vadd.f32 0.0, %v2108
  %2110 = vmatprep.mubr.f32.mxu0 0.0
  %2111 = vmatmul.mubr.f32.gmra.mrb[0].mxu0 %v1203
  %v2112 = vpop.f32.mrb[0].mxu0
  %v2113 = vadd.f32 0.0, %v2112
  %v2114 = vpop.f32.mrb[0].mxu0
  %v2115 = vadd.f32 0.0, %v2114
  %2116 = vmatprep.mubr.f32.mxu0 0.0
  %2117 = vmatmul.mubr.f32.gmra.mrb[0].mxu0 %v1204
  %v2118 = vpop.f32.mrb[0].mxu0
  %v2119 = vadd.f32 0.0, %v2118
  %v2120 = vpop.f32.mrb[0].mxu0
  %v2121 = vadd.f32 0.0, %v2120
  %2122 = vmatprep.mubr.f32.mxu0 0.0
  %2123 = vmatmul.mubr.f32.gmra.mrb[0].mxu0 %v1205
  %v2124 = vpop.f32.mrb[0].mxu0
  %v2125 = vadd.f32 0.0, %v2124
  %v2126 = vpop.f32.mrb[0].mxu0
  %v2127 = vadd.f32 0.0, %v2126
  %2128 = vmatprep.mubr.f32.mxu0 0.0
  %2129 = vmatmul.mubr.f32.gmra.mrb[0].mxu0 %v1206
  %v2130 = vpop.f32.mrb[0].mxu0
  %v2131 = vadd.f32 0.0, %v2130
  %v2132 = vpop.f32.mrb[0].mxu0
  %v2133 = vadd.f32 0.0, %v2132
  %2134 = vdwg.mxu0
  %v2135 = vmul.f32 %v819, %v1558
  %v2136 = vmul.f32 %v820, %v1560
  %v2137 = vmul.f32 %v821, %v1719
  %v2138 = vmul.f32 %v822, %v1721
  %v2139 = vmul.f32 %v823, %v1880
  %v2140 = vmul.f32 %v824, %v1882
  %v2141 = vmul.f32 %v825, %v2041
  %v2142 = vmul.f32 %v826, %v2043
  %v2143 = vmul.f32 %v827, %v1564
  %v2144 = vmul.f32 %v828, %v1566
  %v2145 = vmul.f32 %v829, %v1725
  %v2146 = vmul.f32 %v830, %v1727
  %v2147 = vmul.f32 %v831, %v1886
  %v2148 = vmul.f32 %v832, %v1888
  %v2149 = vmul.f32 %v833, %v2047
  %v2150 = vmul.f32 %v834, %v2049
  %v2151 = vmul.f32 %v835, %v1570
  %v2152 = vmul.f32 %v836, %v1572
  %v2153 = vmul.f32 %v837, %v1731
  %v2154 = vmul.f32 %v838, %v1733
  %v2155 = vmul.f32 %v839, %v1892
  %v2156 = vmul.f32 %v840, %v1894
  %v2157 = vmul.f32 %v841, %v2053
  %v2158 = vmul.f32 %v842, %v2055
  %v2159 = vmul.f32 %v843, %v1576
  %v2160 = vmul.f32 %v844, %v1578
  %v2161 = vmul.f32 %v845, %v1737
  %v2162 = vmul.f32 %v846, %v1739
  %v2163 = vmul.f32 %v847, %v1898
  %v2164 = vmul.f32 %v848, %v1900
  %v2165 = vmul.f32 %v849, %v2059
  %v2166 = vmul.f32 %v850, %v2061
  %v2167 = vmul.f32 %v851, %v1582
  %v2168 = vmul.f32 %v852, %v1584
  %v2169 = vmul.f32 %v853, %v1743
  %v2170 = vmul.f32 %v854, %v1745
  %v2171 = vmul.f32 %v855, %v1904
  %v2172 = vmul.f32 %v856, %v1906
  %v2173 = vmul.f32 %v857, %v2065
  %v2174 = vmul.f32 %v858, %v2067
  %v2175 = vmul.f32 %v859, %v1588
  %v2176 = vmul.f32 %v860, %v1590
  %v2177 = vmul.f32 %v861, %v1749
  %v2178 = vmul.f32 %v862, %v1751
  %v2179 = vmul.f32 %v863, %v1910
  %v2180 = vmul.f32 %v864, %v1912
  %v2181 = vmul.f32 %v865, %v2071
  %v2182 = vmul.f32 %v866, %v2073
  %v2183 = vmul.f32 %v867, %v1594
  %v2184 = vmul.f32 %v868, %v1596
  %v2185 = vmul.f32 %v869, %v1755
  %v2186 = vmul.f32 %v870, %v1757
  %v2187 = vmul.f32 %v871, %v1916
  %v2188 = vmul.f32 %v872, %v1918
  %v2189 = vmul.f32 %v873, %v2077
  %v2190 = vmul.f32 %v874, %v2079
  %v2191 = vmul.f32 %v875, %v1600
  %v2192 = vmul.f32 %v876, %v1602
  %v2193 = vmul.f32 %v877, %v1761
  %v2194 = vmul.f32 %v878, %v1763
  %v2195 = vmul.f32 %v879, %v1922
  %v2196 = vmul.f32 %v880, %v1924
  %v2197 = vmul.f32 %v881, %v2083
  %v2198 = vmul.f32 %v882, %v2085
  %v2199 = vmul.f32 %v883, %v1606
  %v2200 = vmul.f32 %v884, %v1608
  %v2201 = vmul.f32 %v885, %v1767
  %v2202 = vmul.f32 %v886, %v1769
  %v2203 = vmul.f32 %v887, %v1928
  %v2204 = vmul.f32 %v888, %v1930
  %v2205 = vmul.f32 %v889, %v2089
  %v2206 = vmul.f32 %v890, %v2091
  %v2207 = vmul.f32 %v891, %v1612
  %v2208 = vmul.f32 %v892, %v1614
  %v2209 = vmul.f32 %v893, %v1773
  %v2210 = vmul.f32 %v894, %v1775
  %v2211 = vmul.f32 %v895, %v1934
  %v2212 = vmul.f32 %v896, %v1936
  %v2213 = vmul.f32 %v897, %v2095
  %v2214 = vmul.f32 %v898, %v2097
  %v2215 = vmul.f32 %v899, %v1618
  %v2216 = vmul.f32 %v900, %v1620
  %v2217 = vmul.f32 %v901, %v1779
  %v2218 = vmul.f32 %v902, %v1781
  %v2219 = vmul.f32 %v903, %v1940
  %v2220 = vmul.f32 %v904, %v1942
  %v2221 = vmul.f32 %v905, %v2101
  %v2222 = vmul.f32 %v906, %v2103
  %v2223 = vmul.f32 %v907, %v1624
  %v2224 = vmul.f32 %v908, %v1626
  %v2225 = vmul.f32 %v909, %v1785
  %v2226 = vmul.f32 %v910, %v1787
  %v2227 = vmul.f32 %v911, %v1946
  %v2228 = vmul.f32 %v912, %v1948
  %v2229 = vmul.f32 %v913, %v2107
  %v2230 = vmul.f32 %v914, %v2109
  %v2231 = vmul.f32 %v915, %v1630
  %v2232 = vmul.f32 %v916, %v1632
  %v2233 = vmul.f32 %v917, %v1791
  %v2234 = vmul.f32 %v918, %v1793
  %v2235 = vmul.f32 %v919, %v1952
  %v2236 = vmul.f32 %v920, %v1954
  %v2237 = vmul.f32 %v921, %v2113
  %v2238 = vmul.f32 %v922, %v2115
  %v2239 = vmul.f32 %v923, %v1636
  %v2240 = vmul.f32 %v924, %v1638
  %v2241 = vmul.f32 %v925, %v1797
  %v2242 = vmul.f32 %v926, %v1799
  %v2243 = vmul.f32 %v927, %v1958
  %v2244 = vmul.f32 %v928, %v1960
  %v2245 = vmul.f32 %v929, %v2119
  %v2246 = vmul.f32 %v930, %v2121
  %v2247 = vmul.f32 %v931, %v1642
  %v2248 = vmul.f32 %v932, %v1644
  %v2249 = vmul.f32 %v933, %v1803
  %v2250 = vmul.f32 %v934, %v1805
  %v2251 = vmul.f32 %v935, %v1964
  %v2252 = vmul.f32 %v936, %v1966
  %v2253 = vmul.f32 %v937, %v2125
  %v2254 = vmul.f32 %v938, %v2127
  %v2255 = vmul.f32 %v939, %v1648
  %v2256 = vmul.f32 %v940, %v1650
  %v2257 = vmul.f32 %v941, %v1809
  %v2258 = vmul.f32 %v942, %v1811
  %v2259 = vmul.f32 %v943, %v1970
  %v2260 = vmul.f32 %v944, %v1972
  %v2261 = vmul.f32 %v945, %v2131
  %v2262 = vmul.f32 %v946, %v2133
  %v2263 = vadd.f32 %v2135, %v2143
  %v2264 = vadd.f32 %v2263, %v2151
  %v2265 = vadd.f32 %v2264, %v2159
  %v2266 = vadd.f32 %v2265, %v2167
  %v2267 = vadd.f32 %v2266, %v2175
  %v2268 = vadd.f32 %v2267, %v2183
  %v2269 = vadd.f32 %v2268, %v2191
  %v2270 = vadd.f32 %v2269, %v2199
  %v2271 = vadd.f32 %v2270, %v2207
  %v2272 = vadd.f32 %v2271, %v2215
  %v2273 = vadd.f32 %v2272, %v2223
  %v2274 = vadd.f32 %v2273, %v2231
  %v2275 = vadd.f32 %v2274, %v2239
  %v2276 = vadd.f32 %v2275, %v2247
  %v2277 = vadd.f32 %v2276, %v2255
  %v2278 = vrot.slane %v2277, 4
  %v2279 = vadd.f32 %v2277, %v2278
  %v2280 = vrot.slane %v2279, 2
  %v2281 = vadd.f32 %v2279, %v2280
  %v2282 = vrot.slane %v2281, 1
  %v2283 = vadd.f32 %v2281, %v2282
  %v2284 = vadd.f32 %v2136, %v2144
  %v2285 = vadd.f32 %v2284, %v2152
  %v2286 = vadd.f32 %v2285, %v2160
  %v2287 = vadd.f32 %v2286, %v2168
  %v2288 = vadd.f32 %v2287, %v2176
  %v2289 = vadd.f32 %v2288, %v2184
  %v2290 = vadd.f32 %v2289, %v2192
  %v2291 = vadd.f32 %v2290, %v2200
  %v2292 = vadd.f32 %v2291, %v2208
  %v2293 = vadd.f32 %v2292, %v2216
  %v2294 = vadd.f32 %v2293, %v2224
  %v2295 = vadd.f32 %v2294, %v2232
  %v2296 = vadd.f32 %v2295, %v2240
  %v2297 = vadd.f32 %v2296, %v2248
  %v2298 = vadd.f32 %v2297, %v2256
  %v2299 = vrot.slane %v2298, 4
  %v2300 = vadd.f32 %v2298, %v2299
  %v2301 = vrot.slane %v2300, 2
  %v2302 = vadd.f32 %v2300, %v2301
  %v2303 = vrot.slane %v2302, 1
  %v2304 = vadd.f32 %v2302, %v2303
  %v2305 = vadd.f32 %v2137, %v2145
  %v2306 = vadd.f32 %v2305, %v2153
  %v2307 = vadd.f32 %v2306, %v2161
  %v2308 = vadd.f32 %v2307, %v2169
  %v2309 = vadd.f32 %v2308, %v2177
  %v2310 = vadd.f32 %v2309, %v2185
  %v2311 = vadd.f32 %v2310, %v2193
  %v2312 = vadd.f32 %v2311, %v2201
  %v2313 = vadd.f32 %v2312, %v2209
  %v2314 = vadd.f32 %v2313, %v2217
  %v2315 = vadd.f32 %v2314, %v2225
  %v2316 = vadd.f32 %v2315, %v2233
  %v2317 = vadd.f32 %v2316, %v2241
  %v2318 = vadd.f32 %v2317, %v2249
  %v2319 = vadd.f32 %v2318, %v2257
  %v2320 = vrot.slane %v2319, 4
  %v2321 = vadd.f32 %v2319, %v2320
  %v2322 = vrot.slane %v2321, 2
  %v2323 = vadd.f32 %v2321, %v2322
  %v2324 = vrot.slane %v2323, 1
  %v2325 = vadd.f32 %v2323, %v2324
  %v2326 = vadd.f32 %v2138, %v2146
  %v2327 = vadd.f32 %v2326, %v2154
  %v2328 = vadd.f32 %v2327, %v2162
  %v2329 = vadd.f32 %v2328, %v2170
  %v2330 = vadd.f32 %v2329, %v2178
  %v2331 = vadd.f32 %v2330, %v2186
  %v2332 = vadd.f32 %v2331, %v2194
  %v2333 = vadd.f32 %v2332, %v2202
  %v2334 = vadd.f32 %v2333, %v2210
  %v2335 = vadd.f32 %v2334, %v2218
  %v2336 = vadd.f32 %v2335, %v2226
  %v2337 = vadd.f32 %v2336, %v2234
  %v2338 = vadd.f32 %v2337, %v2242
  %v2339 = vadd.f32 %v2338, %v2250
  %v2340 = vadd.f32 %v2339, %v2258
  %v2341 = vrot.slane %v2340, 4
  %v2342 = vadd.f32 %v2340, %v2341
  %v2343 = vrot.slane %v2342, 2
  %v2344 = vadd.f32 %v2342, %v2343
  %v2345 = vrot.slane %v2344, 1
  %v2346 = vadd.f32 %v2344, %v2345
  %v2347 = vadd.f32 %v2139, %v2147
  %v2348 = vadd.f32 %v2347, %v2155
  %v2349 = vadd.f32 %v2348, %v2163
  %v2350 = vadd.f32 %v2349, %v2171
  %v2351 = vadd.f32 %v2350, %v2179
  %v2352 = vadd.f32 %v2351, %v2187
  %v2353 = vadd.f32 %v2352, %v2195
  %v2354 = vadd.f32 %v2353, %v2203
  %v2355 = vadd.f32 %v2354, %v2211
  %v2356 = vadd.f32 %v2355, %v2219
  %v2357 = vadd.f32 %v2356, %v2227
  %v2358 = vadd.f32 %v2357, %v2235
  %v2359 = vadd.f32 %v2358, %v2243
  %v2360 = vadd.f32 %v2359, %v2251
  %v2361 = vadd.f32 %v2360, %v2259
  %v2362 = vrot.slane %v2361, 4
  %v2363 = vadd.f32 %v2361, %v2362
  %v2364 = vrot.slane %v2363, 2
  %v2365 = vadd.f32 %v2363, %v2364
  %v2366 = vrot.slane %v2365, 1
  %v2367 = vadd.f32 %v2365, %v2366
  %v2368 = vadd.f32 %v2140, %v2148
  %v2369 = vadd.f32 %v2368, %v2156
  %v2370 = vadd.f32 %v2369, %v2164
  %v2371 = vadd.f32 %v2370, %v2172
  %v2372 = vadd.f32 %v2371, %v2180
  %v2373 = vadd.f32 %v2372, %v2188
  %v2374 = vadd.f32 %v2373, %v2196
  %v2375 = vadd.f32 %v2374, %v2204
  %v2376 = vadd.f32 %v2375, %v2212
  %v2377 = vadd.f32 %v2376, %v2220
  %v2378 = vadd.f32 %v2377, %v2228
  %v2379 = vadd.f32 %v2378, %v2236
  %v2380 = vadd.f32 %v2379, %v2244
  %v2381 = vadd.f32 %v2380, %v2252
  %v2382 = vadd.f32 %v2381, %v2260
  %v2383 = vrot.slane %v2382, 4
  %v2384 = vadd.f32 %v2382, %v2383
  %v2385 = vrot.slane %v2384, 2
  %v2386 = vadd.f32 %v2384, %v2385
  %v2387 = vrot.slane %v2386, 1
  %v2388 = vadd.f32 %v2386, %v2387
  %v2389 = vadd.f32 %v2141, %v2149
  %v2390 = vadd.f32 %v2389, %v2157
  %v2391 = vadd.f32 %v2390, %v2165
  %v2392 = vadd.f32 %v2391, %v2173
  %v2393 = vadd.f32 %v2392, %v2181
  %v2394 = vadd.f32 %v2393, %v2189
  %v2395 = vadd.f32 %v2394, %v2197
  %v2396 = vadd.f32 %v2395, %v2205
  %v2397 = vadd.f32 %v2396, %v2213
  %v2398 = vadd.f32 %v2397, %v2221
  %v2399 = vadd.f32 %v2398, %v2229
  %v2400 = vadd.f32 %v2399, %v2237
  %v2401 = vadd.f32 %v2400, %v2245
  %v2402 = vadd.f32 %v2401, %v2253
  %v2403 = vadd.f32 %v2402, %v2261
  %v2404 = vrot.slane %v2403, 4
  %v2405 = vadd.f32 %v2403, %v2404
  %v2406 = vrot.slane %v2405, 2
  %v2407 = vadd.f32 %v2405, %v2406
  %v2408 = vrot.slane %v2407, 1
  %v2409 = vadd.f32 %v2407, %v2408
  %v2410 = vadd.f32 %v2142, %v2150
  %v2411 = vadd.f32 %v2410, %v2158
  %v2412 = vadd.f32 %v2411, %v2166
  %v2413 = vadd.f32 %v2412, %v2174
  %v2414 = vadd.f32 %v2413, %v2182
  %v2415 = vadd.f32 %v2414, %v2190
  %v2416 = vadd.f32 %v2415, %v2198
  %v2417 = vadd.f32 %v2416, %v2206
  %v2418 = vadd.f32 %v2417, %v2214
  %v2419 = vadd.f32 %v2418, %v2222
  %v2420 = vadd.f32 %v2419, %v2230
  %v2421 = vadd.f32 %v2420, %v2238
  %v2422 = vadd.f32 %v2421, %v2246
  %v2423 = vadd.f32 %v2422, %v2254
  %v2424 = vadd.f32 %v2423, %v2262
  %v2425 = vrot.slane %v2424, 4
  %v2426 = vadd.f32 %v2424, %v2425
  %v2427 = vrot.slane %v2426, 2
  %v2428 = vadd.f32 %v2426, %v2427
  %v2429 = vrot.slane %v2428, 1
  %v2430 = vadd.f32 %v2428, %v2429
  %v2431 = vmul.f32 %v1274, %v1274
  %v2432 = vmul.f32 %v1276, %v1276
  %v2433 = vmul.f32 %v1345, %v1345
  %v2434 = vmul.f32 %v1347, %v1347
  %v2435 = vmul.f32 %v1416, %v1416
  %v2436 = vmul.f32 %v1418, %v1418
  %v2437 = vmul.f32 %v1487, %v1487
  %v2438 = vmul.f32 %v1489, %v1489
  %v2439 = vsub.f32 %v2283, %v2431
  %v2440 = vsub.f32 %v2304, %v2432
  %v2441 = vsub.f32 %v2325, %v2433
  %v2442 = vsub.f32 %v2346, %v2434
  %v2443 = vsub.f32 %v2367, %v2435
  %v2444 = vsub.f32 %v2388, %v2436
  %v2445 = vsub.f32 %v2409, %v2437
  %v2446 = vsub.f32 %v2430, %v2438
  %v2447 = vmax.f32 %v2439, 0.0
  %v2448 = vmax.f32 %v2440, 0.0
  %v2449 = vmax.f32 %v2441, 0.0
  %v2450 = vmax.f32 %v2442, 0.0
  %v2451 = vmax.f32 %v2443, 0.0
  %v2452 = vmax.f32 %v2444, 0.0
  %v2453 = vmax.f32 %v2445, 0.0
  %v2454 = vmax.f32 %v2446, 0.0
  %s2455 = scalar_lea.vmem %s1, 4
  %v2456 = vld [vmem:[%s2455] ss:$8 sm:$0xf]
  %v2457 = vld [vmem:[%s2455] ss:$8 sm:$0xf0]
  %v2458 = vor.u32 %v2456, %v2457
  %v2459 = vadd.f32 %v2447, 1e-05
  %v2460 = vadd.f32 %v2448, 1e-05
  %v2461 = vadd.f32 %v2449, 1e-05
  %v2462 = vadd.f32 %v2450, 1e-05
  %v2463 = vadd.f32 %v2451, 1e-05
  %v2464 = vadd.f32 %v2452, 1e-05
  %v2465 = vadd.f32 %v2453, 1e-05
  %v2466 = vadd.f32 %v2454, 1e-05
  %v2467 = vrsqrt.pop %v2459
  %v2468 = vrsqrt.pop %v2460
  %v2469 = vrsqrt.pop %v2461
  %v2470 = vrsqrt.pop %v2462
  %v2471 = vrsqrt.pop %v2463
  %v2472 = vrsqrt.pop %v2464
  %v2473 = vrsqrt.pop %v2465
  %v2474 = vrsqrt.pop %v2466
  %v2483 = vcombine.low %v2467, %v2468
  %v2484 = vcombine.low %v2469, %v2470
  %v2485 = vcombine.low %v2471, %v2472
  %v2486 = vcombine.low %v2473, %v2474
  %v2488 = vunpack.c.l.s4 1966171168
  %v2489 = vunpack.c.0.s8 %v2488
  %v2490 = vlaneseq
  %v2491 = vshrl.u32 %v2490, 7
  %v2492 = vsub.s32 %v2489, %v2491
  %v2493 = vrot.slane %v2483, %v2492
  %v2495 = vunpack.c.l.s4 1966171168
  %v2496 = vunpack.c.0.s8 %v2495
  %v2497 = vlaneseq
  %v2498 = vshrl.u32 %v2497, 7
  %v2499 = vsub.s32 %v2496, %v2498
  %v2500 = vrot.slane %v2484, %v2499
  %v2502 = vunpack.c.l.s4 1966171168
  %v2503 = vunpack.c.0.s8 %v2502
  %v2504 = vlaneseq
  %v2505 = vshrl.u32 %v2504, 7
  %v2506 = vsub.s32 %v2503, %v2505
  %v2507 = vrot.slane %v2485, %v2506
  %v2509 = vunpack.c.l.s4 1966171168
  %v2510 = vunpack.c.0.s8 %v2509
  %v2511 = vlaneseq
  %v2512 = vshrl.u32 %v2511, 7
  %v2513 = vsub.s32 %v2510, %v2512
  %v2514 = vrot.slane %v2486, %v2513
  %v2515 = vcombine.low %v2493, %v2500
  %v2516 = vcombine.low %v2507, %v2514
  %v2518 = vunpack.c.l.s4 1966171168
  %v2519 = vunpack.c.0.s8 %v2518
  %v2520 = vlaneseq
  %v2521 = vshrl.u32 %v2520, 7
  %v2522 = vsub.s32 %v2519, %v2521
  %v2523 = vrot.slane %v2515, %v2522
  %v2525 = vunpack.c.l.s4 1966171168
  %v2526 = vunpack.c.0.s8 %v2525
  %v2527 = vlaneseq
  %v2528 = vshrl.u32 %v2527, 7
  %v2529 = vsub.s32 %v2526, %v2528
  %v2530 = vrot.slane %v2516, %v2529
  %v2531 = vcombine.low %v2523, %v2530
  %v2533 = vmul.f32 %v2458, %v2531
  %s2534 = scalar_lea.vmem %s1, 5
  %v2535 = vld [vmem:[%s2534] ss:$8 sm:$0xf]
  %v2536 = vld [vmem:[%s2534] ss:$8 sm:$0xf0]
  %v2537 = vor.u32 %v2535, %v2536
  %v2539 = vlaneseq
  %v2540 = vshrl.u32 %v2539, 7
  %v2541 = vsub.s32 0, %v2540
  %v2542 = vrot.slane %v2533, %v2541
  %v2543 = vlaneseq
  %v2544 = vshrl.u32 %v2543, 7
  %v2545 = vsub.s32 1, %v2544
  %v2546 = vrot.slane %v2533, %v2545
  %v2547 = vlaneseq
  %v2548 = vshrl.u32 %v2547, 7
  %v2549 = vsub.s32 2, %v2548
  %v2550 = vrot.slane %v2533, %v2549
  %v2551 = vlaneseq
  %v2552 = vshrl.u32 %v2551, 7
  %v2553 = vsub.s32 3, %v2552
  %v2554 = vrot.slane %v2533, %v2553
  %v2555 = vlaneseq
  %v2556 = vshrl.u32 %v2555, 7
  %v2557 = vsub.s32 4, %v2556
  %v2558 = vrot.slane %v2533, %v2557
  %v2559 = vlaneseq
  %v2560 = vshrl.u32 %v2559, 7
  %v2561 = vsub.s32 5, %v2560
  %v2562 = vrot.slane %v2533, %v2561
  %v2563 = vlaneseq
  %v2564 = vshrl.u32 %v2563, 7
  %v2565 = vsub.s32 6, %v2564
  %v2566 = vrot.slane %v2533, %v2565
  %v2567 = vlaneseq
  %v2568 = vshrl.u32 %v2567, 7
  %v2569 = vsub.s32 7, %v2568
  %v2570 = vrot.slane %v2533, %v2569
  %v2579 = vmul.f32 %v1274, %v2542
  %v2580 = vmul.f32 %v1276, %v2546
  %v2581 = vmul.f32 %v1345, %v2550
  %v2582 = vmul.f32 %v1347, %v2554
  %v2583 = vmul.f32 %v1416, %v2558
  %v2584 = vmul.f32 %v1418, %v2562
  %v2585 = vmul.f32 %v1487, %v2566
  %v2586 = vmul.f32 %v1489, %v2570
  %v2595 = vcombine.low %v2579, %v2580
  %v2596 = vcombine.low %v2581, %v2582
  %v2597 = vcombine.low %v2583, %v2584
  %v2598 = vcombine.low %v2585, %v2586
  %v2600 = vunpack.c.l.s4 1966171168
  %v2601 = vunpack.c.0.s8 %v2600
  %v2602 = vlaneseq
  %v2603 = vshrl.u32 %v2602, 7
  %v2604 = vsub.s32 %v2601, %v2603
  %v2605 = vrot.slane %v2595, %v2604
  %v2607 = vunpack.c.l.s4 1966171168
  %v2608 = vunpack.c.0.s8 %v2607
  %v2609 = vlaneseq
  %v2610 = vshrl.u32 %v2609, 7
  %v2611 = vsub.s32 %v2608, %v2610
  %v2612 = vrot.slane %v2596, %v2611
  %v2614 = vunpack.c.l.s4 1966171168
  %v2615 = vunpack.c.0.s8 %v2614
  %v2616 = vlaneseq
  %v2617 = vshrl.u32 %v2616, 7
  %v2618 = vsub.s32 %v2615, %v2617
  %v2619 = vrot.slane %v2597, %v2618
  %v2621 = vunpack.c.l.s4 1966171168
  %v2622 = vunpack.c.0.s8 %v2621
  %v2623 = vlaneseq
  %v2624 = vshrl.u32 %v2623, 7
  %v2625 = vsub.s32 %v2622, %v2624
  %v2626 = vrot.slane %v2598, %v2625
  %v2627 = vcombine.low %v2605, %v2612
  %v2628 = vcombine.low %v2619, %v2626
  %v2630 = vunpack.c.l.s4 1966171168
  %v2631 = vunpack.c.0.s8 %v2630
  %v2632 = vlaneseq
  %v2633 = vshrl.u32 %v2632, 7
  %v2634 = vsub.s32 %v2631, %v2633
  %v2635 = vrot.slane %v2627, %v2634
  %v2637 = vunpack.c.l.s4 1966171168
  %v2638 = vunpack.c.0.s8 %v2637
  %v2639 = vlaneseq
  %v2640 = vshrl.u32 %v2639, 7
  %v2641 = vsub.s32 %v2638, %v2640
  %v2642 = vrot.slane %v2628, %v2641
  %v2643 = vcombine.low %v2635, %v2642
  %v2645 = vsub.f32 %v2537, %v2643
  %v2646 = vpack.c.bf16 %v744, %v743
  %v2647 = vpack.c.bf16 %v746, %v745
  %v2648 = vpack.c.bf16 %v748, %v747
  %v2649 = vpack.c.bf16 %v750, %v749
  %v2650 = vpack.c.bf16 %v752, %v751
  %v2651 = vpack.c.bf16 %v754, %v753
  %v2716 = vunpack.c.l.b16 %v755
  %v2717 = vunpack.c.h.b16 %v755
  %v2718 = vunpack.c.l.b16 %v756
  %v2719 = vunpack.c.h.b16 %v756
  %v2720 = vunpack.c.l.b16 %v757
  %v2721 = vunpack.c.h.b16 %v757
  %v2722 = vunpack.c.l.b16 %v758
  %v2723 = vunpack.c.h.b16 %v758
  %v2724 = vunpack.c.l.b16 %v759
  %v2725 = vunpack.c.h.b16 %v759
  %v2726 = vunpack.c.l.b16 %v760
  %v2727 = vunpack.c.h.b16 %v760
  %v2728 = vunpack.c.l.b16 %v761
  %v2729 = vunpack.c.h.b16 %v761
  %v2730 = vunpack.c.l.b16 %v762
  %v2731 = vunpack.c.h.b16 %v762
  %v2732 = vunpack.c.l.b16 %v763
  %v2733 = vunpack.c.h.b16 %v763
  %v2734 = vunpack.c.l.b16 %v764
  %v2735 = vunpack.c.h.b16 %v764
  %v2736 = vunpack.c.l.b16 %v765
  %v2737 = vunpack.c.h.b16 %v765
  %v2738 = vunpack.c.l.b16 %v766
  %v2739 = vunpack.c.h.b16 %v766
  %v2740 = vunpack.c.l.b16 %v767
  %v2741 = vunpack.c.h.b16 %v767
  %v2742 = vunpack.c.l.b16 %v768
  %v2743 = vunpack.c.h.b16 %v768
  %v2744 = vunpack.c.l.b16 %v769
  %v2745 = vunpack.c.h.b16 %v769
  %v2746 = vunpack.c.l.b16 %v770
  %v2747 = vunpack.c.h.b16 %v770
  %v2748 = vunpack.c.l.b16 %v771
  %v2749 = vunpack.c.h.b16 %v771
  %v2750 = vunpack.c.l.b16 %v772
  %v2751 = vunpack.c.h.b16 %v772
  %v2752 = vunpack.c.l.b16 %v773
  %v2753 = vunpack.c.h.b16 %v773
  %v2754 = vunpack.c.l.b16 %v774
  %v2755 = vunpack.c.h.b16 %v774
  %v2756 = vunpack.c.l.b16 %v775
  %v2757 = vunpack.c.h.b16 %v775
  %v2758 = vunpack.c.l.b16 %v776
  %v2759 = vunpack.c.h.b16 %v776
  %v2760 = vunpack.c.l.b16 %v777
  %v2761 = vunpack.c.h.b16 %v777
  %v2762 = vunpack.c.l.b16 %v778
  %v2763 = vunpack.c.h.b16 %v778
  %v2764 = vunpack.c.l.b16 %v779
  %v2765 = vunpack.c.h.b16 %v779
  %v2766 = vunpack.c.l.b16 %v780
  %v2767 = vunpack.c.h.b16 %v780
  %v2768 = vunpack.c.l.b16 %v781
  %v2769 = vunpack.c.h.b16 %v781
  %v2770 = vunpack.c.l.b16 %v782
  %v2771 = vunpack.c.h.b16 %v782
  %v2772 = vunpack.c.l.b16 %v783
  %v2773 = vunpack.c.h.b16 %v783
  %v2774 = vunpack.c.l.b16 %v784
  %v2775 = vunpack.c.h.b16 %v784
  %v2776 = vunpack.c.l.b16 %v785
  %v2777 = vunpack.c.h.b16 %v785
  %v2778 = vunpack.c.l.b16 %v786
  %v2779 = vunpack.c.h.b16 %v786
  %v2780 = vunpack.c.l.b16 %v787
  %v2781 = vunpack.c.h.b16 %v787
  %v2782 = vunpack.c.l.b16 %v788
  %v2783 = vunpack.c.h.b16 %v788
  %v2784 = vunpack.c.l.b16 %v789
  %v2785 = vunpack.c.h.b16 %v789
  %v2786 = vunpack.c.l.b16 %v790
  %v2787 = vunpack.c.h.b16 %v790
  %v2788 = vunpack.c.l.b16 %v791
  %v2789 = vunpack.c.h.b16 %v791
  %v2790 = vunpack.c.l.b16 %v792
  %v2791 = vunpack.c.h.b16 %v792
  %v2792 = vunpack.c.l.b16 %v793
  %v2793 = vunpack.c.h.b16 %v793
  %v2794 = vunpack.c.l.b16 %v794
  %v2795 = vunpack.c.h.b16 %v794
  %v2796 = vunpack.c.l.b16 %v795
  %v2797 = vunpack.c.h.b16 %v795
  %v2798 = vunpack.c.l.b16 %v796
  %v2799 = vunpack.c.h.b16 %v796
  %v2800 = vunpack.c.l.b16 %v797
  %v2801 = vunpack.c.h.b16 %v797
  %v2802 = vunpack.c.l.b16 %v798
  %v2803 = vunpack.c.h.b16 %v798
  %v2804 = vunpack.c.l.b16 %v799
  %v2805 = vunpack.c.h.b16 %v799
  %v2806 = vunpack.c.l.b16 %v800
  %v2807 = vunpack.c.h.b16 %v800
  %v2808 = vunpack.c.l.b16 %v801
  %v2809 = vunpack.c.h.b16 %v801
  %v2810 = vunpack.c.l.b16 %v802
  %v2811 = vunpack.c.h.b16 %v802
  %v2812 = vunpack.c.l.b16 %v803
  %v2813 = vunpack.c.h.b16 %v803
  %v2814 = vunpack.c.l.b16 %v804
  %v2815 = vunpack.c.h.b16 %v804
  %v2816 = vunpack.c.l.b16 %v805
  %v2817 = vunpack.c.h.b16 %v805
  %v2818 = vunpack.c.l.b16 %v806
  %v2819 = vunpack.c.h.b16 %v806
  %v2820 = vunpack.c.l.b16 %v807
  %v2821 = vunpack.c.h.b16 %v807
  %v2822 = vunpack.c.l.b16 %v808
  %v2823 = vunpack.c.h.b16 %v808
  %v2824 = vunpack.c.l.b16 %v809
  %v2825 = vunpack.c.h.b16 %v809
  %v2826 = vunpack.c.l.b16 %v810
  %v2827 = vunpack.c.h.b16 %v810
  %v2828 = vunpack.c.l.b16 %v811
  %v2829 = vunpack.c.h.b16 %v811
  %v2830 = vunpack.c.l.b16 %v812
  %v2831 = vunpack.c.h.b16 %v812
  %v2832 = vunpack.c.l.b16 %v813
  %v2833 = vunpack.c.h.b16 %v813
  %v2834 = vunpack.c.l.b16 %v814
  %v2835 = vunpack.c.h.b16 %v814
  %v2836 = vunpack.c.l.b16 %v815
  %v2837 = vunpack.c.h.b16 %v815
  %v2838 = vunpack.c.l.b16 %v816
  %v2839 = vunpack.c.h.b16 %v816
  %v2840 = vunpack.c.l.b16 %v817
  %v2841 = vunpack.c.h.b16 %v817
  %v2842 = vunpack.c.l.b16 %v818
  %v2843 = vunpack.c.h.b16 %v818
  %v2844 = vpack.c.b16 %v2724, %v2716
  %v2845 = vpack.c.b16 %v2725, %v2717
  %v2846 = vpack.c.b16 %v2726, %v2718
  %v2847 = vpack.c.b16 %v2727, %v2719
  %v2848 = vpack.c.b16 %v2728, %v2720
  %v2849 = vpack.c.b16 %v2729, %v2721
  %v2850 = vpack.c.b16 %v2730, %v2722
  %v2851 = vpack.c.b16 %v2731, %v2723
  %v2852 = vpack.c.b16 %v2740, %v2732
  %v2853 = vpack.c.b16 %v2741, %v2733
  %v2854 = vpack.c.b16 %v2742, %v2734
  %v2855 = vpack.c.b16 %v2743, %v2735
  %v2856 = vpack.c.b16 %v2744, %v2736
  %v2857 = vpack.c.b16 %v2745, %v2737
  %v2858 = vpack.c.b16 %v2746, %v2738
  %v2859 = vpack.c.b16 %v2747, %v2739
  %v2860 = vpack.c.b16 %v2756, %v2748
  %v2861 = vpack.c.b16 %v2757, %v2749
  %v2862 = vpack.c.b16 %v2758, %v2750
  %v2863 = vpack.c.b16 %v2759, %v2751
  %v2864 = vpack.c.b16 %v2760, %v2752
  %v2865 = vpack.c.b16 %v2761, %v2753
  %v2866 = vpack.c.b16 %v2762, %v2754
  %v2867 = vpack.c.b16 %v2763, %v2755
  %v2868 = vpack.c.b16 %v2772, %v2764
  %v2869 = vpack.c.b16 %v2773, %v2765
  %v2870 = vpack.c.b16 %v2774, %v2766
  %v2871 = vpack.c.b16 %v2775, %v2767
  %v2872 = vpack.c.b16 %v2776, %v2768
  %v2873 = vpack.c.b16 %v2777, %v2769
  %v2874 = vpack.c.b16 %v2778, %v2770
  %v2875 = vpack.c.b16 %v2779, %v2771
  %v2876 = vpack.c.b16 %v2788, %v2780
  %v2877 = vpack.c.b16 %v2789, %v2781
  %v2878 = vpack.c.b16 %v2790, %v2782
  %v2879 = vpack.c.b16 %v2791, %v2783
  %v2880 = vpack.c.b16 %v2792, %v2784
  %v2881 = vpack.c.b16 %v2793, %v2785
  %v2882 = vpack.c.b16 %v2794, %v2786
  %v2883 = vpack.c.b16 %v2795, %v2787
  %v2884 = vpack.c.b16 %v2804, %v2796
  %v2885 = vpack.c.b16 %v2805, %v2797
  %v2886 = vpack.c.b16 %v2806, %v2798
  %v2887 = vpack.c.b16 %v2807, %v2799
  %v2888 = vpack.c.b16 %v2808, %v2800
  %v2889 = vpack.c.b16 %v2809, %v2801
  %v2890 = vpack.c.b16 %v2810, %v2802
  %v2891 = vpack.c.b16 %v2811, %v2803
  %v2892 = vpack.c.b16 %v2820, %v2812
  %v2893 = vpack.c.b16 %v2821, %v2813
  %v2894 = vpack.c.b16 %v2822, %v2814
  %v2895 = vpack.c.b16 %v2823, %v2815
  %v2896 = vpack.c.b16 %v2824, %v2816
  %v2897 = vpack.c.b16 %v2825, %v2817
  %v2898 = vpack.c.b16 %v2826, %v2818
  %v2899 = vpack.c.b16 %v2827, %v2819
  %v2900 = vpack.c.b16 %v2836, %v2828
  %v2901 = vpack.c.b16 %v2837, %v2829
  %v2902 = vpack.c.b16 %v2838, %v2830
  %v2903 = vpack.c.b16 %v2839, %v2831
  %v2904 = vpack.c.b16 %v2840, %v2832
  %v2905 = vpack.c.b16 %v2841, %v2833
  %v2906 = vpack.c.b16 %v2842, %v2834
  %v2907 = vpack.c.b16 %v2843, %v2835
  %2972 = vmatprep.subr.bf16.mxu0 %v2845
  %2973 = vmatpush1.bf16.msra.mxu0 %v2844
  %2974 = vmatprep.subr.bf16.mxu0 %v2853
  %2975 = vmatpush1.bf16.msra.mxu0 %v2852
  %2976 = vmatprep.subr.bf16.mxu0 %v2861
  %2977 = vmatpush1.bf16.msra.mxu0 %v2860
  %2978 = vmatprep.subr.bf16.mxu0 %v2869
  %2979 = vmatpush1.bf16.msra.mxu0 %v2868
  %2980 = vmatprep.subr.bf16.mxu0 %v2877
  %2981 = vmatpush1.bf16.msra.mxu0 %v2876
  %2982 = vmatprep.subr.bf16.mxu0 %v2885
  %2983 = vmatpush1.bf16.msra.mxu0 %v2884
  %2984 = vmatprep.subr.bf16.mxu0 %v2893
  %2985 = vmatpush1.bf16.msra.mxu0 %v2892
  %2986 = vmatprep.subr.bf16.mxu0 %v2901
  %2987 = vmatpush1.bf16.msra.mxu0 %v2900
  %2988 = vmatprep.subr.bf16.mxu0 0
  %2989 = vmatpush1.bf16.msra.mxu0 0
  %2990 = vmatprep.subr.bf16.mxu0 0
  %2991 = vmatpush1.bf16.msra.mxu0 0
  %2992 = vmatprep.subr.bf16.mxu0 0
  %2993 = vmatpush1.bf16.msra.mxu0 0
  %2994 = vmatprep.subr.bf16.mxu0 0
  %2995 = vmatpush1.bf16.msra.mxu0 0
  %2996 = vmatprep.subr.bf16.mxu0 0
  %2997 = vmatpush1.bf16.msra.mxu0 0
  %2998 = vmatprep.subr.bf16.mxu0 0
  %2999 = vmatpush1.bf16.msra.mxu0 0
  %3000 = vmatprep.subr.bf16.mxu0 0
  %3001 = vmatpush1.bf16.msra.mxu0 0
  %3002 = vmatprep.subr.bf16.mxu0 0
  %3003 = vmatpush1.bf16.msra.mxu0 0
  %3004 = vmatprep.mubr.bf16.mxu0 0
  %3005 = vmatmul.mubr.bf16.gmra.mrb[0].mxu0 %v2646
  %v3006 = vpop.f32.mrb[0].mxu0
  %v3007 = vadd.f32 0.0, %v3006
  %v3008 = vpop.f32.mrb[0].mxu0
  %v3009 = vadd.f32 0.0, %v3008
  %v3010 = vpop.f32.mrb[0].mxu0
  %v3011 = vadd.f32 0.0, %v3010
  %v3012 = vpop.f32.mrb[0].mxu0
  %v3013 = vadd.f32 0.0, %v3012
  %3014 = vmatprep.mubr.bf16.mxu0 0
  %3015 = vmatmul.mubr.bf16.gmra.mrb[0].mxu0 %v2647
  %v3016 = vpop.f32.mrb[0].mxu0
  %v3017 = vadd.f32 0.0, %v3016
  %v3018 = vpop.f32.mrb[0].mxu0
  %v3019 = vadd.f32 0.0, %v3018
  %v3020 = vpop.f32.mrb[0].mxu0
  %v3021 = vadd.f32 0.0, %v3020
  %v3022 = vpop.f32.mrb[0].mxu0
  %v3023 = vadd.f32 0.0, %v3022
  %3024 = vmatprep.mubr.bf16.mxu0 0
  %3025 = vmatmul.mubr.bf16.gmra.mrb[0].mxu0 %v2648
  %v3026 = vpop.f32.mrb[0].mxu0
  %v3027 = vadd.f32 0.0, %v3026
  %v3028 = vpop.f32.mrb[0].mxu0
  %v3029 = vadd.f32 0.0, %v3028
  %v3030 = vpop.f32.mrb[0].mxu0
  %v3031 = vadd.f32 0.0, %v3030
  %v3032 = vpop.f32.mrb[0].mxu0
  %v3033 = vadd.f32 0.0, %v3032
  %3034 = vmatprep.mubr.bf16.mxu0 0
  %3035 = vmatmul.mubr.bf16.gmra.mrb[0].mxu0 %v2649
  %v3036 = vpop.f32.mrb[0].mxu0
  %v3037 = vadd.f32 0.0, %v3036
  %v3038 = vpop.f32.mrb[0].mxu0
  %v3039 = vadd.f32 0.0, %v3038
  %v3040 = vpop.f32.mrb[0].mxu0
  %v3041 = vadd.f32 0.0, %v3040
  %v3042 = vpop.f32.mrb[0].mxu0
  %v3043 = vadd.f32 0.0, %v3042
  %3044 = vmatprep.mubr.bf16.mxu0 0
  %3045 = vmatmul.mubr.bf16.gmra.mrb[0].mxu0 %v2650
  %v3046 = vpop.f32.mrb[0].mxu0
  %v3047 = vadd.f32 0.0, %v3046
  %v3048 = vpop.f32.mrb[0].mxu0
  %v3049 = vadd.f32 0.0, %v3048
  %v3050 = vpop.f32.mrb[0].mxu0
  %v3051 = vadd.f32 0.0, %v3050
  %v3052 = vpop.f32.mrb[0].mxu0
  %v3053 = vadd.f32 0.0, %v3052
  %3054 = vmatprep.mubr.bf16.mxu0 0
  %3055 = vmatmul.mubr.bf16.gmra.mrb[0].mxu0 %v2651
  %v3056 = vpop.f32.mrb[0].mxu0
  %v3057 = vadd.f32 0.0, %v3056
  %v3058 = vpop.f32.mrb[0].mxu0
  %v3059 = vadd.f32 0.0, %v3058
  %v3060 = vpop.f32.mrb[0].mxu0
  %v3061 = vadd.f32 0.0, %v3060
  %v3062 = vpop.f32.mrb[0].mxu0
  %v3063 = vadd.f32 0.0, %v3062
  %3064 = vdwg.mxu0
  %3065 = vmatprep.subr.bf16.mxu0 %v2847
  %3066 = vmatpush1.bf16.msra.mxu0 %v2846
  %3067 = vmatprep.subr.bf16.mxu0 %v2855
  %3068 = vmatpush1.bf16.msra.mxu0 %v2854
  %3069 = vmatprep.subr.bf16.mxu0 %v2863
  %3070 = vmatpush1.bf16.msra.mxu0 %v2862
  %3071 = vmatprep.subr.bf16.mxu0 %v2871
  %3072 = vmatpush1.bf16.msra.mxu0 %v2870
  %3073 = vmatprep.subr.bf16.mxu0 %v2879
  %3074 = vmatpush1.bf16.msra.mxu0 %v2878
  %3075 = vmatprep.subr.bf16.mxu0 %v2887
  %3076 = vmatpush1.bf16.msra.mxu0 %v2886
  %3077 = vmatprep.subr.bf16.mxu0 %v2895
  %3078 = vmatpush1.bf16.msra.mxu0 %v2894
  %3079 = vmatprep.subr.bf16.mxu0 %v2903
  %3080 = vmatpush1.bf16.msra.mxu0 %v2902
  %3081 = vmatprep.subr.bf16.mxu0 0
  %3082 = vmatpush1.bf16.msra.mxu0 0
  %3083 = vmatprep.subr.bf16.mxu0 0
  %3084 = vmatpush1.bf16.msra.mxu0 0
  %3085 = vmatprep.subr.bf16.mxu0 0
  %3086 = vmatpush1.bf16.msra.mxu0 0
  %3087 = vmatprep.subr.bf16.mxu0 0
  %3088 = vmatpush1.bf16.msra.mxu0 0
  %3089 = vmatprep.subr.bf16.mxu0 0
  %3090 = vmatpush1.bf16.msra.mxu0 0
  %3091 = vmatprep.subr.bf16.mxu0 0
  %3092 = vmatpush1.bf16.msra.mxu0 0
  %3093 = vmatprep.subr.bf16.mxu0 0
  %3094 = vmatpush1.bf16.msra.mxu0 0
  %3095 = vmatprep.subr.bf16.mxu0 0
  %3096 = vmatpush1.bf16.msra.mxu0 0
  %3097 = vmatprep.mubr.bf16.mxu0 0
  %3098 = vmatmul.mubr.bf16.gmra.mrb[0].mxu0 %v2646
  %v3099 = vpop.f32.mrb[0].mxu0
  %v3100 = vadd.f32 0.0, %v3099
  %v3101 = vpop.f32.mrb[0].mxu0
  %v3102 = vadd.f32 0.0, %v3101
  %v3103 = vpop.f32.mrb[0].mxu0
  %v3104 = vadd.f32 0.0, %v3103
  %v3105 = vpop.f32.mrb[0].mxu0
  %v3106 = vadd.f32 0.0, %v3105
  %3107 = vmatprep.mubr.bf16.mxu0 0
  %3108 = vmatmul.mubr.bf16.gmra.mrb[0].mxu0 %v2647
  %v3109 = vpop.f32.mrb[0].mxu0
  %v3110 = vadd.f32 0.0, %v3109
  %v3111 = vpop.f32.mrb[0].mxu0
  %v3112 = vadd.f32 0.0, %v3111
  %v3113 = vpop.f32.mrb[0].mxu0
  %v3114 = vadd.f32 0.0, %v3113
  %v3115 = vpop.f32.mrb[0].mxu0
  %v3116 = vadd.f32 0.0, %v3115
  %3117 = vmatprep.mubr.bf16.mxu0 0
  %3118 = vmatmul.mubr.bf16.gmra.mrb[0].mxu0 %v2648
  %v3119 = vpop.f32.mrb[0].mxu0
  %v3120 = vadd.f32 0.0, %v3119
  %v3121 = vpop.f32.mrb[0].mxu0
  %v3122 = vadd.f32 0.0, %v3121
  %v3123 = vpop.f32.mrb[0].mxu0
  %v3124 = vadd.f32 0.0, %v3123
  %v3125 = vpop.f32.mrb[0].mxu0
  %v3126 = vadd.f32 0.0, %v3125
  %3127 = vmatprep.mubr.bf16.mxu0 0
  %3128 = vmatmul.mubr.bf16.gmra.mrb[0].mxu0 %v2649
  %v3129 = vpop.f32.mrb[0].mxu0
  %v3130 = vadd.f32 0.0, %v3129
  %v3131 = vpop.f32.mrb[0].mxu0
  %v3132 = vadd.f32 0.0, %v3131
  %v3133 = vpop.f32.mrb[0].mxu0
  %v3134 = vadd.f32 0.0, %v3133
  %v3135 = vpop.f32.mrb[0].mxu0
  %v3136 = vadd.f32 0.0, %v3135
  %3137 = vmatprep.mubr.bf16.mxu0 0
  %3138 = vmatmul.mubr.bf16.gmra.mrb[0].mxu0 %v2650
  %v3139 = vpop.f32.mrb[0].mxu0
  %v3140 = vadd.f32 0.0, %v3139
  %v3141 = vpop.f32.mrb[0].mxu0
  %v3142 = vadd.f32 0.0, %v3141
  %v3143 = vpop.f32.mrb[0].mxu0
  %v3144 = vadd.f32 0.0, %v3143
  %v3145 = vpop.f32.mrb[0].mxu0
  %v3146 = vadd.f32 0.0, %v3145
  %3147 = vmatprep.mubr.bf16.mxu0 0
  %3148 = vmatmul.mubr.bf16.gmra.mrb[0].mxu0 %v2651
  %v3149 = vpop.f32.mrb[0].mxu0
  %v3150 = vadd.f32 0.0, %v3149
  %v3151 = vpop.f32.mrb[0].mxu0
  %v3152 = vadd.f32 0.0, %v3151
  %v3153 = vpop.f32.mrb[0].mxu0
  %v3154 = vadd.f32 0.0, %v3153
  %v3155 = vpop.f32.mrb[0].mxu0
  %v3156 = vadd.f32 0.0, %v3155
  %3157 = vdwg.mxu0
  %3158 = vmatprep.subr.bf16.mxu0 %v2849
  %3159 = vmatpush1.bf16.msra.mxu0 %v2848
  %3160 = vmatprep.subr.bf16.mxu0 %v2857
  %3161 = vmatpush1.bf16.msra.mxu0 %v2856
  %3162 = vmatprep.subr.bf16.mxu0 %v2865
  %3163 = vmatpush1.bf16.msra.mxu0 %v2864
  %3164 = vmatprep.subr.bf16.mxu0 %v2873
  %3165 = vmatpush1.bf16.msra.mxu0 %v2872
  %3166 = vmatprep.subr.bf16.mxu0 %v2881
  %3167 = vmatpush1.bf16.msra.mxu0 %v2880
  %3168 = vmatprep.subr.bf16.mxu0 %v2889
  %3169 = vmatpush1.bf16.msra.mxu0 %v2888
  %3170 = vmatprep.subr.bf16.mxu0 %v2897
  %3171 = vmatpush1.bf16.msra.mxu0 %v2896
  %3172 = vmatprep.subr.bf16.mxu0 %v2905
  %3173 = vmatpush1.bf16.msra.mxu0 %v2904
  %3174 = vmatprep.subr.bf16.mxu0 0
  %3175 = vmatpush1.bf16.msra.mxu0 0
  %3176 = vmatprep.subr.bf16.mxu0 0
  %3177 = vmatpush1.bf16.msra.mxu0 0
  %3178 = vmatprep.subr.bf16.mxu0 0
  %3179 = vmatpush1.bf16.msra.mxu0 0
  %3180 = vmatprep.subr.bf16.mxu0 0
  %3181 = vmatpush1.bf16.msra.mxu0 0
  %3182 = vmatprep.subr.bf16.mxu0 0
  %3183 = vmatpush1.bf16.msra.mxu0 0
  %3184 = vmatprep.subr.bf16.mxu0 0
  %3185 = vmatpush1.bf16.msra.mxu0 0
  %3186 = vmatprep.subr.bf16.mxu0 0
  %3187 = vmatpush1.bf16.msra.mxu0 0
  %3188 = vmatprep.subr.bf16.mxu0 0
  %3189 = vmatpush1.bf16.msra.mxu0 0
  %3190 = vmatprep.mubr.bf16.mxu0 0
  %3191 = vmatmul.mubr.bf16.gmra.mrb[0].mxu0 %v2646
  %v3192 = vpop.f32.mrb[0].mxu0
  %v3193 = vadd.f32 0.0, %v3192
  %v3194 = vpop.f32.mrb[0].mxu0
  %v3195 = vadd.f32 0.0, %v3194
  %v3196 = vpop.f32.mrb[0].mxu0
  %v3197 = vadd.f32 0.0, %v3196
  %v3198 = vpop.f32.mrb[0].mxu0
  %v3199 = vadd.f32 0.0, %v3198
  %3200 = vmatprep.mubr.bf16.mxu0 0
  %3201 = vmatmul.mubr.bf16.gmra.mrb[0].mxu0 %v2647
  %v3202 = vpop.f32.mrb[0].mxu0
  %v3203 = vadd.f32 0.0, %v3202
  %v3204 = vpop.f32.mrb[0].mxu0
  %v3205 = vadd.f32 0.0, %v3204
  %v3206 = vpop.f32.mrb[0].mxu0
  %v3207 = vadd.f32 0.0, %v3206
  %v3208 = vpop.f32.mrb[0].mxu0
  %v3209 = vadd.f32 0.0, %v3208
  %3210 = vmatprep.mubr.bf16.mxu0 0
  %3211 = vmatmul.mubr.bf16.gmra.mrb[0].mxu0 %v2648
  %v3212 = vpop.f32.mrb[0].mxu0
  %v3213 = vadd.f32 0.0, %v3212
  %v3214 = vpop.f32.mrb[0].mxu0
  %v3215 = vadd.f32 0.0, %v3214
  %v3216 = vpop.f32.mrb[0].mxu0
  %v3217 = vadd.f32 0.0, %v3216
  %v3218 = vpop.f32.mrb[0].mxu0
  %v3219 = vadd.f32 0.0, %v3218
  %3220 = vmatprep.mubr.bf16.mxu0 0
  %3221 = vmatmul.mubr.bf16.gmra.mrb[0].mxu0 %v2649
  %v3222 = vpop.f32.mrb[0].mxu0
  %v3223 = vadd.f32 0.0, %v3222
  %v3224 = vpop.f32.mrb[0].mxu0
  %v3225 = vadd.f32 0.0, %v3224
  %v3226 = vpop.f32.mrb[0].mxu0
  %v3227 = vadd.f32 0.0, %v3226
  %v3228 = vpop.f32.mrb[0].mxu0
  %v3229 = vadd.f32 0.0, %v3228
  %3230 = vmatprep.mubr.bf16.mxu0 0
  %3231 = vmatmul.mubr.bf16.gmra.mrb[0].mxu0 %v2650
  %v3232 = vpop.f32.mrb[0].mxu0
  %v3233 = vadd.f32 0.0, %v3232
  %v3234 = vpop.f32.mrb[0].mxu0
  %v3235 = vadd.f32 0.0, %v3234
  %v3236 = vpop.f32.mrb[0].mxu0
  %v3237 = vadd.f32 0.0, %v3236
  %v3238 = vpop.f32.mrb[0].mxu0
  %v3239 = vadd.f32 0.0, %v3238
  %3240 = vmatprep.mubr.bf16.mxu0 0
  %3241 = vmatmul.mubr.bf16.gmra.mrb[0].mxu0 %v2651
  %v3242 = vpop.f32.mrb[0].mxu0
  %v3243 = vadd.f32 0.0, %v3242
  %v3244 = vpop.f32.mrb[0].mxu0
  %v3245 = vadd.f32 0.0, %v3244
  %v3246 = vpop.f32.mrb[0].mxu0
  %v3247 = vadd.f32 0.0, %v3246
  %v3248 = vpop.f32.mrb[0].mxu0
  %v3249 = vadd.f32 0.0, %v3248
  %3250 = vdwg.mxu0
  %3251 = vmatprep.subr.bf16.mxu0 %v2851
  %3252 = vmatpush1.bf16.msra.mxu0 %v2850
  %3253 = vmatprep.subr.bf16.mxu0 %v2859
  %3254 = vmatpush1.bf16.msra.mxu0 %v2858
  %3255 = vmatprep.subr.bf16.mxu0 %v2867
  %3256 = vmatpush1.bf16.msra.mxu0 %v2866
  %3257 = vmatprep.subr.bf16.mxu0 %v2875
  %3258 = vmatpush1.bf16.msra.mxu0 %v2874
  %3259 = vmatprep.subr.bf16.mxu0 %v2883
  %3260 = vmatpush1.bf16.msra.mxu0 %v2882
  %3261 = vmatprep.subr.bf16.mxu0 %v2891
  %3262 = vmatpush1.bf16.msra.mxu0 %v2890
  %3263 = vmatprep.subr.bf16.mxu0 %v2899
  %3264 = vmatpush1.bf16.msra.mxu0 %v2898
  %3265 = vmatprep.subr.bf16.mxu0 %v2907
  %3266 = vmatpush1.bf16.msra.mxu0 %v2906
  %3267 = vmatprep.subr.bf16.mxu0 0
  %3268 = vmatpush1.bf16.msra.mxu0 0
  %3269 = vmatprep.subr.bf16.mxu0 0
  %3270 = vmatpush1.bf16.msra.mxu0 0
  %3271 = vmatprep.subr.bf16.mxu0 0
  %3272 = vmatpush1.bf16.msra.mxu0 0
  %3273 = vmatprep.subr.bf16.mxu0 0
  %3274 = vmatpush1.bf16.msra.mxu0 0
  %3275 = vmatprep.subr.bf16.mxu0 0
  %3276 = vmatpush1.bf16.msra.mxu0 0
  %3277 = vmatprep.subr.bf16.mxu0 0
  %3278 = vmatpush1.bf16.msra.mxu0 0
  %3279 = vmatprep.subr.bf16.mxu0 0
  %3280 = vmatpush1.bf16.msra.mxu0 0
  %3281 = vmatprep.subr.bf16.mxu0 0
  %3282 = vmatpush1.bf16.msra.mxu0 0
  %3283 = vmatprep.mubr.bf16.mxu0 0
  %3284 = vmatmul.mubr.bf16.gmra.mrb[0].mxu0 %v2646
  %v3285 = vpop.f32.mrb[0].mxu0
  %v3286 = vadd.f32 0.0, %v3285
  %v3287 = vpop.f32.mrb[0].mxu0
  %v3288 = vadd.f32 0.0, %v3287
  %v3289 = vpop.f32.mrb[0].mxu0
  %v3290 = vadd.f32 0.0, %v3289
  %v3291 = vpop.f32.mrb[0].mxu0
  %v3292 = vadd.f32 0.0, %v3291
  %3293 = vmatprep.mubr.bf16.mxu0 0
  %3294 = vmatmul.mubr.bf16.gmra.mrb[0].mxu0 %v2647
  %v3295 = vpop.f32.mrb[0].mxu0
  %v3296 = vadd.f32 0.0, %v3295
  %v3297 = vpop.f32.mrb[0].mxu0
  %v3298 = vadd.f32 0.0, %v3297
  %v3299 = vpop.f32.mrb[0].mxu0
  %v3300 = vadd.f32 0.0, %v3299
  %v3301 = vpop.f32.mrb[0].mxu0
  %v3302 = vadd.f32 0.0, %v3301
  %3303 = vmatprep.mubr.bf16.mxu0 0
  %3304 = vmatmul.mubr.bf16.gmra.mrb[0].mxu0 %v2648
  %v3305 = vpop.f32.mrb[0].mxu0
  %v3306 = vadd.f32 0.0, %v3305
  %v3307 = vpop.f32.mrb[0].mxu0
  %v3308 = vadd.f32 0.0, %v3307
  %v3309 = vpop.f32.mrb[0].mxu0
  %v3310 = vadd.f32 0.0, %v3309
  %v3311 = vpop.f32.mrb[0].mxu0
  %v3312 = vadd.f32 0.0, %v3311
  %3313 = vmatprep.mubr.bf16.mxu0 0
  %3314 = vmatmul.mubr.bf16.gmra.mrb[0].mxu0 %v2649
  %v3315 = vpop.f32.mrb[0].mxu0
  %v3316 = vadd.f32 0.0, %v3315
  %v3317 = vpop.f32.mrb[0].mxu0
  %v3318 = vadd.f32 0.0, %v3317
  %v3319 = vpop.f32.mrb[0].mxu0
  %v3320 = vadd.f32 0.0, %v3319
  %v3321 = vpop.f32.mrb[0].mxu0
  %v3322 = vadd.f32 0.0, %v3321
  %3323 = vmatprep.mubr.bf16.mxu0 0
  %3324 = vmatmul.mubr.bf16.gmra.mrb[0].mxu0 %v2650
  %v3325 = vpop.f32.mrb[0].mxu0
  %v3326 = vadd.f32 0.0, %v3325
  %v3327 = vpop.f32.mrb[0].mxu0
  %v3328 = vadd.f32 0.0, %v3327
  %v3329 = vpop.f32.mrb[0].mxu0
  %v3330 = vadd.f32 0.0, %v3329
  %v3331 = vpop.f32.mrb[0].mxu0
  %v3332 = vadd.f32 0.0, %v3331
  %3333 = vmatprep.mubr.bf16.mxu0 0
  %3334 = vmatmul.mubr.bf16.gmra.mrb[0].mxu0 %v2651
  %v3335 = vpop.f32.mrb[0].mxu0
  %v3336 = vadd.f32 0.0, %v3335
  %v3337 = vpop.f32.mrb[0].mxu0
  %v3338 = vadd.f32 0.0, %v3337
  %v3339 = vpop.f32.mrb[0].mxu0
  %v3340 = vadd.f32 0.0, %v3339
  %v3341 = vpop.f32.mrb[0].mxu0
  %v3342 = vadd.f32 0.0, %v3341
  %3343 = vdwg.mxu0
  %v3344 = vmul.f32 %v3007, %v2542
  %v3345 = vmul.f32 %v3009, %v2546
  %v3346 = vmul.f32 %v3100, %v2550
  %v3347 = vmul.f32 %v3102, %v2554
  %v3348 = vmul.f32 %v3193, %v2558
  %v3349 = vmul.f32 %v3195, %v2562
  %v3350 = vmul.f32 %v3286, %v2566
  %v3351 = vmul.f32 %v3288, %v2570
  %v3352 = vmul.f32 %v3011, %v2542
  %v3353 = vmul.f32 %v3013, %v2546
  %v3354 = vmul.f32 %v3104, %v2550
  %v3355 = vmul.f32 %v3106, %v2554
  %v3356 = vmul.f32 %v3197, %v2558
  %v3357 = vmul.f32 %v3199, %v2562
  %v3358 = vmul.f32 %v3290, %v2566
  %v3359 = vmul.f32 %v3292, %v2570
  %v3360 = vmul.f32 %v3017, %v2542
  %v3361 = vmul.f32 %v3019, %v2546
  %v3362 = vmul.f32 %v3110, %v2550
  %v3363 = vmul.f32 %v3112, %v2554
  %v3364 = vmul.f32 %v3203, %v2558
  %v3365 = vmul.f32 %v3205, %v2562
  %v3366 = vmul.f32 %v3296, %v2566
  %v3367 = vmul.f32 %v3298, %v2570
  %v3368 = vmul.f32 %v3021, %v2542
  %v3369 = vmul.f32 %v3023, %v2546
  %v3370 = vmul.f32 %v3114, %v2550
  %v3371 = vmul.f32 %v3116, %v2554
  %v3372 = vmul.f32 %v3207, %v2558
  %v3373 = vmul.f32 %v3209, %v2562
  %v3374 = vmul.f32 %v3300, %v2566
  %v3375 = vmul.f32 %v3302, %v2570
  %v3376 = vmul.f32 %v3027, %v2542
  %v3377 = vmul.f32 %v3029, %v2546
  %v3378 = vmul.f32 %v3120, %v2550
  %v3379 = vmul.f32 %v3122, %v2554
  %v3380 = vmul.f32 %v3213, %v2558
  %v3381 = vmul.f32 %v3215, %v2562
  %v3382 = vmul.f32 %v3306, %v2566
  %v3383 = vmul.f32 %v3308, %v2570
  %v3384 = vmul.f32 %v3031, %v2542
  %v3385 = vmul.f32 %v3033, %v2546
  %v3386 = vmul.f32 %v3124, %v2550
  %v3387 = vmul.f32 %v3126, %v2554
  %v3388 = vmul.f32 %v3217, %v2558
  %v3389 = vmul.f32 %v3219, %v2562
  %v3390 = vmul.f32 %v3310, %v2566
  %v3391 = vmul.f32 %v3312, %v2570
  %v3392 = vmul.f32 %v3037, %v2542
  %v3393 = vmul.f32 %v3039, %v2546
  %v3394 = vmul.f32 %v3130, %v2550
  %v3395 = vmul.f32 %v3132, %v2554
  %v3396 = vmul.f32 %v3223, %v2558
  %v3397 = vmul.f32 %v3225, %v2562
  %v3398 = vmul.f32 %v3316, %v2566
  %v3399 = vmul.f32 %v3318, %v2570
  %v3400 = vmul.f32 %v3041, %v2542
  %v3401 = vmul.f32 %v3043, %v2546
  %v3402 = vmul.f32 %v3134, %v2550
  %v3403 = vmul.f32 %v3136, %v2554
  %v3404 = vmul.f32 %v3227, %v2558
  %v3405 = vmul.f32 %v3229, %v2562
  %v3406 = vmul.f32 %v3320, %v2566
  %v3407 = vmul.f32 %v3322, %v2570
  %v3408 = vmul.f32 %v3047, %v2542
  %v3409 = vmul.f32 %v3049, %v2546
  %v3410 = vmul.f32 %v3140, %v2550
  %v3411 = vmul.f32 %v3142, %v2554
  %v3412 = vmul.f32 %v3233, %v2558
  %v3413 = vmul.f32 %v3235, %v2562
  %v3414 = vmul.f32 %v3326, %v2566
  %v3415 = vmul.f32 %v3328, %v2570
  %v3416 = vmul.f32 %v3051, %v2542
  %v3417 = vmul.f32 %v3053, %v2546
  %v3418 = vmul.f32 %v3144, %v2550
  %v3419 = vmul.f32 %v3146, %v2554
  %v3420 = vmul.f32 %v3237, %v2558
  %v3421 = vmul.f32 %v3239, %v2562
  %v3422 = vmul.f32 %v3330, %v2566
  %v3423 = vmul.f32 %v3332, %v2570
  %v3424 = vmul.f32 %v3057, %v2542
  %v3425 = vmul.f32 %v3059, %v2546
  %v3426 = vmul.f32 %v3150, %v2550
  %v3427 = vmul.f32 %v3152, %v2554
  %v3428 = vmul.f32 %v3243, %v2558
  %v3429 = vmul.f32 %v3245, %v2562
  %v3430 = vmul.f32 %v3336, %v2566
  %v3431 = vmul.f32 %v3338, %v2570
  %v3432 = vmul.f32 %v3061, %v2542
  %v3433 = vmul.f32 %v3063, %v2546
  %v3434 = vmul.f32 %v3154, %v2550
  %v3435 = vmul.f32 %v3156, %v2554
  %v3436 = vmul.f32 %v3247, %v2558
  %v3437 = vmul.f32 %v3249, %v2562
  %v3438 = vmul.f32 %v3340, %v2566
  %v3439 = vmul.f32 %v3342, %v2570
  %v3441 = vlaneseq
  %v3442 = vshrl.u32 %v3441, 7
  %v3443 = vsub.s32 0, %v3442
  %v3444 = vrot.slane %v2645, %v3443
  %v3445 = vlaneseq
  %v3446 = vshrl.u32 %v3445, 7
  %v3447 = vsub.s32 1, %v3446
  %v3448 = vrot.slane %v2645, %v3447
  %v3449 = vlaneseq
  %v3450 = vshrl.u32 %v3449, 7
  %v3451 = vsub.s32 2, %v3450
  %v3452 = vrot.slane %v2645, %v3451
  %v3453 = vlaneseq
  %v3454 = vshrl.u32 %v3453, 7
  %v3455 = vsub.s32 3, %v3454
  %v3456 = vrot.slane %v2645, %v3455
  %v3457 = vlaneseq
  %v3458 = vshrl.u32 %v3457, 7
  %v3459 = vsub.s32 4, %v3458
  %v3460 = vrot.slane %v2645, %v3459
  %v3461 = vlaneseq
  %v3462 = vshrl.u32 %v3461, 7
  %v3463 = vsub.s32 5, %v3462
  %v3464 = vrot.slane %v2645, %v3463
  %v3465 = vlaneseq
  %v3466 = vshrl.u32 %v3465, 7
  %v3467 = vsub.s32 6, %v3466
  %v3468 = vrot.slane %v2645, %v3467
  %v3469 = vlaneseq
  %v3470 = vshrl.u32 %v3469, 7
  %v3471 = vsub.s32 7, %v3470
  %v3472 = vrot.slane %v2645, %v3471
  %v3481 = vadd.f32 %v3344, %v3444
  %v3482 = vadd.f32 %v3345, %v3448
  %v3483 = vadd.f32 %v3346, %v3452
  %v3484 = vadd.f32 %v3347, %v3456
  %v3485 = vadd.f32 %v3348, %v3460
  %v3486 = vadd.f32 %v3349, %v3464
  %v3487 = vadd.f32 %v3350, %v3468
  %v3488 = vadd.f32 %v3351, %v3472
  %v3489 = vadd.f32 %v3352, %v3444
  %v3490 = vadd.f32 %v3353, %v3448
  %v3491 = vadd.f32 %v3354, %v3452
  %v3492 = vadd.f32 %v3355, %v3456
  %v3493 = vadd.f32 %v3356, %v3460
  %v3494 = vadd.f32 %v3357, %v3464
  %v3495 = vadd.f32 %v3358, %v3468
  %v3496 = vadd.f32 %v3359, %v3472
  %v3497 = vadd.f32 %v3360, %v3444
  %v3498 = vadd.f32 %v3361, %v3448
  %v3499 = vadd.f32 %v3362, %v3452
  %v3500 = vadd.f32 %v3363, %v3456
  %v3501 = vadd.f32 %v3364, %v3460
  %v3502 = vadd.f32 %v3365, %v3464
  %v3503 = vadd.f32 %v3366, %v3468
  %v3504 = vadd.f32 %v3367, %v3472
  %v3505 = vadd.f32 %v3368, %v3444
  %v3506 = vadd.f32 %v3369, %v3448
  %v3507 = vadd.f32 %v3370, %v3452
  %v3508 = vadd.f32 %v3371, %v3456
  %v3509 = vadd.f32 %v3372, %v3460
  %v3510 = vadd.f32 %v3373, %v3464
  %v3511 = vadd.f32 %v3374, %v3468
  %v3512 = vadd.f32 %v3375, %v3472
  %v3513 = vadd.f32 %v3376, %v3444
  %v3514 = vadd.f32 %v3377, %v3448
  %v3515 = vadd.f32 %v3378, %v3452
  %v3516 = vadd.f32 %v3379, %v3456
  %v3517 = vadd.f32 %v3380, %v3460
  %v3518 = vadd.f32 %v3381, %v3464
  %v3519 = vadd.f32 %v3382, %v3468
  %v3520 = vadd.f32 %v3383, %v3472
  %v3521 = vadd.f32 %v3384, %v3444
  %v3522 = vadd.f32 %v3385, %v3448
  %v3523 = vadd.f32 %v3386, %v3452
  %v3524 = vadd.f32 %v3387, %v3456
  %v3525 = vadd.f32 %v3388, %v3460
  %v3526 = vadd.f32 %v3389, %v3464
  %v3527 = vadd.f32 %v3390, %v3468
  %v3528 = vadd.f32 %v3391, %v3472
  %v3529 = vadd.f32 %v3392, %v3444
  %v3530 = vadd.f32 %v3393, %v3448
  %v3531 = vadd.f32 %v3394, %v3452
  %v3532 = vadd.f32 %v3395, %v3456
  %v3533 = vadd.f32 %v3396, %v3460
  %v3534 = vadd.f32 %v3397, %v3464
  %v3535 = vadd.f32 %v3398, %v3468
  %v3536 = vadd.f32 %v3399, %v3472
  %v3537 = vadd.f32 %v3400, %v3444
  %v3538 = vadd.f32 %v3401, %v3448
  %v3539 = vadd.f32 %v3402, %v3452
  %v3540 = vadd.f32 %v3403, %v3456
  %v3541 = vadd.f32 %v3404, %v3460
  %v3542 = vadd.f32 %v3405, %v3464
  %v3543 = vadd.f32 %v3406, %v3468
  %v3544 = vadd.f32 %v3407, %v3472
  %v3545 = vadd.f32 %v3408, %v3444
  %v3546 = vadd.f32 %v3409, %v3448
  %v3547 = vadd.f32 %v3410, %v3452
  %v3548 = vadd.f32 %v3411, %v3456
  %v3549 = vadd.f32 %v3412, %v3460
  %v3550 = vadd.f32 %v3413, %v3464
  %v3551 = vadd.f32 %v3414, %v3468
  %v3552 = vadd.f32 %v3415, %v3472
  %v3553 = vadd.f32 %v3416, %v3444
  %v3554 = vadd.f32 %v3417, %v3448
  %v3555 = vadd.f32 %v3418, %v3452
  %v3556 = vadd.f32 %v3419, %v3456
  %v3557 = vadd.f32 %v3420, %v3460
  %v3558 = vadd.f32 %v3421, %v3464
  %v3559 = vadd.f32 %v3422, %v3468
  %v3560 = vadd.f32 %v3423, %v3472
  %v3561 = vadd.f32 %v3424, %v3444
  %v3562 = vadd.f32 %v3425, %v3448
  %v3563 = vadd.f32 %v3426, %v3452
  %v3564 = vadd.f32 %v3427, %v3456
  %v3565 = vadd.f32 %v3428, %v3460
  %v3566 = vadd.f32 %v3429, %v3464
  %v3567 = vadd.f32 %v3430, %v3468
  %v3568 = vadd.f32 %v3431, %v3472
  %v3569 = vadd.f32 %v3432, %v3444
  %v3570 = vadd.f32 %v3433, %v3448
  %v3571 = vadd.f32 %v3434, %v3452
  %v3572 = vadd.f32 %v3435, %v3456
  %v3573 = vadd.f32 %v3436, %v3460
  %v3574 = vadd.f32 %v3437, %v3464
  %v3575 = vadd.f32 %v3438, %v3468
  %v3576 = vadd.f32 %v3439, %v3472
  %v3577 = vmax.f32 %v3481, 0.0
  %v3578 = vmax.f32 %v3482, 0.0
  %v3579 = vmax.f32 %v3483, 0.0
  %v3580 = vmax.f32 %v3484, 0.0
  %v3581 = vmax.f32 %v3485, 0.0
  %v3582 = vmax.f32 %v3486, 0.0
  %v3583 = vmax.f32 %v3487, 0.0
  %v3584 = vmax.f32 %v3488, 0.0
  %v3585 = vmax.f32 %v3489, 0.0
  %v3586 = vmax.f32 %v3490, 0.0
  %v3587 = vmax.f32 %v3491, 0.0
  %v3588 = vmax.f32 %v3492, 0.0
  %v3589 = vmax.f32 %v3493, 0.0
  %v3590 = vmax.f32 %v3494, 0.0
  %v3591 = vmax.f32 %v3495, 0.0
  %v3592 = vmax.f32 %v3496, 0.0
  %v3593 = vmax.f32 %v3497, 0.0
  %v3594 = vmax.f32 %v3498, 0.0
  %v3595 = vmax.f32 %v3499, 0.0
  %v3596 = vmax.f32 %v3500, 0.0
  %v3597 = vmax.f32 %v3501, 0.0
  %v3598 = vmax.f32 %v3502, 0.0
  %v3599 = vmax.f32 %v3503, 0.0
  %v3600 = vmax.f32 %v3504, 0.0
  %v3601 = vmax.f32 %v3505, 0.0
  %v3602 = vmax.f32 %v3506, 0.0
  %v3603 = vmax.f32 %v3507, 0.0
  %v3604 = vmax.f32 %v3508, 0.0
  %v3605 = vmax.f32 %v3509, 0.0
  %v3606 = vmax.f32 %v3510, 0.0
  %v3607 = vmax.f32 %v3511, 0.0
  %v3608 = vmax.f32 %v3512, 0.0
  %v3609 = vmax.f32 %v3513, 0.0
  %v3610 = vmax.f32 %v3514, 0.0
  %v3611 = vmax.f32 %v3515, 0.0
  %v3612 = vmax.f32 %v3516, 0.0
  %v3613 = vmax.f32 %v3517, 0.0
  %v3614 = vmax.f32 %v3518, 0.0
  %v3615 = vmax.f32 %v3519, 0.0
  %v3616 = vmax.f32 %v3520, 0.0
  %v3617 = vmax.f32 %v3521, 0.0
  %v3618 = vmax.f32 %v3522, 0.0
  %v3619 = vmax.f32 %v3523, 0.0
  %v3620 = vmax.f32 %v3524, 0.0
  %v3621 = vmax.f32 %v3525, 0.0
  %v3622 = vmax.f32 %v3526, 0.0
  %v3623 = vmax.f32 %v3527, 0.0
  %v3624 = vmax.f32 %v3528, 0.0
  %v3625 = vmax.f32 %v3529, 0.0
  %v3626 = vmax.f32 %v3530, 0.0
  %v3627 = vmax.f32 %v3531, 0.0
  %v3628 = vmax.f32 %v3532, 0.0
  %v3629 = vmax.f32 %v3533, 0.0
  %v3630 = vmax.f32 %v3534, 0.0
  %v3631 = vmax.f32 %v3535, 0.0
  %v3632 = vmax.f32 %v3536, 0.0
  %v3633 = vmax.f32 %v3537, 0.0
  %v3634 = vmax.f32 %v3538, 0.0
  %v3635 = vmax.f32 %v3539, 0.0
  %v3636 = vmax.f32 %v3540, 0.0
  %v3637 = vmax.f32 %v3541, 0.0
  %v3638 = vmax.f32 %v3542, 0.0
  %v3639 = vmax.f32 %v3543, 0.0
  %v3640 = vmax.f32 %v3544, 0.0
  %v3641 = vmax.f32 %v3545, 0.0
  %v3642 = vmax.f32 %v3546, 0.0
  %v3643 = vmax.f32 %v3547, 0.0
  %v3644 = vmax.f32 %v3548, 0.0
  %v3645 = vmax.f32 %v3549, 0.0
  %v3646 = vmax.f32 %v3550, 0.0
  %v3647 = vmax.f32 %v3551, 0.0
  %v3648 = vmax.f32 %v3552, 0.0
  %v3649 = vmax.f32 %v3553, 0.0
  %v3650 = vmax.f32 %v3554, 0.0
  %v3651 = vmax.f32 %v3555, 0.0
  %v3652 = vmax.f32 %v3556, 0.0
  %v3653 = vmax.f32 %v3557, 0.0
  %v3654 = vmax.f32 %v3558, 0.0
  %v3655 = vmax.f32 %v3559, 0.0
  %v3656 = vmax.f32 %v3560, 0.0
  %v3657 = vmax.f32 %v3561, 0.0
  %v3658 = vmax.f32 %v3562, 0.0
  %v3659 = vmax.f32 %v3563, 0.0
  %v3660 = vmax.f32 %v3564, 0.0
  %v3661 = vmax.f32 %v3565, 0.0
  %v3662 = vmax.f32 %v3566, 0.0
  %v3663 = vmax.f32 %v3567, 0.0
  %v3664 = vmax.f32 %v3568, 0.0
  %v3665 = vmax.f32 %v3569, 0.0
  %v3666 = vmax.f32 %v3570, 0.0
  %v3667 = vmax.f32 %v3571, 0.0
  %v3668 = vmax.f32 %v3572, 0.0
  %v3669 = vmax.f32 %v3573, 0.0
  %v3670 = vmax.f32 %v3574, 0.0
  %v3671 = vmax.f32 %v3575, 0.0
  %v3672 = vmax.f32 %v3576, 0.0
  %v3673 = vmax.f32 %v3577, %v3585
  %v3674 = vrot.slane %v3673, 4
  %v3675 = vmax.f32 %v3673, %v3674
  %v3676 = vrot.slane %v3675, 2
  %v3677 = vmax.f32 %v3675, %v3676
  %v3678 = vrot.slane %v3677, 1
  %v3679 = vmax.f32 %v3677, %v3678
  %v3680 = vmax.f32 %v3578, %v3586
  %v3681 = vrot.slane %v3680, 4
  %v3682 = vmax.f32 %v3680, %v3681
  %v3683 = vrot.slane %v3682, 2
  %v3684 = vmax.f32 %v3682, %v3683
  %v3685 = vrot.slane %v3684, 1
  %v3686 = vmax.f32 %v3684, %v3685
  %v3687 = vmax.f32 %v3579, %v3587
  %v3688 = vrot.slane %v3687, 4
  %v3689 = vmax.f32 %v3687, %v3688
  %v3690 = vrot.slane %v3689, 2
  %v3691 = vmax.f32 %v3689, %v3690
  %v3692 = vrot.slane %v3691, 1
  %v3693 = vmax.f32 %v3691, %v3692
  %v3694 = vmax.f32 %v3580, %v3588
  %v3695 = vrot.slane %v3694, 4
  %v3696 = vmax.f32 %v3694, %v3695
  %v3697 = vrot.slane %v3696, 2
  %v3698 = vmax.f32 %v3696, %v3697
  %v3699 = vrot.slane %v3698, 1
  %v3700 = vmax.f32 %v3698, %v3699
  %v3701 = vmax.f32 %v3581, %v3589
  %v3702 = vrot.slane %v3701, 4
  %v3703 = vmax.f32 %v3701, %v3702
  %v3704 = vrot.slane %v3703, 2
  %v3705 = vmax.f32 %v3703, %v3704
  %v3706 = vrot.slane %v3705, 1
  %v3707 = vmax.f32 %v3705, %v3706
  %v3708 = vmax.f32 %v3582, %v3590
  %v3709 = vrot.slane %v3708, 4
  %v3710 = vmax.f32 %v3708, %v3709
  %v3711 = vrot.slane %v3710, 2
  %v3712 = vmax.f32 %v3710, %v3711
  %v3713 = vrot.slane %v3712, 1
  %v3714 = vmax.f32 %v3712, %v3713
  %v3715 = vmax.f32 %v3583, %v3591
  %v3716 = vrot.slane %v3715, 4
  %v3717 = vmax.f32 %v3715, %v3716
  %v3718 = vrot.slane %v3717, 2
  %v3719 = vmax.f32 %v3717, %v3718
  %v3720 = vrot.slane %v3719, 1
  %v3721 = vmax.f32 %v3719, %v3720
  %v3722 = vmax.f32 %v3584, %v3592
  %v3723 = vrot.slane %v3722, 4
  %v3724 = vmax.f32 %v3722, %v3723
  %v3725 = vrot.slane %v3724, 2
  %v3726 = vmax.f32 %v3724, %v3725
  %v3727 = vrot.slane %v3726, 1
  %v3728 = vmax.f32 %v3726, %v3727
  %v3729 = vmax.f32 %v3593, %v3601
  %v3730 = vrot.slane %v3729, 4
  %v3731 = vmax.f32 %v3729, %v3730
  %v3732 = vrot.slane %v3731, 2
  %v3733 = vmax.f32 %v3731, %v3732
  %v3734 = vrot.slane %v3733, 1
  %v3735 = vmax.f32 %v3733, %v3734
  %v3736 = vmax.f32 %v3594, %v3602
  %v3737 = vrot.slane %v3736, 4
  %v3738 = vmax.f32 %v3736, %v3737
  %v3739 = vrot.slane %v3738, 2
  %v3740 = vmax.f32 %v3738, %v3739
  %v3741 = vrot.slane %v3740, 1
  %v3742 = vmax.f32 %v3740, %v3741
  %v3743 = vmax.f32 %v3595, %v3603
  %v3744 = vrot.slane %v3743, 4
  %v3745 = vmax.f32 %v3743, %v3744
  %v3746 = vrot.slane %v3745, 2
  %v3747 = vmax.f32 %v3745, %v3746
  %v3748 = vrot.slane %v3747, 1
  %v3749 = vmax.f32 %v3747, %v3748
  %v3750 = vmax.f32 %v3596, %v3604
  %v3751 = vrot.slane %v3750, 4
  %v3752 = vmax.f32 %v3750, %v3751
  %v3753 = vrot.slane %v3752, 2
  %v3754 = vmax.f32 %v3752, %v3753
  %v3755 = vrot.slane %v3754, 1
  %v3756 = vmax.f32 %v3754, %v3755
  %v3757 = vmax.f32 %v3597, %v3605
  %v3758 = vrot.slane %v3757, 4
  %v3759 = vmax.f32 %v3757, %v3758
  %v3760 = vrot.slane %v3759, 2
  %v3761 = vmax.f32 %v3759, %v3760
  %v3762 = vrot.slane %v3761, 1
  %v3763 = vmax.f32 %v3761, %v3762
  %v3764 = vmax.f32 %v3598, %v3606
  %v3765 = vrot.slane %v3764, 4
  %v3766 = vmax.f32 %v3764, %v3765
  %v3767 = vrot.slane %v3766, 2
  %v3768 = vmax.f32 %v3766, %v3767
  %v3769 = vrot.slane %v3768, 1
  %v3770 = vmax.f32 %v3768, %v3769
  %v3771 = vmax.f32 %v3599, %v3607
  %v3772 = vrot.slane %v3771, 4
  %v3773 = vmax.f32 %v3771, %v3772
  %v3774 = vrot.slane %v3773, 2
  %v3775 = vmax.f32 %v3773, %v3774
  %v3776 = vrot.slane %v3775, 1
  %v3777 = vmax.f32 %v3775, %v3776
  %v3778 = vmax.f32 %v3600, %v3608
  %v3779 = vrot.slane %v3778, 4
  %v3780 = vmax.f32 %v3778, %v3779
  %v3781 = vrot.slane %v3780, 2
  %v3782 = vmax.f32 %v3780, %v3781
  %v3783 = vrot.slane %v3782, 1
  %v3784 = vmax.f32 %v3782, %v3783
  %v3785 = vmax.f32 %v3609, %v3617
  %v3786 = vrot.slane %v3785, 4
  %v3787 = vmax.f32 %v3785, %v3786
  %v3788 = vrot.slane %v3787, 2
  %v3789 = vmax.f32 %v3787, %v3788
  %v3790 = vrot.slane %v3789, 1
  %v3791 = vmax.f32 %v3789, %v3790
  %v3792 = vmax.f32 %v3610, %v3618
  %v3793 = vrot.slane %v3792, 4
  %v3794 = vmax.f32 %v3792, %v3793
  %v3795 = vrot.slane %v3794, 2
  %v3796 = vmax.f32 %v3794, %v3795
  %v3797 = vrot.slane %v3796, 1
  %v3798 = vmax.f32 %v3796, %v3797
  %v3799 = vmax.f32 %v3611, %v3619
  %v3800 = vrot.slane %v3799, 4
  %v3801 = vmax.f32 %v3799, %v3800
  %v3802 = vrot.slane %v3801, 2
  %v3803 = vmax.f32 %v3801, %v3802
  %v3804 = vrot.slane %v3803, 1
  %v3805 = vmax.f32 %v3803, %v3804
  %v3806 = vmax.f32 %v3612, %v3620
  %v3807 = vrot.slane %v3806, 4
  %v3808 = vmax.f32 %v3806, %v3807
  %v3809 = vrot.slane %v3808, 2
  %v3810 = vmax.f32 %v3808, %v3809
  %v3811 = vrot.slane %v3810, 1
  %v3812 = vmax.f32 %v3810, %v3811
  %v3813 = vmax.f32 %v3613, %v3621
  %v3814 = vrot.slane %v3813, 4
  %v3815 = vmax.f32 %v3813, %v3814
  %v3816 = vrot.slane %v3815, 2
  %v3817 = vmax.f32 %v3815, %v3816
  %v3818 = vrot.slane %v3817, 1
  %v3819 = vmax.f32 %v3817, %v3818
  %v3820 = vmax.f32 %v3614, %v3622
  %v3821 = vrot.slane %v3820, 4
  %v3822 = vmax.f32 %v3820, %v3821
  %v3823 = vrot.slane %v3822, 2
  %v3824 = vmax.f32 %v3822, %v3823
  %v3825 = vrot.slane %v3824, 1
  %v3826 = vmax.f32 %v3824, %v3825
  %v3827 = vmax.f32 %v3615, %v3623
  %v3828 = vrot.slane %v3827, 4
  %v3829 = vmax.f32 %v3827, %v3828
  %v3830 = vrot.slane %v3829, 2
  %v3831 = vmax.f32 %v3829, %v3830
  %v3832 = vrot.slane %v3831, 1
  %v3833 = vmax.f32 %v3831, %v3832
  %v3834 = vmax.f32 %v3616, %v3624
  %v3835 = vrot.slane %v3834, 4
  %v3836 = vmax.f32 %v3834, %v3835
  %v3837 = vrot.slane %v3836, 2
  %v3838 = vmax.f32 %v3836, %v3837
  %v3839 = vrot.slane %v3838, 1
  %v3840 = vmax.f32 %v3838, %v3839
  %v3841 = vmax.f32 %v3625, %v3633
  %v3842 = vrot.slane %v3841, 4
  %v3843 = vmax.f32 %v3841, %v3842
  %v3844 = vrot.slane %v3843, 2
  %v3845 = vmax.f32 %v3843, %v3844
  %v3846 = vrot.slane %v3845, 1
  %v3847 = vmax.f32 %v3845, %v3846
  %v3848 = vmax.f32 %v3626, %v3634
  %v3849 = vrot.slane %v3848, 4
  %v3850 = vmax.f32 %v3848, %v3849
  %v3851 = vrot.slane %v3850, 2
  %v3852 = vmax.f32 %v3850, %v3851
  %v3853 = vrot.slane %v3852, 1
  %v3854 = vmax.f32 %v3852, %v3853
  %v3855 = vmax.f32 %v3627, %v3635
  %v3856 = vrot.slane %v3855, 4
  %v3857 = vmax.f32 %v3855, %v3856
  %v3858 = vrot.slane %v3857, 2
  %v3859 = vmax.f32 %v3857, %v3858
  %v3860 = vrot.slane %v3859, 1
  %v3861 = vmax.f32 %v3859, %v3860
  %v3862 = vmax.f32 %v3628, %v3636
  %v3863 = vrot.slane %v3862, 4
  %v3864 = vmax.f32 %v3862, %v3863
  %v3865 = vrot.slane %v3864, 2
  %v3866 = vmax.f32 %v3864, %v3865
  %v3867 = vrot.slane %v3866, 1
  %v3868 = vmax.f32 %v3866, %v3867
  %v3869 = vmax.f32 %v3629, %v3637
  %v3870 = vrot.slane %v3869, 4
  %v3871 = vmax.f32 %v3869, %v3870
  %v3872 = vrot.slane %v3871, 2
  %v3873 = vmax.f32 %v3871, %v3872
  %v3874 = vrot.slane %v3873, 1
  %v3875 = vmax.f32 %v3873, %v3874
  %v3876 = vmax.f32 %v3630, %v3638
  %v3877 = vrot.slane %v3876, 4
  %v3878 = vmax.f32 %v3876, %v3877
  %v3879 = vrot.slane %v3878, 2
  %v3880 = vmax.f32 %v3878, %v3879
  %v3881 = vrot.slane %v3880, 1
  %v3882 = vmax.f32 %v3880, %v3881
  %v3883 = vmax.f32 %v3631, %v3639
  %v3884 = vrot.slane %v3883, 4
  %v3885 = vmax.f32 %v3883, %v3884
  %v3886 = vrot.slane %v3885, 2
  %v3887 = vmax.f32 %v3885, %v3886
  %v3888 = vrot.slane %v3887, 1
  %v3889 = vmax.f32 %v3887, %v3888
  %v3890 = vmax.f32 %v3632, %v3640
  %v3891 = vrot.slane %v3890, 4
  %v3892 = vmax.f32 %v3890, %v3891
  %v3893 = vrot.slane %v3892, 2
  %v3894 = vmax.f32 %v3892, %v3893
  %v3895 = vrot.slane %v3894, 1
  %v3896 = vmax.f32 %v3894, %v3895
  %v3897 = vmax.f32 %v3641, %v3649
  %v3898 = vrot.slane %v3897, 4
  %v3899 = vmax.f32 %v3897, %v3898
  %v3900 = vrot.slane %v3899, 2
  %v3901 = vmax.f32 %v3899, %v3900
  %v3902 = vrot.slane %v3901, 1
  %v3903 = vmax.f32 %v3901, %v3902
  %v3904 = vmax.f32 %v3642, %v3650
  %v3905 = vrot.slane %v3904, 4
  %v3906 = vmax.f32 %v3904, %v3905
  %v3907 = vrot.slane %v3906, 2
  %v3908 = vmax.f32 %v3906, %v3907
  %v3909 = vrot.slane %v3908, 1
  %v3910 = vmax.f32 %v3908, %v3909
  %v3911 = vmax.f32 %v3643, %v3651
  %v3912 = vrot.slane %v3911, 4
  %v3913 = vmax.f32 %v3911, %v3912
  %v3914 = vrot.slane %v3913, 2
  %v3915 = vmax.f32 %v3913, %v3914
  %v3916 = vrot.slane %v3915, 1
  %v3917 = vmax.f32 %v3915, %v3916
  %v3918 = vmax.f32 %v3644, %v3652
  %v3919 = vrot.slane %v3918, 4
  %v3920 = vmax.f32 %v3918, %v3919
  %v3921 = vrot.slane %v3920, 2
  %v3922 = vmax.f32 %v3920, %v3921
  %v3923 = vrot.slane %v3922, 1
  %v3924 = vmax.f32 %v3922, %v3923
  %v3925 = vmax.f32 %v3645, %v3653
  %v3926 = vrot.slane %v3925, 4
  %v3927 = vmax.f32 %v3925, %v3926
  %v3928 = vrot.slane %v3927, 2
  %v3929 = vmax.f32 %v3927, %v3928
  %v3930 = vrot.slane %v3929, 1
  %v3931 = vmax.f32 %v3929, %v3930
  %v3932 = vmax.f32 %v3646, %v3654
  %v3933 = vrot.slane %v3932, 4
  %v3934 = vmax.f32 %v3932, %v3933
  %v3935 = vrot.slane %v3934, 2
  %v3936 = vmax.f32 %v3934, %v3935
  %v3937 = vrot.slane %v3936, 1
  %v3938 = vmax.f32 %v3936, %v3937
  %v3939 = vmax.f32 %v3647, %v3655
  %v3940 = vrot.slane %v3939, 4
  %v3941 = vmax.f32 %v3939, %v3940
  %v3942 = vrot.slane %v3941, 2
  %v3943 = vmax.f32 %v3941, %v3942
  %v3944 = vrot.slane %v3943, 1
  %v3945 = vmax.f32 %v3943, %v3944
  %v3946 = vmax.f32 %v3648, %v3656
  %v3947 = vrot.slane %v3946, 4
  %v3948 = vmax.f32 %v3946, %v3947
  %v3949 = vrot.slane %v3948, 2
  %v3950 = vmax.f32 %v3948, %v3949
  %v3951 = vrot.slane %v3950, 1
  %v3952 = vmax.f32 %v3950, %v3951
  %v3953 = vmax.f32 %v3657, %v3665
  %v3954 = vrot.slane %v3953, 4
  %v3955 = vmax.f32 %v3953, %v3954
  %v3956 = vrot.slane %v3955, 2
  %v3957 = vmax.f32 %v3955, %v3956
  %v3958 = vrot.slane %v3957, 1
  %v3959 = vmax.f32 %v3957, %v3958
  %v3960 = vmax.f32 %v3658, %v3666
  %v3961 = vrot.slane %v3960, 4
  %v3962 = vmax.f32 %v3960, %v3961
  %v3963 = vrot.slane %v3962, 2
  %v3964 = vmax.f32 %v3962, %v3963
  %v3965 = vrot.slane %v3964, 1
  %v3966 = vmax.f32 %v3964, %v3965
  %v3967 = vmax.f32 %v3659, %v3667
  %v3968 = vrot.slane %v3967, 4
  %v3969 = vmax.f32 %v3967, %v3968
  %v3970 = vrot.slane %v3969, 2
  %v3971 = vmax.f32 %v3969, %v3970
  %v3972 = vrot.slane %v3971, 1
  %v3973 = vmax.f32 %v3971, %v3972
  %v3974 = vmax.f32 %v3660, %v3668
  %v3975 = vrot.slane %v3974, 4
  %v3976 = vmax.f32 %v3974, %v3975
  %v3977 = vrot.slane %v3976, 2
  %v3978 = vmax.f32 %v3976, %v3977
  %v3979 = vrot.slane %v3978, 1
  %v3980 = vmax.f32 %v3978, %v3979
  %v3981 = vmax.f32 %v3661, %v3669
  %v3982 = vrot.slane %v3981, 4
  %v3983 = vmax.f32 %v3981, %v3982
  %v3984 = vrot.slane %v3983, 2
  %v3985 = vmax.f32 %v3983, %v3984
  %v3986 = vrot.slane %v3985, 1
  %v3987 = vmax.f32 %v3985, %v3986
  %v3988 = vmax.f32 %v3662, %v3670
  %v3989 = vrot.slane %v3988, 4
  %v3990 = vmax.f32 %v3988, %v3989
  %v3991 = vrot.slane %v3990, 2
  %v3992 = vmax.f32 %v3990, %v3991
  %v3993 = vrot.slane %v3992, 1
  %v3994 = vmax.f32 %v3992, %v3993
  %v3995 = vmax.f32 %v3663, %v3671
  %v3996 = vrot.slane %v3995, 4
  %v3997 = vmax.f32 %v3995, %v3996
  %v3998 = vrot.slane %v3997, 2
  %v3999 = vmax.f32 %v3997, %v3998
  %v4000 = vrot.slane %v3999, 1
  %v4001 = vmax.f32 %v3999, %v4000
  %v4002 = vmax.f32 %v3664, %v3672
  %v4003 = vrot.slane %v4002, 4
  %v4004 = vmax.f32 %v4002, %v4003
  %v4005 = vrot.slane %v4004, 2
  %v4006 = vmax.f32 %v4004, %v4005
  %v4007 = vrot.slane %v4006, 1
  %v4008 = vmax.f32 %v4006, %v4007
  %v4009 = vmax.f32 %v3679, 0.0
  %v4010 = vmax.f32 %v3686, 0.0
  %v4011 = vmax.f32 %v3693, 0.0
  %v4012 = vmax.f32 %v3700, 0.0
  %v4013 = vmax.f32 %v3707, 0.0
  %v4014 = vmax.f32 %v3714, 0.0
  %v4015 = vmax.f32 %v3721, 0.0
  %v4016 = vmax.f32 %v3728, 0.0
  %v4017 = vmax.f32 %v3735, 0.0
  %v4018 = vmax.f32 %v3742, 0.0
  %v4019 = vmax.f32 %v3749, 0.0
  %v4020 = vmax.f32 %v3756, 0.0
  %v4021 = vmax.f32 %v3763, 0.0
  %v4022 = vmax.f32 %v3770, 0.0
  %v4023 = vmax.f32 %v3777, 0.0
  %v4024 = vmax.f32 %v3784, 0.0
  %v4025 = vmax.f32 %v3791, 0.0
  %v4026 = vmax.f32 %v3798, 0.0
  %v4027 = vmax.f32 %v3805, 0.0
  %v4028 = vmax.f32 %v3812, 0.0
  %v4029 = vmax.f32 %v3819, 0.0
  %v4030 = vmax.f32 %v3826, 0.0
  %v4031 = vmax.f32 %v3833, 0.0
  %v4032 = vmax.f32 %v3840, 0.0
  %v4033 = vmax.f32 %v3847, 0.0
  %v4034 = vmax.f32 %v3854, 0.0
  %v4035 = vmax.f32 %v3861, 0.0
  %v4036 = vmax.f32 %v3868, 0.0
  %v4037 = vmax.f32 %v3875, 0.0
  %v4038 = vmax.f32 %v3882, 0.0
  %v4039 = vmax.f32 %v3889, 0.0
  %v4040 = vmax.f32 %v3896, 0.0
  %v4041 = vmax.f32 %v3903, 0.0
  %v4042 = vmax.f32 %v3910, 0.0
  %v4043 = vmax.f32 %v3917, 0.0
  %v4044 = vmax.f32 %v3924, 0.0
  %v4045 = vmax.f32 %v3931, 0.0
  %v4046 = vmax.f32 %v3938, 0.0
  %v4047 = vmax.f32 %v3945, 0.0
  %v4048 = vmax.f32 %v3952, 0.0
  %v4049 = vmax.f32 %v3959, 0.0
  %v4050 = vmax.f32 %v3966, 0.0
  %v4051 = vmax.f32 %v3973, 0.0
  %v4052 = vmax.f32 %v3980, 0.0
  %v4053 = vmax.f32 %v3987, 0.0
  %v4054 = vmax.f32 %v3994, 0.0
  %v4055 = vmax.f32 %v4001, 0.0
  %v4056 = vmax.f32 %v4008, 0.0
  %v4057 = vld [vmem:[%s5] sm:$0xff]
  %v4058 = vld [vmem:[%s5 + $0x8] sm:$0xff]
  %v4059 = vld [vmem:[%s5 + $0x10] sm:$0xff]
  %v4060 = vld [vmem:[%s5 + $0x18] sm:$0xff]
  %v4061 = vld [vmem:[%s5 + $0x20] sm:$0xff]
  %v4062 = vld [vmem:[%s5 + $0x28] sm:$0xff]
  %v4063 = vld [vmem:[%s5 + $0x30] sm:$0xff]
  %v4064 = vld [vmem:[%s5 + $0x38] sm:$0xff]
  %v4065 = vld [vmem:[%s5 + $0x40] sm:$0xff]
  %v4066 = vld [vmem:[%s5 + $0x48] sm:$0xff]
  %v4067 = vld [vmem:[%s5 + $0x50] sm:$0xff]
  %v4068 = vld [vmem:[%s5 + $0x58] sm:$0xff]
  %v4069 = vld [vmem:[%s5 + $0x60] sm:$0xff]
  %v4070 = vld [vmem:[%s5 + $0x68] sm:$0xff]
  %v4071 = vld [vmem:[%s5 + $0x70] sm:$0xff]
  %v4072 = vld [vmem:[%s5 + $0x78] sm:$0xff]
  %v4073 = vld [vmem:[%s5 + $0x80] sm:$0xff]
  %v4074 = vld [vmem:[%s5 + $0x88] sm:$0xff]
  %v4075 = vld [vmem:[%s5 + $0x90] sm:$0xff]
  %v4076 = vld [vmem:[%s5 + $0x98] sm:$0xff]
  %v4077 = vld [vmem:[%s5 + $0xa0] sm:$0xff]
  %v4078 = vld [vmem:[%s5 + $0xa8] sm:$0xff]
  %v4079 = vld [vmem:[%s5 + $0xb0] sm:$0xff]
  %v4080 = vld [vmem:[%s5 + $0xb8] sm:$0xff]
  %v4081 = vld [vmem:[%s5 + $0xc0] sm:$0xff]
  %v4082 = vld [vmem:[%s5 + $0xc8] sm:$0xff]
  %v4083 = vld [vmem:[%s5 + $0xd0] sm:$0xff]
  %v4084 = vld [vmem:[%s5 + $0xd8] sm:$0xff]
  %v4085 = vld [vmem:[%s5 + $0xe0] sm:$0xff]
  %v4086 = vld [vmem:[%s5 + $0xe8] sm:$0xff]
  %v4087 = vld [vmem:[%s5 + $0xf0] sm:$0xff]
  %v4088 = vld [vmem:[%s5 + $0xf8] sm:$0xff]
  %v4089 = vld [vmem:[%s5 + $0x100] sm:$0xff]
  %v4090 = vld [vmem:[%s5 + $0x108] sm:$0xff]
  %v4091 = vld [vmem:[%s5 + $0x110] sm:$0xff]
  %v4092 = vld [vmem:[%s5 + $0x118] sm:$0xff]
  %v4093 = vld [vmem:[%s5 + $0x120] sm:$0xff]
  %v4094 = vld [vmem:[%s5 + $0x128] sm:$0xff]
  %v4095 = vld [vmem:[%s5 + $0x130] sm:$0xff]
  %v4096 = vld [vmem:[%s5 + $0x138] sm:$0xff]
  %v4097 = vld [vmem:[%s5 + $0x140] sm:$0xff]
  %v4098 = vld [vmem:[%s5 + $0x148] sm:$0xff]
  %v4099 = vld [vmem:[%s5 + $0x150] sm:$0xff]
  %v4100 = vld [vmem:[%s5 + $0x158] sm:$0xff]
  %v4101 = vld [vmem:[%s5 + $0x160] sm:$0xff]
  %v4102 = vld [vmem:[%s5 + $0x168] sm:$0xff]
  %v4103 = vld [vmem:[%s5 + $0x170] sm:$0xff]
  %v4104 = vld [vmem:[%s5 + $0x178] sm:$0xff]
  %v4105 = vld [vmem:[%s5 + $0x180] sm:$0xff]
  %v4106 = vld [vmem:[%s5 + $0x188] sm:$0xff]
  %v4107 = vld [vmem:[%s5 + $0x190] sm:$0xff]
  %v4108 = vld [vmem:[%s5 + $0x198] sm:$0xff]
  %v4109 = vld [vmem:[%s5 + $0x1a0] sm:$0xff]
  %v4110 = vld [vmem:[%s5 + $0x1a8] sm:$0xff]
  %v4111 = vld [vmem:[%s5 + $0x1b0] sm:$0xff]
  %v4112 = vld [vmem:[%s5 + $0x1b8] sm:$0xff]
  %v4113 = vld [vmem:[%s5 + $0x1c0] sm:$0xff]
  %v4114 = vld [vmem:[%s5 + $0x1c8] sm:$0xff]
  %v4115 = vld [vmem:[%s5 + $0x1d0] sm:$0xff]
  %v4116 = vld [vmem:[%s5 + $0x1d8] sm:$0xff]
  %v4117 = vld [vmem:[%s5 + $0x1e0] sm:$0xff]
  %v4118 = vld [vmem:[%s5 + $0x1e8] sm:$0xff]
  %v4119 = vld [vmem:[%s5 + $0x1f0] sm:$0xff]
  %v4120 = vld [vmem:[%s5 + $0x1f8] sm:$0xff]
  %v4121 = vld [vmem:[%s5 + $0x200] sm:$0xff]
  %v4122 = vld [vmem:[%s5 + $0x208] sm:$0xff]
  %v4123 = vld [vmem:[%s5 + $0x210] sm:$0xff]
  %v4124 = vld [vmem:[%s5 + $0x218] sm:$0xff]
  %v4125 = vld [vmem:[%s5 + $0x220] sm:$0xff]
  %v4126 = vld [vmem:[%s5 + $0x228] sm:$0xff]
  %v4127 = vld [vmem:[%s5 + $0x230] sm:$0xff]
  %v4128 = vld [vmem:[%s5 + $0x238] sm:$0xff]
  %v4129 = vld [vmem:[%s5 + $0x240] sm:$0xff]
  %v4130 = vld [vmem:[%s5 + $0x248] sm:$0xff]
  %v4131 = vld [vmem:[%s5 + $0x250] sm:$0xff]
  %v4132 = vld [vmem:[%s5 + $0x258] sm:$0xff]
  %v4133 = vld [vmem:[%s5 + $0x260] sm:$0xff]
  %v4134 = vld [vmem:[%s5 + $0x268] sm:$0xff]
  %v4135 = vld [vmem:[%s5 + $0x270] sm:$0xff]
  %v4136 = vld [vmem:[%s5 + $0x278] sm:$0xff]
  %v4137 = vld [vmem:[%s5 + $0x280] sm:$0xff]
  %v4138 = vld [vmem:[%s5 + $0x288] sm:$0xff]
  %v4139 = vld [vmem:[%s5 + $0x290] sm:$0xff]
  %v4140 = vld [vmem:[%s5 + $0x298] sm:$0xff]
  %v4141 = vld [vmem:[%s5 + $0x2a0] sm:$0xff]
  %v4142 = vld [vmem:[%s5 + $0x2a8] sm:$0xff]
  %v4143 = vld [vmem:[%s5 + $0x2b0] sm:$0xff]
  %v4144 = vld [vmem:[%s5 + $0x2b8] sm:$0xff]
  %v4145 = vld [vmem:[%s5 + $0x2c0] sm:$0xff]
  %v4146 = vld [vmem:[%s5 + $0x2c8] sm:$0xff]
  %v4147 = vld [vmem:[%s5 + $0x2d0] sm:$0xff]
  %v4148 = vld [vmem:[%s5 + $0x2d8] sm:$0xff]
  %v4149 = vld [vmem:[%s5 + $0x2e0] sm:$0xff]
  %v4150 = vld [vmem:[%s5 + $0x2e8] sm:$0xff]
  %v4151 = vld [vmem:[%s5 + $0x2f0] sm:$0xff]
  %v4152 = vld [vmem:[%s5 + $0x2f8] sm:$0xff]
  %v4153 = vld [vmem:[%s5 + $0x300] sm:$0xff]
  %v4154 = vld [vmem:[%s5 + $0x308] sm:$0xff]
  %v4155 = vld [vmem:[%s5 + $0x310] sm:$0xff]
  %v4156 = vld [vmem:[%s5 + $0x318] sm:$0xff]
  %v4157 = vld [vmem:[%s5 + $0x320] sm:$0xff]
  %v4158 = vld [vmem:[%s5 + $0x328] sm:$0xff]
  %v4159 = vld [vmem:[%s5 + $0x330] sm:$0xff]
  %v4160 = vld [vmem:[%s5 + $0x338] sm:$0xff]
  %v4161 = vld [vmem:[%s5 + $0x340] sm:$0xff]
  %v4162 = vld [vmem:[%s5 + $0x348] sm:$0xff]
  %v4163 = vld [vmem:[%s5 + $0x350] sm:$0xff]
  %v4164 = vld [vmem:[%s5 + $0x358] sm:$0xff]
  %v4165 = vld [vmem:[%s5 + $0x360] sm:$0xff]
  %v4166 = vld [vmem:[%s5 + $0x368] sm:$0xff]
  %v4167 = vld [vmem:[%s5 + $0x370] sm:$0xff]
  %v4168 = vld [vmem:[%s5 + $0x378] sm:$0xff]
  %v4169 = vld [vmem:[%s5 + $0x380] sm:$0xff]
  %v4170 = vld [vmem:[%s5 + $0x388] sm:$0xff]
  %v4171 = vld [vmem:[%s5 + $0x390] sm:$0xff]
  %v4172 = vld [vmem:[%s5 + $0x398] sm:$0xff]
  %v4173 = vld [vmem:[%s5 + $0x3a0] sm:$0xff]
  %v4174 = vld [vmem:[%s5 + $0x3a8] sm:$0xff]
  %v4175 = vld [vmem:[%s5 + $0x3b0] sm:$0xff]
  %v4176 = vld [vmem:[%s5 + $0x3b8] sm:$0xff]
  %v4177 = vld [vmem:[%s5 + $0x3c0] sm:$0xff]
  %v4178 = vld [vmem:[%s5 + $0x3c8] sm:$0xff]
  %v4179 = vld [vmem:[%s5 + $0x3d0] sm:$0xff]
  %v4180 = vld [vmem:[%s5 + $0x3d8] sm:$0xff]
  %v4181 = vld [vmem:[%s5 + $0x3e0] sm:$0xff]
  %v4182 = vld [vmem:[%s5 + $0x3e8] sm:$0xff]
  %v4183 = vld [vmem:[%s5 + $0x3f0] sm:$0xff]
  %v4184 = vld [vmem:[%s5 + $0x3f8] sm:$0xff]
  %v4185 = vld [vmem:[%s5 + $0x400] sm:$0xff]
  %v4186 = vld [vmem:[%s5 + $0x408] sm:$0xff]
  %v4187 = vld [vmem:[%s5 + $0x410] sm:$0xff]
  %v4188 = vld [vmem:[%s5 + $0x418] sm:$0xff]
  %v4189 = vld [vmem:[%s5 + $0x420] sm:$0xff]
  %v4190 = vld [vmem:[%s5 + $0x428] sm:$0xff]
  %v4191 = vld [vmem:[%s5 + $0x430] sm:$0xff]
  %v4192 = vld [vmem:[%s5 + $0x438] sm:$0xff]
  %v4193 = vld [vmem:[%s5 + $0x440] sm:$0xff]
  %v4194 = vld [vmem:[%s5 + $0x448] sm:$0xff]
  %v4195 = vld [vmem:[%s5 + $0x450] sm:$0xff]
  %v4196 = vld [vmem:[%s5 + $0x458] sm:$0xff]
  %v4197 = vld [vmem:[%s5 + $0x460] sm:$0xff]
  %v4198 = vld [vmem:[%s5 + $0x468] sm:$0xff]
  %v4199 = vld [vmem:[%s5 + $0x470] sm:$0xff]
  %v4200 = vld [vmem:[%s5 + $0x478] sm:$0xff]
  %v4201 = vld [vmem:[%s5 + $0x480] sm:$0xff]
  %v4202 = vld [vmem:[%s5 + $0x488] sm:$0xff]
  %v4203 = vld [vmem:[%s5 + $0x490] sm:$0xff]
  %v4204 = vld [vmem:[%s5 + $0x498] sm:$0xff]
  %v4205 = vld [vmem:[%s5 + $0x4a0] sm:$0xff]
  %v4206 = vld [vmem:[%s5 + $0x4a8] sm:$0xff]
  %v4207 = vld [vmem:[%s5 + $0x4b0] sm:$0xff]
  %v4208 = vld [vmem:[%s5 + $0x4b8] sm:$0xff]
  %v4209 = vld [vmem:[%s5 + $0x4c0] sm:$0xff]
  %v4210 = vld [vmem:[%s5 + $0x4c8] sm:$0xff]
  %v4211 = vld [vmem:[%s5 + $0x4d0] sm:$0xff]
  %v4212 = vld [vmem:[%s5 + $0x4d8] sm:$0xff]
  %v4213 = vld [vmem:[%s5 + $0x4e0] sm:$0xff]
  %v4214 = vld [vmem:[%s5 + $0x4e8] sm:$0xff]
  %v4215 = vld [vmem:[%s5 + $0x4f0] sm:$0xff]
  %v4216 = vld [vmem:[%s5 + $0x4f8] sm:$0xff]
  %v4217 = vld [vmem:[%s5 + $0x500] sm:$0xff]
  %v4218 = vld [vmem:[%s5 + $0x508] sm:$0xff]
  %v4219 = vld [vmem:[%s5 + $0x510] sm:$0xff]
  %v4220 = vld [vmem:[%s5 + $0x518] sm:$0xff]
  %v4221 = vld [vmem:[%s5 + $0x520] sm:$0xff]
  %v4222 = vld [vmem:[%s5 + $0x528] sm:$0xff]
  %v4223 = vld [vmem:[%s5 + $0x530] sm:$0xff]
  %v4224 = vld [vmem:[%s5 + $0x538] sm:$0xff]
  %v4225 = vld [vmem:[%s5 + $0x540] sm:$0xff]
  %v4226 = vld [vmem:[%s5 + $0x548] sm:$0xff]
  %v4227 = vld [vmem:[%s5 + $0x550] sm:$0xff]
  %v4228 = vld [vmem:[%s5 + $0x558] sm:$0xff]
  %v4229 = vld [vmem:[%s5 + $0x560] sm:$0xff]
  %v4230 = vld [vmem:[%s5 + $0x568] sm:$0xff]
  %v4231 = vld [vmem:[%s5 + $0x570] sm:$0xff]
  %v4232 = vld [vmem:[%s5 + $0x578] sm:$0xff]
  %v4233 = vld [vmem:[%s5 + $0x580] sm:$0xff]
  %v4234 = vld [vmem:[%s5 + $0x588] sm:$0xff]
  %v4235 = vld [vmem:[%s5 + $0x590] sm:$0xff]
  %v4236 = vld [vmem:[%s5 + $0x598] sm:$0xff]
  %v4237 = vld [vmem:[%s5 + $0x5a0] sm:$0xff]
  %v4238 = vld [vmem:[%s5 + $0x5a8] sm:$0xff]
  %v4239 = vld [vmem:[%s5 + $0x5b0] sm:$0xff]
  %v4240 = vld [vmem:[%s5 + $0x5b8] sm:$0xff]
  %v4241 = vld [vmem:[%s5 + $0x5c0] sm:$0xff]
  %v4242 = vld [vmem:[%s5 + $0x5c8] sm:$0xff]
  %v4243 = vld [vmem:[%s5 + $0x5d0] sm:$0xff]
  %v4244 = vld [vmem:[%s5 + $0x5d8] sm:$0xff]
  %v4245 = vld [vmem:[%s5 + $0x5e0] sm:$0xff]
  %v4246 = vld [vmem:[%s5 + $0x5e8] sm:$0xff]
  %v4247 = vld [vmem:[%s5 + $0x5f0] sm:$0xff]
  %v4248 = vld [vmem:[%s5 + $0x5f8] sm:$0xff]
  %v4249 = vld [vmem:[%s5 + $0x600] sm:$0xff]
  %v4250 = vld [vmem:[%s5 + $0x608] sm:$0xff]
  %v4251 = vld [vmem:[%s5 + $0x610] sm:$0xff]
  %v4252 = vld [vmem:[%s5 + $0x618] sm:$0xff]
  %v4253 = vld [vmem:[%s5 + $0x620] sm:$0xff]
  %v4254 = vld [vmem:[%s5 + $0x628] sm:$0xff]
  %v4255 = vld [vmem:[%s5 + $0x630] sm:$0xff]
  %v4256 = vld [vmem:[%s5 + $0x638] sm:$0xff]
  %v4257 = vld [vmem:[%s5 + $0x640] sm:$0xff]
  %v4258 = vld [vmem:[%s5 + $0x648] sm:$0xff]
  %v4259 = vld [vmem:[%s5 + $0x650] sm:$0xff]
  %v4260 = vld [vmem:[%s5 + $0x658] sm:$0xff]
  %v4261 = vld [vmem:[%s5 + $0x660] sm:$0xff]
  %v4262 = vld [vmem:[%s5 + $0x668] sm:$0xff]
  %v4263 = vld [vmem:[%s5 + $0x670] sm:$0xff]
  %v4264 = vld [vmem:[%s5 + $0x678] sm:$0xff]
  %v4265 = vld [vmem:[%s5 + $0x680] sm:$0xff]
  %v4266 = vld [vmem:[%s5 + $0x688] sm:$0xff]
  %v4267 = vld [vmem:[%s5 + $0x690] sm:$0xff]
  %v4268 = vld [vmem:[%s5 + $0x698] sm:$0xff]
  %v4269 = vld [vmem:[%s5 + $0x6a0] sm:$0xff]
  %v4270 = vld [vmem:[%s5 + $0x6a8] sm:$0xff]
  %v4271 = vld [vmem:[%s5 + $0x6b0] sm:$0xff]
  %v4272 = vld [vmem:[%s5 + $0x6b8] sm:$0xff]
  %v4273 = vld [vmem:[%s5 + $0x6c0] sm:$0xff]
  %v4274 = vld [vmem:[%s5 + $0x6c8] sm:$0xff]
  %v4275 = vld [vmem:[%s5 + $0x6d0] sm:$0xff]
  %v4276 = vld [vmem:[%s5 + $0x6d8] sm:$0xff]
  %v4277 = vld [vmem:[%s5 + $0x6e0] sm:$0xff]
  %v4278 = vld [vmem:[%s5 + $0x6e8] sm:$0xff]
  %v4279 = vld [vmem:[%s5 + $0x6f0] sm:$0xff]
  %v4280 = vld [vmem:[%s5 + $0x6f8] sm:$0xff]
  %v4281 = vld [vmem:[%s5 + $0x700] sm:$0xff]
  %v4282 = vld [vmem:[%s5 + $0x708] sm:$0xff]
  %v4283 = vld [vmem:[%s5 + $0x710] sm:$0xff]
  %v4284 = vld [vmem:[%s5 + $0x718] sm:$0xff]
  %v4285 = vld [vmem:[%s5 + $0x720] sm:$0xff]
  %v4286 = vld [vmem:[%s5 + $0x728] sm:$0xff]
  %v4287 = vld [vmem:[%s5 + $0x730] sm:$0xff]
  %v4288 = vld [vmem:[%s5 + $0x738] sm:$0xff]
  %v4289 = vld [vmem:[%s5 + $0x740] sm:$0xff]
  %v4290 = vld [vmem:[%s5 + $0x748] sm:$0xff]
  %v4291 = vld [vmem:[%s5 + $0x750] sm:$0xff]
  %v4292 = vld [vmem:[%s5 + $0x758] sm:$0xff]
  %v4293 = vld [vmem:[%s5 + $0x760] sm:$0xff]
  %v4294 = vld [vmem:[%s5 + $0x768] sm:$0xff]
  %v4295 = vld [vmem:[%s5 + $0x770] sm:$0xff]
  %v4296 = vld [vmem:[%s5 + $0x778] sm:$0xff]
  %v4297 = vld [vmem:[%s5 + $0x780] sm:$0xff]
  %v4298 = vld [vmem:[%s5 + $0x788] sm:$0xff]
  %v4299 = vld [vmem:[%s5 + $0x790] sm:$0xff]
  %v4300 = vld [vmem:[%s5 + $0x798] sm:$0xff]
  %v4301 = vld [vmem:[%s5 + $0x7a0] sm:$0xff]
  %v4302 = vld [vmem:[%s5 + $0x7a8] sm:$0xff]
  %v4303 = vld [vmem:[%s5 + $0x7b0] sm:$0xff]
  %v4304 = vld [vmem:[%s5 + $0x7b8] sm:$0xff]
  %v4305 = vld [vmem:[%s5 + $0x7c0] sm:$0xff]
  %v4306 = vld [vmem:[%s5 + $0x7c8] sm:$0xff]
  %v4307 = vld [vmem:[%s5 + $0x7d0] sm:$0xff]
  %v4308 = vld [vmem:[%s5 + $0x7d8] sm:$0xff]
  %v4309 = vld [vmem:[%s5 + $0x7e0] sm:$0xff]
  %v4310 = vld [vmem:[%s5 + $0x7e8] sm:$0xff]
  %v4311 = vld [vmem:[%s5 + $0x7f0] sm:$0xff]
  %v4312 = vld [vmem:[%s5 + $0x7f8] sm:$0xff]
  %v4313 = vpack.c.bf16 %v4009, %v4009
  %v4314 = vpack.c.bf16 %v4010, %v4010
  %v4315 = vpack.c.bf16 %v4011, %v4011
  %v4316 = vpack.c.bf16 %v4012, %v4012
  %v4317 = vpack.c.bf16 %v4013, %v4013
  %v4318 = vpack.c.bf16 %v4014, %v4014
  %v4319 = vpack.c.bf16 %v4015, %v4015
  %v4320 = vpack.c.bf16 %v4016, %v4016
  %v4321 = vpack.c.bf16 %v4017, %v4017
  %v4322 = vpack.c.bf16 %v4018, %v4018
  %v4323 = vpack.c.bf16 %v4019, %v4019
  %v4324 = vpack.c.bf16 %v4020, %v4020
  %v4325 = vpack.c.bf16 %v4021, %v4021
  %v4326 = vpack.c.bf16 %v4022, %v4022
  %v4327 = vpack.c.bf16 %v4023, %v4023
  %v4328 = vpack.c.bf16 %v4024, %v4024
  %v4329 = vpack.c.bf16 %v4025, %v4025
  %v4330 = vpack.c.bf16 %v4026, %v4026
  %v4331 = vpack.c.bf16 %v4027, %v4027
  %v4332 = vpack.c.bf16 %v4028, %v4028
  %v4333 = vpack.c.bf16 %v4029, %v4029
  %v4334 = vpack.c.bf16 %v4030, %v4030
  %v4335 = vpack.c.bf16 %v4031, %v4031
  %v4336 = vpack.c.bf16 %v4032, %v4032
  %v4337 = vpack.c.bf16 %v4033, %v4033
  %v4338 = vpack.c.bf16 %v4034, %v4034
  %v4339 = vpack.c.bf16 %v4035, %v4035
  %v4340 = vpack.c.bf16 %v4036, %v4036
  %v4341 = vpack.c.bf16 %v4037, %v4037
  %v4342 = vpack.c.bf16 %v4038, %v4038
  %v4343 = vpack.c.bf16 %v4039, %v4039
  %v4344 = vpack.c.bf16 %v4040, %v4040
  %v4345 = vpack.c.bf16 %v4041, %v4041
  %v4346 = vpack.c.bf16 %v4042, %v4042
  %v4347 = vpack.c.bf16 %v4043, %v4043
  %v4348 = vpack.c.bf16 %v4044, %v4044
  %v4349 = vpack.c.bf16 %v4045, %v4045
  %v4350 = vpack.c.bf16 %v4046, %v4046
  %v4351 = vpack.c.bf16 %v4047, %v4047
  %v4352 = vpack.c.bf16 %v4048, %v4048
  %v4353 = vpack.c.bf16 %v4049, %v4049
  %v4354 = vpack.c.bf16 %v4050, %v4050
  %v4355 = vpack.c.bf16 %v4051, %v4051
  %v4356 = vpack.c.bf16 %v4052, %v4052
  %v4357 = vpack.c.bf16 %v4053, %v4053
  %v4358 = vpack.c.bf16 %v4054, %v4054
  %v4359 = vpack.c.bf16 %v4055, %v4055
  %v4360 = vpack.c.bf16 %v4056, %v4056
  %v4409 = vunpack.c.l.b16 %v4313
  %v4410 = vunpack.c.l.b16 %v4314
  %v4411 = vunpack.c.l.b16 %v4315
  %v4412 = vunpack.c.l.b16 %v4316
  %v4413 = vunpack.c.l.b16 %v4317
  %v4414 = vunpack.c.l.b16 %v4318
  %v4415 = vunpack.c.l.b16 %v4319
  %v4416 = vunpack.c.l.b16 %v4320
  %v4417 = vunpack.c.l.b16 %v4321
  %v4418 = vunpack.c.l.b16 %v4322
  %v4419 = vunpack.c.l.b16 %v4323
  %v4420 = vunpack.c.l.b16 %v4324
  %v4421 = vunpack.c.l.b16 %v4325
  %v4422 = vunpack.c.l.b16 %v4326
  %v4423 = vunpack.c.l.b16 %v4327
  %v4424 = vunpack.c.l.b16 %v4328
  %v4425 = vunpack.c.l.b16 %v4329
  %v4426 = vunpack.c.l.b16 %v4330
  %v4427 = vunpack.c.l.b16 %v4331
  %v4428 = vunpack.c.l.b16 %v4332
  %v4429 = vunpack.c.l.b16 %v4333
  %v4430 = vunpack.c.l.b16 %v4334
  %v4431 = vunpack.c.l.b16 %v4335
  %v4432 = vunpack.c.l.b16 %v4336
  %v4433 = vunpack.c.l.b16 %v4337
  %v4434 = vunpack.c.l.b16 %v4338
  %v4435 = vunpack.c.l.b16 %v4339
  %v4436 = vunpack.c.l.b16 %v4340
  %v4437 = vunpack.c.l.b16 %v4341
  %v4438 = vunpack.c.l.b16 %v4342
  %v4439 = vunpack.c.l.b16 %v4343
  %v4440 = vunpack.c.l.b16 %v4344
  %v4441 = vunpack.c.l.b16 %v4345
  %v4442 = vunpack.c.l.b16 %v4346
  %v4443 = vunpack.c.l.b16 %v4347
  %v4444 = vunpack.c.l.b16 %v4348
  %v4445 = vunpack.c.l.b16 %v4349
  %v4446 = vunpack.c.l.b16 %v4350
  %v4447 = vunpack.c.l.b16 %v4351
  %v4448 = vunpack.c.l.b16 %v4352
  %v4449 = vunpack.c.l.b16 %v4353
  %v4450 = vunpack.c.l.b16 %v4354
  %v4451 = vunpack.c.l.b16 %v4355
  %v4452 = vunpack.c.l.b16 %v4356
  %v4453 = vunpack.c.l.b16 %v4357
  %v4454 = vunpack.c.l.b16 %v4358
  %v4455 = vunpack.c.l.b16 %v4359
  %v4456 = vunpack.c.l.b16 %v4360
  %vm4457 = vcmask 1041409
  %v4458 = vsel %vm4457, %v4417, %v4409
  %vm4459 = vcmask 1042434
  %v4460 = vsel %vm4459, %v4425, %v4458
  %vm4461 = vcmask 1043459
  %v4462 = vsel %vm4461, %v4433, %v4460
  %vm4463 = vcmask 1044484
  %v4464 = vsel %vm4463, %v4441, %v4462
  %vm4465 = vcmask 1045509
  %v4466 = vsel %vm4465, %v4449, %v4464
  %v4467 = vsel %vm4457, %v4418, %v4410
  %v4468 = vsel %vm4459, %v4426, %v4467
  %v4469 = vsel %vm4461, %v4434, %v4468
  %v4470 = vsel %vm4463, %v4442, %v4469
  %v4471 = vsel %vm4465, %v4450, %v4470
  %v4472 = vsel %vm4457, %v4419, %v4411
  %v4473 = vsel %vm4459, %v4427, %v4472
  %v4474 = vsel %vm4461, %v4435, %v4473
  %v4475 = vsel %vm4463, %v4443, %v4474
  %v4476 = vsel %vm4465, %v4451, %v4475
  %v4477 = vsel %vm4457, %v4420, %v4412
  %v4478 = vsel %vm4459, %v4428, %v4477
  %v4479 = vsel %vm4461, %v4436, %v4478
  %v4480 = vsel %vm4463, %v4444, %v4479
  %v4481 = vsel %vm4465, %v4452, %v4480
  %v4482 = vsel %vm4457, %v4421, %v4413
  %v4483 = vsel %vm4459, %v4429, %v4482
  %v4484 = vsel %vm4461, %v4437, %v4483
  %v4485 = vsel %vm4463, %v4445, %v4484
  %v4486 = vsel %vm4465, %v4453, %v4485
  %v4487 = vsel %vm4457, %v4422, %v4414
  %v4488 = vsel %vm4459, %v4430, %v4487
  %v4489 = vsel %vm4461, %v4438, %v4488
  %v4490 = vsel %vm4463, %v4446, %v4489
  %v4491 = vsel %vm4465, %v4454, %v4490
  %v4492 = vsel %vm4457, %v4423, %v4415
  %v4493 = vsel %vm4459, %v4431, %v4492
  %v4494 = vsel %vm4461, %v4439, %v4493
  %v4495 = vsel %vm4463, %v4447, %v4494
  %v4496 = vsel %vm4465, %v4455, %v4495
  %v4497 = vsel %vm4457, %v4424, %v4416
  %v4498 = vsel %vm4459, %v4432, %v4497
  %v4499 = vsel %vm4461, %v4440, %v4498
  %v4500 = vsel %vm4463, %v4448, %v4499
  %v4501 = vsel %vm4465, %v4456, %v4500
  %v4502 = vpack.c.b16 %v4466, %v4466
  %v4503 = vpack.c.b16 %v4471, %v4471
  %v4504 = vpack.c.b16 %v4476, %v4476
  %v4505 = vpack.c.b16 %v4481, %v4481
  %v4506 = vpack.c.b16 %v4486, %v4486
  %v4507 = vpack.c.b16 %v4491, %v4491
  %v4508 = vpack.c.b16 %v4496, %v4496
  %v4509 = vpack.c.b16 %v4501, %v4501
  %v4774 = vunpack.c.l.b16 %v4057
  %v4775 = vunpack.c.h.b16 %v4057
  %v4776 = vunpack.c.l.b16 %v4058
  %v4777 = vunpack.c.h.b16 %v4058
  %v4778 = vunpack.c.l.b16 %v4059
  %v4779 = vunpack.c.h.b16 %v4059
  %v4780 = vunpack.c.l.b16 %v4060
  %v4781 = vunpack.c.h.b16 %v4060
  %v4782 = vunpack.c.l.b16 %v4061
  %v4783 = vunpack.c.h.b16 %v4061
  %v4784 = vunpack.c.l.b16 %v4062
  %v4785 = vunpack.c.h.b16 %v4062
  %v4786 = vunpack.c.l.b16 %v4063
  %v4787 = vunpack.c.h.b16 %v4063
  %v4788 = vunpack.c.l.b16 %v4064
  %v4789 = vunpack.c.h.b16 %v4064
  %v4790 = vunpack.c.l.b16 %v4065
  %v4791 = vunpack.c.h.b16 %v4065
  %v4792 = vunpack.c.l.b16 %v4066
  %v4793 = vunpack.c.h.b16 %v4066
  %v4794 = vunpack.c.l.b16 %v4067
  %v4795 = vunpack.c.h.b16 %v4067
  %v4796 = vunpack.c.l.b16 %v4068
  %v4797 = vunpack.c.h.b16 %v4068
  %v4798 = vunpack.c.l.b16 %v4069
  %v4799 = vunpack.c.h.b16 %v4069
  %v4800 = vunpack.c.l.b16 %v4070
  %v4801 = vunpack.c.h.b16 %v4070
  %v4802 = vunpack.c.l.b16 %v4071
  %v4803 = vunpack.c.h.b16 %v4071
  %v4804 = vunpack.c.l.b16 %v4072
  %v4805 = vunpack.c.h.b16 %v4072
  %v4806 = vunpack.c.l.b16 %v4073
  %v4807 = vunpack.c.h.b16 %v4073
  %v4808 = vunpack.c.l.b16 %v4074
  %v4809 = vunpack.c.h.b16 %v4074
  %v4810 = vunpack.c.l.b16 %v4075
  %v4811 = vunpack.c.h.b16 %v4075
  %v4812 = vunpack.c.l.b16 %v4076
  %v4813 = vunpack.c.h.b16 %v4076
  %v4814 = vunpack.c.l.b16 %v4077
  %v4815 = vunpack.c.h.b16 %v4077
  %v4816 = vunpack.c.l.b16 %v4078
  %v4817 = vunpack.c.h.b16 %v4078
  %v4818 = vunpack.c.l.b16 %v4079
  %v4819 = vunpack.c.h.b16 %v4079
  %v4820 = vunpack.c.l.b16 %v4080
  %v4821 = vunpack.c.h.b16 %v4080
  %v4822 = vunpack.c.l.b16 %v4081
  %v4823 = vunpack.c.h.b16 %v4081
  %v4824 = vunpack.c.l.b16 %v4082
  %v4825 = vunpack.c.h.b16 %v4082
  %v4826 = vunpack.c.l.b16 %v4083
  %v4827 = vunpack.c.h.b16 %v4083
  %v4828 = vunpack.c.l.b16 %v4084
  %v4829 = vunpack.c.h.b16 %v4084
  %v4830 = vunpack.c.l.b16 %v4085
  %v4831 = vunpack.c.h.b16 %v4085
  %v4832 = vunpack.c.l.b16 %v4086
  %v4833 = vunpack.c.h.b16 %v4086
  %v4834 = vunpack.c.l.b16 %v4087
  %v4835 = vunpack.c.h.b16 %v4087
  %v4836 = vunpack.c.l.b16 %v4088
  %v4837 = vunpack.c.h.b16 %v4088
  %v4838 = vunpack.c.l.b16 %v4089
  %v4839 = vunpack.c.h.b16 %v4089
  %v4840 = vunpack.c.l.b16 %v4090
  %v4841 = vunpack.c.h.b16 %v4090
  %v4842 = vunpack.c.l.b16 %v4091
  %v4843 = vunpack.c.h.b16 %v4091
  %v4844 = vunpack.c.l.b16 %v4092
  %v4845 = vunpack.c.h.b16 %v4092
  %v4846 = vunpack.c.l.b16 %v4093
  %v4847 = vunpack.c.h.b16 %v4093
  %v4848 = vunpack.c.l.b16 %v4094
  %v4849 = vunpack.c.h.b16 %v4094
  %v4850 = vunpack.c.l.b16 %v4095
  %v4851 = vunpack.c.h.b16 %v4095
  %v4852 = vunpack.c.l.b16 %v4096
  %v4853 = vunpack.c.h.b16 %v4096
  %v4854 = vunpack.c.l.b16 %v4097
  %v4855 = vunpack.c.h.b16 %v4097
  %v4856 = vunpack.c.l.b16 %v4098
  %v4857 = vunpack.c.h.b16 %v4098
  %v4858 = vunpack.c.l.b16 %v4099
  %v4859 = vunpack.c.h.b16 %v4099
  %v4860 = vunpack.c.l.b16 %v4100
  %v4861 = vunpack.c.h.b16 %v4100
  %v4862 = vunpack.c.l.b16 %v4101
  %v4863 = vunpack.c.h.b16 %v4101
  %v4864 = vunpack.c.l.b16 %v4102
  %v4865 = vunpack.c.h.b16 %v4102
  %v4866 = vunpack.c.l.b16 %v4103
  %v4867 = vunpack.c.h.b16 %v4103
  %v4868 = vunpack.c.l.b16 %v4104
  %v4869 = vunpack.c.h.b16 %v4104
  %v4870 = vunpack.c.l.b16 %v4105
  %v4871 = vunpack.c.h.b16 %v4105
  %v4872 = vunpack.c.l.b16 %v4106
  %v4873 = vunpack.c.h.b16 %v4106
  %v4874 = vunpack.c.l.b16 %v4107
  %v4875 = vunpack.c.h.b16 %v4107
  %v4876 = vunpack.c.l.b16 %v4108
  %v4877 = vunpack.c.h.b16 %v4108
  %v4878 = vunpack.c.l.b16 %v4109
  %v4879 = vunpack.c.h.b16 %v4109
  %v4880 = vunpack.c.l.b16 %v4110
  %v4881 = vunpack.c.h.b16 %v4110
  %v4882 = vunpack.c.l.b16 %v4111
  %v4883 = vunpack.c.h.b16 %v4111
  %v4884 = vunpack.c.l.b16 %v4112
  %v4885 = vunpack.c.h.b16 %v4112
  %v4886 = vunpack.c.l.b16 %v4113
  %v4887 = vunpack.c.h.b16 %v4113
  %v4888 = vunpack.c.l.b16 %v4114
  %v4889 = vunpack.c.h.b16 %v4114
  %v4890 = vunpack.c.l.b16 %v4115
  %v4891 = vunpack.c.h.b16 %v4115
  %v4892 = vunpack.c.l.b16 %v4116
  %v4893 = vunpack.c.h.b16 %v4116
  %v4894 = vunpack.c.l.b16 %v4117
  %v4895 = vunpack.c.h.b16 %v4117
  %v4896 = vunpack.c.l.b16 %v4118
  %v4897 = vunpack.c.h.b16 %v4118
  %v4898 = vunpack.c.l.b16 %v4119
  %v4899 = vunpack.c.h.b16 %v4119
  %v4900 = vunpack.c.l.b16 %v4120
  %v4901 = vunpack.c.h.b16 %v4120
  %v4902 = vunpack.c.l.b16 %v4121
  %v4903 = vunpack.c.h.b16 %v4121
  %v4904 = vunpack.c.l.b16 %v4122
  %v4905 = vunpack.c.h.b16 %v4122
  %v4906 = vunpack.c.l.b16 %v4123
  %v4907 = vunpack.c.h.b16 %v4123
  %v4908 = vunpack.c.l.b16 %v4124
  %v4909 = vunpack.c.h.b16 %v4124
  %v4910 = vunpack.c.l.b16 %v4125
  %v4911 = vunpack.c.h.b16 %v4125
  %v4912 = vunpack.c.l.b16 %v4126
  %v4913 = vunpack.c.h.b16 %v4126
  %v4914 = vunpack.c.l.b16 %v4127
  %v4915 = vunpack.c.h.b16 %v4127
  %v4916 = vunpack.c.l.b16 %v4128
  %v4917 = vunpack.c.h.b16 %v4128
  %v4918 = vunpack.c.l.b16 %v4129
  %v4919 = vunpack.c.h.b16 %v4129
  %v4920 = vunpack.c.l.b16 %v4130
  %v4921 = vunpack.c.h.b16 %v4130
  %v4922 = vunpack.c.l.b16 %v4131
  %v4923 = vunpack.c.h.b16 %v4131
  %v4924 = vunpack.c.l.b16 %v4132
  %v4925 = vunpack.c.h.b16 %v4132
  %v4926 = vunpack.c.l.b16 %v4133
  %v4927 = vunpack.c.h.b16 %v4133
  %v4928 = vunpack.c.l.b16 %v4134
  %v4929 = vunpack.c.h.b16 %v4134
  %v4930 = vunpack.c.l.b16 %v4135
  %v4931 = vunpack.c.h.b16 %v4135
  %v4932 = vunpack.c.l.b16 %v4136
  %v4933 = vunpack.c.h.b16 %v4136
  %v4934 = vunpack.c.l.b16 %v4137
  %v4935 = vunpack.c.h.b16 %v4137
  %v4936 = vunpack.c.l.b16 %v4138
  %v4937 = vunpack.c.h.b16 %v4138
  %v4938 = vunpack.c.l.b16 %v4139
  %v4939 = vunpack.c.h.b16 %v4139
  %v4940 = vunpack.c.l.b16 %v4140
  %v4941 = vunpack.c.h.b16 %v4140
  %v4942 = vunpack.c.l.b16 %v4141
  %v4943 = vunpack.c.h.b16 %v4141
  %v4944 = vunpack.c.l.b16 %v4142
  %v4945 = vunpack.c.h.b16 %v4142
  %v4946 = vunpack.c.l.b16 %v4143
  %v4947 = vunpack.c.h.b16 %v4143
  %v4948 = vunpack.c.l.b16 %v4144
  %v4949 = vunpack.c.h.b16 %v4144
  %v4950 = vunpack.c.l.b16 %v4145
  %v4951 = vunpack.c.h.b16 %v4145
  %v4952 = vunpack.c.l.b16 %v4146
  %v4953 = vunpack.c.h.b16 %v4146
  %v4954 = vunpack.c.l.b16 %v4147
  %v4955 = vunpack.c.h.b16 %v4147
  %v4956 = vunpack.c.l.b16 %v4148
  %v4957 = vunpack.c.h.b16 %v4148
  %v4958 = vunpack.c.l.b16 %v4149
  %v4959 = vunpack.c.h.b16 %v4149
  %v4960 = vunpack.c.l.b16 %v4150
  %v4961 = vunpack.c.h.b16 %v4150
  %v4962 = vunpack.c.l.b16 %v4151
  %v4963 = vunpack.c.h.b16 %v4151
  %v4964 = vunpack.c.l.b16 %v4152
  %v4965 = vunpack.c.h.b16 %v4152
  %v4966 = vunpack.c.l.b16 %v4153
  %v4967 = vunpack.c.h.b16 %v4153
  %v4968 = vunpack.c.l.b16 %v4154
  %v4969 = vunpack.c.h.b16 %v4154
  %v4970 = vunpack.c.l.b16 %v4155
  %v4971 = vunpack.c.h.b16 %v4155
  %v4972 = vunpack.c.l.b16 %v4156
  %v4973 = vunpack.c.h.b16 %v4156
  %v4974 = vunpack.c.l.b16 %v4157
  %v4975 = vunpack.c.h.b16 %v4157
  %v4976 = vunpack.c.l.b16 %v4158
  %v4977 = vunpack.c.h.b16 %v4158
  %v4978 = vunpack.c.l.b16 %v4159
  %v4979 = vunpack.c.h.b16 %v4159
  %v4980 = vunpack.c.l.b16 %v4160
  %v4981 = vunpack.c.h.b16 %v4160
  %v4982 = vunpack.c.l.b16 %v4161
  %v4983 = vunpack.c.h.b16 %v4161
  %v4984 = vunpack.c.l.b16 %v4162
  %v4985 = vunpack.c.h.b16 %v4162
  %v4986 = vunpack.c.l.b16 %v4163
  %v4987 = vunpack.c.h.b16 %v4163
  %v4988 = vunpack.c.l.b16 %v4164
  %v4989 = vunpack.c.h.b16 %v4164
  %v4990 = vunpack.c.l.b16 %v4165
  %v4991 = vunpack.c.h.b16 %v4165
  %v4992 = vunpack.c.l.b16 %v4166
  %v4993 = vunpack.c.h.b16 %v4166
  %v4994 = vunpack.c.l.b16 %v4167
  %v4995 = vunpack.c.h.b16 %v4167
  %v4996 = vunpack.c.l.b16 %v4168
  %v4997 = vunpack.c.h.b16 %v4168
  %v4998 = vunpack.c.l.b16 %v4169
  %v4999 = vunpack.c.h.b16 %v4169
  %v5000 = vunpack.c.l.b16 %v4170
  %v5001 = vunpack.c.h.b16 %v4170
  %v5002 = vunpack.c.l.b16 %v4171
  %v5003 = vunpack.c.h.b16 %v4171
  %v5004 = vunpack.c.l.b16 %v4172
  %v5005 = vunpack.c.h.b16 %v4172
  %v5006 = vunpack.c.l.b16 %v4173
  %v5007 = vunpack.c.h.b16 %v4173
  %v5008 = vunpack.c.l.b16 %v4174
  %v5009 = vunpack.c.h.b16 %v4174
  %v5010 = vunpack.c.l.b16 %v4175
  %v5011 = vunpack.c.h.b16 %v4175
  %v5012 = vunpack.c.l.b16 %v4176
  %v5013 = vunpack.c.h.b16 %v4176
  %v5014 = vunpack.c.l.b16 %v4177
  %v5015 = vunpack.c.h.b16 %v4177
  %v5016 = vunpack.c.l.b16 %v4178
  %v5017 = vunpack.c.h.b16 %v4178
  %v5018 = vunpack.c.l.b16 %v4179
  %v5019 = vunpack.c.h.b16 %v4179
  %v5020 = vunpack.c.l.b16 %v4180
  %v5021 = vunpack.c.h.b16 %v4180
  %v5022 = vunpack.c.l.b16 %v4181
  %v5023 = vunpack.c.h.b16 %v4181
  %v5024 = vunpack.c.l.b16 %v4182
  %v5025 = vunpack.c.h.b16 %v4182
  %v5026 = vunpack.c.l.b16 %v4183
  %v5027 = vunpack.c.h.b16 %v4183
  %v5028 = vunpack.c.l.b16 %v4184
  %v5029 = vunpack.c.h.b16 %v4184
  %v5030 = vunpack.c.l.b16 %v4185
  %v5031 = vunpack.c.h.b16 %v4185
  %v5032 = vunpack.c.l.b16 %v4186
  %v5033 = vunpack.c.h.b16 %v4186
  %v5034 = vunpack.c.l.b16 %v4187
  %v5035 = vunpack.c.h.b16 %v4187
  %v5036 = vunpack.c.l.b16 %v4188
  %v5037 = vunpack.c.h.b16 %v4188
  %v5038 = vunpack.c.l.b16 %v4189
  %v5039 = vunpack.c.h.b16 %v4189
  %v5040 = vunpack.c.l.b16 %v4190
  %v5041 = vunpack.c.h.b16 %v4190
  %v5042 = vunpack.c.l.b16 %v4191
  %v5043 = vunpack.c.h.b16 %v4191
  %v5044 = vunpack.c.l.b16 %v4192
  %v5045 = vunpack.c.h.b16 %v4192
  %v5046 = vunpack.c.l.b16 %v4193
  %v5047 = vunpack.c.h.b16 %v4193
  %v5048 = vunpack.c.l.b16 %v4194
  %v5049 = vunpack.c.h.b16 %v4194
  %v5050 = vunpack.c.l.b16 %v4195
  %v5051 = vunpack.c.h.b16 %v4195
  %v5052 = vunpack.c.l.b16 %v4196
  %v5053 = vunpack.c.h.b16 %v4196
  %v5054 = vunpack.c.l.b16 %v4197
  %v5055 = vunpack.c.h.b16 %v4197
  %v5056 = vunpack.c.l.b16 %v4198
  %v5057 = vunpack.c.h.b16 %v4198
  %v5058 = vunpack.c.l.b16 %v4199
  %v5059 = vunpack.c.h.b16 %v4199
  %v5060 = vunpack.c.l.b16 %v4200
  %v5061 = vunpack.c.h.b16 %v4200
  %v5062 = vunpack.c.l.b16 %v4201
  %v5063 = vunpack.c.h.b16 %v4201
  %v5064 = vunpack.c.l.b16 %v4202
  %v5065 = vunpack.c.h.b16 %v4202
  %v5066 = vunpack.c.l.b16 %v4203
  %v5067 = vunpack.c.h.b16 %v4203
  %v5068 = vunpack.c.l.b16 %v4204
  %v5069 = vunpack.c.h.b16 %v4204
  %v5070 = vunpack.c.l.b16 %v4205
  %v5071 = vunpack.c.h.b16 %v4205
  %v5072 = vunpack.c.l.b16 %v4206
  %v5073 = vunpack.c.h.b16 %v4206
  %v5074 = vunpack.c.l.b16 %v4207
  %v5075 = vunpack.c.h.b16 %v4207
  %v5076 = vunpack.c.l.b16 %v4208
  %v5077 = vunpack.c.h.b16 %v4208
  %v5078 = vunpack.c.l.b16 %v4209
  %v5079 = vunpack.c.h.b16 %v4209
  %v5080 = vunpack.c.l.b16 %v4210
  %v5081 = vunpack.c.h.b16 %v4210
  %v5082 = vunpack.c.l.b16 %v4211
  %v5083 = vunpack.c.h.b16 %v4211
  %v5084 = vunpack.c.l.b16 %v4212
  %v5085 = vunpack.c.h.b16 %v4212
  %v5086 = vunpack.c.l.b16 %v4213
  %v5087 = vunpack.c.h.b16 %v4213
  %v5088 = vunpack.c.l.b16 %v4214
  %v5089 = vunpack.c.h.b16 %v4214
  %v5090 = vunpack.c.l.b16 %v4215
  %v5091 = vunpack.c.h.b16 %v4215
  %v5092 = vunpack.c.l.b16 %v4216
  %v5093 = vunpack.c.h.b16 %v4216
  %v5094 = vunpack.c.l.b16 %v4217
  %v5095 = vunpack.c.h.b16 %v4217
  %v5096 = vunpack.c.l.b16 %v4218
  %v5097 = vunpack.c.h.b16 %v4218
  %v5098 = vunpack.c.l.b16 %v4219
  %v5099 = vunpack.c.h.b16 %v4219
  %v5100 = vunpack.c.l.b16 %v4220
  %v5101 = vunpack.c.h.b16 %v4220
  %v5102 = vunpack.c.l.b16 %v4221
  %v5103 = vunpack.c.h.b16 %v4221
  %v5104 = vunpack.c.l.b16 %v4222
  %v5105 = vunpack.c.h.b16 %v4222
  %v5106 = vunpack.c.l.b16 %v4223
  %v5107 = vunpack.c.h.b16 %v4223
  %v5108 = vunpack.c.l.b16 %v4224
  %v5109 = vunpack.c.h.b16 %v4224
  %v5110 = vunpack.c.l.b16 %v4225
  %v5111 = vunpack.c.h.b16 %v4225
  %v5112 = vunpack.c.l.b16 %v4226
  %v5113 = vunpack.c.h.b16 %v4226
  %v5114 = vunpack.c.l.b16 %v4227
  %v5115 = vunpack.c.h.b16 %v4227
  %v5116 = vunpack.c.l.b16 %v4228
  %v5117 = vunpack.c.h.b16 %v4228
  %v5118 = vunpack.c.l.b16 %v4229
  %v5119 = vunpack.c.h.b16 %v4229
  %v5120 = vunpack.c.l.b16 %v4230
  %v5121 = vunpack.c.h.b16 %v4230
  %v5122 = vunpack.c.l.b16 %v4231
  %v5123 = vunpack.c.h.b16 %v4231
  %v5124 = vunpack.c.l.b16 %v4232
  %v5125 = vunpack.c.h.b16 %v4232
  %v5126 = vunpack.c.l.b16 %v4233
  %v5127 = vunpack.c.h.b16 %v4233
  %v5128 = vunpack.c.l.b16 %v4234
  %v5129 = vunpack.c.h.b16 %v4234
  %v5130 = vunpack.c.l.b16 %v4235
  %v5131 = vunpack.c.h.b16 %v4235
  %v5132 = vunpack.c.l.b16 %v4236
  %v5133 = vunpack.c.h.b16 %v4236
  %v5134 = vunpack.c.l.b16 %v4237
  %v5135 = vunpack.c.h.b16 %v4237
  %v5136 = vunpack.c.l.b16 %v4238
  %v5137 = vunpack.c.h.b16 %v4238
  %v5138 = vunpack.c.l.b16 %v4239
  %v5139 = vunpack.c.h.b16 %v4239
  %v5140 = vunpack.c.l.b16 %v4240
  %v5141 = vunpack.c.h.b16 %v4240
  %v5142 = vunpack.c.l.b16 %v4241
  %v5143 = vunpack.c.h.b16 %v4241
  %v5144 = vunpack.c.l.b16 %v4242
  %v5145 = vunpack.c.h.b16 %v4242
  %v5146 = vunpack.c.l.b16 %v4243
  %v5147 = vunpack.c.h.b16 %v4243
  %v5148 = vunpack.c.l.b16 %v4244
  %v5149 = vunpack.c.h.b16 %v4244
  %v5150 = vunpack.c.l.b16 %v4245
  %v5151 = vunpack.c.h.b16 %v4245
  %v5152 = vunpack.c.l.b16 %v4246
  %v5153 = vunpack.c.h.b16 %v4246
  %v5154 = vunpack.c.l.b16 %v4247
  %v5155 = vunpack.c.h.b16 %v4247
  %v5156 = vunpack.c.l.b16 %v4248
  %v5157 = vunpack.c.h.b16 %v4248
  %v5158 = vunpack.c.l.b16 %v4249
  %v5159 = vunpack.c.h.b16 %v4249
  %v5160 = vunpack.c.l.b16 %v4250
  %v5161 = vunpack.c.h.b16 %v4250
  %v5162 = vunpack.c.l.b16 %v4251
  %v5163 = vunpack.c.h.b16 %v4251
  %v5164 = vunpack.c.l.b16 %v4252
  %v5165 = vunpack.c.h.b16 %v4252
  %v5166 = vunpack.c.l.b16 %v4253
  %v5167 = vunpack.c.h.b16 %v4253
  %v5168 = vunpack.c.l.b16 %v4254
  %v5169 = vunpack.c.h.b16 %v4254
  %v5170 = vunpack.c.l.b16 %v4255
  %v5171 = vunpack.c.h.b16 %v4255
  %v5172 = vunpack.c.l.b16 %v4256
  %v5173 = vunpack.c.h.b16 %v4256
  %v5174 = vunpack.c.l.b16 %v4257
  %v5175 = vunpack.c.h.b16 %v4257
  %v5176 = vunpack.c.l.b16 %v4258
  %v5177 = vunpack.c.h.b16 %v4258
  %v5178 = vunpack.c.l.b16 %v4259
  %v5179 = vunpack.c.h.b16 %v4259
  %v5180 = vunpack.c.l.b16 %v4260
  %v5181 = vunpack.c.h.b16 %v4260
  %v5182 = vunpack.c.l.b16 %v4261
  %v5183 = vunpack.c.h.b16 %v4261
  %v5184 = vunpack.c.l.b16 %v4262
  %v5185 = vunpack.c.h.b16 %v4262
  %v5186 = vunpack.c.l.b16 %v4263
  %v5187 = vunpack.c.h.b16 %v4263
  %v5188 = vunpack.c.l.b16 %v4264
  %v5189 = vunpack.c.h.b16 %v4264
  %v5190 = vunpack.c.l.b16 %v4265
  %v5191 = vunpack.c.h.b16 %v4265
  %v5192 = vunpack.c.l.b16 %v4266
  %v5193 = vunpack.c.h.b16 %v4266
  %v5194 = vunpack.c.l.b16 %v4267
  %v5195 = vunpack.c.h.b16 %v4267
  %v5196 = vunpack.c.l.b16 %v4268
  %v5197 = vunpack.c.h.b16 %v4268
  %v5198 = vunpack.c.l.b16 %v4269
  %v5199 = vunpack.c.h.b16 %v4269
  %v5200 = vunpack.c.l.b16 %v4270
  %v5201 = vunpack.c.h.b16 %v4270
  %v5202 = vunpack.c.l.b16 %v4271
  %v5203 = vunpack.c.h.b16 %v4271
  %v5204 = vunpack.c.l.b16 %v4272
  %v5205 = vunpack.c.h.b16 %v4272
  %v5206 = vunpack.c.l.b16 %v4273
  %v5207 = vunpack.c.h.b16 %v4273
  %v5208 = vunpack.c.l.b16 %v4274
  %v5209 = vunpack.c.h.b16 %v4274
  %v5210 = vunpack.c.l.b16 %v4275
  %v5211 = vunpack.c.h.b16 %v4275
  %v5212 = vunpack.c.l.b16 %v4276
  %v5213 = vunpack.c.h.b16 %v4276
  %v5214 = vunpack.c.l.b16 %v4277
  %v5215 = vunpack.c.h.b16 %v4277
  %v5216 = vunpack.c.l.b16 %v4278
  %v5217 = vunpack.c.h.b16 %v4278
  %v5218 = vunpack.c.l.b16 %v4279
  %v5219 = vunpack.c.h.b16 %v4279
  %v5220 = vunpack.c.l.b16 %v4280
  %v5221 = vunpack.c.h.b16 %v4280
  %v5222 = vunpack.c.l.b16 %v4281
  %v5223 = vunpack.c.h.b16 %v4281
  %v5224 = vunpack.c.l.b16 %v4282
  %v5225 = vunpack.c.h.b16 %v4282
  %v5226 = vunpack.c.l.b16 %v4283
  %v5227 = vunpack.c.h.b16 %v4283
  %v5228 = vunpack.c.l.b16 %v4284
  %v5229 = vunpack.c.h.b16 %v4284
  %v5230 = vunpack.c.l.b16 %v4285
  %v5231 = vunpack.c.h.b16 %v4285
  %v5232 = vunpack.c.l.b16 %v4286
  %v5233 = vunpack.c.h.b16 %v4286
  %v5234 = vunpack.c.l.b16 %v4287
  %v5235 = vunpack.c.h.b16 %v4287
  %v5236 = vunpack.c.l.b16 %v4288
  %v5237 = vunpack.c.h.b16 %v4288
  %v5238 = vunpack.c.l.b16 %v4289
  %v5239 = vunpack.c.h.b16 %v4289
  %v5240 = vunpack.c.l.b16 %v4290
  %v5241 = vunpack.c.h.b16 %v4290
  %v5242 = vunpack.c.l.b16 %v4291
  %v5243 = vunpack.c.h.b16 %v4291
  %v5244 = vunpack.c.l.b16 %v4292
  %v5245 = vunpack.c.h.b16 %v4292
  %v5246 = vunpack.c.l.b16 %v4293
  %v5247 = vunpack.c.h.b16 %v4293
  %v5248 = vunpack.c.l.b16 %v4294
  %v5249 = vunpack.c.h.b16 %v4294
  %v5250 = vunpack.c.l.b16 %v4295
  %v5251 = vunpack.c.h.b16 %v4295
  %v5252 = vunpack.c.l.b16 %v4296
  %v5253 = vunpack.c.h.b16 %v4296
  %v5254 = vunpack.c.l.b16 %v4297
  %v5255 = vunpack.c.h.b16 %v4297
  %v5256 = vunpack.c.l.b16 %v4298
  %v5257 = vunpack.c.h.b16 %v4298
  %v5258 = vunpack.c.l.b16 %v4299
  %v5259 = vunpack.c.h.b16 %v4299
  %v5260 = vunpack.c.l.b16 %v4300
  %v5261 = vunpack.c.h.b16 %v4300
  %v5262 = vunpack.c.l.b16 %v4301
  %v5263 = vunpack.c.h.b16 %v4301
  %v5264 = vunpack.c.l.b16 %v4302
  %v5265 = vunpack.c.h.b16 %v4302
  %v5266 = vunpack.c.l.b16 %v4303
  %v5267 = vunpack.c.h.b16 %v4303
  %v5268 = vunpack.c.l.b16 %v4304
  %v5269 = vunpack.c.h.b16 %v4304
  %v5270 = vunpack.c.l.b16 %v4305
  %v5271 = vunpack.c.h.b16 %v4305
  %v5272 = vunpack.c.l.b16 %v4306
  %v5273 = vunpack.c.h.b16 %v4306
  %v5274 = vunpack.c.l.b16 %v4307
  %v5275 = vunpack.c.h.b16 %v4307
  %v5276 = vunpack.c.l.b16 %v4308
  %v5277 = vunpack.c.h.b16 %v4308
  %v5278 = vunpack.c.l.b16 %v4309
  %v5279 = vunpack.c.h.b16 %v4309
  %v5280 = vunpack.c.l.b16 %v4310
  %v5281 = vunpack.c.h.b16 %v4310
  %v5282 = vunpack.c.l.b16 %v4311
  %v5283 = vunpack.c.h.b16 %v4311
  %v5284 = vunpack.c.l.b16 %v4312
  %v5285 = vunpack.c.h.b16 %v4312
  %v5286 = vpack.c.b16 %v4778, %v4774
  %v5287 = vpack.c.b16 %v4779, %v4775
  %v5288 = vpack.c.b16 %v4780, %v4776
  %v5289 = vpack.c.b16 %v4781, %v4777
  %v5290 = vpack.c.b16 %v4786, %v4782
  %v5291 = vpack.c.b16 %v4787, %v4783
  %v5292 = vpack.c.b16 %v4788, %v4784
  %v5293 = vpack.c.b16 %v4789, %v4785
  %v5294 = vpack.c.b16 %v4794, %v4790
  %v5295 = vpack.c.b16 %v4795, %v4791
  %v5296 = vpack.c.b16 %v4796, %v4792
  %v5297 = vpack.c.b16 %v4797, %v4793
  %v5298 = vpack.c.b16 %v4802, %v4798
  %v5299 = vpack.c.b16 %v4803, %v4799
  %v5300 = vpack.c.b16 %v4804, %v4800
  %v5301 = vpack.c.b16 %v4805, %v4801
  %v5302 = vpack.c.b16 %v4810, %v4806
  %v5303 = vpack.c.b16 %v4811, %v4807
  %v5304 = vpack.c.b16 %v4812, %v4808
  %v5305 = vpack.c.b16 %v4813, %v4809
  %v5306 = vpack.c.b16 %v4818, %v4814
  %v5307 = vpack.c.b16 %v4819, %v4815
  %v5308 = vpack.c.b16 %v4820, %v4816
  %v5309 = vpack.c.b16 %v4821, %v4817
  %v5310 = vpack.c.b16 %v4826, %v4822
  %v5311 = vpack.c.b16 %v4827, %v4823
  %v5312 = vpack.c.b16 %v4828, %v4824
  %v5313 = vpack.c.b16 %v4829, %v4825
  %v5314 = vpack.c.b16 %v4834, %v4830
  %v5315 = vpack.c.b16 %v4835, %v4831
  %v5316 = vpack.c.b16 %v4836, %v4832
  %v5317 = vpack.c.b16 %v4837, %v4833
  %v5318 = vpack.c.b16 %v4842, %v4838
  %v5319 = vpack.c.b16 %v4843, %v4839
  %v5320 = vpack.c.b16 %v4844, %v4840
  %v5321 = vpack.c.b16 %v4845, %v4841
  %v5322 = vpack.c.b16 %v4850, %v4846
  %v5323 = vpack.c.b16 %v4851, %v4847
  %v5324 = vpack.c.b16 %v4852, %v4848
  %v5325 = vpack.c.b16 %v4853, %v4849
  %v5326 = vpack.c.b16 %v4858, %v4854
  %v5327 = vpack.c.b16 %v4859, %v4855
  %v5328 = vpack.c.b16 %v4860, %v4856
  %v5329 = vpack.c.b16 %v4861, %v4857
  %v5330 = vpack.c.b16 %v4866, %v4862
  %v5331 = vpack.c.b16 %v4867, %v4863
  %v5332 = vpack.c.b16 %v4868, %v4864
  %v5333 = vpack.c.b16 %v4869, %v4865
  %v5334 = vpack.c.b16 %v4874, %v4870
  %v5335 = vpack.c.b16 %v4875, %v4871
  %v5336 = vpack.c.b16 %v4876, %v4872
  %v5337 = vpack.c.b16 %v4877, %v4873
  %v5338 = vpack.c.b16 %v4882, %v4878
  %v5339 = vpack.c.b16 %v4883, %v4879
  %v5340 = vpack.c.b16 %v4884, %v4880
  %v5341 = vpack.c.b16 %v4885, %v4881
  %v5342 = vpack.c.b16 %v4890, %v4886
  %v5343 = vpack.c.b16 %v4891, %v4887
  %v5344 = vpack.c.b16 %v4892, %v4888
  %v5345 = vpack.c.b16 %v4893, %v4889
  %v5346 = vpack.c.b16 %v4898, %v4894
  %v5347 = vpack.c.b16 %v4899, %v4895
  %v5348 = vpack.c.b16 %v4900, %v4896
  %v5349 = vpack.c.b16 %v4901, %v4897
  %v5350 = vpack.c.b16 %v4906, %v4902
  %v5351 = vpack.c.b16 %v4907, %v4903
  %v5352 = vpack.c.b16 %v4908, %v4904
  %v5353 = vpack.c.b16 %v4909, %v4905
  %v5354 = vpack.c.b16 %v4914, %v4910
  %v5355 = vpack.c.b16 %v4915, %v4911
  %v5356 = vpack.c.b16 %v4916, %v4912
  %v5357 = vpack.c.b16 %v4917, %v4913
  %v5358 = vpack.c.b16 %v4922, %v4918
  %v5359 = vpack.c.b16 %v4923, %v4919
  %v5360 = vpack.c.b16 %v4924, %v4920
  %v5361 = vpack.c.b16 %v4925, %v4921
  %v5362 = vpack.c.b16 %v4930, %v4926
  %v5363 = vpack.c.b16 %v4931, %v4927
  %v5364 = vpack.c.b16 %v4932, %v4928
  %v5365 = vpack.c.b16 %v4933, %v4929
  %v5366 = vpack.c.b16 %v4938, %v4934
  %v5367 = vpack.c.b16 %v4939, %v4935
  %v5368 = vpack.c.b16 %v4940, %v4936
  %v5369 = vpack.c.b16 %v4941, %v4937
  %v5370 = vpack.c.b16 %v4946, %v4942
  %v5371 = vpack.c.b16 %v4947, %v4943
  %v5372 = vpack.c.b16 %v4948, %v4944
  %v5373 = vpack.c.b16 %v4949, %v4945
  %v5374 = vpack.c.b16 %v4954, %v4950
  %v5375 = vpack.c.b16 %v4955, %v4951
  %v5376 = vpack.c.b16 %v4956, %v4952
  %v5377 = vpack.c.b16 %v4957, %v4953
  %v5378 = vpack.c.b16 %v4962, %v4958
  %v5379 = vpack.c.b16 %v4963, %v4959
  %v5380 = vpack.c.b16 %v4964, %v4960
  %v5381 = vpack.c.b16 %v4965, %v4961
  %v5382 = vpack.c.b16 %v4970, %v4966
  %v5383 = vpack.c.b16 %v4971, %v4967
  %v5384 = vpack.c.b16 %v4972, %v4968
  %v5385 = vpack.c.b16 %v4973, %v4969
  %v5386 = vpack.c.b16 %v4978, %v4974
  %v5387 = vpack.c.b16 %v4979, %v4975
  %v5388 = vpack.c.b16 %v4980, %v4976
  %v5389 = vpack.c.b16 %v4981, %v4977
  %v5390 = vpack.c.b16 %v4986, %v4982
  %v5391 = vpack.c.b16 %v4987, %v4983
  %v5392 = vpack.c.b16 %v4988, %v4984
  %v5393 = vpack.c.b16 %v4989, %v4985
  %v5394 = vpack.c.b16 %v4994, %v4990
  %v5395 = vpack.c.b16 %v4995, %v4991
  %v5396 = vpack.c.b16 %v4996, %v4992
  %v5397 = vpack.c.b16 %v4997, %v4993
  %v5398 = vpack.c.b16 %v5002, %v4998
  %v5399 = vpack.c.b16 %v5003, %v4999
  %v5400 = vpack.c.b16 %v5004, %v5000
  %v5401 = vpack.c.b16 %v5005, %v5001
  %v5402 = vpack.c.b16 %v5010, %v5006
  %v5403 = vpack.c.b16 %v5011, %v5007
  %v5404 = vpack.c.b16 %v5012, %v5008
  %v5405 = vpack.c.b16 %v5013, %v5009
  %v5406 = vpack.c.b16 %v5018, %v5014
  %v5407 = vpack.c.b16 %v5019, %v5015
  %v5408 = vpack.c.b16 %v5020, %v5016
  %v5409 = vpack.c.b16 %v5021, %v5017
  %v5410 = vpack.c.b16 %v5026, %v5022
  %v5411 = vpack.c.b16 %v5027, %v5023
  %v5412 = vpack.c.b16 %v5028, %v5024
  %v5413 = vpack.c.b16 %v5029, %v5025
  %v5414 = vpack.c.b16 %v5034, %v5030
  %v5415 = vpack.c.b16 %v5035, %v5031
  %v5416 = vpack.c.b16 %v5036, %v5032
  %v5417 = vpack.c.b16 %v5037, %v5033
  %v5418 = vpack.c.b16 %v5042, %v5038
  %v5419 = vpack.c.b16 %v5043, %v5039
  %v5420 = vpack.c.b16 %v5044, %v5040
  %v5421 = vpack.c.b16 %v5045, %v5041
  %v5422 = vpack.c.b16 %v5050, %v5046
  %v5423 = vpack.c.b16 %v5051, %v5047
  %v5424 = vpack.c.b16 %v5052, %v5048
  %v5425 = vpack.c.b16 %v5053, %v5049
  %v5426 = vpack.c.b16 %v5058, %v5054
  %v5427 = vpack.c.b16 %v5059, %v5055
  %v5428 = vpack.c.b16 %v5060, %v5056
  %v5429 = vpack.c.b16 %v5061, %v5057
  %v5430 = vpack.c.b16 %v5066, %v5062
  %v5431 = vpack.c.b16 %v5067, %v5063
  %v5432 = vpack.c.b16 %v5068, %v5064
  %v5433 = vpack.c.b16 %v5069, %v5065
  %v5434 = vpack.c.b16 %v5074, %v5070
  %v5435 = vpack.c.b16 %v5075, %v5071
  %v5436 = vpack.c.b16 %v5076, %v5072
  %v5437 = vpack.c.b16 %v5077, %v5073
  %v5438 = vpack.c.b16 %v5082, %v5078
  %v5439 = vpack.c.b16 %v5083, %v5079
  %v5440 = vpack.c.b16 %v5084, %v5080
  %v5441 = vpack.c.b16 %v5085, %v5081
  %v5442 = vpack.c.b16 %v5090, %v5086
  %v5443 = vpack.c.b16 %v5091, %v5087
  %v5444 = vpack.c.b16 %v5092, %v5088
  %v5445 = vpack.c.b16 %v5093, %v5089
  %v5446 = vpack.c.b16 %v5098, %v5094
  %v5447 = vpack.c.b16 %v5099, %v5095
  %v5448 = vpack.c.b16 %v5100, %v5096
  %v5449 = vpack.c.b16 %v5101, %v5097
  %v5450 = vpack.c.b16 %v5106, %v5102
  %v5451 = vpack.c.b16 %v5107, %v5103
  %v5452 = vpack.c.b16 %v5108, %v5104
  %v5453 = vpack.c.b16 %v5109, %v5105
  %v5454 = vpack.c.b16 %v5114, %v5110
  %v5455 = vpack.c.b16 %v5115, %v5111
  %v5456 = vpack.c.b16 %v5116, %v5112
  %v5457 = vpack.c.b16 %v5117, %v5113
  %v5458 = vpack.c.b16 %v5122, %v5118
  %v5459 = vpack.c.b16 %v5123, %v5119
  %v5460 = vpack.c.b16 %v5124, %v5120
  %v5461 = vpack.c.b16 %v5125, %v5121
  %v5462 = vpack.c.b16 %v5130, %v5126
  %v5463 = vpack.c.b16 %v5131, %v5127
  %v5464 = vpack.c.b16 %v5132, %v5128
  %v5465 = vpack.c.b16 %v5133, %v5129
  %v5466 = vpack.c.b16 %v5138, %v5134
  %v5467 = vpack.c.b16 %v5139, %v5135
  %v5468 = vpack.c.b16 %v5140, %v5136
  %v5469 = vpack.c.b16 %v5141, %v5137
  %v5470 = vpack.c.b16 %v5146, %v5142
  %v5471 = vpack.c.b16 %v5147, %v5143
  %v5472 = vpack.c.b16 %v5148, %v5144
  %v5473 = vpack.c.b16 %v5149, %v5145
  %v5474 = vpack.c.b16 %v5154, %v5150
  %v5475 = vpack.c.b16 %v5155, %v5151
  %v5476 = vpack.c.b16 %v5156, %v5152
  %v5477 = vpack.c.b16 %v5157, %v5153
  %v5478 = vpack.c.b16 %v5162, %v5158
  %v5479 = vpack.c.b16 %v5163, %v5159
  %v5480 = vpack.c.b16 %v5164, %v5160
  %v5481 = vpack.c.b16 %v5165, %v5161
  %v5482 = vpack.c.b16 %v5170, %v5166
  %v5483 = vpack.c.b16 %v5171, %v5167
  %v5484 = vpack.c.b16 %v5172, %v5168
  %v5485 = vpack.c.b16 %v5173, %v5169
  %v5486 = vpack.c.b16 %v5178, %v5174
  %v5487 = vpack.c.b16 %v5179, %v5175
  %v5488 = vpack.c.b16 %v5180, %v5176
  %v5489 = vpack.c.b16 %v5181, %v5177
  %v5490 = vpack.c.b16 %v5186, %v5182
  %v5491 = vpack.c.b16 %v5187, %v5183
  %v5492 = vpack.c.b16 %v5188, %v5184
  %v5493 = vpack.c.b16 %v5189, %v5185
  %v5494 = vpack.c.b16 %v5194, %v5190
  %v5495 = vpack.c.b16 %v5195, %v5191
  %v5496 = vpack.c.b16 %v5196, %v5192
  %v5497 = vpack.c.b16 %v5197, %v5193
  %v5498 = vpack.c.b16 %v5202, %v5198
  %v5499 = vpack.c.b16 %v5203, %v5199
  %v5500 = vpack.c.b16 %v5204, %v5200
  %v5501 = vpack.c.b16 %v5205, %v5201
  %v5502 = vpack.c.b16 %v5210, %v5206
  %v5503 = vpack.c.b16 %v5211, %v5207
  %v5504 = vpack.c.b16 %v5212, %v5208
  %v5505 = vpack.c.b16 %v5213, %v5209
  %v5506 = vpack.c.b16 %v5218, %v5214
  %v5507 = vpack.c.b16 %v5219, %v5215
  %v5508 = vpack.c.b16 %v5220, %v5216
  %v5509 = vpack.c.b16 %v5221, %v5217
  %v5510 = vpack.c.b16 %v5226, %v5222
  %v5511 = vpack.c.b16 %v5227, %v5223
  %v5512 = vpack.c.b16 %v5228, %v5224
  %v5513 = vpack.c.b16 %v5229, %v5225
  %v5514 = vpack.c.b16 %v5234, %v5230
  %v5515 = vpack.c.b16 %v5235, %v5231
  %v5516 = vpack.c.b16 %v5236, %v5232
  %v5517 = vpack.c.b16 %v5237, %v5233
  %v5518 = vpack.c.b16 %v5242, %v5238
  %v5519 = vpack.c.b16 %v5243, %v5239
  %v5520 = vpack.c.b16 %v5244, %v5240
  %v5521 = vpack.c.b16 %v5245, %v5241
  %v5522 = vpack.c.b16 %v5250, %v5246
  %v5523 = vpack.c.b16 %v5251, %v5247
  %v5524 = vpack.c.b16 %v5252, %v5248
  %v5525 = vpack.c.b16 %v5253, %v5249
  %v5526 = vpack.c.b16 %v5258, %v5254
  %v5527 = vpack.c.b16 %v5259, %v5255
  %v5528 = vpack.c.b16 %v5260, %v5256
  %v5529 = vpack.c.b16 %v5261, %v5257
  %v5530 = vpack.c.b16 %v5266, %v5262
  %v5531 = vpack.c.b16 %v5267, %v5263
  %v5532 = vpack.c.b16 %v5268, %v5264
  %v5533 = vpack.c.b16 %v5269, %v5265
  %v5534 = vpack.c.b16 %v5274, %v5270
  %v5535 = vpack.c.b16 %v5275, %v5271
  %v5536 = vpack.c.b16 %v5276, %v5272
  %v5537 = vpack.c.b16 %v5277, %v5273
  %v5538 = vpack.c.b16 %v5282, %v5278
  %v5539 = vpack.c.b16 %v5283, %v5279
  %v5540 = vpack.c.b16 %v5284, %v5280
  %v5541 = vpack.c.b16 %v5285, %v5281
  %5798 = vmatprep.subr.bf16.mxu0 %v5287
  %5799 = vmatpush1.bf16.msra.mxu0 %v5286
  %5800 = vmatprep.subr.bf16.mxu0 %v5291
  %5801 = vmatpush1.bf16.msra.mxu0 %v5290
  %5802 = vmatprep.subr.bf16.mxu0 %v5295
  %5803 = vmatpush1.bf16.msra.mxu0 %v5294
  %5804 = vmatprep.subr.bf16.mxu0 %v5299
  %5805 = vmatpush1.bf16.msra.mxu0 %v5298
  %5806 = vmatprep.subr.bf16.mxu0 %v5303
  %5807 = vmatpush1.bf16.msra.mxu0 %v5302
  %5808 = vmatprep.subr.bf16.mxu0 %v5307
  %5809 = vmatpush1.bf16.msra.mxu0 %v5306
  %5810 = vmatprep.subr.bf16.mxu0 %v5311
  %5811 = vmatpush1.bf16.msra.mxu0 %v5310
  %5812 = vmatprep.subr.bf16.mxu0 %v5315
  %5813 = vmatpush1.bf16.msra.mxu0 %v5314
  %5814 = vmatprep.subr.bf16.mxu0 %v5319
  %5815 = vmatpush1.bf16.msra.mxu0 %v5318
  %5816 = vmatprep.subr.bf16.mxu0 %v5323
  %5817 = vmatpush1.bf16.msra.mxu0 %v5322
  %5818 = vmatprep.subr.bf16.mxu0 %v5327
  %5819 = vmatpush1.bf16.msra.mxu0 %v5326
  %5820 = vmatprep.subr.bf16.mxu0 %v5331
  %5821 = vmatpush1.bf16.msra.mxu0 %v5330
  %5822 = vmatprep.subr.bf16.mxu0 %v5335
  %5823 = vmatpush1.bf16.msra.mxu0 %v5334
  %5824 = vmatprep.subr.bf16.mxu0 %v5339
  %5825 = vmatpush1.bf16.msra.mxu0 %v5338
  %5826 = vmatprep.subr.bf16.mxu0 %v5343
  %5827 = vmatpush1.bf16.msra.mxu0 %v5342
  %5828 = vmatprep.subr.bf16.mxu0 %v5347
  %5829 = vmatpush1.bf16.msra.mxu0 %v5346
  %5830 = vmatprep.mubr.bf16.mxu0 %v4503
  %5831 = vmatmul.mubr.bf16.gmra.mrb[0].mxu0 %v4502
  %v5832 = vpop.f32.mrb[0].mxu0
  %v5833 = vadd.f32 0.0, %v5832
  %v5834 = vpop.f32.mrb[0].mxu0
  %v5835 = vadd.f32 0.0, %v5834
  %v5836 = vpop.f32.mrb[0].mxu0
  %v5837 = vpop.f32.mrb[0].mxu0
  %5838 = vdwg.mxu0
  %5839 = vmatprep.subr.bf16.mxu0 %v5351
  %5840 = vmatpush1.bf16.msra.mxu0 %v5350
  %5841 = vmatprep.subr.bf16.mxu0 %v5355
  %5842 = vmatpush1.bf16.msra.mxu0 %v5354
  %5843 = vmatprep.subr.bf16.mxu0 %v5359
  %5844 = vmatpush1.bf16.msra.mxu0 %v5358
  %5845 = vmatprep.subr.bf16.mxu0 %v5363
  %5846 = vmatpush1.bf16.msra.mxu0 %v5362
  %5847 = vmatprep.subr.bf16.mxu0 %v5367
  %5848 = vmatpush1.bf16.msra.mxu0 %v5366
  %5849 = vmatprep.subr.bf16.mxu0 %v5371
  %5850 = vmatpush1.bf16.msra.mxu0 %v5370
  %5851 = vmatprep.subr.bf16.mxu0 %v5375
  %5852 = vmatpush1.bf16.msra.mxu0 %v5374
  %5853 = vmatprep.subr.bf16.mxu0 %v5379
  %5854 = vmatpush1.bf16.msra.mxu0 %v5378
  %5855 = vmatprep.subr.bf16.mxu0 %v5383
  %5856 = vmatpush1.bf16.msra.mxu0 %v5382
  %5857 = vmatprep.subr.bf16.mxu0 %v5387
  %5858 = vmatpush1.bf16.msra.mxu0 %v5386
  %5859 = vmatprep.subr.bf16.mxu0 %v5391
  %5860 = vmatpush1.bf16.msra.mxu0 %v5390
  %5861 = vmatprep.subr.bf16.mxu0 %v5395
  %5862 = vmatpush1.bf16.msra.mxu0 %v5394
  %5863 = vmatprep.subr.bf16.mxu0 %v5399
  %5864 = vmatpush1.bf16.msra.mxu0 %v5398
  %5865 = vmatprep.subr.bf16.mxu0 %v5403
  %5866 = vmatpush1.bf16.msra.mxu0 %v5402
  %5867 = vmatprep.subr.bf16.mxu0 %v5407
  %5868 = vmatpush1.bf16.msra.mxu0 %v5406
  %5869 = vmatprep.subr.bf16.mxu0 %v5411
  %5870 = vmatpush1.bf16.msra.mxu0 %v5410
  %5871 = vmatprep.mubr.bf16.mxu0 %v4505
  %5872 = vmatmul.mubr.bf16.gmra.mrb[0].mxu0 %v4504
  %v5873 = vpop.f32.mrb[0].mxu0
  %v5874 = vadd.f32 %v5833, %v5873
  %v5875 = vpop.f32.mrb[0].mxu0
  %v5876 = vadd.f32 %v5835, %v5875
  %v5877 = vpop.f32.mrb[0].mxu0
  %v5878 = vpop.f32.mrb[0].mxu0
  %5879 = vdwg.mxu0
  %5880 = vmatprep.subr.bf16.mxu0 %v5415
  %5881 = vmatpush1.bf16.msra.mxu0 %v5414
  %5882 = vmatprep.subr.bf16.mxu0 %v5419
  %5883 = vmatpush1.bf16.msra.mxu0 %v5418
  %5884 = vmatprep.subr.bf16.mxu0 %v5423
  %5885 = vmatpush1.bf16.msra.mxu0 %v5422
  %5886 = vmatprep.subr.bf16.mxu0 %v5427
  %5887 = vmatpush1.bf16.msra.mxu0 %v5426
  %5888 = vmatprep.subr.bf16.mxu0 %v5431
  %5889 = vmatpush1.bf16.msra.mxu0 %v5430
  %5890 = vmatprep.subr.bf16.mxu0 %v5435
  %5891 = vmatpush1.bf16.msra.mxu0 %v5434
  %5892 = vmatprep.subr.bf16.mxu0 %v5439
  %5893 = vmatpush1.bf16.msra.mxu0 %v5438
  %5894 = vmatprep.subr.bf16.mxu0 %v5443
  %5895 = vmatpush1.bf16.msra.mxu0 %v5442
  %5896 = vmatprep.subr.bf16.mxu0 %v5447
  %5897 = vmatpush1.bf16.msra.mxu0 %v5446
  %5898 = vmatprep.subr.bf16.mxu0 %v5451
  %5899 = vmatpush1.bf16.msra.mxu0 %v5450
  %5900 = vmatprep.subr.bf16.mxu0 %v5455
  %5901 = vmatpush1.bf16.msra.mxu0 %v5454
  %5902 = vmatprep.subr.bf16.mxu0 %v5459
  %5903 = vmatpush1.bf16.msra.mxu0 %v5458
  %5904 = vmatprep.subr.bf16.mxu0 %v5463
  %5905 = vmatpush1.bf16.msra.mxu0 %v5462
  %5906 = vmatprep.subr.bf16.mxu0 %v5467
  %5907 = vmatpush1.bf16.msra.mxu0 %v5466
  %5908 = vmatprep.subr.bf16.mxu0 %v5471
  %5909 = vmatpush1.bf16.msra.mxu0 %v5470
  %5910 = vmatprep.subr.bf16.mxu0 %v5475
  %5911 = vmatpush1.bf16.msra.mxu0 %v5474
  %5912 = vmatprep.mubr.bf16.mxu0 %v4507
  %5913 = vmatmul.mubr.bf16.gmra.mrb[0].mxu0 %v4506
  %v5914 = vpop.f32.mrb[0].mxu0
  %v5915 = vadd.f32 %v5874, %v5914
  %v5916 = vpop.f32.mrb[0].mxu0
  %v5917 = vadd.f32 %v5876, %v5916
  %v5918 = vpop.f32.mrb[0].mxu0
  %v5919 = vpop.f32.mrb[0].mxu0
  %5920 = vdwg.mxu0
  %5921 = vmatprep.subr.bf16.mxu0 %v5479
  %5922 = vmatpush1.bf16.msra.mxu0 %v5478
  %5923 = vmatprep.subr.bf16.mxu0 %v5483
  %5924 = vmatpush1.bf16.msra.mxu0 %v5482
  %5925 = vmatprep.subr.bf16.mxu0 %v5487
  %5926 = vmatpush1.bf16.msra.mxu0 %v5486
  %5927 = vmatprep.subr.bf16.mxu0 %v5491
  %5928 = vmatpush1.bf16.msra.mxu0 %v5490
  %5929 = vmatprep.subr.bf16.mxu0 %v5495
  %5930 = vmatpush1.bf16.msra.mxu0 %v5494
  %5931 = vmatprep.subr.bf16.mxu0 %v5499
  %5932 = vmatpush1.bf16.msra.mxu0 %v5498
  %5933 = vmatprep.subr.bf16.mxu0 %v5503
  %5934 = vmatpush1.bf16.msra.mxu0 %v5502
  %5935 = vmatprep.subr.bf16.mxu0 %v5507
  %5936 = vmatpush1.bf16.msra.mxu0 %v5506
  %5937 = vmatprep.subr.bf16.mxu0 %v5511
  %5938 = vmatpush1.bf16.msra.mxu0 %v5510
  %5939 = vmatprep.subr.bf16.mxu0 %v5515
  %5940 = vmatpush1.bf16.msra.mxu0 %v5514
  %5941 = vmatprep.subr.bf16.mxu0 %v5519
  %5942 = vmatpush1.bf16.msra.mxu0 %v5518
  %5943 = vmatprep.subr.bf16.mxu0 %v5523
  %5944 = vmatpush1.bf16.msra.mxu0 %v5522
  %5945 = vmatprep.subr.bf16.mxu0 %v5527
  %5946 = vmatpush1.bf16.msra.mxu0 %v5526
  %5947 = vmatprep.subr.bf16.mxu0 %v5531
  %5948 = vmatpush1.bf16.msra.mxu0 %v5530
  %5949 = vmatprep.subr.bf16.mxu0 %v5535
  %5950 = vmatpush1.bf16.msra.mxu0 %v5534
  %5951 = vmatprep.subr.bf16.mxu0 %v5539
  %5952 = vmatpush1.bf16.msra.mxu0 %v5538
  %5953 = vmatprep.mubr.bf16.mxu0 %v4509
  %5954 = vmatmul.mubr.bf16.gmra.mrb[0].mxu0 %v4508
  %v5955 = vpop.f32.mrb[0].mxu0
  %v5956 = vadd.f32 %v5915, %v5955
  %v5957 = vpop.f32.mrb[0].mxu0
  %v5958 = vadd.f32 %v5917, %v5957
  %v5959 = vpop.f32.mrb[0].mxu0
  %v5960 = vpop.f32.mrb[0].mxu0
  %5961 = vdwg.mxu0
  %5962 = vmatprep.subr.bf16.mxu0 %v5289
  %5963 = vmatpush1.bf16.msra.mxu0 %v5288
  %5964 = vmatprep.subr.bf16.mxu0 %v5293
  %5965 = vmatpush1.bf16.msra.mxu0 %v5292
  %5966 = vmatprep.subr.bf16.mxu0 %v5297
  %5967 = vmatpush1.bf16.msra.mxu0 %v5296
  %5968 = vmatprep.subr.bf16.mxu0 %v5301
  %5969 = vmatpush1.bf16.msra.mxu0 %v5300
  %5970 = vmatprep.subr.bf16.mxu0 %v5305
  %5971 = vmatpush1.bf16.msra.mxu0 %v5304
  %5972 = vmatprep.subr.bf16.mxu0 %v5309
  %5973 = vmatpush1.bf16.msra.mxu0 %v5308
  %5974 = vmatprep.subr.bf16.mxu0 %v5313
  %5975 = vmatpush1.bf16.msra.mxu0 %v5312
  %5976 = vmatprep.subr.bf16.mxu0 %v5317
  %5977 = vmatpush1.bf16.msra.mxu0 %v5316
  %5978 = vmatprep.subr.bf16.mxu0 %v5321
  %5979 = vmatpush1.bf16.msra.mxu0 %v5320
  %5980 = vmatprep.subr.bf16.mxu0 %v5325
  %5981 = vmatpush1.bf16.msra.mxu0 %v5324
  %5982 = vmatprep.subr.bf16.mxu0 %v5329
  %5983 = vmatpush1.bf16.msra.mxu0 %v5328
  %5984 = vmatprep.subr.bf16.mxu0 %v5333
  %5985 = vmatpush1.bf16.msra.mxu0 %v5332
  %5986 = vmatprep.subr.bf16.mxu0 %v5337
  %5987 = vmatpush1.bf16.msra.mxu0 %v5336
  %5988 = vmatprep.subr.bf16.mxu0 %v5341
  %5989 = vmatpush1.bf16.msra.mxu0 %v5340
  %5990 = vmatprep.subr.bf16.mxu0 %v5345
  %5991 = vmatpush1.bf16.msra.mxu0 %v5344
  %5992 = vmatprep.subr.bf16.mxu0 %v5349
  %5993 = vmatpush1.bf16.msra.mxu0 %v5348
  %5994 = vmatprep.mubr.bf16.mxu0 %v4503
  %5995 = vmatmul.mubr.bf16.gmra.mrb[0].mxu0 %v4502
  %v5996 = vpop.f32.mrb[0].mxu0
  %v5997 = vadd.f32 0.0, %v5996
  %v5998 = vpop.f32.mrb[0].mxu0
  %v5999 = vadd.f32 0.0, %v5998
  %v6000 = vpop.f32.mrb[0].mxu0
  %v6001 = vpop.f32.mrb[0].mxu0
  %6002 = vdwg.mxu0
  %6003 = vmatprep.subr.bf16.mxu0 %v5353
  %6004 = vmatpush1.bf16.msra.mxu0 %v5352
  %6005 = vmatprep.subr.bf16.mxu0 %v5357
  %6006 = vmatpush1.bf16.msra.mxu0 %v5356
  %6007 = vmatprep.subr.bf16.mxu0 %v5361
  %6008 = vmatpush1.bf16.msra.mxu0 %v5360
  %6009 = vmatprep.subr.bf16.mxu0 %v5365
  %6010 = vmatpush1.bf16.msra.mxu0 %v5364
  %6011 = vmatprep.subr.bf16.mxu0 %v5369
  %6012 = vmatpush1.bf16.msra.mxu0 %v5368
  %6013 = vmatprep.subr.bf16.mxu0 %v5373
  %6014 = vmatpush1.bf16.msra.mxu0 %v5372
  %6015 = vmatprep.subr.bf16.mxu0 %v5377
  %6016 = vmatpush1.bf16.msra.mxu0 %v5376
  %6017 = vmatprep.subr.bf16.mxu0 %v5381
  %6018 = vmatpush1.bf16.msra.mxu0 %v5380
  %6019 = vmatprep.subr.bf16.mxu0 %v5385
  %6020 = vmatpush1.bf16.msra.mxu0 %v5384
  %6021 = vmatprep.subr.bf16.mxu0 %v5389
  %6022 = vmatpush1.bf16.msra.mxu0 %v5388
  %6023 = vmatprep.subr.bf16.mxu0 %v5393
  %6024 = vmatpush1.bf16.msra.mxu0 %v5392
  %6025 = vmatprep.subr.bf16.mxu0 %v5397
  %6026 = vmatpush1.bf16.msra.mxu0 %v5396
  %6027 = vmatprep.subr.bf16.mxu0 %v5401
  %6028 = vmatpush1.bf16.msra.mxu0 %v5400
  %6029 = vmatprep.subr.bf16.mxu0 %v5405
  %6030 = vmatpush1.bf16.msra.mxu0 %v5404
  %6031 = vmatprep.subr.bf16.mxu0 %v5409
  %6032 = vmatpush1.bf16.msra.mxu0 %v5408
  %6033 = vmatprep.subr.bf16.mxu0 %v5413
  %6034 = vmatpush1.bf16.msra.mxu0 %v5412
  %6035 = vmatprep.mubr.bf16.mxu0 %v4505
  %6036 = vmatmul.mubr.bf16.gmra.mrb[0].mxu0 %v4504
  %v6037 = vpop.f32.mrb[0].mxu0
  %v6038 = vadd.f32 %v5997, %v6037
  %v6039 = vpop.f32.mrb[0].mxu0
  %v6040 = vadd.f32 %v5999, %v6039
  %v6041 = vpop.f32.mrb[0].mxu0
  %v6042 = vpop.f32.mrb[0].mxu0
  %6043 = vdwg.mxu0
  %6044 = vmatprep.subr.bf16.mxu0 %v5417
  %6045 = vmatpush1.bf16.msra.mxu0 %v5416
  %6046 = vmatprep.subr.bf16.mxu0 %v5421
  %6047 = vmatpush1.bf16.msra.mxu0 %v5420
  %6048 = vmatprep.subr.bf16.mxu0 %v5425
  %6049 = vmatpush1.bf16.msra.mxu0 %v5424
  %6050 = vmatprep.subr.bf16.mxu0 %v5429
  %6051 = vmatpush1.bf16.msra.mxu0 %v5428
  %6052 = vmatprep.subr.bf16.mxu0 %v5433
  %6053 = vmatpush1.bf16.msra.mxu0 %v5432
  %6054 = vmatprep.subr.bf16.mxu0 %v5437
  %6055 = vmatpush1.bf16.msra.mxu0 %v5436
  %6056 = vmatprep.subr.bf16.mxu0 %v5441
  %6057 = vmatpush1.bf16.msra.mxu0 %v5440
  %6058 = vmatprep.subr.bf16.mxu0 %v5445
  %6059 = vmatpush1.bf16.msra.mxu0 %v5444
  %6060 = vmatprep.subr.bf16.mxu0 %v5449
  %6061 = vmatpush1.bf16.msra.mxu0 %v5448
  %6062 = vmatprep.subr.bf16.mxu0 %v5453
  %6063 = vmatpush1.bf16.msra.mxu0 %v5452
  %6064 = vmatprep.subr.bf16.mxu0 %v5457
  %6065 = vmatpush1.bf16.msra.mxu0 %v5456
  %6066 = vmatprep.subr.bf16.mxu0 %v5461
  %6067 = vmatpush1.bf16.msra.mxu0 %v5460
  %6068 = vmatprep.subr.bf16.mxu0 %v5465
  %6069 = vmatpush1.bf16.msra.mxu0 %v5464
  %6070 = vmatprep.subr.bf16.mxu0 %v5469
  %6071 = vmatpush1.bf16.msra.mxu0 %v5468
  %6072 = vmatprep.subr.bf16.mxu0 %v5473
  %6073 = vmatpush1.bf16.msra.mxu0 %v5472
  %6074 = vmatprep.subr.bf16.mxu0 %v5477
  %6075 = vmatpush1.bf16.msra.mxu0 %v5476
  %6076 = vmatprep.mubr.bf16.mxu0 %v4507
  %6077 = vmatmul.mubr.bf16.gmra.mrb[0].mxu0 %v4506
  %v6078 = vpop.f32.mrb[0].mxu0
  %v6079 = vadd.f32 %v6038, %v6078
  %v6080 = vpop.f32.mrb[0].mxu0
  %v6081 = vadd.f32 %v6040, %v6080
  %v6082 = vpop.f32.mrb[0].mxu0
  %v6083 = vpop.f32.mrb[0].mxu0
  %6084 = vdwg.mxu0
  %6085 = vmatprep.subr.bf16.mxu0 %v5481
  %6086 = vmatpush1.bf16.msra.mxu0 %v5480
  %6087 = vmatprep.subr.bf16.mxu0 %v5485
  %6088 = vmatpush1.bf16.msra.mxu0 %v5484
  %6089 = vmatprep.subr.bf16.mxu0 %v5489
  %6090 = vmatpush1.bf16.msra.mxu0 %v5488
  %6091 = vmatprep.subr.bf16.mxu0 %v5493
  %6092 = vmatpush1.bf16.msra.mxu0 %v5492
  %6093 = vmatprep.subr.bf16.mxu0 %v5497
  %6094 = vmatpush1.bf16.msra.mxu0 %v5496
  %6095 = vmatprep.subr.bf16.mxu0 %v5501
  %6096 = vmatpush1.bf16.msra.mxu0 %v5500
  %6097 = vmatprep.subr.bf16.mxu0 %v5505
  %6098 = vmatpush1.bf16.msra.mxu0 %v5504
  %6099 = vmatprep.subr.bf16.mxu0 %v5509
  %6100 = vmatpush1.bf16.msra.mxu0 %v5508
  %6101 = vmatprep.subr.bf16.mxu0 %v5513
  %6102 = vmatpush1.bf16.msra.mxu0 %v5512
  %6103 = vmatprep.subr.bf16.mxu0 %v5517
  %6104 = vmatpush1.bf16.msra.mxu0 %v5516
  %6105 = vmatprep.subr.bf16.mxu0 %v5521
  %6106 = vmatpush1.bf16.msra.mxu0 %v5520
  %6107 = vmatprep.subr.bf16.mxu0 %v5525
  %6108 = vmatpush1.bf16.msra.mxu0 %v5524
  %6109 = vmatprep.subr.bf16.mxu0 %v5529
  %6110 = vmatpush1.bf16.msra.mxu0 %v5528
  %6111 = vmatprep.subr.bf16.mxu0 %v5533
  %6112 = vmatpush1.bf16.msra.mxu0 %v5532
  %6113 = vmatprep.subr.bf16.mxu0 %v5537
  %6114 = vmatpush1.bf16.msra.mxu0 %v5536
  %6115 = vmatprep.subr.bf16.mxu0 %v5541
  %6116 = vmatpush1.bf16.msra.mxu0 %v5540
  %6117 = vmatprep.mubr.bf16.mxu0 %v4509
  %6118 = vmatmul.mubr.bf16.gmra.mrb[0].mxu0 %v4508
  %v6119 = vpop.f32.mrb[0].mxu0
  %v6120 = vadd.f32 %v6079, %v6119
  %v6121 = vpop.f32.mrb[0].mxu0
  %v6122 = vadd.f32 %v6081, %v6121
  %v6123 = vpop.f32.mrb[0].mxu0
  %v6124 = vpop.f32.mrb[0].mxu0
  %6125 = vdwg.mxu0
  %vm6126 = vcmask 1045504
  %v6127 = vsel %vm6126, %v5956, 0.0
  %v6128 = vrot.slane %v6127, 4
  %v6129 = vadd.f32 %v6127, %v6128
  %v6130 = vrot.slane %v6129, 2
  %v6131 = vadd.f32 %v6129, %v6130
  %v6132 = vrot.slane %v6131, 1
  %v6133 = vadd.f32 %v6131, %v6132
  %v6134 = vsel %vm6126, %v5958, 0.0
  %v6135 = vrot.slane %v6134, 4
  %v6136 = vadd.f32 %v6134, %v6135
  %v6137 = vrot.slane %v6136, 2
  %v6138 = vadd.f32 %v6136, %v6137
  %v6139 = vrot.slane %v6138, 1
  %v6140 = vadd.f32 %v6138, %v6139
  %v6141 = vsel %vm6126, %v6120, 0.0
  %v6142 = vrot.slane %v6141, 4
  %v6143 = vadd.f32 %v6141, %v6142
  %v6144 = vrot.slane %v6143, 2
  %v6145 = vadd.f32 %v6143, %v6144
  %v6146 = vrot.slane %v6145, 1
  %v6147 = vadd.f32 %v6145, %v6146
  %v6148 = vsel %vm6126, %v6122, 0.0
  %v6149 = vrot.slane %v6148, 4
  %v6150 = vadd.f32 %v6148, %v6149
  %v6151 = vrot.slane %v6150, 2
  %v6152 = vadd.f32 %v6150, %v6151
  %v6153 = vrot.slane %v6152, 1
  %v6154 = vadd.f32 %v6152, %v6153
  %v6155 = vrcp.pop 6.0
  %v6156 = vmul.f32 %v6133, %v6155
  %v6157 = vmul.f32 %v6140, %v6155
  %v6158 = vmul.f32 %v6147, %v6155
  %v6159 = vmul.f32 %v6154, %v6155
  %v6160 = vmul.f32 %v5956, %v5956
  %v6161 = vmul.f32 %v5958, %v5958
  %v6162 = vmul.f32 %v6120, %v6120
  %v6163 = vmul.f32 %v6122, %v6122
  %v6164 = vsel %vm6126, %v6160, 0.0
  %v6165 = vrot.slane %v6164, 4
  %v6166 = vadd.f32 %v6164, %v6165
  %v6167 = vrot.slane %v6166, 2
  %v6168 = vadd.f32 %v6166, %v6167
  %v6169 = vrot.slane %v6168, 1
  %v6170 = vadd.f32 %v6168, %v6169
  %v6171 = vsel %vm6126, %v6161, 0.0
  %v6172 = vrot.slane %v6171, 4
  %v6173 = vadd.f32 %v6171, %v6172
  %v6174 = vrot.slane %v6173, 2
  %v6175 = vadd.f32 %v6173, %v6174
  %v6176 = vrot.slane %v6175, 1
  %v6177 = vadd.f32 %v6175, %v6176
  %v6178 = vsel %vm6126, %v6162, 0.0
  %v6179 = vrot.slane %v6178, 4
  %v6180 = vadd.f32 %v6178, %v6179
  %v6181 = vrot.slane %v6180, 2
  %v6182 = vadd.f32 %v6180, %v6181
  %v6183 = vrot.slane %v6182, 1
  %v6184 = vadd.f32 %v6182, %v6183
  %v6185 = vsel %vm6126, %v6163, 0.0
  %v6186 = vrot.slane %v6185, 4
  %v6187 = vadd.f32 %v6185, %v6186
  %v6188 = vrot.slane %v6187, 2
  %v6189 = vadd.f32 %v6187, %v6188
  %v6190 = vrot.slane %v6189, 1
  %v6191 = vadd.f32 %v6189, %v6190
  %v6192 = vmul.f32 %v6170, %v6155
  %v6193 = vmul.f32 %v6177, %v6155
  %v6194 = vmul.f32 %v6184, %v6155
  %v6195 = vmul.f32 %v6191, %v6155
  %v6196 = vmul.f32 %v6156, %v6156
  %v6197 = vmul.f32 %v6157, %v6157
  %v6198 = vmul.f32 %v6158, %v6158
  %v6199 = vmul.f32 %v6159, %v6159
  %v6200 = vsub.f32 %v6192, %v6196
  %v6201 = vsub.f32 %v6193, %v6197
  %v6202 = vsub.f32 %v6194, %v6198
  %v6203 = vsub.f32 %v6195, %v6199
  %v6204 = vmax.f32 %v6200, 0.0
  %v6205 = vmax.f32 %v6201, 0.0
  %v6206 = vmax.f32 %v6202, 0.0
  %v6207 = vmax.f32 %v6203, 0.0
  %s6208 = scalar_lea.vmem %s1, 6
  %v6209 = vld [vmem:[%s6208] ss:$8 sm:$0xf]
  %v6210 = vadd.f32 %v6204, 1e-05
  %v6211 = vadd.f32 %v6205, 1e-05
  %v6212 = vadd.f32 %v6206, 1e-05
  %v6213 = vadd.f32 %v6207, 1e-05
  %v6214 = vrsqrt.pop %v6210
  %v6215 = vrsqrt.pop %v6211
  %v6216 = vrsqrt.pop %v6212
  %v6217 = vrsqrt.pop %v6213
  %v6222 = vcombine.low %v6214, %v6215
  %v6223 = vcombine.low %v6216, %v6217
  %v6225 = vunpack.c.l.s4 1966171168
  %v6226 = vunpack.c.0.s8 %v6225
  %v6227 = vlaneseq
  %v6228 = vshrl.u32 %v6227, 7
  %v6229 = vsub.s32 %v6226, %v6228
  %v6230 = vrot.slane %v6222, %v6229
  %v6232 = vunpack.c.l.s4 1966171168
  %v6233 = vunpack.c.0.s8 %v6232
  %v6234 = vlaneseq
  %v6235 = vshrl.u32 %v6234, 7
  %v6236 = vsub.s32 %v6233, %v6235
  %v6237 = vrot.slane %v6223, %v6236
  %v6238 = vcombine.low %v6230, %v6237
  %v6240 = vunpack.c.l.s4 1966171168
  %v6241 = vunpack.c.0.s8 %v6240
  %v6242 = vlaneseq
  %v6243 = vshrl.u32 %v6242, 7
  %v6244 = vsub.s32 %v6241, %v6243
  %v6245 = vrot.slane %v6238, %v6244
  %v6247 = vmul.f32 %v6209, %v6245
  %v6249 = vlaneseq
  %v6250 = vshrl.u32 %v6249, 7
  %v6251 = vsub.s32 0, %v6250
  %v6252 = vrot.slane %v6247, %v6251
  %v6253 = vlaneseq
  %v6254 = vshrl.u32 %v6253, 7
  %v6255 = vsub.s32 1, %v6254
  %v6256 = vrot.slane %v6247, %v6255
  %v6257 = vlaneseq
  %v6258 = vshrl.u32 %v6257, 7
  %v6259 = vsub.s32 2, %v6258
  %v6260 = vrot.slane %v6247, %v6259
  %v6261 = vlaneseq
  %v6262 = vshrl.u32 %v6261, 7
  %v6263 = vsub.s32 3, %v6262
  %v6264 = vrot.slane %v6247, %v6263
  %v6269 = vmul.f32 %v5956, %v6252
  %v6270 = vmul.f32 %v5958, %v6256
  %v6271 = vmul.f32 %v6120, %v6260
  %v6272 = vmul.f32 %v6122, %v6264
  %s6273 = scalar_lea.vmem %s1, 7
  %v6274 = vld [vmem:[%s6273] ss:$8 sm:$0xf]
  %v6275 = vmul.f32 %v6156, %v6252
  %v6276 = vmul.f32 %v6157, %v6256
  %v6277 = vmul.f32 %v6158, %v6260
  %v6278 = vmul.f32 %v6159, %v6264
  %v6283 = vcombine.low %v6275, %v6276
  %v6284 = vcombine.low %v6277, %v6278
  %v6286 = vunpack.c.l.s4 1966171168
  %v6287 = vunpack.c.0.s8 %v6286
  %v6288 = vlaneseq
  %v6289 = vshrl.u32 %v6288, 7
  %v6290 = vsub.s32 %v6287, %v6289
  %v6291 = vrot.slane %v6283, %v6290
  %v6293 = vunpack.c.l.s4 1966171168
  %v6294 = vunpack.c.0.s8 %v6293
  %v6295 = vlaneseq
  %v6296 = vshrl.u32 %v6295, 7
  %v6297 = vsub.s32 %v6294, %v6296
  %v6298 = vrot.slane %v6284, %v6297
  %v6299 = vcombine.low %v6291, %v6298
  %v6301 = vunpack.c.l.s4 1966171168
  %v6302 = vunpack.c.0.s8 %v6301
  %v6303 = vlaneseq
  %v6304 = vshrl.u32 %v6303, 7
  %v6305 = vsub.s32 %v6302, %v6304
  %v6306 = vrot.slane %v6299, %v6305
  %v6308 = vsub.f32 %v6274, %v6306
  %v6310 = vlaneseq
  %v6311 = vshrl.u32 %v6310, 7
  %v6312 = vsub.s32 0, %v6311
  %v6313 = vrot.slane %v6308, %v6312
  %v6314 = vlaneseq
  %v6315 = vshrl.u32 %v6314, 7
  %v6316 = vsub.s32 1, %v6315
  %v6317 = vrot.slane %v6308, %v6316
  %v6318 = vlaneseq
  %v6319 = vshrl.u32 %v6318, 7
  %v6320 = vsub.s32 2, %v6319
  %v6321 = vrot.slane %v6308, %v6320
  %v6322 = vlaneseq
  %v6323 = vshrl.u32 %v6322, 7
  %v6324 = vsub.s32 3, %v6323
  %v6325 = vrot.slane %v6308, %v6324
  %v6330 = vadd.f32 %v6269, %v6313
  %v6331 = vadd.f32 %v6270, %v6317
  %v6332 = vadd.f32 %v6271, %v6321
  %v6333 = vadd.f32 %v6272, %v6325
  %v6334 = vmax.f32 %v6330, 0.0
  %v6335 = vmax.f32 %v6331, 0.0
  %v6336 = vmax.f32 %v6332, 0.0
  %v6337 = vmax.f32 %v6333, 0.0
  %v6338 = vld [vmem:[%s6] sm:$0xff]
  %v6339 = vld [vmem:[%s6 + $0x8] sm:$0xff]
  %v6340 = vld [vmem:[%s6 + $0x10] sm:$0xff]
  %v6341 = vld [vmem:[%s6 + $0x18] sm:$0xff]
  %v6342 = vld [vmem:[%s6 + $0x20] sm:$0xff]
  %v6343 = vld [vmem:[%s6 + $0x28] sm:$0xff]
  %v6344 = vld [vmem:[%s6 + $0x30] sm:$0xff]
  %v6345 = vld [vmem:[%s6 + $0x38] sm:$0xff]
  %v6346 = vld [vmem:[%s6 + $0x40] sm:$0xff]
  %v6347 = vld [vmem:[%s6 + $0x48] sm:$0xff]
  %v6348 = vld [vmem:[%s6 + $0x50] sm:$0xff]
  %v6349 = vld [vmem:[%s6 + $0x58] sm:$0xff]
  %v6350 = vld [vmem:[%s6 + $0x60] sm:$0xff]
  %v6351 = vld [vmem:[%s6 + $0x68] sm:$0xff]
  %v6352 = vld [vmem:[%s6 + $0x70] sm:$0xff]
  %v6353 = vld [vmem:[%s6 + $0x78] sm:$0xff]
  %v6354 = vld [vmem:[%s6 + $0x80] sm:$0xff]
  %v6355 = vld [vmem:[%s6 + $0x88] sm:$0xff]
  %v6356 = vld [vmem:[%s6 + $0x90] sm:$0xff]
  %v6357 = vld [vmem:[%s6 + $0x98] sm:$0xff]
  %v6358 = vld [vmem:[%s6 + $0xa0] sm:$0xff]
  %v6359 = vld [vmem:[%s6 + $0xa8] sm:$0xff]
  %v6360 = vld [vmem:[%s6 + $0xb0] sm:$0xff]
  %v6361 = vld [vmem:[%s6 + $0xb8] sm:$0xff]
  %v6362 = vld [vmem:[%s6 + $0xc0] sm:$0xff]
  %v6363 = vld [vmem:[%s6 + $0xc8] sm:$0xff]
  %v6364 = vld [vmem:[%s6 + $0xd0] sm:$0xff]
  %v6365 = vld [vmem:[%s6 + $0xd8] sm:$0xff]
  %v6366 = vld [vmem:[%s6 + $0xe0] sm:$0xff]
  %v6367 = vld [vmem:[%s6 + $0xe8] sm:$0xff]
  %v6368 = vld [vmem:[%s6 + $0xf0] sm:$0xff]
  %v6369 = vld [vmem:[%s6 + $0xf8] sm:$0xff]
  %v6370 = vld [vmem:[%s6 + $0x100] sm:$0xff]
  %v6371 = vld [vmem:[%s6 + $0x108] sm:$0xff]
  %v6372 = vld [vmem:[%s6 + $0x110] sm:$0xff]
  %v6373 = vld [vmem:[%s6 + $0x118] sm:$0xff]
  %v6374 = vld [vmem:[%s6 + $0x120] sm:$0xff]
  %v6375 = vld [vmem:[%s6 + $0x128] sm:$0xff]
  %v6376 = vld [vmem:[%s6 + $0x130] sm:$0xff]
  %v6377 = vld [vmem:[%s6 + $0x138] sm:$0xff]
  %v6378 = vld [vmem:[%s6 + $0x140] sm:$0xff]
  %v6379 = vld [vmem:[%s6 + $0x148] sm:$0xff]
  %v6380 = vld [vmem:[%s6 + $0x150] sm:$0xff]
  %v6381 = vld [vmem:[%s6 + $0x158] sm:$0xff]
  %v6382 = vld [vmem:[%s6 + $0x160] sm:$0xff]
  %v6383 = vld [vmem:[%s6 + $0x168] sm:$0xff]
  %v6384 = vld [vmem:[%s6 + $0x170] sm:$0xff]
  %v6385 = vld [vmem:[%s6 + $0x178] sm:$0xff]
  %v6386 = vld [vmem:[%s6 + $0x180] sm:$0xff]
  %v6387 = vld [vmem:[%s6 + $0x188] sm:$0xff]
  %v6388 = vld [vmem:[%s6 + $0x190] sm:$0xff]
  %v6389 = vld [vmem:[%s6 + $0x198] sm:$0xff]
  %v6390 = vld [vmem:[%s6 + $0x1a0] sm:$0xff]
  %v6391 = vld [vmem:[%s6 + $0x1a8] sm:$0xff]
  %v6392 = vld [vmem:[%s6 + $0x1b0] sm:$0xff]
  %v6393 = vld [vmem:[%s6 + $0x1b8] sm:$0xff]
  %v6394 = vld [vmem:[%s6 + $0x1c0] sm:$0xff]
  %v6395 = vld [vmem:[%s6 + $0x1c8] sm:$0xff]
  %v6396 = vld [vmem:[%s6 + $0x1d0] sm:$0xff]
  %v6397 = vld [vmem:[%s6 + $0x1d8] sm:$0xff]
  %v6398 = vld [vmem:[%s6 + $0x1e0] sm:$0xff]
  %v6399 = vld [vmem:[%s6 + $0x1e8] sm:$0xff]
  %v6400 = vld [vmem:[%s6 + $0x1f0] sm:$0xff]
  %v6401 = vld [vmem:[%s6 + $0x1f8] sm:$0xff]
  %v6402 = vpack.c.bf16 %v6334, %v6334
  %v6403 = vpack.c.bf16 %v6335, %v6335
  %v6404 = vpack.c.bf16 %v6336, %v6336
  %v6405 = vpack.c.bf16 %v6337, %v6337
  %v6470 = vunpack.c.l.b16 %v6338
  %v6471 = vunpack.c.h.b16 %v6338
  %v6472 = vunpack.c.l.b16 %v6339
  %v6473 = vunpack.c.h.b16 %v6339
  %v6474 = vunpack.c.l.b16 %v6340
  %v6475 = vunpack.c.h.b16 %v6340
  %v6476 = vunpack.c.l.b16 %v6341
  %v6477 = vunpack.c.h.b16 %v6341
  %v6478 = vunpack.c.l.b16 %v6342
  %v6479 = vunpack.c.h.b16 %v6342
  %v6480 = vunpack.c.l.b16 %v6343
  %v6481 = vunpack.c.h.b16 %v6343
  %v6482 = vunpack.c.l.b16 %v6344
  %v6483 = vunpack.c.h.b16 %v6344
  %v6484 = vunpack.c.l.b16 %v6345
  %v6485 = vunpack.c.h.b16 %v6345
  %v6486 = vunpack.c.l.b16 %v6346
  %v6487 = vunpack.c.h.b16 %v6346
  %v6488 = vunpack.c.l.b16 %v6347
  %v6489 = vunpack.c.h.b16 %v6347
  %v6490 = vunpack.c.l.b16 %v6348
  %v6491 = vunpack.c.h.b16 %v6348
  %v6492 = vunpack.c.l.b16 %v6349
  %v6493 = vunpack.c.h.b16 %v6349
  %v6494 = vunpack.c.l.b16 %v6350
  %v6495 = vunpack.c.h.b16 %v6350
  %v6496 = vunpack.c.l.b16 %v6351
  %v6497 = vunpack.c.h.b16 %v6351
  %v6498 = vunpack.c.l.b16 %v6352
  %v6499 = vunpack.c.h.b16 %v6352
  %v6500 = vunpack.c.l.b16 %v6353
  %v6501 = vunpack.c.h.b16 %v6353
  %v6502 = vunpack.c.l.b16 %v6354
  %v6503 = vunpack.c.h.b16 %v6354
  %v6504 = vunpack.c.l.b16 %v6355
  %v6505 = vunpack.c.h.b16 %v6355
  %v6506 = vunpack.c.l.b16 %v6356
  %v6507 = vunpack.c.h.b16 %v6356
  %v6508 = vunpack.c.l.b16 %v6357
  %v6509 = vunpack.c.h.b16 %v6357
  %v6510 = vunpack.c.l.b16 %v6358
  %v6511 = vunpack.c.h.b16 %v6358
  %v6512 = vunpack.c.l.b16 %v6359
  %v6513 = vunpack.c.h.b16 %v6359
  %v6514 = vunpack.c.l.b16 %v6360
  %v6515 = vunpack.c.h.b16 %v6360
  %v6516 = vunpack.c.l.b16 %v6361
  %v6517 = vunpack.c.h.b16 %v6361
  %v6518 = vunpack.c.l.b16 %v6362
  %v6519 = vunpack.c.h.b16 %v6362
  %v6520 = vunpack.c.l.b16 %v6363
  %v6521 = vunpack.c.h.b16 %v6363
  %v6522 = vunpack.c.l.b16 %v6364
  %v6523 = vunpack.c.h.b16 %v6364
  %v6524 = vunpack.c.l.b16 %v6365
  %v6525 = vunpack.c.h.b16 %v6365
  %v6526 = vunpack.c.l.b16 %v6366
  %v6527 = vunpack.c.h.b16 %v6366
  %v6528 = vunpack.c.l.b16 %v6367
  %v6529 = vunpack.c.h.b16 %v6367
  %v6530 = vunpack.c.l.b16 %v6368
  %v6531 = vunpack.c.h.b16 %v6368
  %v6532 = vunpack.c.l.b16 %v6369
  %v6533 = vunpack.c.h.b16 %v6369
  %v6534 = vunpack.c.l.b16 %v6370
  %v6535 = vunpack.c.h.b16 %v6370
  %v6536 = vunpack.c.l.b16 %v6371
  %v6537 = vunpack.c.h.b16 %v6371
  %v6538 = vunpack.c.l.b16 %v6372
  %v6539 = vunpack.c.h.b16 %v6372
  %v6540 = vunpack.c.l.b16 %v6373
  %v6541 = vunpack.c.h.b16 %v6373
  %v6542 = vunpack.c.l.b16 %v6374
  %v6543 = vunpack.c.h.b16 %v6374
  %v6544 = vunpack.c.l.b16 %v6375
  %v6545 = vunpack.c.h.b16 %v6375
  %v6546 = vunpack.c.l.b16 %v6376
  %v6547 = vunpack.c.h.b16 %v6376
  %v6548 = vunpack.c.l.b16 %v6377
  %v6549 = vunpack.c.h.b16 %v6377
  %v6550 = vunpack.c.l.b16 %v6378
  %v6551 = vunpack.c.h.b16 %v6378
  %v6552 = vunpack.c.l.b16 %v6379
  %v6553 = vunpack.c.h.b16 %v6379
  %v6554 = vunpack.c.l.b16 %v6380
  %v6555 = vunpack.c.h.b16 %v6380
  %v6556 = vunpack.c.l.b16 %v6381
  %v6557 = vunpack.c.h.b16 %v6381
  %v6558 = vunpack.c.l.b16 %v6382
  %v6559 = vunpack.c.h.b16 %v6382
  %v6560 = vunpack.c.l.b16 %v6383
  %v6561 = vunpack.c.h.b16 %v6383
  %v6562 = vunpack.c.l.b16 %v6384
  %v6563 = vunpack.c.h.b16 %v6384
  %v6564 = vunpack.c.l.b16 %v6385
  %v6565 = vunpack.c.h.b16 %v6385
  %v6566 = vunpack.c.l.b16 %v6386
  %v6567 = vunpack.c.h.b16 %v6386
  %v6568 = vunpack.c.l.b16 %v6387
  %v6569 = vunpack.c.h.b16 %v6387
  %v6570 = vunpack.c.l.b16 %v6388
  %v6571 = vunpack.c.h.b16 %v6388
  %v6572 = vunpack.c.l.b16 %v6389
  %v6573 = vunpack.c.h.b16 %v6389
  %v6574 = vunpack.c.l.b16 %v6390
  %v6575 = vunpack.c.h.b16 %v6390
  %v6576 = vunpack.c.l.b16 %v6391
  %v6577 = vunpack.c.h.b16 %v6391
  %v6578 = vunpack.c.l.b16 %v6392
  %v6579 = vunpack.c.h.b16 %v6392
  %v6580 = vunpack.c.l.b16 %v6393
  %v6581 = vunpack.c.h.b16 %v6393
  %v6582 = vunpack.c.l.b16 %v6394
  %v6583 = vunpack.c.h.b16 %v6394
  %v6584 = vunpack.c.l.b16 %v6395
  %v6585 = vunpack.c.h.b16 %v6395
  %v6586 = vunpack.c.l.b16 %v6396
  %v6587 = vunpack.c.h.b16 %v6396
  %v6588 = vunpack.c.l.b16 %v6397
  %v6589 = vunpack.c.h.b16 %v6397
  %v6590 = vunpack.c.l.b16 %v6398
  %v6591 = vunpack.c.h.b16 %v6398
  %v6592 = vunpack.c.l.b16 %v6399
  %v6593 = vunpack.c.h.b16 %v6399
  %v6594 = vunpack.c.l.b16 %v6400
  %v6595 = vunpack.c.h.b16 %v6400
  %v6596 = vunpack.c.l.b16 %v6401
  %v6597 = vunpack.c.h.b16 %v6401
  %v6598 = vpack.c.b16 %v6472, %v6470
  %v6599 = vpack.c.b16 %v6473, %v6471
  %v6600 = vpack.c.b16 %v6476, %v6474
  %v6601 = vpack.c.b16 %v6477, %v6475
  %v6602 = vpack.c.b16 %v6480, %v6478
  %v6603 = vpack.c.b16 %v6481, %v6479
  %v6604 = vpack.c.b16 %v6484, %v6482
  %v6605 = vpack.c.b16 %v6485, %v6483
  %v6606 = vpack.c.b16 %v6488, %v6486
  %v6607 = vpack.c.b16 %v6489, %v6487
  %v6608 = vpack.c.b16 %v6492, %v6490
  %v6609 = vpack.c.b16 %v6493, %v6491
  %v6610 = vpack.c.b16 %v6496, %v6494
  %v6611 = vpack.c.b16 %v6497, %v6495
  %v6612 = vpack.c.b16 %v6500, %v6498
  %v6613 = vpack.c.b16 %v6501, %v6499
  %v6614 = vpack.c.b16 %v6504, %v6502
  %v6615 = vpack.c.b16 %v6505, %v6503
  %v6616 = vpack.c.b16 %v6508, %v6506
  %v6617 = vpack.c.b16 %v6509, %v6507
  %v6618 = vpack.c.b16 %v6512, %v6510
  %v6619 = vpack.c.b16 %v6513, %v6511
  %v6620 = vpack.c.b16 %v6516, %v6514
  %v6621 = vpack.c.b16 %v6517, %v6515
  %v6622 = vpack.c.b16 %v6520, %v6518
  %v6623 = vpack.c.b16 %v6521, %v6519
  %v6624 = vpack.c.b16 %v6524, %v6522
  %v6625 = vpack.c.b16 %v6525, %v6523
  %v6626 = vpack.c.b16 %v6528, %v6526
  %v6627 = vpack.c.b16 %v6529, %v6527
  %v6628 = vpack.c.b16 %v6532, %v6530
  %v6629 = vpack.c.b16 %v6533, %v6531
  %v6630 = vpack.c.b16 %v6536, %v6534
  %v6631 = vpack.c.b16 %v6537, %v6535
  %v6632 = vpack.c.b16 %v6540, %v6538
  %v6633 = vpack.c.b16 %v6541, %v6539
  %v6634 = vpack.c.b16 %v6544, %v6542
  %v6635 = vpack.c.b16 %v6545, %v6543
  %v6636 = vpack.c.b16 %v6548, %v6546
  %v6637 = vpack.c.b16 %v6549, %v6547
  %v6638 = vpack.c.b16 %v6552, %v6550
  %v6639 = vpack.c.b16 %v6553, %v6551
  %v6640 = vpack.c.b16 %v6556, %v6554
  %v6641 = vpack.c.b16 %v6557, %v6555
  %v6642 = vpack.c.b16 %v6560, %v6558
  %v6643 = vpack.c.b16 %v6561, %v6559
  %v6644 = vpack.c.b16 %v6564, %v6562
  %v6645 = vpack.c.b16 %v6565, %v6563
  %v6646 = vpack.c.b16 %v6568, %v6566
  %v6647 = vpack.c.b16 %v6569, %v6567
  %v6648 = vpack.c.b16 %v6572, %v6570
  %v6649 = vpack.c.b16 %v6573, %v6571
  %v6650 = vpack.c.b16 %v6576, %v6574
  %v6651 = vpack.c.b16 %v6577, %v6575
  %v6652 = vpack.c.b16 %v6580, %v6578
  %v6653 = vpack.c.b16 %v6581, %v6579
  %v6654 = vpack.c.b16 %v6584, %v6582
  %v6655 = vpack.c.b16 %v6585, %v6583
  %v6656 = vpack.c.b16 %v6588, %v6586
  %v6657 = vpack.c.b16 %v6589, %v6587
  %v6658 = vpack.c.b16 %v6592, %v6590
  %v6659 = vpack.c.b16 %v6593, %v6591
  %v6660 = vpack.c.b16 %v6596, %v6594
  %v6661 = vpack.c.b16 %v6597, %v6595
  %6726 = vmatprep.subr.bf16.mxu0 %v6599
  %6727 = vmatpush1.bf16.msra.mxu0 %v6598
  %6728 = vmatprep.subr.bf16.mxu0 %v6601
  %6729 = vmatpush1.bf16.msra.mxu0 %v6600
  %6730 = vmatprep.subr.bf16.mxu0 %v6603
  %6731 = vmatpush1.bf16.msra.mxu0 %v6602
  %6732 = vmatprep.subr.bf16.mxu0 %v6605
  %6733 = vmatpush1.bf16.msra.mxu0 %v6604
  %6734 = vmatprep.subr.bf16.mxu0 %v6607
  %6735 = vmatpush1.bf16.msra.mxu0 %v6606
  %6736 = vmatprep.subr.bf16.mxu0 %v6609
  %6737 = vmatpush1.bf16.msra.mxu0 %v6608
  %6738 = vmatprep.subr.bf16.mxu0 %v6611
  %6739 = vmatpush1.bf16.msra.mxu0 %v6610
  %6740 = vmatprep.subr.bf16.mxu0 %v6613
  %6741 = vmatpush1.bf16.msra.mxu0 %v6612
  %6742 = vmatprep.subr.bf16.mxu0 %v6615
  %6743 = vmatpush1.bf16.msra.mxu0 %v6614
  %6744 = vmatprep.subr.bf16.mxu0 %v6617
  %6745 = vmatpush1.bf16.msra.mxu0 %v6616
  %6746 = vmatprep.subr.bf16.mxu0 %v6619
  %6747 = vmatpush1.bf16.msra.mxu0 %v6618
  %6748 = vmatprep.subr.bf16.mxu0 %v6621
  %6749 = vmatpush1.bf16.msra.mxu0 %v6620
  %6750 = vmatprep.subr.bf16.mxu0 %v6623
  %6751 = vmatpush1.bf16.msra.mxu0 %v6622
  %6752 = vmatprep.subr.bf16.mxu0 %v6625
  %6753 = vmatpush1.bf16.msra.mxu0 %v6624
  %6754 = vmatprep.subr.bf16.mxu0 %v6627
  %6755 = vmatpush1.bf16.msra.mxu0 %v6626
  %6756 = vmatprep.subr.bf16.mxu0 %v6629
  %6757 = vmatpush1.bf16.msra.mxu0 %v6628
  %6758 = vmatprep.mubr.bf16.mxu0 %v6403
  %6759 = vmatmul.mubr.bf16.gmra.mrb[0].mxu0 %v6402
  %v6760 = vpop.f32.mrb[0].mxu0
  %v6761 = vadd.f32 0.0, %v6760
  %v6762 = vpop.f32.mrb[0].mxu0
  %v6763 = vadd.f32 0.0, %v6762
  %v6764 = vpop.f32.mrb[0].mxu0
  %v6765 = vpop.f32.mrb[0].mxu0
  %6766 = vdwg.mxu0
  %6767 = vmatprep.subr.bf16.mxu0 %v6631
  %6768 = vmatpush1.bf16.msra.mxu0 %v6630
  %6769 = vmatprep.subr.bf16.mxu0 %v6633
  %6770 = vmatpush1.bf16.msra.mxu0 %v6632
  %6771 = vmatprep.subr.bf16.mxu0 %v6635
  %6772 = vmatpush1.bf16.msra.mxu0 %v6634
  %6773 = vmatprep.subr.bf16.mxu0 %v6637
  %6774 = vmatpush1.bf16.msra.mxu0 %v6636
  %6775 = vmatprep.subr.bf16.mxu0 %v6639
  %6776 = vmatpush1.bf16.msra.mxu0 %v6638
  %6777 = vmatprep.subr.bf16.mxu0 %v6641
  %6778 = vmatpush1.bf16.msra.mxu0 %v6640
  %6779 = vmatprep.subr.bf16.mxu0 %v6643
  %6780 = vmatpush1.bf16.msra.mxu0 %v6642
  %6781 = vmatprep.subr.bf16.mxu0 %v6645
  %6782 = vmatpush1.bf16.msra.mxu0 %v6644
  %6783 = vmatprep.subr.bf16.mxu0 %v6647
  %6784 = vmatpush1.bf16.msra.mxu0 %v6646
  %6785 = vmatprep.subr.bf16.mxu0 %v6649
  %6786 = vmatpush1.bf16.msra.mxu0 %v6648
  %6787 = vmatprep.subr.bf16.mxu0 %v6651
  %6788 = vmatpush1.bf16.msra.mxu0 %v6650
  %6789 = vmatprep.subr.bf16.mxu0 %v6653
  %6790 = vmatpush1.bf16.msra.mxu0 %v6652
  %6791 = vmatprep.subr.bf16.mxu0 %v6655
  %6792 = vmatpush1.bf16.msra.mxu0 %v6654
  %6793 = vmatprep.subr.bf16.mxu0 %v6657
  %6794 = vmatpush1.bf16.msra.mxu0 %v6656
  %6795 = vmatprep.subr.bf16.mxu0 %v6659
  %6796 = vmatpush1.bf16.msra.mxu0 %v6658
  %6797 = vmatprep.subr.bf16.mxu0 %v6661
  %6798 = vmatpush1.bf16.msra.mxu0 %v6660
  %6799 = vmatprep.mubr.bf16.mxu0 %v6405
  %6800 = vmatmul.mubr.bf16.gmra.mrb[0].mxu0 %v6404
  %v6801 = vpop.f32.mrb[0].mxu0
  %v6802 = vadd.f32 %v6761, %v6801
  %v6803 = vpop.f32.mrb[0].mxu0
  %v6804 = vadd.f32 %v6763, %v6803
  %v6805 = vpop.f32.mrb[0].mxu0
  %v6806 = vpop.f32.mrb[0].mxu0
  %6807 = vdwg.mxu0
  %v6808 = vsel %vm6126, %v6802, 0.0
  %v6809 = vrot.slane %v6808, 4
  %v6810 = vadd.f32 %v6808, %v6809
  %v6811 = vrot.slane %v6810, 2
  %v6812 = vadd.f32 %v6810, %v6811
  %v6813 = vrot.slane %v6812, 1
  %v6814 = vadd.f32 %v6812, %v6813
  %v6815 = vsel %vm6126, %v6804, 0.0
  %v6816 = vrot.slane %v6815, 4
  %v6817 = vadd.f32 %v6815, %v6816
  %v6818 = vrot.slane %v6817, 2
  %v6819 = vadd.f32 %v6817, %v6818
  %v6820 = vrot.slane %v6819, 1
  %v6821 = vadd.f32 %v6819, %v6820
  %v6822 = vmul.f32 %v6814, %v6155
  %v6823 = vmul.f32 %v6821, %v6155
  %v6824 = vmul.f32 %v6802, %v6802
  %v6825 = vmul.f32 %v6804, %v6804
  %v6826 = vsel %vm6126, %v6824, 0.0
  %v6827 = vrot.slane %v6826, 4
  %v6828 = vadd.f32 %v6826, %v6827
  %v6829 = vrot.slane %v6828, 2
  %v6830 = vadd.f32 %v6828, %v6829
  %v6831 = vrot.slane %v6830, 1
  %v6832 = vadd.f32 %v6830, %v6831
  %v6833 = vsel %vm6126, %v6825, 0.0
  %v6834 = vrot.slane %v6833, 4
  %v6835 = vadd.f32 %v6833, %v6834
  %v6836 = vrot.slane %v6835, 2
  %v6837 = vadd.f32 %v6835, %v6836
  %v6838 = vrot.slane %v6837, 1
  %v6839 = vadd.f32 %v6837, %v6838
  %v6840 = vmul.f32 %v6832, %v6155
  %v6841 = vmul.f32 %v6839, %v6155
  %v6842 = vmul.f32 %v6822, %v6822
  %v6843 = vmul.f32 %v6823, %v6823
  %v6844 = vsub.f32 %v6840, %v6842
  %v6845 = vsub.f32 %v6841, %v6843
  %v6846 = vmax.f32 %v6844, 0.0
  %v6847 = vmax.f32 %v6845, 0.0
  %s6848 = scalar_lea.vmem %s1, 64
  %v6849 = vld [vmem:[%s6848] ss:$8 sm:$0x3]
  %v6850 = vadd.f32 %v6846, 1e-05
  %v6851 = vadd.f32 %v6847, 1e-05
  %v6852 = vrsqrt.pop %v6850
  %v6853 = vrsqrt.pop %v6851
  %v6856 = vcombine.low %v6852, %v6853
  %v6858 = vunpack.c.l.s4 1966171168
  %v6859 = vunpack.c.0.s8 %v6858
  %v6860 = vlaneseq
  %v6861 = vshrl.u32 %v6860, 7
  %v6862 = vsub.s32 %v6859, %v6861
  %v6863 = vrot.slane %v6856, %v6862
  %v6865 = vunpack.c.l.s4 1966171168
  %v6866 = vunpack.c.0.s8 %v6865
  %v6867 = vlaneseq
  %v6868 = vshrl.u32 %v6867, 7
  %v6869 = vsub.s32 %v6866, %v6868
  %v6870 = vrot.slane %v6863, %v6869
  %v6872 = vmul.f32 %v6849, %v6870
  %v6874 = vlaneseq
  %v6875 = vshrl.u32 %v6874, 7
  %v6876 = vsub.s32 0, %v6875
  %v6877 = vrot.slane %v6872, %v6876
  %v6878 = vlaneseq
  %v6879 = vshrl.u32 %v6878, 7
  %v6880 = vsub.s32 1, %v6879
  %v6881 = vrot.slane %v6872, %v6880
  %v6884 = vmul.f32 %v6802, %v6877
  %v6885 = vmul.f32 %v6804, %v6881
  %s6886 = scalar_lea.vmem %s1, 65
  %v6887 = vld [vmem:[%s6886] ss:$8 sm:$0x3]
  %v6888 = vmul.f32 %v6822, %v6877
  %v6889 = vmul.f32 %v6823, %v6881
  %v6892 = vcombine.low %v6888, %v6889
  %v6894 = vunpack.c.l.s4 1966171168
  %v6895 = vunpack.c.0.s8 %v6894
  %v6896 = vlaneseq
  %v6897 = vshrl.u32 %v6896, 7
  %v6898 = vsub.s32 %v6895, %v6897
  %v6899 = vrot.slane %v6892, %v6898
  %v6901 = vunpack.c.l.s4 1966171168
  %v6902 = vunpack.c.0.s8 %v6901
  %v6903 = vlaneseq
  %v6904 = vshrl.u32 %v6903, 7
  %v6905 = vsub.s32 %v6902, %v6904
  %v6906 = vrot.slane %v6899, %v6905
  %v6908 = vsub.f32 %v6887, %v6906
  %v6910 = vlaneseq
  %v6911 = vshrl.u32 %v6910, 7
  %v6912 = vsub.s32 0, %v6911
  %v6913 = vrot.slane %v6908, %v6912
  %v6914 = vlaneseq
  %v6915 = vshrl.u32 %v6914, 7
  %v6916 = vsub.s32 1, %v6915
  %v6917 = vrot.slane %v6908, %v6916
  %v6920 = vadd.f32 %v6884, %v6913
  %v6921 = vadd.f32 %v6885, %v6917
  %v6922 = vmax.f32 %v6920, 0.0
  %v6923 = vmax.f32 %v6921, 0.0
  %v6924 = vld [vmem:[%s7] sm:$0xff]
  %v6925 = vld [vmem:[%s7 + $0x8] sm:$0xff]
  %v6926 = vld [vmem:[%s7 + $0x10] sm:$0xff]
  %v6927 = vld [vmem:[%s7 + $0x18] sm:$0xff]
  %v6928 = vld [vmem:[%s7 + $0x20] sm:$0xff]
  %v6929 = vld [vmem:[%s7 + $0x28] sm:$0xff]
  %v6930 = vld [vmem:[%s7 + $0x30] sm:$0xff]
  %v6931 = vld [vmem:[%s7 + $0x38] sm:$0xff]
  %v6932 = vld [vmem:[%s7 + $0x40] sm:$0xff]
  %v6933 = vld [vmem:[%s7 + $0x48] sm:$0xff]
  %v6934 = vld [vmem:[%s7 + $0x50] sm:$0xff]
  %v6935 = vld [vmem:[%s7 + $0x58] sm:$0xff]
  %v6936 = vld [vmem:[%s7 + $0x60] sm:$0xff]
  %v6937 = vld [vmem:[%s7 + $0x68] sm:$0xff]
  %v6938 = vld [vmem:[%s7 + $0x70] sm:$0xff]
  %v6939 = vld [vmem:[%s7 + $0x78] sm:$0xff]
  %v6940 = vld [vmem:[%s7 + $0x80] sm:$0xff]
  %v6941 = vld [vmem:[%s7 + $0x88] sm:$0xff]
  %v6942 = vld [vmem:[%s7 + $0x90] sm:$0xff]
  %v6943 = vld [vmem:[%s7 + $0x98] sm:$0xff]
  %v6944 = vld [vmem:[%s7 + $0xa0] sm:$0xff]
  %v6945 = vld [vmem:[%s7 + $0xa8] sm:$0xff]
  %v6946 = vld [vmem:[%s7 + $0xb0] sm:$0xff]
  %v6947 = vld [vmem:[%s7 + $0xb8] sm:$0xff]
  %v6948 = vld [vmem:[%s7 + $0xc0] sm:$0xff]
  %v6949 = vld [vmem:[%s7 + $0xc8] sm:$0xff]
  %v6950 = vld [vmem:[%s7 + $0xd0] sm:$0xff]
  %v6951 = vld [vmem:[%s7 + $0xd8] sm:$0xff]
  %v6952 = vld [vmem:[%s7 + $0xe0] sm:$0xff]
  %v6953 = vld [vmem:[%s7 + $0xe8] sm:$0xff]
  %v6954 = vld [vmem:[%s7 + $0xf0] sm:$0xff]
  %v6955 = vld [vmem:[%s7 + $0xf8] sm:$0xff]
  %v6956 = vld [vmem:[%s1 + $0x42] ss:$0 sm:$0xff]
  %6957 = vmatprep.subr.mxu0 0.0
  %6958 = vmatpush1.msra.mxu0 %v6924
  %6959 = vmatprep.subr.mxu0 0.0
  %6960 = vmatpush1.msra.mxu0 %v6925
  %6961 = vmatprep.subr.mxu0 0.0
  %6962 = vmatpush1.msra.mxu0 %v6926
  %6963 = vmatprep.subr.mxu0 0.0
  %6964 = vmatpush1.msra.mxu0 %v6927
  %6965 = vmatprep.subr.mxu0 0.0
  %6966 = vmatpush1.msra.mxu0 %v6928
  %6967 = vmatprep.subr.mxu0 0.0
  %6968 = vmatpush1.msra.mxu0 %v6929
  %6969 = vmatprep.subr.mxu0 0.0
  %6970 = vmatpush1.msra.mxu0 %v6930
  %6971 = vmatprep.subr.mxu0 0.0
  %6972 = vmatpush1.msra.mxu0 %v6931
  %6973 = vmatprep.subr.mxu0 0.0
  %6974 = vmatpush1.msra.mxu0 %v6932
  %6975 = vmatprep.subr.mxu0 0.0
  %6976 = vmatpush1.msra.mxu0 %v6933
  %6977 = vmatprep.subr.mxu0 0.0
  %6978 = vmatpush1.msra.mxu0 %v6934
  %6979 = vmatprep.subr.mxu0 0.0
  %6980 = vmatpush1.msra.mxu0 %v6935
  %6981 = vmatprep.subr.mxu0 0.0
  %6982 = vmatpush1.msra.mxu0 %v6936
  %6983 = vmatprep.subr.mxu0 0.0
  %6984 = vmatpush1.msra.mxu0 %v6937
  %6985 = vmatprep.subr.mxu0 0.0
  %6986 = vmatpush1.msra.mxu0 %v6938
  %6987 = vmatprep.subr.mxu0 0.0
  %6988 = vmatpush1.msra.mxu0 %v6939
  %6989 = vmatprep.subr.mxu0 0.0
  %6990 = vmatpush1.msra.mxu0 %v6940
  %6991 = vmatprep.subr.mxu0 0.0
  %6992 = vmatpush1.msra.mxu0 %v6941
  %6993 = vmatprep.subr.mxu0 0.0
  %6994 = vmatpush1.msra.mxu0 %v6942
  %6995 = vmatprep.subr.mxu0 0.0
  %6996 = vmatpush1.msra.mxu0 %v6943
  %6997 = vmatprep.subr.mxu0 0.0
  %6998 = vmatpush1.msra.mxu0 %v6944
  %6999 = vmatprep.subr.mxu0 0.0
  %7000 = vmatpush1.msra.mxu0 %v6945
  %7001 = vmatprep.subr.mxu0 0.0
  %7002 = vmatpush1.msra.mxu0 %v6946
  %7003 = vmatprep.subr.mxu0 0.0
  %7004 = vmatpush1.msra.mxu0 %v6947
  %7005 = vmatprep.subr.mxu0 0.0
  %7006 = vmatpush1.msra.mxu0 %v6948
  %7007 = vmatprep.subr.mxu0 0.0
  %7008 = vmatpush1.msra.mxu0 %v6949
  %7009 = vmatprep.subr.mxu0 0.0
  %7010 = vmatpush1.msra.mxu0 %v6950
  %7011 = vmatprep.subr.mxu0 0.0
  %7012 = vmatpush1.msra.mxu0 %v6951
  %7013 = vmatprep.subr.mxu0 0.0
  %7014 = vmatpush1.msra.mxu0 %v6952
  %7015 = vmatprep.subr.mxu0 0.0
  %7016 = vmatpush1.msra.mxu0 %v6953
  %7017 = vmatprep.subr.mxu0 0.0
  %7018 = vmatpush1.msra.mxu0 %v6954
  %7019 = vmatprep.subr.mxu0 0.0
  %7020 = vmatpush1.msra.mxu0 %v6955
  %7021 = vmatprep.mubr.f32.mxu0 %v6923
  %7022 = vmatmul.mubr.f32.gmra.mrb[0].mxu0 %v6922
  %v7023 = vpop.f32.mrb[0].mxu0
  %v7024 = vadd.f32 %v6956, %v7023
  %v7025 = vpop.f32.mrb[0].mxu0
  %7026 = vdwg.mxu0
  %v7027 = vld [vmem:[%s8] sm:$0x7]
  %v7029 = vcombine.high %v7024, %v7024
  %v7031 = vunpack.c.l.s4 1966171168
  %v7032 = vunpack.c.0.s8 %v7031
  %v7033 = vlaneseq
  %v7034 = vshrl.u32 %v7033, 7
  %v7035 = vsub.s32 %v7032, %v7034
  %v7036 = vrot.slane %v7024, %v7035
  %v7038 = vunpack.c.l.s4 1966171168
  %v7039 = vunpack.c.0.s8 %v7038
  %v7040 = vlaneseq
  %v7041 = vshrl.u32 %v7040, 7
  %v7042 = vsub.s32 %v7039, %v7041
  %v7043 = vrot.slane %v7029, %v7042
  %v7044 = vcombine.high %v7036, %v7036
  %v7045 = vcombine.high %v7043, %v7043
  %v7047 = vunpack.c.l.s4 1966171168
  %v7048 = vunpack.c.0.s8 %v7047
  %v7049 = vlaneseq
  %v7050 = vshrl.u32 %v7049, 7
  %v7051 = vsub.s32 %v7048, %v7050
  %v7052 = vrot.slane %v7036, %v7051
  %v7054 = vunpack.c.l.s4 1966171168
  %v7055 = vunpack.c.0.s8 %v7054
  %v7056 = vlaneseq
  %v7057 = vshrl.u32 %v7056, 7
  %v7058 = vsub.s32 %v7055, %v7057
  %v7059 = vrot.slane %v7043, %v7058
  %v7061 = vunpack.c.l.s4 1966171168
  %v7062 = vunpack.c.0.s8 %v7061
  %v7063 = vlaneseq
  %v7064 = vshrl.u32 %v7063, 7
  %v7065 = vsub.s32 %v7062, %v7064
  %v7066 = vrot.slane %v7044, %v7065
  %v7068 = vunpack.c.l.s4 1966171168
  %v7069 = vunpack.c.0.s8 %v7068
  %v7070 = vlaneseq
  %v7071 = vshrl.u32 %v7070, 7
  %v7072 = vsub.s32 %v7069, %v7071
  %v7073 = vrot.slane %v7045, %v7072
  %v7074 = vcombine.high %v7052, %v7052
  %v7075 = vcombine.high %v7066, %v7066
  %v7082 = vlaneseq
  %v7083 = vshrl.u32 %v7082, 7
  %v7084 = vsub.s32 0, %v7083
  %v7085 = vrot.slane %v7052, %v7084
  %v7086 = vlaneseq
  %v7087 = vshrl.u32 %v7086, 7
  %v7088 = vsub.s32 0, %v7087
  %v7089 = vrot.slane %v7066, %v7088
  %v7090 = vlaneseq
  %v7091 = vshrl.u32 %v7090, 7
  %v7092 = vsub.s32 0, %v7091
  %v7093 = vrot.slane %v7074, %v7092
  %v7094 = vlaneseq
  %v7095 = vshrl.u32 %v7094, 7
  %v7096 = vsub.s32 0, %v7095
  %v7097 = vrot.slane %v7075, %v7096
  %v7098 = vlaneseq
  %v7099 = vshrl.u32 %v7098, 7
  %v7100 = vsub.s32 0, %v7099
  %v7101 = vrot.slane %v7059, %v7100
  %v7102 = vlaneseq
  %v7103 = vshrl.u32 %v7102, 7
  %v7104 = vsub.s32 0, %v7103
  %v7105 = vrot.slane %v7073, %v7104
  %7106 = vrot.lane.b32.xlu0 %v7085, 125
  %v7107 = vpop.permute.xlu0 %7106
  %7108 = vrot.lane.b32.xlu0 %v7089, 125
  %v7109 = vpop.permute.xlu0 %7108
  %7110 = vrot.lane.b32.xlu0 %v7093, 125
  %v7111 = vpop.permute.xlu0 %7110
  %7112 = vrot.lane.b32.xlu0 %v7097, 125
  %v7113 = vpop.permute.xlu0 %7112
  %7114 = vrot.lane.b32.xlu0 %v7101, 125
  %v7115 = vpop.permute.xlu0 %7114
  %7116 = vrot.lane.b32.xlu0 %v7105, 125
  %v7117 = vpop.permute.xlu0 %7116
  %7124 = vrot.lane.b32.xlu0 %v7085, 122
  %v7125 = vpop.permute.xlu0 %7124
  %7126 = vrot.lane.b32.xlu0 %v7089, 122
  %v7127 = vpop.permute.xlu0 %7126
  %7128 = vrot.lane.b32.xlu0 %v7093, 122
  %v7129 = vpop.permute.xlu0 %7128
  %7130 = vrot.lane.b32.xlu0 %v7097, 122
  %v7131 = vpop.permute.xlu0 %7130
  %7132 = vrot.lane.b32.xlu0 %v7101, 122
  %v7133 = vpop.permute.xlu0 %7132
  %7134 = vrot.lane.b32.xlu0 %v7105, 122
  %v7135 = vpop.permute.xlu0 %7134
  %vm7142 = vcmask 1040384
  %v7143 = vsel %vm7142, %v7052, %v7107
  %v7144 = vsel %vm7142, %v7066, %v7109
  %v7145 = vsel %vm7142, %v7074, %v7111
  %v7146 = vsel %vm7142, %v7075, %v7113
  %v7147 = vsel %vm7142, %v7059, %v7115
  %v7148 = vsel %vm7142, %v7073, %v7117
  %vm7149 = vcmask 1041408
  %v7150 = vsel %vm7149, %v7143, %v7125
  %v7151 = vsel %vm7149, %v7144, %v7127
  %v7152 = vsel %vm7149, %v7145, %v7129
  %v7153 = vsel %vm7149, %v7146, %v7131
  %v7154 = vsel %vm7149, %v7147, %v7133
  %v7155 = vsel %vm7149, %v7148, %v7135
  %v7163 = vunpack.c.l.s4 1966171168
  %v7164 = vunpack.c.0.s8 %v7163
  %v7165 = vlaneseq
  %v7166 = vshrl.u32 %v7165, 7
  %v7167 = vsub.s32 %v7164, %v7166
  %v7168 = vrot.slane %v7150, %v7167
  %v7169 = vcombine.high %v7168, %v7168
  %v7171 = vunpack.c.l.s4 1966171168
  %v7172 = vunpack.c.0.s8 %v7171
  %v7173 = vlaneseq
  %v7174 = vshrl.u32 %v7173, 7
  %v7175 = vsub.s32 %v7172, %v7174
  %v7176 = vrot.slane %v7168, %v7175
  %v7178 = vunpack.c.l.s4 1966171168
  %v7179 = vunpack.c.0.s8 %v7178
  %v7180 = vlaneseq
  %v7181 = vshrl.u32 %v7180, 7
  %v7182 = vsub.s32 %v7179, %v7181
  %v7183 = vrot.slane %v7169, %v7182
  %v7184 = vcombine.high %v7176, %v7176
  %v7186 = vunpack.c.l.s4 1966171168
  %v7187 = vunpack.c.0.s8 %v7186
  %v7188 = vlaneseq
  %v7189 = vshrl.u32 %v7188, 7
  %v7190 = vsub.s32 %v7187, %v7189
  %v7191 = vrot.slane %v7151, %v7190
  %v7192 = vcombine.high %v7191, %v7191
  %v7194 = vunpack.c.l.s4 1966171168
  %v7195 = vunpack.c.0.s8 %v7194
  %v7196 = vlaneseq
  %v7197 = vshrl.u32 %v7196, 7
  %v7198 = vsub.s32 %v7195, %v7197
  %v7199 = vrot.slane %v7191, %v7198
  %v7201 = vunpack.c.l.s4 1966171168
  %v7202 = vunpack.c.0.s8 %v7201
  %v7203 = vlaneseq
  %v7204 = vshrl.u32 %v7203, 7
  %v7205 = vsub.s32 %v7202, %v7204
  %v7206 = vrot.slane %v7192, %v7205
  %v7207 = vcombine.high %v7199, %v7199
  %v7209 = vunpack.c.l.s4 1966171168
  %v7210 = vunpack.c.0.s8 %v7209
  %v7211 = vlaneseq
  %v7212 = vshrl.u32 %v7211, 7
  %v7213 = vsub.s32 %v7210, %v7212
  %v7214 = vrot.slane %v7152, %v7213
  %v7215 = vcombine.high %v7214, %v7214
  %v7217 = vunpack.c.l.s4 1966171168
  %v7218 = vunpack.c.0.s8 %v7217
  %v7219 = vlaneseq
  %v7220 = vshrl.u32 %v7219, 7
  %v7221 = vsub.s32 %v7218, %v7220
  %v7222 = vrot.slane %v7214, %v7221
  %v7224 = vunpack.c.l.s4 1966171168
  %v7225 = vunpack.c.0.s8 %v7224
  %v7226 = vlaneseq
  %v7227 = vshrl.u32 %v7226, 7
  %v7228 = vsub.s32 %v7225, %v7227
  %v7229 = vrot.slane %v7215, %v7228
  %v7230 = vcombine.high %v7222, %v7222
  %v7232 = vunpack.c.l.s4 1966171168
  %v7233 = vunpack.c.0.s8 %v7232
  %v7234 = vlaneseq
  %v7235 = vshrl.u32 %v7234, 7
  %v7236 = vsub.s32 %v7233, %v7235
  %v7237 = vrot.slane %v7153, %v7236
  %v7238 = vcombine.high %v7237, %v7237
  %v7240 = vunpack.c.l.s4 1966171168
  %v7241 = vunpack.c.0.s8 %v7240
  %v7242 = vlaneseq
  %v7243 = vshrl.u32 %v7242, 7
  %v7244 = vsub.s32 %v7241, %v7243
  %v7245 = vrot.slane %v7237, %v7244
  %v7247 = vunpack.c.l.s4 1966171168
  %v7248 = vunpack.c.0.s8 %v7247
  %v7249 = vlaneseq
  %v7250 = vshrl.u32 %v7249, 7
  %v7251 = vsub.s32 %v7248, %v7250
  %v7252 = vrot.slane %v7238, %v7251
  %v7253 = vcombine.high %v7245, %v7245
  %v7255 = vunpack.c.l.s4 1966171168
  %v7256 = vunpack.c.0.s8 %v7255
  %v7257 = vlaneseq
  %v7258 = vshrl.u32 %v7257, 7
  %v7259 = vsub.s32 %v7256, %v7258
  %v7260 = vrot.slane %v7154, %v7259
  %v7261 = vcombine.high %v7260, %v7260
  %v7263 = vunpack.c.l.s4 1966171168
  %v7264 = vunpack.c.0.s8 %v7263
  %v7265 = vlaneseq
  %v7266 = vshrl.u32 %v7265, 7
  %v7267 = vsub.s32 %v7264, %v7266
  %v7268 = vrot.slane %v7260, %v7267
  %v7270 = vunpack.c.l.s4 1966171168
  %v7271 = vunpack.c.0.s8 %v7270
  %v7272 = vlaneseq
  %v7273 = vshrl.u32 %v7272, 7
  %v7274 = vsub.s32 %v7271, %v7273
  %v7275 = vrot.slane %v7261, %v7274
  %v7276 = vcombine.high %v7268, %v7268
  %v7278 = vunpack.c.l.s4 1966171168
  %v7279 = vunpack.c.0.s8 %v7278
  %v7280 = vlaneseq
  %v7281 = vshrl.u32 %v7280, 7
  %v7282 = vsub.s32 %v7279, %v7281
  %v7283 = vrot.slane %v7155, %v7282
  %v7284 = vcombine.high %v7283, %v7283
  %v7286 = vunpack.c.l.s4 1966171168
  %v7287 = vunpack.c.0.s8 %v7286
  %v7288 = vlaneseq
  %v7289 = vshrl.u32 %v7288, 7
  %v7290 = vsub.s32 %v7287, %v7289
  %v7291 = vrot.slane %v7283, %v7290
  %v7293 = vunpack.c.l.s4 1966171168
  %v7294 = vunpack.c.0.s8 %v7293
  %v7295 = vlaneseq
  %v7296 = vshrl.u32 %v7295, 7
  %v7297 = vsub.s32 %v7294, %v7296
  %v7298 = vrot.slane %v7284, %v7297
  %v7299 = vcombine.high %v7291, %v7291
  %v7300 = vcombine.low %v7176, %v7183
  %v7301 = vcombine.low %v7184, %v7199
  %v7302 = vcombine.low %v7206, %v7207
  %v7303 = vcombine.low %v7222, %v7229
  %v7305 = vunpack.c.l.s4 1966171168
  %v7306 = vunpack.c.0.s8 %v7305
  %v7307 = vlaneseq
  %v7308 = vshrl.u32 %v7307, 7
  %v7309 = vsub.s32 %v7306, %v7308
  %v7310 = vrot.slane %v7300, %v7309
  %v7312 = vunpack.c.l.s4 1966171168
  %v7313 = vunpack.c.0.s8 %v7312
  %v7314 = vlaneseq
  %v7315 = vshrl.u32 %v7314, 7
  %v7316 = vsub.s32 %v7313, %v7315
  %v7317 = vrot.slane %v7301, %v7316
  %v7319 = vunpack.c.l.s4 1966171168
  %v7320 = vunpack.c.0.s8 %v7319
  %v7321 = vlaneseq
  %v7322 = vshrl.u32 %v7321, 7
  %v7323 = vsub.s32 %v7320, %v7322
  %v7324 = vrot.slane %v7302, %v7323
  %v7326 = vunpack.c.l.s4 1966171168
  %v7327 = vunpack.c.0.s8 %v7326
  %v7328 = vlaneseq
  %v7329 = vshrl.u32 %v7328, 7
  %v7330 = vsub.s32 %v7327, %v7329
  %v7331 = vrot.slane %v7303, %v7330
  %v7332 = vcombine.low %v7310, %v7317
  %v7333 = vcombine.low %v7324, %v7331
  %v7335 = vunpack.c.l.s4 1966171168
  %v7336 = vunpack.c.0.s8 %v7335
  %v7337 = vlaneseq
  %v7338 = vshrl.u32 %v7337, 7
  %v7339 = vsub.s32 %v7336, %v7338
  %v7340 = vrot.slane %v7332, %v7339
  %v7342 = vunpack.c.l.s4 1966171168
  %v7343 = vunpack.c.0.s8 %v7342
  %v7344 = vlaneseq
  %v7345 = vshrl.u32 %v7344, 7
  %v7346 = vsub.s32 %v7343, %v7345
  %v7347 = vrot.slane %v7333, %v7346
  %v7348 = vcombine.low %v7340, %v7347
  %v7349 = vcombine.low %v7230, %v7245
  %v7350 = vcombine.low %v7252, %v7253
  %v7351 = vcombine.low %v7268, %v7275
  %v7352 = vcombine.low %v7276, %v7291
  %v7354 = vunpack.c.l.s4 1966171168
  %v7355 = vunpack.c.0.s8 %v7354
  %v7356 = vlaneseq
  %v7357 = vshrl.u32 %v7356, 7
  %v7358 = vsub.s32 %v7355, %v7357
  %v7359 = vrot.slane %v7349, %v7358
  %v7361 = vunpack.c.l.s4 1966171168
  %v7362 = vunpack.c.0.s8 %v7361
  %v7363 = vlaneseq
  %v7364 = vshrl.u32 %v7363, 7
  %v7365 = vsub.s32 %v7362, %v7364
  %v7366 = vrot.slane %v7350, %v7365
  %v7368 = vunpack.c.l.s4 1966171168
  %v7369 = vunpack.c.0.s8 %v7368
  %v7370 = vlaneseq
  %v7371 = vshrl.u32 %v7370, 7
  %v7372 = vsub.s32 %v7369, %v7371
  %v7373 = vrot.slane %v7351, %v7372
  %v7375 = vunpack.c.l.s4 1966171168
  %v7376 = vunpack.c.0.s8 %v7375
  %v7377 = vlaneseq
  %v7378 = vshrl.u32 %v7377, 7
  %v7379 = vsub.s32 %v7376, %v7378
  %v7380 = vrot.slane %v7352, %v7379
  %v7381 = vcombine.low %v7359, %v7366
  %v7382 = vcombine.low %v7373, %v7380
  %v7384 = vunpack.c.l.s4 1966171168
  %v7385 = vunpack.c.0.s8 %v7384
  %v7386 = vlaneseq
  %v7387 = vshrl.u32 %v7386, 7
  %v7388 = vsub.s32 %v7385, %v7387
  %v7389 = vrot.slane %v7381, %v7388
  %v7391 = vunpack.c.l.s4 1966171168
  %v7392 = vunpack.c.0.s8 %v7391
  %v7393 = vlaneseq
  %v7394 = vshrl.u32 %v7393, 7
  %v7395 = vsub.s32 %v7392, %v7394
  %v7396 = vrot.slane %v7382, %v7395
  %v7397 = vcombine.low %v7389, %v7396
  %v7398 = vcombine.low %v7298, %v7299
  %v7400 = vunpack.c.l.s4 1966171168
  %v7401 = vunpack.c.0.s8 %v7400
  %v7402 = vlaneseq
  %v7403 = vshrl.u32 %v7402, 7
  %v7404 = vsub.s32 %v7401, %v7403
  %v7405 = vrot.slane %v7398, %v7404
  %v7407 = vunpack.c.l.s4 1966171168
  %v7408 = vunpack.c.0.s8 %v7407
  %v7409 = vlaneseq
  %v7410 = vshrl.u32 %v7409, 7
  %v7411 = vsub.s32 %v7408, %v7410
  %v7412 = vrot.slane %v7405, %v7411
  %v7413 = vsel %vm238, %v7348, 0
  %v7415 = vsel %vm238, %v7397, 0
  %v7417 = vsel %vm238, %v7412, 0
  %v7420 = vsel %vm275, %v7027, 0
  %7422 = vmatprep.subr.mxu0 0.0
  %7423 = vmatpush1.msra.mxu0 %v7420
  %7424 = vmatprep.subr.mxu0 0.0
  %7425 = vmatpush1.msra.mxu0 0.0
  %7426 = vmatprep.subr.mxu0 0.0
  %7427 = vmatpush1.msra.mxu0 0.0
  %7428 = vmatprep.subr.mxu0 0.0
  %7429 = vmatpush1.msra.mxu0 0.0
  %7430 = vmatprep.subr.mxu0 0.0
  %7431 = vmatpush1.msra.mxu0 0.0
  %7432 = vmatprep.subr.mxu0 0.0
  %7433 = vmatpush1.msra.mxu0 0.0
  %7434 = vmatprep.subr.mxu0 0.0
  %7435 = vmatpush1.msra.mxu0 0.0
  %7436 = vmatprep.subr.mxu0 0.0
  %7437 = vmatpush1.msra.mxu0 0.0
  %7438 = vmatprep.subr.mxu0 0.0
  %7439 = vmatpush1.msra.mxu0 0.0
  %7440 = vmatprep.subr.mxu0 0.0
  %7441 = vmatpush1.msra.mxu0 0.0
  %7442 = vmatprep.subr.mxu0 0.0
  %7443 = vmatpush1.msra.mxu0 0.0
  %7444 = vmatprep.subr.mxu0 0.0
  %7445 = vmatpush1.msra.mxu0 0.0
  %7446 = vmatprep.subr.mxu0 0.0
  %7447 = vmatpush1.msra.mxu0 0.0
  %7448 = vmatprep.subr.mxu0 0.0
  %7449 = vmatpush1.msra.mxu0 0.0
  %7450 = vmatprep.subr.mxu0 0.0
  %7451 = vmatpush1.msra.mxu0 0.0
  %7452 = vmatprep.subr.mxu0 0.0
  %7453 = vmatpush1.msra.mxu0 0.0
  %7454 = vmatprep.subr.mxu0 0.0
  %7455 = vmatpush1.msra.mxu0 0.0
  %7456 = vmatprep.subr.mxu0 0.0
  %7457 = vmatpush1.msra.mxu0 0.0
  %7458 = vmatprep.subr.mxu0 0.0
  %7459 = vmatpush1.msra.mxu0 0.0
  %7460 = vmatprep.subr.mxu0 0.0
  %7461 = vmatpush1.msra.mxu0 0.0
  %7462 = vmatprep.subr.mxu0 0.0
  %7463 = vmatpush1.msra.mxu0 0.0
  %7464 = vmatprep.subr.mxu0 0.0
  %7465 = vmatpush1.msra.mxu0 0.0
  %7466 = vmatprep.subr.mxu0 0.0
  %7467 = vmatpush1.msra.mxu0 0.0
  %7468 = vmatprep.subr.mxu0 0.0
  %7469 = vmatpush1.msra.mxu0 0.0
  %7470 = vmatprep.subr.mxu0 0.0
  %7471 = vmatpush1.msra.mxu0 0.0
  %7472 = vmatprep.subr.mxu0 0.0
  %7473 = vmatpush1.msra.mxu0 0.0
  %7474 = vmatprep.subr.mxu0 0.0
  %7475 = vmatpush1.msra.mxu0 0.0
  %7476 = vmatprep.subr.mxu0 0.0
  %7477 = vmatpush1.msra.mxu0 0.0
  %7478 = vmatprep.subr.mxu0 0.0
  %7479 = vmatpush1.msra.mxu0 0.0
  %7480 = vmatprep.subr.mxu0 0.0
  %7481 = vmatpush1.msra.mxu0 0.0
  %7482 = vmatprep.subr.mxu0 0.0
  %7483 = vmatpush1.msra.mxu0 0.0
  %7484 = vmatprep.subr.mxu0 0.0
  %7485 = vmatpush1.msra.mxu0 0.0
  %7486 = vmatprep.mubr.f32.mxu0 0.0
  %7487 = vmatmul.mubr.f32.gmra.mrb[0].mxu0 %v7413
  %v7488 = vpop.f32.mrb[0].mxu0
  %v7489 = vadd.f32 0.0, %v7488
  %v7490 = vpop.f32.mrb[0].mxu0
  %7491 = vmatprep.mubr.f32.mxu0 0.0
  %7492 = vmatmul.mubr.f32.gmra.mrb[0].mxu0 %v7415
  %v7493 = vpop.f32.mrb[0].mxu0
  %v7494 = vadd.f32 0.0, %v7493
  %v7495 = vpop.f32.mrb[0].mxu0
  %7496 = vmatprep.mubr.f32.mxu0 0.0
  %7497 = vmatmul.mubr.f32.gmra.mrb[0].mxu0 %v7417
  %v7498 = vpop.f32.mrb[0].mxu0
  %v7499 = vadd.f32 0.0, %v7498
  %v7500 = vpop.f32.mrb[0].mxu0
  %7501 = vdwg.mxu0
  %v7505 = vcombine.high %v7489, %v7489
  %v7507 = vunpack.c.l.s4 1966171168
  %v7508 = vunpack.c.0.s8 %v7507
  %v7509 = vlaneseq
  %v7510 = vshrl.u32 %v7509, 7
  %v7511 = vsub.s32 %v7508, %v7510
  %v7512 = vrot.slane %v7489, %v7511
  %v7514 = vunpack.c.l.s4 1966171168
  %v7515 = vunpack.c.0.s8 %v7514
  %v7516 = vlaneseq
  %v7517 = vshrl.u32 %v7516, 7
  %v7518 = vsub.s32 %v7515, %v7517
  %v7519 = vrot.slane %v7505, %v7518
  %v7520 = vcombine.high %v7512, %v7512
  %v7521 = vcombine.high %v7519, %v7519
  %v7523 = vunpack.c.l.s4 1966171168
  %v7524 = vunpack.c.0.s8 %v7523
  %v7525 = vlaneseq
  %v7526 = vshrl.u32 %v7525, 7
  %v7527 = vsub.s32 %v7524, %v7526
  %v7528 = vrot.slane %v7512, %v7527
  %v7530 = vunpack.c.l.s4 1966171168
  %v7531 = vunpack.c.0.s8 %v7530
  %v7532 = vlaneseq
  %v7533 = vshrl.u32 %v7532, 7
  %v7534 = vsub.s32 %v7531, %v7533
  %v7535 = vrot.slane %v7519, %v7534
  %v7537 = vunpack.c.l.s4 1966171168
  %v7538 = vunpack.c.0.s8 %v7537
  %v7539 = vlaneseq
  %v7540 = vshrl.u32 %v7539, 7
  %v7541 = vsub.s32 %v7538, %v7540
  %v7542 = vrot.slane %v7520, %v7541
  %v7544 = vunpack.c.l.s4 1966171168
  %v7545 = vunpack.c.0.s8 %v7544
  %v7546 = vlaneseq
  %v7547 = vshrl.u32 %v7546, 7
  %v7548 = vsub.s32 %v7545, %v7547
  %v7549 = vrot.slane %v7521, %v7548
  %v7550 = vcombine.high %v7528, %v7528
  %v7551 = vcombine.high %v7535, %v7535
  %v7552 = vcombine.high %v7542, %v7542
  %v7553 = vcombine.high %v7549, %v7549
  %v7554 = vcombine.high %v7494, %v7494
  %v7556 = vunpack.c.l.s4 1966171168
  %v7557 = vunpack.c.0.s8 %v7556
  %v7558 = vlaneseq
  %v7559 = vshrl.u32 %v7558, 7
  %v7560 = vsub.s32 %v7557, %v7559
  %v7561 = vrot.slane %v7494, %v7560
  %v7563 = vunpack.c.l.s4 1966171168
  %v7564 = vunpack.c.0.s8 %v7563
  %v7565 = vlaneseq
  %v7566 = vshrl.u32 %v7565, 7
  %v7567 = vsub.s32 %v7564, %v7566
  %v7568 = vrot.slane %v7554, %v7567
  %v7569 = vcombine.high %v7561, %v7561
  %v7570 = vcombine.high %v7568, %v7568
  %v7572 = vunpack.c.l.s4 1966171168
  %v7573 = vunpack.c.0.s8 %v7572
  %v7574 = vlaneseq
  %v7575 = vshrl.u32 %v7574, 7
  %v7576 = vsub.s32 %v7573, %v7575
  %v7577 = vrot.slane %v7561, %v7576
  %v7579 = vunpack.c.l.s4 1966171168
  %v7580 = vunpack.c.0.s8 %v7579
  %v7581 = vlaneseq
  %v7582 = vshrl.u32 %v7581, 7
  %v7583 = vsub.s32 %v7580, %v7582
  %v7584 = vrot.slane %v7568, %v7583
  %v7586 = vunpack.c.l.s4 1966171168
  %v7587 = vunpack.c.0.s8 %v7586
  %v7588 = vlaneseq
  %v7589 = vshrl.u32 %v7588, 7
  %v7590 = vsub.s32 %v7587, %v7589
  %v7591 = vrot.slane %v7569, %v7590
  %v7593 = vunpack.c.l.s4 1966171168
  %v7594 = vunpack.c.0.s8 %v7593
  %v7595 = vlaneseq
  %v7596 = vshrl.u32 %v7595, 7
  %v7597 = vsub.s32 %v7594, %v7596
  %v7598 = vrot.slane %v7570, %v7597
  %v7599 = vcombine.high %v7577, %v7577
  %v7600 = vcombine.high %v7584, %v7584
  %v7601 = vcombine.high %v7591, %v7591
  %v7602 = vcombine.high %v7598, %v7598
  %v7604 = vunpack.c.l.s4 1966171168
  %v7605 = vunpack.c.0.s8 %v7604
  %v7606 = vlaneseq
  %v7607 = vshrl.u32 %v7606, 7
  %v7608 = vsub.s32 %v7605, %v7607
  %v7609 = vrot.slane %v7499, %v7608
  %v7610 = vcombine.high %v7609, %v7609
  %v7612 = vunpack.c.l.s4 1966171168
  %v7613 = vunpack.c.0.s8 %v7612
  %v7614 = vlaneseq
  %v7615 = vshrl.u32 %v7614, 7
  %v7616 = vsub.s32 %v7613, %v7615
  %v7617 = vrot.slane %v7609, %v7616
  %v7619 = vunpack.c.l.s4 1966171168
  %v7620 = vunpack.c.0.s8 %v7619
  %v7621 = vlaneseq
  %v7622 = vshrl.u32 %v7621, 7
  %v7623 = vsub.s32 %v7620, %v7622
  %v7624 = vrot.slane %v7610, %v7623
  %v7625 = vcombine.low %v7528, %v7542
  %v7627 = vunpack.c.l.s4 1966171168
  %v7628 = vunpack.c.0.s8 %v7627
  %v7629 = vlaneseq
  %v7630 = vshrl.u32 %v7629, 7
  %v7631 = vsub.s32 %v7628, %v7630
  %v7632 = vrot.slane %v7625, %v7631
  %v7634 = vunpack.c.l.s4 1966171168
  %v7635 = vunpack.c.0.s8 %v7634
  %v7636 = vlaneseq
  %v7637 = vshrl.u32 %v7636, 7
  %v7638 = vsub.s32 %v7635, %v7637
  %v7639 = vrot.slane %v7550, %v7638
  %v7640 = vcombine.low %v7632, %v7639
  %v7642 = vunpack.c.l.s4 1966171168
  %v7643 = vunpack.c.0.s8 %v7642
  %v7644 = vlaneseq
  %v7645 = vshrl.u32 %v7644, 7
  %v7646 = vsub.s32 %v7643, %v7645
  %v7647 = vrot.slane %v7640, %v7646
  %v7648 = vsel %vm275, %v7647, 0
  %7650 = vmatprep.subr.mxu0 0.0
  %7651 = vmatpush1.msra.mxu0 %v7648
  %7652 = vmatprep.subr.mxu0 0.0
  %7653 = vmatpush1.msra.mxu0 0.0
  %7654 = vmatprep.subr.mxu0 0.0
  %7655 = vmatpush1.msra.mxu0 0.0
  %7656 = vmatprep.subr.mxu0 0.0
  %7657 = vmatpush1.msra.mxu0 0.0
  %7658 = vmatprep.subr.mxu0 0.0
  %7659 = vmatpush1.msra.mxu0 0.0
  %7660 = vmatprep.subr.mxu0 0.0
  %7661 = vmatpush1.msra.mxu0 0.0
  %7662 = vmatprep.subr.mxu0 0.0
  %7663 = vmatpush1.msra.mxu0 0.0
  %7664 = vmatprep.subr.mxu0 0.0
  %7665 = vmatpush1.msra.mxu0 0.0
  %7666 = vmatprep.subr.mxu0 0.0
  %7667 = vmatpush1.msra.mxu0 0.0
  %7668 = vmatprep.subr.mxu0 0.0
  %7669 = vmatpush1.msra.mxu0 0.0
  %7670 = vmatprep.subr.mxu0 0.0
  %7671 = vmatpush1.msra.mxu0 0.0
  %7672 = vmatprep.subr.mxu0 0.0
  %7673 = vmatpush1.msra.mxu0 0.0
  %7674 = vmatprep.subr.mxu0 0.0
  %7675 = vmatpush1.msra.mxu0 0.0
  %7676 = vmatprep.subr.mxu0 0.0
  %7677 = vmatpush1.msra.mxu0 0.0
  %7678 = vmatprep.subr.mxu0 0.0
  %7679 = vmatpush1.msra.mxu0 0.0
  %7680 = vmatprep.subr.mxu0 0.0
  %7681 = vmatpush1.msra.mxu0 0.0
  %7682 = vmatprep.subr.mxu0 0.0
  %7683 = vmatpush1.msra.mxu0 0.0
  %7684 = vmatprep.subr.mxu0 0.0
  %7685 = vmatpush1.msra.mxu0 0.0
  %7686 = vmatprep.subr.mxu0 0.0
  %7687 = vmatpush1.msra.mxu0 0.0
  %7688 = vmatprep.subr.mxu0 0.0
  %7689 = vmatpush1.msra.mxu0 0.0
  %7690 = vmatprep.subr.mxu0 0.0
  %7691 = vmatpush1.msra.mxu0 0.0
  %7692 = vmatprep.subr.mxu0 0.0
  %7693 = vmatpush1.msra.mxu0 0.0
  %7694 = vmatprep.subr.mxu0 0.0
  %7695 = vmatpush1.msra.mxu0 0.0
  %7696 = vmatprep.subr.mxu0 0.0
  %7697 = vmatpush1.msra.mxu0 0.0
  %7698 = vmatprep.subr.mxu0 0.0
  %7699 = vmatpush1.msra.mxu0 0.0
  %7700 = vmatprep.subr.mxu0 0.0
  %7701 = vmatpush1.msra.mxu0 0.0
  %7702 = vmatprep.subr.mxu0 0.0
  %7703 = vmatpush1.msra.mxu0 0.0
  %7704 = vmatprep.subr.mxu0 0.0
  %7705 = vmatpush1.msra.mxu0 0.0
  %7706 = vmatprep.subr.mxu0 0.0
  %7707 = vmatpush1.msra.mxu0 0.0
  %7708 = vmatprep.subr.mxu0 0.0
  %7709 = vmatpush1.msra.mxu0 0.0
  %7710 = vmatprep.subr.mxu0 0.0
  %7711 = vmatpush1.msra.mxu0 0.0
  %7712 = vmatprep.subr.mxu0 0.0
  %7713 = vmatpush1.msra.mxu0 0.0
  %7714 = vmatprep.mubr.f32.mxu0 0.0
  %7715 = vmatmul.mubr.f32.gmra.mrb[0].mxu0 %v240
  %v7716 = vpop.f32.mrb[0].mxu0
  %v7717 = vadd.f32 0.0, %v7716
  %v7718 = vpop.f32.mrb[0].mxu0
  %7719 = vmatprep.mubr.f32.mxu0 0.0
  %7720 = vmatmul.mubr.f32.gmra.mrb[0].mxu0 %v243
  %v7721 = vpop.f32.mrb[0].mxu0
  %v7722 = vadd.f32 0.0, %v7721
  %v7723 = vpop.f32.mrb[0].mxu0
  %7724 = vdwg.mxu0
  %v7725 = vcombine.low %v7552, %v7535
  %v7727 = vunpack.c.l.s4 1966171168
  %v7728 = vunpack.c.0.s8 %v7727
  %v7729 = vlaneseq
  %v7730 = vshrl.u32 %v7729, 7
  %v7731 = vsub.s32 %v7728, %v7730
  %v7732 = vrot.slane %v7725, %v7731
  %v7734 = vunpack.c.l.s4 1966171168
  %v7735 = vunpack.c.0.s8 %v7734
  %v7736 = vlaneseq
  %v7737 = vshrl.u32 %v7736, 7
  %v7738 = vsub.s32 %v7735, %v7737
  %v7739 = vrot.slane %v7549, %v7738
  %v7740 = vcombine.low %v7732, %v7739
  %v7742 = vunpack.c.l.s4 1966171168
  %v7743 = vunpack.c.0.s8 %v7742
  %v7744 = vlaneseq
  %v7745 = vshrl.u32 %v7744, 7
  %v7746 = vsub.s32 %v7743, %v7745
  %v7747 = vrot.slane %v7740, %v7746
  %v7748 = vsel %vm275, %v7747, 0
  %7750 = vmatprep.subr.mxu0 0.0
  %7751 = vmatpush1.msra.mxu0 %v7748
  %7752 = vmatprep.subr.mxu0 0.0
  %7753 = vmatpush1.msra.mxu0 0.0
  %7754 = vmatprep.subr.mxu0 0.0
  %7755 = vmatpush1.msra.mxu0 0.0
  %7756 = vmatprep.subr.mxu0 0.0
  %7757 = vmatpush1.msra.mxu0 0.0
  %7758 = vmatprep.subr.mxu0 0.0
  %7759 = vmatpush1.msra.mxu0 0.0
  %7760 = vmatprep.subr.mxu0 0.0
  %7761 = vmatpush1.msra.mxu0 0.0
  %7762 = vmatprep.subr.mxu0 0.0
  %7763 = vmatpush1.msra.mxu0 0.0
  %7764 = vmatprep.subr.mxu0 0.0
  %7765 = vmatpush1.msra.mxu0 0.0
  %7766 = vmatprep.subr.mxu0 0.0
  %7767 = vmatpush1.msra.mxu0 0.0
  %7768 = vmatprep.subr.mxu0 0.0
  %7769 = vmatpush1.msra.mxu0 0.0
  %7770 = vmatprep.subr.mxu0 0.0
  %7771 = vmatpush1.msra.mxu0 0.0
  %7772 = vmatprep.subr.mxu0 0.0
  %7773 = vmatpush1.msra.mxu0 0.0
  %7774 = vmatprep.subr.mxu0 0.0
  %7775 = vmatpush1.msra.mxu0 0.0
  %7776 = vmatprep.subr.mxu0 0.0
  %7777 = vmatpush1.msra.mxu0 0.0
  %7778 = vmatprep.subr.mxu0 0.0
  %7779 = vmatpush1.msra.mxu0 0.0
  %7780 = vmatprep.subr.mxu0 0.0
  %7781 = vmatpush1.msra.mxu0 0.0
  %7782 = vmatprep.subr.mxu0 0.0
  %7783 = vmatpush1.msra.mxu0 0.0
  %7784 = vmatprep.subr.mxu0 0.0
  %7785 = vmatpush1.msra.mxu0 0.0
  %7786 = vmatprep.subr.mxu0 0.0
  %7787 = vmatpush1.msra.mxu0 0.0
  %7788 = vmatprep.subr.mxu0 0.0
  %7789 = vmatpush1.msra.mxu0 0.0
  %7790 = vmatprep.subr.mxu0 0.0
  %7791 = vmatpush1.msra.mxu0 0.0
  %7792 = vmatprep.subr.mxu0 0.0
  %7793 = vmatpush1.msra.mxu0 0.0
  %7794 = vmatprep.subr.mxu0 0.0
  %7795 = vmatpush1.msra.mxu0 0.0
  %7796 = vmatprep.subr.mxu0 0.0
  %7797 = vmatpush1.msra.mxu0 0.0
  %7798 = vmatprep.subr.mxu0 0.0
  %7799 = vmatpush1.msra.mxu0 0.0
  %7800 = vmatprep.subr.mxu0 0.0
  %7801 = vmatpush1.msra.mxu0 0.0
  %7802 = vmatprep.subr.mxu0 0.0
  %7803 = vmatpush1.msra.mxu0 0.0
  %7804 = vmatprep.subr.mxu0 0.0
  %7805 = vmatpush1.msra.mxu0 0.0
  %7806 = vmatprep.subr.mxu0 0.0
  %7807 = vmatpush1.msra.mxu0 0.0
  %7808 = vmatprep.subr.mxu0 0.0
  %7809 = vmatpush1.msra.mxu0 0.0
  %7810 = vmatprep.subr.mxu0 0.0
  %7811 = vmatpush1.msra.mxu0 0.0
  %7812 = vmatprep.subr.mxu0 0.0
  %7813 = vmatpush1.msra.mxu0 0.0
  %7814 = vmatprep.mubr.f32.mxu0 0.0
  %7815 = vmatmul.mubr.f32.gmra.mrb[0].mxu0 %v246
  %v7816 = vpop.f32.mrb[0].mxu0
  %v7817 = vadd.f32 0.0, %v7816
  %v7818 = vpop.f32.mrb[0].mxu0
  %7819 = vmatprep.mubr.f32.mxu0 0.0
  %7820 = vmatmul.mubr.f32.gmra.mrb[0].mxu0 %v249
  %v7821 = vpop.f32.mrb[0].mxu0
  %v7822 = vadd.f32 0.0, %v7821
  %v7823 = vpop.f32.mrb[0].mxu0
  %7824 = vdwg.mxu0
  %v7825 = vcombine.low %v7551, %v7553
  %v7827 = vunpack.c.l.s4 1966171168
  %v7828 = vunpack.c.0.s8 %v7827
  %v7829 = vlaneseq
  %v7830 = vshrl.u32 %v7829, 7
  %v7831 = vsub.s32 %v7828, %v7830
  %v7832 = vrot.slane %v7825, %v7831
  %v7834 = vunpack.c.l.s4 1966171168
  %v7835 = vunpack.c.0.s8 %v7834
  %v7836 = vlaneseq
  %v7837 = vshrl.u32 %v7836, 7
  %v7838 = vsub.s32 %v7835, %v7837
  %v7839 = vrot.slane %v7577, %v7838
  %v7840 = vcombine.low %v7832, %v7839
  %v7842 = vunpack.c.l.s4 1966171168
  %v7843 = vunpack.c.0.s8 %v7842
  %v7844 = vlaneseq
  %v7845 = vshrl.u32 %v7844, 7
  %v7846 = vsub.s32 %v7843, %v7845
  %v7847 = vrot.slane %v7840, %v7846
  %v7848 = vsel %vm275, %v7847, 0
  %7850 = vmatprep.subr.mxu0 0.0
  %7851 = vmatpush1.msra.mxu0 %v7848
  %7852 = vmatprep.subr.mxu0 0.0
  %7853 = vmatpush1.msra.mxu0 0.0
  %7854 = vmatprep.subr.mxu0 0.0
  %7855 = vmatpush1.msra.mxu0 0.0
  %7856 = vmatprep.subr.mxu0 0.0
  %7857 = vmatpush1.msra.mxu0 0.0
  %7858 = vmatprep.subr.mxu0 0.0
  %7859 = vmatpush1.msra.mxu0 0.0
  %7860 = vmatprep.subr.mxu0 0.0
  %7861 = vmatpush1.msra.mxu0 0.0
  %7862 = vmatprep.subr.mxu0 0.0
  %7863 = vmatpush1.msra.mxu0 0.0
  %7864 = vmatprep.subr.mxu0 0.0
  %7865 = vmatpush1.msra.mxu0 0.0
  %7866 = vmatprep.subr.mxu0 0.0
  %7867 = vmatpush1.msra.mxu0 0.0
  %7868 = vmatprep.subr.mxu0 0.0
  %7869 = vmatpush1.msra.mxu0 0.0
  %7870 = vmatprep.subr.mxu0 0.0
  %7871 = vmatpush1.msra.mxu0 0.0
  %7872 = vmatprep.subr.mxu0 0.0
  %7873 = vmatpush1.msra.mxu0 0.0
  %7874 = vmatprep.subr.mxu0 0.0
  %7875 = vmatpush1.msra.mxu0 0.0
  %7876 = vmatprep.subr.mxu0 0.0
  %7877 = vmatpush1.msra.mxu0 0.0
  %7878 = vmatprep.subr.mxu0 0.0
  %7879 = vmatpush1.msra.mxu0 0.0
  %7880 = vmatprep.subr.mxu0 0.0
  %7881 = vmatpush1.msra.mxu0 0.0
  %7882 = vmatprep.subr.mxu0 0.0
  %7883 = vmatpush1.msra.mxu0 0.0
  %7884 = vmatprep.subr.mxu0 0.0
  %7885 = vmatpush1.msra.mxu0 0.0
  %7886 = vmatprep.subr.mxu0 0.0
  %7887 = vmatpush1.msra.mxu0 0.0
  %7888 = vmatprep.subr.mxu0 0.0
  %7889 = vmatpush1.msra.mxu0 0.0
  %7890 = vmatprep.subr.mxu0 0.0
  %7891 = vmatpush1.msra.mxu0 0.0
  %7892 = vmatprep.subr.mxu0 0.0
  %7893 = vmatpush1.msra.mxu0 0.0
  %7894 = vmatprep.subr.mxu0 0.0
  %7895 = vmatpush1.msra.mxu0 0.0
  %7896 = vmatprep.subr.mxu0 0.0
  %7897 = vmatpush1.msra.mxu0 0.0
  %7898 = vmatprep.subr.mxu0 0.0
  %7899 = vmatpush1.msra.mxu0 0.0
  %7900 = vmatprep.subr.mxu0 0.0
  %7901 = vmatpush1.msra.mxu0 0.0
  %7902 = vmatprep.subr.mxu0 0.0
  %7903 = vmatpush1.msra.mxu0 0.0
  %7904 = vmatprep.subr.mxu0 0.0
  %7905 = vmatpush1.msra.mxu0 0.0
  %7906 = vmatprep.subr.mxu0 0.0
  %7907 = vmatpush1.msra.mxu0 0.0
  %7908 = vmatprep.subr.mxu0 0.0
  %7909 = vmatpush1.msra.mxu0 0.0
  %7910 = vmatprep.subr.mxu0 0.0
  %7911 = vmatpush1.msra.mxu0 0.0
  %7912 = vmatprep.subr.mxu0 0.0
  %7913 = vmatpush1.msra.mxu0 0.0
  %7914 = vmatprep.mubr.f32.mxu0 0.0
  %7915 = vmatmul.mubr.f32.gmra.mrb[0].mxu0 %v252
  %v7916 = vpop.f32.mrb[0].mxu0
  %v7917 = vadd.f32 0.0, %v7916
  %v7918 = vpop.f32.mrb[0].mxu0
  %7919 = vmatprep.mubr.f32.mxu0 0.0
  %7920 = vmatmul.mubr.f32.gmra.mrb[0].mxu0 %v255
  %v7921 = vpop.f32.mrb[0].mxu0
  %v7922 = vadd.f32 0.0, %v7921
  %v7923 = vpop.f32.mrb[0].mxu0
  %7924 = vdwg.mxu0
  %v7925 = vcombine.low %v7591, %v7599
  %v7927 = vunpack.c.l.s4 1966171168
  %v7928 = vunpack.c.0.s8 %v7927
  %v7929 = vlaneseq
  %v7930 = vshrl.u32 %v7929, 7
  %v7931 = vsub.s32 %v7928, %v7930
  %v7932 = vrot.slane %v7925, %v7931
  %v7934 = vunpack.c.l.s4 1966171168
  %v7935 = vunpack.c.0.s8 %v7934
  %v7936 = vlaneseq
  %v7937 = vshrl.u32 %v7936, 7
  %v7938 = vsub.s32 %v7935, %v7937
  %v7939 = vrot.slane %v7601, %v7938
  %v7940 = vcombine.low %v7932, %v7939
  %v7942 = vunpack.c.l.s4 1966171168
  %v7943 = vunpack.c.0.s8 %v7942
  %v7944 = vlaneseq
  %v7945 = vshrl.u32 %v7944, 7
  %v7946 = vsub.s32 %v7943, %v7945
  %v7947 = vrot.slane %v7940, %v7946
  %v7948 = vsel %vm275, %v7947, 0
  %7950 = vmatprep.subr.mxu0 0.0
  %7951 = vmatpush1.msra.mxu0 %v7948
  %7952 = vmatprep.subr.mxu0 0.0
  %7953 = vmatpush1.msra.mxu0 0.0
  %7954 = vmatprep.subr.mxu0 0.0
  %7955 = vmatpush1.msra.mxu0 0.0
  %7956 = vmatprep.subr.mxu0 0.0
  %7957 = vmatpush1.msra.mxu0 0.0
  %7958 = vmatprep.subr.mxu0 0.0
  %7959 = vmatpush1.msra.mxu0 0.0
  %7960 = vmatprep.subr.mxu0 0.0
  %7961 = vmatpush1.msra.mxu0 0.0
  %7962 = vmatprep.subr.mxu0 0.0
  %7963 = vmatpush1.msra.mxu0 0.0
  %7964 = vmatprep.subr.mxu0 0.0
  %7965 = vmatpush1.msra.mxu0 0.0
  %7966 = vmatprep.subr.mxu0 0.0
  %7967 = vmatpush1.msra.mxu0 0.0
  %7968 = vmatprep.subr.mxu0 0.0
  %7969 = vmatpush1.msra.mxu0 0.0
  %7970 = vmatprep.subr.mxu0 0.0
  %7971 = vmatpush1.msra.mxu0 0.0
  %7972 = vmatprep.subr.mxu0 0.0
  %7973 = vmatpush1.msra.mxu0 0.0
  %7974 = vmatprep.subr.mxu0 0.0
  %7975 = vmatpush1.msra.mxu0 0.0
  %7976 = vmatprep.subr.mxu0 0.0
  %7977 = vmatpush1.msra.mxu0 0.0
  %7978 = vmatprep.subr.mxu0 0.0
  %7979 = vmatpush1.msra.mxu0 0.0
  %7980 = vmatprep.subr.mxu0 0.0
  %7981 = vmatpush1.msra.mxu0 0.0
  %7982 = vmatprep.subr.mxu0 0.0
  %7983 = vmatpush1.msra.mxu0 0.0
  %7984 = vmatprep.subr.mxu0 0.0
  %7985 = vmatpush1.msra.mxu0 0.0
  %7986 = vmatprep.subr.mxu0 0.0
  %7987 = vmatpush1.msra.mxu0 0.0
  %7988 = vmatprep.subr.mxu0 0.0
  %7989 = vmatpush1.msra.mxu0 0.0
  %7990 = vmatprep.subr.mxu0 0.0
  %7991 = vmatpush1.msra.mxu0 0.0
  %7992 = vmatprep.subr.mxu0 0.0
  %7993 = vmatpush1.msra.mxu0 0.0
  %7994 = vmatprep.subr.mxu0 0.0
  %7995 = vmatpush1.msra.mxu0 0.0
  %7996 = vmatprep.subr.mxu0 0.0
  %7997 = vmatpush1.msra.mxu0 0.0
  %7998 = vmatprep.subr.mxu0 0.0
  %7999 = vmatpush1.msra.mxu0 0.0
  %8000 = vmatprep.subr.mxu0 0.0
  %8001 = vmatpush1.msra.mxu0 0.0
  %8002 = vmatprep.subr.mxu0 0.0
  %8003 = vmatpush1.msra.mxu0 0.0
  %8004 = vmatprep.subr.mxu0 0.0
  %8005 = vmatpush1.msra.mxu0 0.0
  %8006 = vmatprep.subr.mxu0 0.0
  %8007 = vmatpush1.msra.mxu0 0.0
  %8008 = vmatprep.subr.mxu0 0.0
  %8009 = vmatpush1.msra.mxu0 0.0
  %8010 = vmatprep.subr.mxu0 0.0
  %8011 = vmatpush1.msra.mxu0 0.0
  %8012 = vmatprep.subr.mxu0 0.0
  %8013 = vmatpush1.msra.mxu0 0.0
  %8014 = vmatprep.mubr.f32.mxu0 0.0
  %8015 = vmatmul.mubr.f32.gmra.mrb[0].mxu0 %v258
  %v8016 = vpop.f32.mrb[0].mxu0
  %v8017 = vadd.f32 0.0, %v8016
  %v8018 = vpop.f32.mrb[0].mxu0
  %8019 = vmatprep.mubr.f32.mxu0 0.0
  %8020 = vmatmul.mubr.f32.gmra.mrb[0].mxu0 %v261
  %v8021 = vpop.f32.mrb[0].mxu0
  %v8022 = vadd.f32 0.0, %v8021
  %v8023 = vpop.f32.mrb[0].mxu0
  %8024 = vdwg.mxu0
  %v8025 = vcombine.low %v7584, %v7598
  %v8027 = vunpack.c.l.s4 1966171168
  %v8028 = vunpack.c.0.s8 %v8027
  %v8029 = vlaneseq
  %v8030 = vshrl.u32 %v8029, 7
  %v8031 = vsub.s32 %v8028, %v8030
  %v8032 = vrot.slane %v8025, %v8031
  %v8034 = vunpack.c.l.s4 1966171168
  %v8035 = vunpack.c.0.s8 %v8034
  %v8036 = vlaneseq
  %v8037 = vshrl.u32 %v8036, 7
  %v8038 = vsub.s32 %v8035, %v8037
  %v8039 = vrot.slane %v7600, %v8038
  %v8040 = vcombine.low %v8032, %v8039
  %v8042 = vunpack.c.l.s4 1966171168
  %v8043 = vunpack.c.0.s8 %v8042
  %v8044 = vlaneseq
  %v8045 = vshrl.u32 %v8044, 7
  %v8046 = vsub.s32 %v8043, %v8045
  %v8047 = vrot.slane %v8040, %v8046
  %v8048 = vsel %vm275, %v8047, 0
  %8050 = vmatprep.subr.mxu0 0.0
  %8051 = vmatpush1.msra.mxu0 %v8048
  %8052 = vmatprep.subr.mxu0 0.0
  %8053 = vmatpush1.msra.mxu0 0.0
  %8054 = vmatprep.subr.mxu0 0.0
  %8055 = vmatpush1.msra.mxu0 0.0
  %8056 = vmatprep.subr.mxu0 0.0
  %8057 = vmatpush1.msra.mxu0 0.0
  %8058 = vmatprep.subr.mxu0 0.0
  %8059 = vmatpush1.msra.mxu0 0.0
  %8060 = vmatprep.subr.mxu0 0.0
  %8061 = vmatpush1.msra.mxu0 0.0
  %8062 = vmatprep.subr.mxu0 0.0
  %8063 = vmatpush1.msra.mxu0 0.0
  %8064 = vmatprep.subr.mxu0 0.0
  %8065 = vmatpush1.msra.mxu0 0.0
  %8066 = vmatprep.subr.mxu0 0.0
  %8067 = vmatpush1.msra.mxu0 0.0
  %8068 = vmatprep.subr.mxu0 0.0
  %8069 = vmatpush1.msra.mxu0 0.0
  %8070 = vmatprep.subr.mxu0 0.0
  %8071 = vmatpush1.msra.mxu0 0.0
  %8072 = vmatprep.subr.mxu0 0.0
  %8073 = vmatpush1.msra.mxu0 0.0
  %8074 = vmatprep.subr.mxu0 0.0
  %8075 = vmatpush1.msra.mxu0 0.0
  %8076 = vmatprep.subr.mxu0 0.0
  %8077 = vmatpush1.msra.mxu0 0.0
  %8078 = vmatprep.subr.mxu0 0.0
  %8079 = vmatpush1.msra.mxu0 0.0
  %8080 = vmatprep.subr.mxu0 0.0
  %8081 = vmatpush1.msra.mxu0 0.0
  %8082 = vmatprep.subr.mxu0 0.0
  %8083 = vmatpush1.msra.mxu0 0.0
  %8084 = vmatprep.subr.mxu0 0.0
  %8085 = vmatpush1.msra.mxu0 0.0
  %8086 = vmatprep.subr.mxu0 0.0
  %8087 = vmatpush1.msra.mxu0 0.0
  %8088 = vmatprep.subr.mxu0 0.0
  %8089 = vmatpush1.msra.mxu0 0.0
  %8090 = vmatprep.subr.mxu0 0.0
  %8091 = vmatpush1.msra.mxu0 0.0
  %8092 = vmatprep.subr.mxu0 0.0
  %8093 = vmatpush1.msra.mxu0 0.0
  %8094 = vmatprep.subr.mxu0 0.0
  %8095 = vmatpush1.msra.mxu0 0.0
  %8096 = vmatprep.subr.mxu0 0.0
  %8097 = vmatpush1.msra.mxu0 0.0
  %8098 = vmatprep.subr.mxu0 0.0
  %8099 = vmatpush1.msra.mxu0 0.0
  %8100 = vmatprep.subr.mxu0 0.0
  %8101 = vmatpush1.msra.mxu0 0.0
  %8102 = vmatprep.subr.mxu0 0.0
  %8103 = vmatpush1.msra.mxu0 0.0
  %8104 = vmatprep.subr.mxu0 0.0
  %8105 = vmatpush1.msra.mxu0 0.0
  %8106 = vmatprep.subr.mxu0 0.0
  %8107 = vmatpush1.msra.mxu0 0.0
  %8108 = vmatprep.subr.mxu0 0.0
  %8109 = vmatpush1.msra.mxu0 0.0
  %8110 = vmatprep.subr.mxu0 0.0
  %8111 = vmatpush1.msra.mxu0 0.0
  %8112 = vmatprep.subr.mxu0 0.0
  %8113 = vmatpush1.msra.mxu0 0.0
  %8114 = vmatprep.mubr.f32.mxu0 0.0
  %8115 = vmatmul.mubr.f32.gmra.mrb[0].mxu0 %v264
  %v8116 = vpop.f32.mrb[0].mxu0
  %v8117 = vadd.f32 0.0, %v8116
  %v8118 = vpop.f32.mrb[0].mxu0
  %8119 = vmatprep.mubr.f32.mxu0 0.0
  %8120 = vmatmul.mubr.f32.gmra.mrb[0].mxu0 %v267
  %v8121 = vpop.f32.mrb[0].mxu0
  %v8122 = vadd.f32 0.0, %v8121
  %v8123 = vpop.f32.mrb[0].mxu0
  %8124 = vdwg.mxu0
  %v8125 = vcombine.low %v7602, %v7617
  %v8127 = vunpack.c.l.s4 1966171168
  %v8128 = vunpack.c.0.s8 %v8127
  %v8129 = vlaneseq
  %v8130 = vshrl.u32 %v8129, 7
  %v8131 = vsub.s32 %v8128, %v8130
  %v8132 = vrot.slane %v8125, %v8131
  %v8134 = vunpack.c.l.s4 1966171168
  %v8135 = vunpack.c.0.s8 %v8134
  %v8136 = vlaneseq
  %v8137 = vshrl.u32 %v8136, 7
  %v8138 = vsub.s32 %v8135, %v8137
  %v8139 = vrot.slane %v7624, %v8138
  %v8140 = vcombine.low %v8132, %v8139
  %v8142 = vunpack.c.l.s4 1966171168
  %v8143 = vunpack.c.0.s8 %v8142
  %v8144 = vlaneseq
  %v8145 = vshrl.u32 %v8144, 7
  %v8146 = vsub.s32 %v8143, %v8145
  %v8147 = vrot.slane %v8140, %v8146
  %v8148 = vsel %vm275, %v8147, 0
  %8150 = vmatprep.subr.mxu0 0.0
  %8151 = vmatpush1.msra.mxu0 %v8148
  %8152 = vmatprep.subr.mxu0 0.0
  %8153 = vmatpush1.msra.mxu0 0.0
  %8154 = vmatprep.subr.mxu0 0.0
  %8155 = vmatpush1.msra.mxu0 0.0
  %8156 = vmatprep.subr.mxu0 0.0
  %8157 = vmatpush1.msra.mxu0 0.0
  %8158 = vmatprep.subr.mxu0 0.0
  %8159 = vmatpush1.msra.mxu0 0.0
  %8160 = vmatprep.subr.mxu0 0.0
  %8161 = vmatpush1.msra.mxu0 0.0
  %8162 = vmatprep.subr.mxu0 0.0
  %8163 = vmatpush1.msra.mxu0 0.0
  %8164 = vmatprep.subr.mxu0 0.0
  %8165 = vmatpush1.msra.mxu0 0.0
  %8166 = vmatprep.subr.mxu0 0.0
  %8167 = vmatpush1.msra.mxu0 0.0
  %8168 = vmatprep.subr.mxu0 0.0
  %8169 = vmatpush1.msra.mxu0 0.0
  %8170 = vmatprep.subr.mxu0 0.0
  %8171 = vmatpush1.msra.mxu0 0.0
  %8172 = vmatprep.subr.mxu0 0.0
  %8173 = vmatpush1.msra.mxu0 0.0
  %8174 = vmatprep.subr.mxu0 0.0
  %8175 = vmatpush1.msra.mxu0 0.0
  %8176 = vmatprep.subr.mxu0 0.0
  %8177 = vmatpush1.msra.mxu0 0.0
  %8178 = vmatprep.subr.mxu0 0.0
  %8179 = vmatpush1.msra.mxu0 0.0
  %8180 = vmatprep.subr.mxu0 0.0
  %8181 = vmatpush1.msra.mxu0 0.0
  %8182 = vmatprep.subr.mxu0 0.0
  %8183 = vmatpush1.msra.mxu0 0.0
  %8184 = vmatprep.subr.mxu0 0.0
  %8185 = vmatpush1.msra.mxu0 0.0
  %8186 = vmatprep.subr.mxu0 0.0
  %8187 = vmatpush1.msra.mxu0 0.0
  %8188 = vmatprep.subr.mxu0 0.0
  %8189 = vmatpush1.msra.mxu0 0.0
  %8190 = vmatprep.subr.mxu0 0.0
  %8191 = vmatpush1.msra.mxu0 0.0
  %8192 = vmatprep.subr.mxu0 0.0
  %8193 = vmatpush1.msra.mxu0 0.0
  %8194 = vmatprep.subr.mxu0 0.0
  %8195 = vmatpush1.msra.mxu0 0.0
  %8196 = vmatprep.subr.mxu0 0.0
  %8197 = vmatpush1.msra.mxu0 0.0
  %8198 = vmatprep.subr.mxu0 0.0
  %8199 = vmatpush1.msra.mxu0 0.0
  %8200 = vmatprep.subr.mxu0 0.0
  %8201 = vmatpush1.msra.mxu0 0.0
  %8202 = vmatprep.subr.mxu0 0.0
  %8203 = vmatpush1.msra.mxu0 0.0
  %8204 = vmatprep.subr.mxu0 0.0
  %8205 = vmatpush1.msra.mxu0 0.0
  %8206 = vmatprep.subr.mxu0 0.0
  %8207 = vmatpush1.msra.mxu0 0.0
  %8208 = vmatprep.subr.mxu0 0.0
  %8209 = vmatpush1.msra.mxu0 0.0
  %8210 = vmatprep.subr.mxu0 0.0
  %8211 = vmatpush1.msra.mxu0 0.0
  %8212 = vmatprep.subr.mxu0 0.0
  %8213 = vmatpush1.msra.mxu0 0.0
  %8214 = vmatprep.mubr.f32.mxu0 0.0
  %8215 = vmatmul.mubr.f32.gmra.mrb[0].mxu0 %v270
  %v8216 = vpop.f32.mrb[0].mxu0
  %v8217 = vadd.f32 0.0, %v8216
  %v8218 = vpop.f32.mrb[0].mxu0
  %8219 = vmatprep.mubr.f32.mxu0 0.0
  %8220 = vmatmul.mubr.f32.gmra.mrb[0].mxu0 %v273
  %v8221 = vpop.f32.mrb[0].mxu0
  %v8222 = vadd.f32 0.0, %v8221
  %v8223 = vpop.f32.mrb[0].mxu0
  %8224 = vdwg.mxu0
  %v8225 = vsel %vm404, %v7717, 0.0
  %v8226 = vsel %vm404, %v7722, 0.0
  %v8227 = vadd.f32 %v8225, %v8226
  %v8228 = vsel %vm404, %v7817, 0.0
  %v8229 = vadd.f32 %v8227, %v8228
  %v8230 = vsel %vm404, %v7822, 0.0
  %v8231 = vadd.f32 %v8229, %v8230
  %v8232 = vsel %vm404, %v7917, 0.0
  %v8233 = vadd.f32 %v8231, %v8232
  %v8234 = vsel %vm404, %v7922, 0.0
  %v8235 = vadd.f32 %v8233, %v8234
  %v8236 = vsel %vm404, %v8017, 0.0
  %v8237 = vadd.f32 %v8235, %v8236
  %v8238 = vsel %vm404, %v8022, 0.0
  %v8239 = vadd.f32 %v8237, %v8238
  %v8240 = vsel %vm404, %v8117, 0.0
  %v8241 = vadd.f32 %v8239, %v8240
  %v8242 = vsel %vm404, %v8122, 0.0
  %v8243 = vadd.f32 %v8241, %v8242
  %v8244 = vsel %vm404, %v8217, 0.0
  %v8245 = vadd.f32 %v8243, %v8244
  %v8246 = vsel %vm404, %v8222, 0.0
  %v8247 = vadd.f32 %v8245, %v8246
  %v8248 = vrot.slane %v8247, 4
  %v8249 = vadd.f32 %v8247, %v8248
  %v8250 = vrot.slane %v8249, 2
  %v8251 = vadd.f32 %v8249, %v8250
  %v8252 = vrot.slane %v8251, 1
  %v8253 = vadd.f32 %v8251, %v8252
  %v8254 = vmul.f32 %v8253, %v434
  %v8255 = vmul.f32 %v7717, %v7717
  %v8256 = vmul.f32 %v7722, %v7722
  %v8257 = vmul.f32 %v7817, %v7817
  %v8258 = vmul.f32 %v7822, %v7822
  %v8259 = vmul.f32 %v7917, %v7917
  %v8260 = vmul.f32 %v7922, %v7922
  %v8261 = vmul.f32 %v8017, %v8017
  %v8262 = vmul.f32 %v8022, %v8022
  %v8263 = vmul.f32 %v8117, %v8117
  %v8264 = vmul.f32 %v8122, %v8122
  %v8265 = vmul.f32 %v8217, %v8217
  %v8266 = vmul.f32 %v8222, %v8222
  %v8267 = vsel %vm404, %v8255, 0.0
  %v8268 = vsel %vm404, %v8256, 0.0
  %v8269 = vadd.f32 %v8267, %v8268
  %v8270 = vsel %vm404, %v8257, 0.0
  %v8271 = vadd.f32 %v8269, %v8270
  %v8272 = vsel %vm404, %v8258, 0.0
  %v8273 = vadd.f32 %v8271, %v8272
  %v8274 = vsel %vm404, %v8259, 0.0
  %v8275 = vadd.f32 %v8273, %v8274
  %v8276 = vsel %vm404, %v8260, 0.0
  %v8277 = vadd.f32 %v8275, %v8276
  %v8278 = vsel %vm404, %v8261, 0.0
  %v8279 = vadd.f32 %v8277, %v8278
  %v8280 = vsel %vm404, %v8262, 0.0
  %v8281 = vadd.f32 %v8279, %v8280
  %v8282 = vsel %vm404, %v8263, 0.0
  %v8283 = vadd.f32 %v8281, %v8282
  %v8284 = vsel %vm404, %v8264, 0.0
  %v8285 = vadd.f32 %v8283, %v8284
  %v8286 = vsel %vm404, %v8265, 0.0
  %v8287 = vadd.f32 %v8285, %v8286
  %v8288 = vsel %vm404, %v8266, 0.0
  %v8289 = vadd.f32 %v8287, %v8288
  %v8290 = vrot.slane %v8289, 4
  %v8291 = vadd.f32 %v8289, %v8290
  %v8292 = vrot.slane %v8291, 2
  %v8293 = vadd.f32 %v8291, %v8292
  %v8294 = vrot.slane %v8293, 1
  %v8295 = vadd.f32 %v8293, %v8294
  %v8296 = vmul.f32 %v8295, %v434
  %v8297 = vmul.f32 %v8254, %v8254
  %v8298 = vsub.f32 %v8296, %v8297
  %v8299 = vmax.f32 %v8298, 0.0
  %v8300 = vld [vmem:[%s1 + $0x43] ss:$0 sm:$0xff]
  %v8301 = vadd.f32 %v8299, 1e-05
  %v8302 = vrsqrt.pop %v8301
  %v8303 = vmul.f32 %v8300, %v8302
  %v8304 = vmul.f32 %v7717, %v8303
  %v8305 = vmul.f32 %v7722, %v8303
  %v8306 = vmul.f32 %v7817, %v8303
  %v8307 = vmul.f32 %v7822, %v8303
  %v8308 = vmul.f32 %v7917, %v8303
  %v8309 = vmul.f32 %v7922, %v8303
  %v8310 = vmul.f32 %v8017, %v8303
  %v8311 = vmul.f32 %v8022, %v8303
  %v8312 = vmul.f32 %v8117, %v8303
  %v8313 = vmul.f32 %v8122, %v8303
  %v8314 = vmul.f32 %v8217, %v8303
  %v8315 = vmul.f32 %v8222, %v8303
  %v8316 = vld [vmem:[%s1 + $0x44] ss:$0 sm:$0xff]
  %v8317 = vmul.f32 %v8254, %v8303
  %v8318 = vsub.f32 %v8316, %v8317
  %v8319 = vadd.f32 %v8304, %v8318
  %v8320 = vadd.f32 %v8305, %v8318
  %v8321 = vadd.f32 %v8306, %v8318
  %v8322 = vadd.f32 %v8307, %v8318
  %v8323 = vadd.f32 %v8308, %v8318
  %v8324 = vadd.f32 %v8309, %v8318
  %v8325 = vadd.f32 %v8310, %v8318
  %v8326 = vadd.f32 %v8311, %v8318
  %v8327 = vadd.f32 %v8312, %v8318
  %v8328 = vadd.f32 %v8313, %v8318
  %v8329 = vadd.f32 %v8314, %v8318
  %v8330 = vadd.f32 %v8315, %v8318
  %v8331 = vmax.f32 %v8319, 0.0
  %v8332 = vmax.f32 %v8320, 0.0
  %v8333 = vmax.f32 %v8321, 0.0
  %v8334 = vmax.f32 %v8322, 0.0
  %v8335 = vmax.f32 %v8323, 0.0
  %v8336 = vmax.f32 %v8324, 0.0
  %v8337 = vmax.f32 %v8325, 0.0
  %v8338 = vmax.f32 %v8326, 0.0
  %v8339 = vmax.f32 %v8327, 0.0
  %v8340 = vmax.f32 %v8328, 0.0
  %v8341 = vmax.f32 %v8329, 0.0
  %v8342 = vmax.f32 %v8330, 0.0
  %v8343 = vld [vmem:[%s9] sm:$0xf]
  %v8344 = vld [vmem:[%s9 + $0x4] sm:$0xf]
  %v8345 = vld [vmem:[%s9 + $0x8] sm:$0xf]
  %v8346 = vld [vmem:[%s9 + $0xc] sm:$0xf]
  %v8347 = vld [vmem:[%s9 + $0x10] sm:$0xf]
  %v8348 = vld [vmem:[%s9 + $0x14] sm:$0xf]
  %v8349 = vld [vmem:[%s9 + $0x18] sm:$0xf]
  %v8350 = vld [vmem:[%s9 + $0x1c] sm:$0xf]
  %v8351 = vpack.c.bf16 %v8332, %v8331
  %v8352 = vpack.c.bf16 %v8334, %v8333
  %v8353 = vpack.c.bf16 %v8336, %v8335
  %v8354 = vpack.c.bf16 %v8338, %v8337
  %v8355 = vpack.c.bf16 %v8340, %v8339
  %v8356 = vpack.c.bf16 %v8342, %v8341
  %v8365 = vunpack.c.l.b16 %v8343
  %v8366 = vunpack.c.l.b16 %v8344
  %v8367 = vunpack.c.l.b16 %v8345
  %v8368 = vunpack.c.l.b16 %v8346
  %v8369 = vunpack.c.l.b16 %v8347
  %v8370 = vunpack.c.l.b16 %v8348
  %v8371 = vunpack.c.l.b16 %v8349
  %v8372 = vunpack.c.l.b16 %v8350
  %v8373 = vpack.c.b16 %v8366, %v8365
  %v8374 = vpack.c.b16 %v8368, %v8367
  %v8375 = vpack.c.b16 %v8370, %v8369
  %v8376 = vpack.c.b16 %v8372, %v8371
  %v8382 = vsel %vm404, %v8351, 0
  %v8385 = vsel %vm404, %v8352, 0
  %v8388 = vsel %vm404, %v8353, 0
  %v8391 = vsel %vm404, %v8354, 0
  %v8394 = vsel %vm404, %v8355, 0
  %v8397 = vsel %vm404, %v8356, 0
  %8399 = vmatprep.subr.bf16.mxu0 0
  %8400 = vmatpush1.bf16.msra.mxu0 %v8373
  %8401 = vmatprep.subr.bf16.mxu0 0
  %8402 = vmatpush1.bf16.msra.mxu0 %v8374
  %8403 = vmatprep.subr.bf16.mxu0 0
  %8404 = vmatpush1.bf16.msra.mxu0 %v8375
  %8405 = vmatprep.subr.bf16.mxu0 0
  %8406 = vmatpush1.bf16.msra.mxu0 %v8376
  %8407 = vmatprep.subr.bf16.mxu0 0
  %8408 = vmatpush1.bf16.msra.mxu0 0
  %8409 = vmatprep.subr.bf16.mxu0 0
  %8410 = vmatpush1.bf16.msra.mxu0 0
  %8411 = vmatprep.subr.bf16.mxu0 0
  %8412 = vmatpush1.bf16.msra.mxu0 0
  %8413 = vmatprep.subr.bf16.mxu0 0
  %8414 = vmatpush1.bf16.msra.mxu0 0
  %8415 = vmatprep.subr.bf16.mxu0 0
  %8416 = vmatpush1.bf16.msra.mxu0 0
  %8417 = vmatprep.subr.bf16.mxu0 0
  %8418 = vmatpush1.bf16.msra.mxu0 0
  %8419 = vmatprep.subr.bf16.mxu0 0
  %8420 = vmatpush1.bf16.msra.mxu0 0
  %8421 = vmatprep.subr.bf16.mxu0 0
  %8422 = vmatpush1.bf16.msra.mxu0 0
  %8423 = vmatprep.subr.bf16.mxu0 0
  %8424 = vmatpush1.bf16.msra.mxu0 0
  %8425 = vmatprep.subr.bf16.mxu0 0
  %8426 = vmatpush1.bf16.msra.mxu0 0
  %8427 = vmatprep.subr.bf16.mxu0 0
  %8428 = vmatpush1.bf16.msra.mxu0 0
  %8429 = vmatprep.subr.bf16.mxu0 0
  %8430 = vmatpush1.bf16.msra.mxu0 0
  %8431 = vmatprep.mubr.bf16.mxu0 0
  %8432 = vmatmul.mubr.bf16.gmra.mrb[0].mxu0 %v8382
  %v8433 = vpop.f32.mrb[0].mxu0
  %v8434 = vadd.f32 0.0, %v8433
  %v8435 = vpop.f32.mrb[0].mxu0
  %v8436 = vpop.f32.mrb[0].mxu0
  %v8437 = vadd.f32 0.0, %v8436
  %v8438 = vpop.f32.mrb[0].mxu0
  %8439 = vmatprep.mubr.bf16.mxu0 0
  %8440 = vmatmul.mubr.bf16.gmra.mrb[0].mxu0 %v8385
  %v8441 = vpop.f32.mrb[0].mxu0
  %v8442 = vadd.f32 0.0, %v8441
  %v8443 = vpop.f32.mrb[0].mxu0
  %v8444 = vpop.f32.mrb[0].mxu0
  %v8445 = vadd.f32 0.0, %v8444
  %v8446 = vpop.f32.mrb[0].mxu0
  %8447 = vmatprep.mubr.bf16.mxu0 0
  %8448 = vmatmul.mubr.bf16.gmra.mrb[0].mxu0 %v8388
  %v8449 = vpop.f32.mrb[0].mxu0
  %v8450 = vadd.f32 0.0, %v8449
  %v8451 = vpop.f32.mrb[0].mxu0
  %v8452 = vpop.f32.mrb[0].mxu0
  %v8453 = vadd.f32 0.0, %v8452
  %v8454 = vpop.f32.mrb[0].mxu0
  %8455 = vmatprep.mubr.bf16.mxu0 0
  %8456 = vmatmul.mubr.bf16.gmra.mrb[0].mxu0 %v8391
  %v8457 = vpop.f32.mrb[0].mxu0
  %v8458 = vadd.f32 0.0, %v8457
  %v8459 = vpop.f32.mrb[0].mxu0
  %v8460 = vpop.f32.mrb[0].mxu0
  %v8461 = vadd.f32 0.0, %v8460
  %v8462 = vpop.f32.mrb[0].mxu0
  %8463 = vmatprep.mubr.bf16.mxu0 0
  %8464 = vmatmul.mubr.bf16.gmra.mrb[0].mxu0 %v8394
  %v8465 = vpop.f32.mrb[0].mxu0
  %v8466 = vadd.f32 0.0, %v8465
  %v8467 = vpop.f32.mrb[0].mxu0
  %v8468 = vpop.f32.mrb[0].mxu0
  %v8469 = vadd.f32 0.0, %v8468
  %v8470 = vpop.f32.mrb[0].mxu0
  %8471 = vmatprep.mubr.bf16.mxu0 0
  %8472 = vmatmul.mubr.bf16.gmra.mrb[0].mxu0 %v8397
  %v8473 = vpop.f32.mrb[0].mxu0
  %v8474 = vadd.f32 0.0, %v8473
  %v8475 = vpop.f32.mrb[0].mxu0
  %v8476 = vpop.f32.mrb[0].mxu0
  %v8477 = vadd.f32 0.0, %v8476
  %v8478 = vpop.f32.mrb[0].mxu0
  %8479 = vdwg.mxu0
  %v8480 = vadd.f32 %v8434, %v8437
  %v8481 = vadd.f32 %v8480, %v8442
  %v8482 = vadd.f32 %v8481, %v8445
  %v8483 = vadd.f32 %v8482, %v8450
  %v8484 = vadd.f32 %v8483, %v8453
  %v8485 = vadd.f32 %v8484, %v8458
  %v8486 = vadd.f32 %v8485, %v8461
  %v8487 = vadd.f32 %v8486, %v8466
  %v8488 = vadd.f32 %v8487, %v8469
  %v8489 = vadd.f32 %v8488, %v8474
  %v8490 = vadd.f32 %v8489, %v8477
  %v8491 = vrot.slane %v8490, 4
  %v8492 = vadd.f32 %v8490, %v8491
  %v8493 = vrot.slane %v8492, 2
  %v8494 = vadd.f32 %v8492, %v8493
  %v8495 = vrot.slane %v8494, 1
  %v8496 = vadd.f32 %v8494, %v8495
  %v8497 = vmul.f32 %v8496, %v434
  %v8498 = vmul.f32 %v8434, %v8434
  %v8499 = vmul.f32 %v8437, %v8437
  %v8500 = vmul.f32 %v8442, %v8442
  %v8501 = vmul.f32 %v8445, %v8445
  %v8502 = vmul.f32 %v8450, %v8450
  %v8503 = vmul.f32 %v8453, %v8453
  %v8504 = vmul.f32 %v8458, %v8458
  %v8505 = vmul.f32 %v8461, %v8461
  %v8506 = vmul.f32 %v8466, %v8466
  %v8507 = vmul.f32 %v8469, %v8469
  %v8508 = vmul.f32 %v8474, %v8474
  %v8509 = vmul.f32 %v8477, %v8477
  %v8510 = vadd.f32 %v8498, %v8499
  %v8511 = vadd.f32 %v8510, %v8500
  %v8512 = vadd.f32 %v8511, %v8501
  %v8513 = vadd.f32 %v8512, %v8502
  %v8514 = vadd.f32 %v8513, %v8503
  %v8515 = vadd.f32 %v8514, %v8504
  %v8516 = vadd.f32 %v8515, %v8505
  %v8517 = vadd.f32 %v8516, %v8506
  %v8518 = vadd.f32 %v8517, %v8507
  %v8519 = vadd.f32 %v8518, %v8508
  %v8520 = vadd.f32 %v8519, %v8509
  %v8521 = vrot.slane %v8520, 4
  %v8522 = vadd.f32 %v8520, %v8521
  %v8523 = vrot.slane %v8522, 2
  %v8524 = vadd.f32 %v8522, %v8523
  %v8525 = vrot.slane %v8524, 1
  %v8526 = vadd.f32 %v8524, %v8525
  %v8527 = vmul.f32 %v8526, %v434
  %v8528 = vmul.f32 %v8497, %v8497
  %v8529 = vsub.f32 %v8527, %v8528
  %v8530 = vmax.f32 %v8529, 0.0
  %v8531 = vld [vmem:[%s1 + $0x45] ss:$0 sm:$0xff]
  %v8532 = vadd.f32 %v8530, 1e-05
  %v8533 = vrsqrt.pop %v8532
  %v8534 = vmul.f32 %v8531, %v8533
  %v8535 = vmul.f32 %v8434, %v8534
  %v8536 = vmul.f32 %v8437, %v8534
  %v8537 = vmul.f32 %v8442, %v8534
  %v8538 = vmul.f32 %v8445, %v8534
  %v8539 = vmul.f32 %v8450, %v8534
  %v8540 = vmul.f32 %v8453, %v8534
  %v8541 = vmul.f32 %v8458, %v8534
  %v8542 = vmul.f32 %v8461, %v8534
  %v8543 = vmul.f32 %v8466, %v8534
  %v8544 = vmul.f32 %v8469, %v8534
  %v8545 = vmul.f32 %v8474, %v8534
  %v8546 = vmul.f32 %v8477, %v8534
  %v8547 = vld [vmem:[%s1 + $0x46] ss:$0 sm:$0xff]
  %v8548 = vmul.f32 %v8497, %v8534
  %v8549 = vsub.f32 %v8547, %v8548
  %v8550 = vadd.f32 %v8535, %v8549
  %v8551 = vadd.f32 %v8536, %v8549
  %v8552 = vadd.f32 %v8537, %v8549
  %v8553 = vadd.f32 %v8538, %v8549
  %v8554 = vadd.f32 %v8539, %v8549
  %v8555 = vadd.f32 %v8540, %v8549
  %v8556 = vadd.f32 %v8541, %v8549
  %v8557 = vadd.f32 %v8542, %v8549
  %v8558 = vadd.f32 %v8543, %v8549
  %v8559 = vadd.f32 %v8544, %v8549
  %v8560 = vadd.f32 %v8545, %v8549
  %v8561 = vadd.f32 %v8546, %v8549
  %v8562 = vmax.f32 %v8550, 0.0
  %v8563 = vmax.f32 %v8551, 0.0
  %v8564 = vmax.f32 %v8552, 0.0
  %v8565 = vmax.f32 %v8553, 0.0
  %v8566 = vmax.f32 %v8554, 0.0
  %v8567 = vmax.f32 %v8555, 0.0
  %v8568 = vmax.f32 %v8556, 0.0
  %v8569 = vmax.f32 %v8557, 0.0
  %v8570 = vmax.f32 %v8558, 0.0
  %v8571 = vmax.f32 %v8559, 0.0
  %v8572 = vmax.f32 %v8560, 0.0
  %v8573 = vmax.f32 %v8561, 0.0
  %v8574 = vld [vmem:[%s10] sm:$0xf]
  %v8575 = vld [vmem:[%s10 + $0x4] sm:$0xf]
  %v8576 = vld [vmem:[%s10 + $0x8] sm:$0xf]
  %v8577 = vld [vmem:[%s10 + $0xc] sm:$0xf]
  %v8578 = vld [vmem:[%s10 + $0x10] sm:$0xf]
  %v8579 = vld [vmem:[%s10 + $0x14] sm:$0xf]
  %v8580 = vld [vmem:[%s10 + $0x18] sm:$0xf]
  %v8581 = vld [vmem:[%s10 + $0x1c] sm:$0xf]
  %v8582 = vld [vmem:[%s10 + $0x20] sm:$0xf]
  %v8583 = vld [vmem:[%s10 + $0x24] sm:$0xf]
  %v8584 = vld [vmem:[%s10 + $0x28] sm:$0xf]
  %v8585 = vld [vmem:[%s10 + $0x2c] sm:$0xf]
  %v8586 = vld [vmem:[%s10 + $0x30] sm:$0xf]
  %v8587 = vld [vmem:[%s10 + $0x34] sm:$0xf]
  %v8588 = vld [vmem:[%s10 + $0x38] sm:$0xf]
  %v8589 = vld [vmem:[%s10 + $0x3c] sm:$0xf]
  %v8590 = vpack.c.bf16 %v8563, %v8562
  %v8591 = vpack.c.bf16 %v8565, %v8564
  %v8592 = vpack.c.bf16 %v8567, %v8566
  %v8593 = vpack.c.bf16 %v8569, %v8568
  %v8594 = vpack.c.bf16 %v8571, %v8570
  %v8595 = vpack.c.bf16 %v8573, %v8572
  %v8612 = vunpack.c.l.b16 %v8574
  %v8613 = vunpack.c.l.b16 %v8575
  %v8614 = vunpack.c.l.b16 %v8576
  %v8615 = vunpack.c.l.b16 %v8577
  %v8616 = vunpack.c.l.b16 %v8578
  %v8617 = vunpack.c.l.b16 %v8579
  %v8618 = vunpack.c.l.b16 %v8580
  %v8619 = vunpack.c.l.b16 %v8581
  %v8620 = vunpack.c.l.b16 %v8582
  %v8621 = vunpack.c.l.b16 %v8583
  %v8622 = vunpack.c.l.b16 %v8584
  %v8623 = vunpack.c.l.b16 %v8585
  %v8624 = vunpack.c.l.b16 %v8586
  %v8625 = vunpack.c.l.b16 %v8587
  %v8626 = vunpack.c.l.b16 %v8588
  %v8627 = vunpack.c.l.b16 %v8589
  %v8628 = vpack.c.b16 %v8613, %v8612
  %v8629 = vpack.c.b16 %v8615, %v8614
  %v8630 = vpack.c.b16 %v8617, %v8616
  %v8631 = vpack.c.b16 %v8619, %v8618
  %v8632 = vpack.c.b16 %v8621, %v8620
  %v8633 = vpack.c.b16 %v8623, %v8622
  %v8634 = vpack.c.b16 %v8625, %v8624
  %v8635 = vpack.c.b16 %v8627, %v8626
  %8644 = vmatprep.subr.bf16.mxu0 0
  %8645 = vmatpush1.bf16.msra.mxu0 %v8628
  %8646 = vmatprep.subr.bf16.mxu0 0
  %8647 = vmatpush1.bf16.msra.mxu0 %v8629
  %8648 = vmatprep.subr.bf16.mxu0 0
  %8649 = vmatpush1.bf16.msra.mxu0 %v8630
  %8650 = vmatprep.subr.bf16.mxu0 0
  %8651 = vmatpush1.bf16.msra.mxu0 %v8631
  %8652 = vmatprep.subr.bf16.mxu0 0
  %8653 = vmatpush1.bf16.msra.mxu0 %v8632
  %8654 = vmatprep.subr.bf16.mxu0 0
  %8655 = vmatpush1.bf16.msra.mxu0 %v8633
  %8656 = vmatprep.subr.bf16.mxu0 0
  %8657 = vmatpush1.bf16.msra.mxu0 %v8634
  %8658 = vmatprep.subr.bf16.mxu0 0
  %8659 = vmatpush1.bf16.msra.mxu0 %v8635
  %8660 = vmatprep.subr.bf16.mxu0 0
  %8661 = vmatpush1.bf16.msra.mxu0 0
  %8662 = vmatprep.subr.bf16.mxu0 0
  %8663 = vmatpush1.bf16.msra.mxu0 0
  %8664 = vmatprep.subr.bf16.mxu0 0
  %8665 = vmatpush1.bf16.msra.mxu0 0
  %8666 = vmatprep.subr.bf16.mxu0 0
  %8667 = vmatpush1.bf16.msra.mxu0 0
  %8668 = vmatprep.subr.bf16.mxu0 0
  %8669 = vmatpush1.bf16.msra.mxu0 0
  %8670 = vmatprep.subr.bf16.mxu0 0
  %8671 = vmatpush1.bf16.msra.mxu0 0
  %8672 = vmatprep.subr.bf16.mxu0 0
  %8673 = vmatpush1.bf16.msra.mxu0 0
  %8674 = vmatprep.subr.bf16.mxu0 0
  %8675 = vmatpush1.bf16.msra.mxu0 0
  %8676 = vmatprep.mubr.bf16.mxu0 0
  %8677 = vmatmul.mubr.bf16.gmra.mrb[0].mxu0 %v8590
  %v8678 = vpop.f32.mrb[0].mxu0
  %v8679 = vadd.f32 0.0, %v8678
  %v8680 = vpop.f32.mrb[0].mxu0
  %v8681 = vpop.f32.mrb[0].mxu0
  %v8682 = vadd.f32 0.0, %v8681
  %v8683 = vpop.f32.mrb[0].mxu0
  %8684 = vmatprep.mubr.bf16.mxu0 0
  %8685 = vmatmul.mubr.bf16.gmra.mrb[0].mxu0 %v8591
  %v8686 = vpop.f32.mrb[0].mxu0
  %v8687 = vadd.f32 0.0, %v8686
  %v8688 = vpop.f32.mrb[0].mxu0
  %v8689 = vpop.f32.mrb[0].mxu0
  %v8690 = vadd.f32 0.0, %v8689
  %v8691 = vpop.f32.mrb[0].mxu0
  %8692 = vmatprep.mubr.bf16.mxu0 0
  %8693 = vmatmul.mubr.bf16.gmra.mrb[0].mxu0 %v8592
  %v8694 = vpop.f32.mrb[0].mxu0
  %v8695 = vadd.f32 0.0, %v8694
  %v8696 = vpop.f32.mrb[0].mxu0
  %v8697 = vpop.f32.mrb[0].mxu0
  %v8698 = vadd.f32 0.0, %v8697
  %v8699 = vpop.f32.mrb[0].mxu0
  %8700 = vmatprep.mubr.bf16.mxu0 0
  %8701 = vmatmul.mubr.bf16.gmra.mrb[0].mxu0 %v8593
  %v8702 = vpop.f32.mrb[0].mxu0
  %v8703 = vadd.f32 0.0, %v8702
  %v8704 = vpop.f32.mrb[0].mxu0
  %v8705 = vpop.f32.mrb[0].mxu0
  %v8706 = vadd.f32 0.0, %v8705
  %v8707 = vpop.f32.mrb[0].mxu0
  %8708 = vmatprep.mubr.bf16.mxu0 0
  %8709 = vmatmul.mubr.bf16.gmra.mrb[0].mxu0 %v8594
  %v8710 = vpop.f32.mrb[0].mxu0
  %v8711 = vadd.f32 0.0, %v8710
  %v8712 = vpop.f32.mrb[0].mxu0
  %v8713 = vpop.f32.mrb[0].mxu0
  %v8714 = vadd.f32 0.0, %v8713
  %v8715 = vpop.f32.mrb[0].mxu0
  %8716 = vmatprep.mubr.bf16.mxu0 0
  %8717 = vmatmul.mubr.bf16.gmra.mrb[0].mxu0 %v8595
  %v8718 = vpop.f32.mrb[0].mxu0
  %v8719 = vadd.f32 0.0, %v8718
  %v8720 = vpop.f32.mrb[0].mxu0
  %v8721 = vpop.f32.mrb[0].mxu0
  %v8722 = vadd.f32 0.0, %v8721
  %v8723 = vpop.f32.mrb[0].mxu0
  %8724 = vdwg.mxu0
  %v8725 = vsel %vm404, %v8679, 0.0
  %v8726 = vsel %vm404, %v8682, 0.0
  %v8727 = vadd.f32 %v8725, %v8726
  %v8728 = vsel %vm404, %v8687, 0.0
  %v8729 = vadd.f32 %v8727, %v8728
  %v8730 = vsel %vm404, %v8690, 0.0
  %v8731 = vadd.f32 %v8729, %v8730
  %v8732 = vsel %vm404, %v8695, 0.0
  %v8733 = vadd.f32 %v8731, %v8732
  %v8734 = vsel %vm404, %v8698, 0.0
  %v8735 = vadd.f32 %v8733, %v8734
  %v8736 = vsel %vm404, %v8703, 0.0
  %v8737 = vadd.f32 %v8735, %v8736
  %v8738 = vsel %vm404, %v8706, 0.0
  %v8739 = vadd.f32 %v8737, %v8738
  %v8740 = vsel %vm404, %v8711, 0.0
  %v8741 = vadd.f32 %v8739, %v8740
  %v8742 = vsel %vm404, %v8714, 0.0
  %v8743 = vadd.f32 %v8741, %v8742
  %v8744 = vsel %vm404, %v8719, 0.0
  %v8745 = vadd.f32 %v8743, %v8744
  %v8746 = vsel %vm404, %v8722, 0.0
  %v8747 = vadd.f32 %v8745, %v8746
  %v8748 = vrot.slane %v8747, 4
  %v8749 = vadd.f32 %v8747, %v8748
  %v8750 = vrot.slane %v8749, 2
  %v8751 = vadd.f32 %v8749, %v8750
  %v8752 = vrot.slane %v8751, 1
  %v8753 = vadd.f32 %v8751, %v8752
  %v8754 = vmul.f32 %v8753, %v434
  %v8755 = vmul.f32 %v8679, %v8679
  %v8756 = vmul.f32 %v8682, %v8682
  %v8757 = vmul.f32 %v8687, %v8687
  %v8758 = vmul.f32 %v8690, %v8690
  %v8759 = vmul.f32 %v8695, %v8695
  %v8760 = vmul.f32 %v8698, %v8698
  %v8761 = vmul.f32 %v8703, %v8703
  %v8762 = vmul.f32 %v8706, %v8706
  %v8763 = vmul.f32 %v8711, %v8711
  %v8764 = vmul.f32 %v8714, %v8714
  %v8765 = vmul.f32 %v8719, %v8719
  %v8766 = vmul.f32 %v8722, %v8722
  %v8767 = vsel %vm404, %v8755, 0.0
  %v8768 = vsel %vm404, %v8756, 0.0
  %v8769 = vadd.f32 %v8767, %v8768
  %v8770 = vsel %vm404, %v8757, 0.0
  %v8771 = vadd.f32 %v8769, %v8770
  %v8772 = vsel %vm404, %v8758, 0.0
  %v8773 = vadd.f32 %v8771, %v8772
  %v8774 = vsel %vm404, %v8759, 0.0
  %v8775 = vadd.f32 %v8773, %v8774
  %v8776 = vsel %vm404, %v8760, 0.0
  %v8777 = vadd.f32 %v8775, %v8776
  %v8778 = vsel %vm404, %v8761, 0.0
  %v8779 = vadd.f32 %v8777, %v8778
  %v8780 = vsel %vm404, %v8762, 0.0
  %v8781 = vadd.f32 %v8779, %v8780
  %v8782 = vsel %vm404, %v8763, 0.0
  %v8783 = vadd.f32 %v8781, %v8782
  %v8784 = vsel %vm404, %v8764, 0.0
  %v8785 = vadd.f32 %v8783, %v8784
  %v8786 = vsel %vm404, %v8765, 0.0
  %v8787 = vadd.f32 %v8785, %v8786
  %v8788 = vsel %vm404, %v8766, 0.0
  %v8789 = vadd.f32 %v8787, %v8788
  %v8790 = vrot.slane %v8789, 4
  %v8791 = vadd.f32 %v8789, %v8790
  %v8792 = vrot.slane %v8791, 2
  %v8793 = vadd.f32 %v8791, %v8792
  %v8794 = vrot.slane %v8793, 1
  %v8795 = vadd.f32 %v8793, %v8794
  %v8796 = vmul.f32 %v8795, %v434
  %v8797 = vmul.f32 %v8754, %v8754
  %v8798 = vsub.f32 %v8796, %v8797
  %v8799 = vmax.f32 %v8798, 0.0
  %v8800 = vld [vmem:[%s1 + $0x47] ss:$0 sm:$0xff]
  %v8801 = vadd.f32 %v8799, 1e-05
  %v8802 = vrsqrt.pop %v8801
  %v8803 = vmul.f32 %v8800, %v8802
  %v8804 = vmul.f32 %v8679, %v8803
  %v8805 = vmul.f32 %v8682, %v8803
  %v8806 = vmul.f32 %v8687, %v8803
  %v8807 = vmul.f32 %v8690, %v8803
  %v8808 = vmul.f32 %v8695, %v8803
  %v8809 = vmul.f32 %v8698, %v8803
  %v8810 = vmul.f32 %v8703, %v8803
  %v8811 = vmul.f32 %v8706, %v8803
  %v8812 = vmul.f32 %v8711, %v8803
  %v8813 = vmul.f32 %v8714, %v8803
  %v8814 = vmul.f32 %v8719, %v8803
  %v8815 = vmul.f32 %v8722, %v8803
  %v8816 = vld [vmem:[%s1 + $0x80] ss:$0 sm:$0xff]
  %v8817 = vmul.f32 %v8754, %v8803
  %v8818 = vsub.f32 %v8816, %v8817
  %v8819 = vadd.f32 %v8804, %v8818
  %v8820 = vadd.f32 %v8805, %v8818
  %v8821 = vadd.f32 %v8806, %v8818
  %v8822 = vadd.f32 %v8807, %v8818
  %v8823 = vadd.f32 %v8808, %v8818
  %v8824 = vadd.f32 %v8809, %v8818
  %v8825 = vadd.f32 %v8810, %v8818
  %v8826 = vadd.f32 %v8811, %v8818
  %v8827 = vadd.f32 %v8812, %v8818
  %v8828 = vadd.f32 %v8813, %v8818
  %v8829 = vadd.f32 %v8814, %v8818
  %v8830 = vadd.f32 %v8815, %v8818
  %v8831 = vsel %vm404, %v8819, -inf
  %v8832 = vsel %vm404, %v8820, -inf
  %v8833 = vmax.f32 %v8831, %v8832
  %v8834 = vrot.slane %v8833, 4
  %v8835 = vmax.f32 %v8833, %v8834
  %v8836 = vrot.slane %v8835, 2
  %v8837 = vmax.f32 %v8835, %v8836
  %v8838 = vrot.slane %v8837, 1
  %v8839 = vmax.f32 %v8837, %v8838
  %v8840 = vsel %vm404, %v8821, -inf
  %v8841 = vsel %vm404, %v8822, -inf
  %v8842 = vmax.f32 %v8840, %v8841
  %v8843 = vrot.slane %v8842, 4
  %v8844 = vmax.f32 %v8842, %v8843
  %v8845 = vrot.slane %v8844, 2
  %v8846 = vmax.f32 %v8844, %v8845
  %v8847 = vrot.slane %v8846, 1
  %v8848 = vmax.f32 %v8846, %v8847
  %v8849 = vsel %vm404, %v8823, -inf
  %v8850 = vsel %vm404, %v8824, -inf
  %v8851 = vmax.f32 %v8849, %v8850
  %v8852 = vrot.slane %v8851, 4
  %v8853 = vmax.f32 %v8851, %v8852
  %v8854 = vrot.slane %v8853, 2
  %v8855 = vmax.f32 %v8853, %v8854
  %v8856 = vrot.slane %v8855, 1
  %v8857 = vmax.f32 %v8855, %v8856
  %v8858 = vsel %vm404, %v8825, -inf
  %v8859 = vsel %vm404, %v8826, -inf
  %v8860 = vmax.f32 %v8858, %v8859
  %v8861 = vrot.slane %v8860, 4
  %v8862 = vmax.f32 %v8860, %v8861
  %v8863 = vrot.slane %v8862, 2
  %v8864 = vmax.f32 %v8862, %v8863
  %v8865 = vrot.slane %v8864, 1
  %v8866 = vmax.f32 %v8864, %v8865
  %v8867 = vsel %vm404, %v8827, -inf
  %v8868 = vsel %vm404, %v8828, -inf
  %v8869 = vmax.f32 %v8867, %v8868
  %v8870 = vrot.slane %v8869, 4
  %v8871 = vmax.f32 %v8869, %v8870
  %v8872 = vrot.slane %v8871, 2
  %v8873 = vmax.f32 %v8871, %v8872
  %v8874 = vrot.slane %v8873, 1
  %v8875 = vmax.f32 %v8873, %v8874
  %v8876 = vsel %vm404, %v8829, -inf
  %v8877 = vsel %vm404, %v8830, -inf
  %v8878 = vmax.f32 %v8876, %v8877
  %v8879 = vrot.slane %v8878, 4
  %v8880 = vmax.f32 %v8878, %v8879
  %v8881 = vrot.slane %v8880, 2
  %v8882 = vmax.f32 %v8880, %v8881
  %v8883 = vrot.slane %v8882, 1
  %v8884 = vmax.f32 %v8882, %v8883
  %v8891 = vsel %vm4457, %v8848, %v8839
  %v8892 = vsel %vm4459, %v8857, %v8891
  %v8893 = vsel %vm4461, %v8866, %v8892
  %v8894 = vsel %vm4463, %v8875, %v8893
  %v8895 = vsel %vm4465, %v8884, %v8894
  %vm8897 = vcmask 521216
  %8898 = vst.msk [vmem:[%s11] sm:$0x3f] %vm8897, %v8895
  // Predicated region
  $region46: #{forward.1} parent=0 // pred_check
    _
  $region47: #{forward.1} parent=0 // pred_check_branch
    %8900 = sbr.rel (0) target = $region49
  $region48: #{forward.1} parent=0 // pred_region
    _
  $region49: #{forward.1} parent=0 // pred_fallthru
    _
  // Predicated region
  $region50: #{forward.1} parent=0 // pred_check
    _
  $region51: #{forward.1} parent=0 // pred_check_branch
    %8902 = sbr.rel (0) target = $region53
  $region52: #{forward.1} parent=0 // pred_region
    _
  $region53: #{forward.1} parent=0 // pred_fallthru
    _

</llo_original>
